<compile_context>
chip_gen: v7x
topology: tpu7x:2x2x1
jax: 0.10.0
libtpu: 0.0.40
codegen_flags: <defaults>
</compile_context>

<pallas_src>
import jax
import jax.numpy as jnp
from jax.experimental import pallas as pl
from jax.experimental.pallas import tpu as pltpu


def _dc_block_kernel(x_ref, w1_ref, b1_ref, w2_ref, b2_ref, w3_ref, b3_ref,
                     a_ref, o_ref, buf_ref):
    # x_ref  : (1, C, H, W)     one batch element, NCHW, f32 (VMEM)
    # wK_ref : (CoutK*CinK*9,)  flattened OIHW conv weights (SMEM scalars)
    # bK_ref : (CoutK,)         biases (SMEM)
    # a_ref  : (3,)             PReLU alphas, one shared scalar per layer (SMEM)
    # o_ref  : (1, C, H, W)     output (VMEM)
    # buf_ref: (2C, H+2, W+2)   zero-padded dense-concat slab (VMEM scratch)
    _, C, H, W = x_ref.shape
    c_half = C // 2
    c_mid = C + c_half        # channels after first concat  (= conv_2 in_channels)
    c_full = 2 * C            # channels after second concat (= conv_3 in_channels)

    # ---- in-kernel "same" padding: zero the slab, write x into the interior ----
    buf_ref[...] = jnp.zeros_like(buf_ref)
    buf_ref[0:C, 1:H + 1, 1:W + 1] = x_ref[0].astype(jnp.float32)

    def conv3x3_prelu(cin, cout, w_ref, b_ref, alpha):
        # 3x3 "same" conv over slab channels [0, cin) + bias + PReLU.
        # Tiny Cin/Cout => VPU scalar-broadcast FMAs (no MXU), f32 accumulate.
        accs = [jnp.full((H, W), b_ref[co], jnp.float32) for co in range(cout)]
        for ci in range(cin):
            for k in range(9):
                dy, dx = k // 3, k % 3
                patch = buf_ref[ci, dy:dy + H, dx:dx + W]     # (H, W) shifted window
                for co in range(cout):
                    accs[co] = accs[co] + w_ref[(co * cin + ci) * 9 + k] * patch
        return [jnp.where(v > 0, v, alpha * v) for v in accs]

    # conv_1 + PReLU -> dense concat #1 (append into slab channels [C, 3C/2))
    out1 = conv3x3_prelu(C, c_half, w1_ref, b1_ref, a_ref[0])
    for co in range(c_half):
        buf_ref[C + co, 1:H + 1, 1:W + 1] = out1[co]

    # conv_2 + PReLU -> dense concat #2 (append into slab channels [3C/2, 2C))
    out2 = conv3x3_prelu(c_mid, c_half, w2_ref, b2_ref, a_ref[1])
    for co in range(c_half):
        buf_ref[c_mid + co, 1:H + 1, 1:W + 1] = out2[co]

    # conv_3 + PReLU + residual add -> output
    out3 = conv3x3_prelu(c_full, C, w3_ref, b3_ref, a_ref[2])
    for co in range(C):
        o_ref[0, co] = (out3[co] + x_ref[0, co].astype(jnp.float32)).astype(o_ref.dtype)


def dc_block_forward(x_nchw, params):
    """Reproduces _DC_block.forward.  Input/output: NCHW float32."""
    N, C, H, W = x_nchw.shape

    def flat(w):
        return jnp.asarray(w, jnp.float32).reshape(-1)   # OIHW -> (Cout*Cin*9,)

    w1, b1 = flat(params["w1"]), jnp.asarray(params["b1"], jnp.float32)
    w2, b2 = flat(params["w2"]), jnp.asarray(params["b2"], jnp.float32)
    w3, b3 = flat(params["w3"]), jnp.asarray(params["b3"], jnp.float32)
    alphas = jnp.stack([params["a1"], params["a2"], params["a3"]]).astype(jnp.float32)

    def smem():
        return pl.BlockSpec(memory_space=pltpu.MemorySpace.SMEM)

    return pl.pallas_call(
        _dc_block_kernel,
        out_shape=jax.ShapeDtypeStruct((N, C, H, W), jnp.float32),
        grid=(N,),
        in_specs=[
            pl.BlockSpec((1, C, H, W), lambda n: (n, 0, 0, 0)),   # x (per batch elem)
            smem(), smem(),                                       # w1, b1
            smem(), smem(),                                       # w2, b2
            smem(), smem(),                                       # w3, b3
            smem(),                                               # PReLU alphas
        ],
        out_specs=pl.BlockSpec((1, C, H, W), lambda n: (n, 0, 0, 0)),
        scratch_shapes=[pltpu.VMEM((2 * C, H + 2, W + 2), jnp.float32)],
        compiler_params=pltpu.CompilerParams(dimension_semantics=("parallel",)),
    )(x_nchw.astype(jnp.float32), w1, b1, w2, b2, w3, b3, alphas)


def init_dc_block_params(channel_in, key):
    """Deterministic parameter init matching the shapes in _DC_block.__init__ (OIHW)."""
    c_half = int(channel_in / 2.0)
    shapes = [
        (c_half, channel_in),                  # conv_1: (out, in) = (C/2,  C)
        (c_half, int(channel_in * 3 / 2.0)),   # conv_2: (C/2, 3C/2)
        (channel_in, channel_in * 2),          # conv_3: (C,   2C)
    ]
    params = {}
    for i, (cout, cin) in enumerate(shapes, start=1):
        key, kw, kb = jax.random.split(key, 3)
        fan_in = cin * 9
        bound = 1.0 / jnp.sqrt(fan_in)
        params[f"w{i}"] = jax.random.uniform(kw, (cout, cin, 3, 3),
                                             jnp.float32, -bound, bound)
        params[f"b{i}"] = jax.random.uniform(kb, (cout,), jnp.float32, -bound, bound)
        params[f"a{i}"] = jnp.float32(0.25)    # PReLU default init
    return params


def _reference_forward(x_nchw, params):
    """Pure-JAX reference (lax.conv) for a correctness sanity check."""
    def conv(x, w, b, a):
        y = jax.lax.conv_general_dilated(
            x, w, window_strides=(1, 1), padding="SAME",
            dimension_numbers=("NCHW", "OIHW", "NCHW"))
        y = y + b[None, :, None, None]
        return jnp.where(y > 0, y, a * y)
    x = x_nchw
    out = conv(x, params["w1"], params["b1"], params["a1"])
    conc = jnp.concatenate([x, out], axis=1)
    out = conv(conc, params["w2"], params["b2"], params["a2"])
    conc = jnp.concatenate([conc, out], axis=1)
    out = conv(conc, params["w3"], params["b3"], params["a3"])
    return out + x


if __name__ == "__main__":
    key = jax.random.PRNGKey(0)
    k_x, k_p = jax.random.split(key)

    N, C, H, W = 2, 4, 16, 16                  # channel_in = 4
    x = jax.random.normal(k_x, (N, C, H, W), jnp.float32)
    params = init_dc_block_params(C, k_p)

    fwd = jax.jit(dc_block_forward)
    out = jax.block_until_ready(fwd(x, params))
    ref = jax.block_until_ready(_reference_forward(x, params))

    assert out.shape == (N, C, H, W), out.shape
    err = float(jnp.max(jnp.abs(out - ref)))
    assert err < 1e-4, err
    print("KERNEL_OK")
</pallas_src>

<mosaic_0001>
module attributes {stable_mosaic.version = 11 : i64} {
  func.func @_dc_block_kernel(%arg0: i32, %arg1: memref<1x4x16x16xf32, #tpu.memory_space<vmem>>, %arg2: memref<72xf32, #tpu.memory_space<smem>>, %arg3: memref<2xf32, #tpu.memory_space<smem>>, %arg4: memref<108xf32, #tpu.memory_space<smem>>, %arg5: memref<2xf32, #tpu.memory_space<smem>>, %arg6: memref<288xf32, #tpu.memory_space<smem>>, %arg7: memref<4xf32, #tpu.memory_space<smem>>, %arg8: memref<3xf32, #tpu.memory_space<smem>>, %arg9: memref<1x4x16x16xf32, #tpu.memory_space<vmem>>, %arg10: memref<8x18x18xf32, #tpu.memory_space<vmem>>) attributes {dimension_semantics = [#tpu.dimension_semantics<parallel>], iteration_bounds = array<i64: 2>, scalar_prefetch = 0 : i64, scratch_operands = 1 : i64, tpu.core_type = #tpu.core_type<tc>, window_params = [{transform_indices = @transform_0, window_bounds = array<i64: 1, 4, 16, 16>}, {transform_indices = @transform_1, window_bounds = array<i64: 72>}, {transform_indices = @transform_2, window_bounds = array<i64: 2>}, {transform_indices = @transform_3, window_bounds = array<i64: 108>}, {transform_indices = @transform_4, window_bounds = array<i64: 2>}, {transform_indices = @transform_5, window_bounds = array<i64: 288>}, {transform_indices = @transform_6, window_bounds = array<i64: 4>}, {transform_indices = @transform_7, window_bounds = array<i64: 3>}, {transform_indices = @transform_8, window_bounds = array<i64: 1, 4, 16, 16>}]} {
    %cst = arith.constant 0.000000e+00 : f32
    %0 = vector.broadcast %cst : f32 to vector<8x18x18xf32>
    %c0 = arith.constant 0 : index
    %c0_0 = arith.constant 0 : index
    %c0_1 = arith.constant 0 : index
    %1 = vector.load %arg10[%c0, %c0_0, %c0_1] : memref<8x18x18xf32, #tpu.memory_space<vmem>>, vector<8x18x18xf32>
    tpu.vector_store %arg10[%c0, %c0_0, %c0_1], %0 {strides = array<i32>} : memref<8x18x18xf32, #tpu.memory_space<vmem>>, vector<8x18x18xf32>,
    %c0_2 = arith.constant 0 : index
    %c0_3 = arith.constant 0 : index
    %c0_4 = arith.constant 0 : index
    %c0_5 = arith.constant 0 : index
    %2 = vector.load %arg1[%c0_2, %c0_3, %c0_4, %c0_5] : memref<1x4x16x16xf32, #tpu.memory_space<vmem>>, vector<1x4x16x16xf32>
    %3 = vector.shape_cast %2 : vector<1x4x16x16xf32> to vector<4x16x16xf32>
    %c0_6 = arith.constant 0 : index
    %c1 = arith.constant 1 : index
    %c1_7 = arith.constant 1 : index
    %4 = vector.load %arg10[%c0_6, %c1, %c1_7] : memref<8x18x18xf32, #tpu.memory_space<vmem>>, vector<4x16x16xf32>
    tpu.vector_store %arg10[%c0_6, %c1, %c1_7], %3 {strides = array<i32>} : memref<8x18x18xf32, #tpu.memory_space<vmem>>, vector<4x16x16xf32>,
    %c0_8 = arith.constant 0 : index
    %5 = memref.load %arg8[%c0_8] : memref<3xf32, #tpu.memory_space<smem>>
    %c0_9 = arith.constant 0 : index
    %6 = memref.load %arg3[%c0_9] : memref<2xf32, #tpu.memory_space<smem>>
    %7 = vector.broadcast %6 : f32 to vector<16x16xf32>
    %c1_10 = arith.constant 1 : index
    %8 = memref.load %arg3[%c1_10] : memref<2xf32, #tpu.memory_space<smem>>
    %9 = vector.broadcast %8 : f32 to vector<16x16xf32>
    %c0_11 = arith.constant 0 : index
    %c0_12 = arith.constant 0 : index
    %c0_13 = arith.constant 0 : index
    %10 = vector.load %arg10[%c0_11, %c0_12, %c0_13] : memref<8x18x18xf32, #tpu.memory_space<vmem>>, vector<1x16x16xf32>
    %11 = vector.shape_cast %10 : vector<1x16x16xf32> to vector<16x16xf32>
    %c0_14 = arith.constant 0 : index
    %12 = memref.load %arg2[%c0_14] : memref<72xf32, #tpu.memory_space<smem>>
    %13 = vector.broadcast %12 : f32 to vector<16x16xf32>
    %14 = arith.mulf %13, %11 : vector<16x16xf32>
    %15 = arith.addf %7, %14 : vector<16x16xf32>
    %c36 = arith.constant 36 : index
    %16 = memref.load %arg2[%c36] : memref<72xf32, #tpu.memory_space<smem>>
    %17 = vector.broadcast %16 : f32 to vector<16x16xf32>
    %18 = arith.mulf %17, %11 : vector<16x16xf32>
    %19 = arith.addf %9, %18 : vector<16x16xf32>
    %c0_15 = arith.constant 0 : index
    %c0_16 = arith.constant 0 : index
    %c1_17 = arith.constant 1 : index
    %20 = vector.load %arg10[%c0_15, %c0_16, %c1_17] : memref<8x18x18xf32, #tpu.memory_space<vmem>>, vector<1x16x16xf32>
    %21 = vector.shape_cast %20 : vector<1x16x16xf32> to vector<16x16xf32>
    %c1_18 = arith.constant 1 : index
    %22 = memref.load %arg2[%c1_18] : memref<72xf32, #tpu.memory_space<smem>>
    %23 = vector.broadcast %22 : f32 to vector<16x16xf32>
    %24 = arith.mulf %23, %21 : vector<16x16xf32>
    %25 = arith.addf %15, %24 : vector<16x16xf32>
    %c37 = arith.constant 37 : index
    %26 = memref.load %arg2[%c37] : memref<72xf32, #tpu.memory_space<smem>>
    %27 = vector.broadcast %26 : f32 to vector<16x16xf32>
    %28 = arith.mulf %27, %21 : vector<16x16xf32>
    %29 = arith.addf %19, %28 : vector<16x16xf32>
    %c0_19 = arith.constant 0 : index
    %c0_20 = arith.constant 0 : index
    %c2 = arith.constant 2 : index
    %30 = vector.load %arg10[%c0_19, %c0_20, %c2] : memref<8x18x18xf32, #tpu.memory_space<vmem>>, vector<1x16x16xf32>
    %31 = vector.shape_cast %30 : vector<1x16x16xf32> to vector<16x16xf32>
    %c2_21 = arith.constant 2 : index
    %32 = memref.load %arg2[%c2_21] : memref<72xf32, #tpu.memory_space<smem>>
    %33 = vector.broadcast %32 : f32 to vector<16x16xf32>
    %34 = arith.mulf %33, %31 : vector<16x16xf32>
    %35 = arith.addf %25, %34 : vector<16x16xf32>
    %c38 = arith.constant 38 : index
    %36 = memref.load %arg2[%c38] : memref<72xf32, #tpu.memory_space<smem>>
    %37 = vector.broadcast %36 : f32 to vector<16x16xf32>
    %38 = arith.mulf %37, %31 : vector<16x16xf32>
    %39 = arith.addf %29, %38 : vector<16x16xf32>
    %c0_22 = arith.constant 0 : index
    %c1_23 = arith.constant 1 : index
    %c0_24 = arith.constant 0 : index
    %40 = vector.load %arg10[%c0_22, %c1_23, %c0_24] : memref<8x18x18xf32, #tpu.memory_space<vmem>>, vector<1x16x16xf32>
    %41 = vector.shape_cast %40 : vector<1x16x16xf32> to vector<16x16xf32>
    %c3 = arith.constant 3 : index
    %42 = memref.load %arg2[%c3] : memref<72xf32, #tpu.memory_space<smem>>
    %43 = vector.broadcast %42 : f32 to vector<16x16xf32>
    %44 = arith.mulf %43, %41 : vector<16x16xf32>
    %45 = arith.addf %35, %44 : vector<16x16xf32>
    %c39 = arith.constant 39 : index
    %46 = memref.load %arg2[%c39] : memref<72xf32, #tpu.memory_space<smem>>
    %47 = vector.broadcast %46 : f32 to vector<16x16xf32>
    %48 = arith.mulf %47, %41 : vector<16x16xf32>
    %49 = arith.addf %39, %48 : vector<16x16xf32>
    %c0_25 = arith.constant 0 : index
    %c1_26 = arith.constant 1 : index
    %c1_27 = arith.constant 1 : index
    %50 = vector.load %arg10[%c0_25, %c1_26, %c1_27] : memref<8x18x18xf32, #tpu.memory_space<vmem>>, vector<1x16x16xf32>
    %51 = vector.shape_cast %50 : vector<1x16x16xf32> to vector<16x16xf32>
    %c4 = arith.constant 4 : index
    %52 = memref.load %arg2[%c4] : memref<72xf32, #tpu.memory_space<smem>>
    %53 = vector.broadcast %52 : f32 to vector<16x16xf32>
    %54 = arith.mulf %53, %51 : vector<16x16xf32>
    %55 = arith.addf %45, %54 : vector<16x16xf32>
    %c40 = arith.constant 40 : index
    %56 = memref.load %arg2[%c40] : memref<72xf32, #tpu.memory_space<smem>>
    %57 = vector.broadcast %56 : f32 to vector<16x16xf32>
    %58 = arith.mulf %57, %51 : vector<16x16xf32>
    %59 = arith.addf %49, %58 : vector<16x16xf32>
    %c0_28 = arith.constant 0 : index
    %c1_29 = arith.constant 1 : index
    %c2_30 = arith.constant 2 : index
    %60 = vector.load %arg10[%c0_28, %c1_29, %c2_30] : memref<8x18x18xf32, #tpu.memory_space<vmem>>, vector<1x16x16xf32>
    %61 = vector.shape_cast %60 : vector<1x16x16xf32> to vector<16x16xf32>
    %c5 = arith.constant 5 : index
    %62 = memref.load %arg2[%c5] : memref<72xf32, #tpu.memory_space<smem>>
    %63 = vector.broadcast %62 : f32 to vector<16x16xf32>
    %64 = arith.mulf %63, %61 : vector<16x16xf32>
    %65 = arith.addf %55, %64 : vector<16x16xf32>
    %c41 = arith.constant 41 : index
    %66 = memref.load %arg2[%c41] : memref<72xf32, #tpu.memory_space<smem>>
    %67 = vector.broadcast %66 : f32 to vector<16x16xf32>
    %68 = arith.mulf %67, %61 : vector<16x16xf32>
    %69 = arith.addf %59, %68 : vector<16x16xf32>
    %c0_31 = arith.constant 0 : index
    %c2_32 = arith.constant 2 : index
    %c0_33 = arith.constant 0 : index
    %70 = vector.load %arg10[%c0_31, %c2_32, %c0_33] : memref<8x18x18xf32, #tpu.memory_space<vmem>>, vector<1x16x16xf32>
    %71 = vector.shape_cast %70 : vector<1x16x16xf32> to vector<16x16xf32>
    %c6 = arith.constant 6 : index
    %72 = memref.load %arg2[%c6] : memref<72xf32, #tpu.memory_space<smem>>
    %73 = vector.broadcast %72 : f32 to vector<16x16xf32>
    %74 = arith.mulf %73, %71 : vector<16x16xf32>
    %75 = arith.addf %65, %74 : vector<16x16xf32>
    %c42 = arith.constant 42 : index
    %76 = memref.load %arg2[%c42] : memref<72xf32, #tpu.memory_space<smem>>
    %77 = vector.broadcast %76 : f32 to vector<16x16xf32>
    %78 = arith.mulf %77, %71 : vector<16x16xf32>
    %79 = arith.addf %69, %78 : vector<16x16xf32>
    %c0_34 = arith.constant 0 : index
    %c2_35 = arith.constant 2 : index
    %c1_36 = arith.constant 1 : index
    %80 = vector.load %arg10[%c0_34, %c2_35, %c1_36] : memref<8x18x18xf32, #tpu.memory_space<vmem>>, vector<1x16x16xf32>
    %81 = vector.shape_cast %80 : vector<1x16x16xf32> to vector<16x16xf32>
    %c7 = arith.constant 7 : index
    %82 = memref.load %arg2[%c7] : memref<72xf32, #tpu.memory_space<smem>>
    %83 = vector.broadcast %82 : f32 to vector<16x16xf32>
    %84 = arith.mulf %83, %81 : vector<16x16xf32>
    %85 = arith.addf %75, %84 : vector<16x16xf32>
    %c43 = arith.constant 43 : index
    %86 = memref.load %arg2[%c43] : memref<72xf32, #tpu.memory_space<smem>>
    %87 = vector.broadcast %86 : f32 to vector<16x16xf32>
    %88 = arith.mulf %87, %81 : vector<16x16xf32>
    %89 = arith.addf %79, %88 : vector<16x16xf32>
    %c0_37 = arith.constant 0 : index
    %c2_38 = arith.constant 2 : index
    %c2_39 = arith.constant 2 : index
    %90 = vector.load %arg10[%c0_37, %c2_38, %c2_39] : memref<8x18x18xf32, #tpu.memory_space<vmem>>, vector<1x16x16xf32>
    %91 = vector.shape_cast %90 : vector<1x16x16xf32> to vector<16x16xf32>
    %c8 = arith.constant 8 : index
    %92 = memref.load %arg2[%c8] : memref<72xf32, #tpu.memory_space<smem>>
    %93 = vector.broadcast %92 : f32 to vector<16x16xf32>
    %94 = arith.mulf %93, %91 : vector<16x16xf32>
    %95 = arith.addf %85, %94 : vector<16x16xf32>
    %c44 = arith.constant 44 : index
    %96 = memref.load %arg2[%c44] : memref<72xf32, #tpu.memory_space<smem>>
    %97 = vector.broadcast %96 : f32 to vector<16x16xf32>
    %98 = arith.mulf %97, %91 : vector<16x16xf32>
    %99 = arith.addf %89, %98 : vector<16x16xf32>
    %c1_40 = arith.constant 1 : index
    %c0_41 = arith.constant 0 : index
    %c0_42 = arith.constant 0 : index
    %100 = vector.load %arg10[%c1_40, %c0_41, %c0_42] : memref<8x18x18xf32, #tpu.memory_space<vmem>>, vector<1x16x16xf32>
    %101 = vector.shape_cast %100 : vector<1x16x16xf32> to vector<16x16xf32>
    %c9 = arith.constant 9 : index
    %102 = memref.load %arg2[%c9] : memref<72xf32, #tpu.memory_space<smem>>
    %103 = vector.broadcast %102 : f32 to vector<16x16xf32>
    %104 = arith.mulf %103, %101 : vector<16x16xf32>
    %105 = arith.addf %95, %104 : vector<16x16xf32>
    %c45 = arith.constant 45 : index
    %106 = memref.load %arg2[%c45] : memref<72xf32, #tpu.memory_space<smem>>
    %107 = vector.broadcast %106 : f32 to vector<16x16xf32>
    %108 = arith.mulf %107, %101 : vector<16x16xf32>
    %109 = arith.addf %99, %108 : vector<16x16xf32>
    %c1_43 = arith.constant 1 : index
    %c0_44 = arith.constant 0 : index
    %c1_45 = arith.constant 1 : index
    %110 = vector.load %arg10[%c1_43, %c0_44, %c1_45] : memref<8x18x18xf32, #tpu.memory_space<vmem>>, vector<1x16x16xf32>
    %111 = vector.shape_cast %110 : vector<1x16x16xf32> to vector<16x16xf32>
    %c10 = arith.constant 10 : index
    %112 = memref.load %arg2[%c10] : memref<72xf32, #tpu.memory_space<smem>>
    %113 = vector.broadcast %112 : f32 to vector<16x16xf32>
    %114 = arith.mulf %113, %111 : vector<16x16xf32>
    %115 = arith.addf %105, %114 : vector<16x16xf32>
    %c46 = arith.constant 46 : index
    %116 = memref.load %arg2[%c46] : memref<72xf32, #tpu.memory_space<smem>>
    %117 = vector.broadcast %116 : f32 to vector<16x16xf32>
    %118 = arith.mulf %117, %111 : vector<16x16xf32>
    %119 = arith.addf %109, %118 : vector<16x16xf32>
    %c1_46 = arith.constant 1 : index
    %c0_47 = arith.constant 0 : index
    %c2_48 = arith.constant 2 : index
    %120 = vector.load %arg10[%c1_46, %c0_47, %c2_48] : memref<8x18x18xf32, #tpu.memory_space<vmem>>, vector<1x16x16xf32>
    %121 = vector.shape_cast %120 : vector<1x16x16xf32> to vector<16x16xf32>
    %c11 = arith.constant 11 : index
    %122 = memref.load %arg2[%c11] : memref<72xf32, #tpu.memory_space<smem>>
    %123 = vector.broadcast %122 : f32 to vector<16x16xf32>
    %124 = arith.mulf %123, %121 : vector<16x16xf32>
    %125 = arith.addf %115, %124 : vector<16x16xf32>
    %c47 = arith.constant 47 : index
    %126 = memref.load %arg2[%c47] : memref<72xf32, #tpu.memory_space<smem>>
    %127 = vector.broadcast %126 : f32 to vector<16x16xf32>
    %128 = arith.mulf %127, %121 : vector<16x16xf32>
    %129 = arith.addf %119, %128 : vector<16x16xf32>
    %c1_49 = arith.constant 1 : index
    %c1_50 = arith.constant 1 : index
    %c0_51 = arith.constant 0 : index
    %130 = vector.load %arg10[%c1_49, %c1_50, %c0_51] : memref<8x18x18xf32, #tpu.memory_space<vmem>>, vector<1x16x16xf32>
    %131 = vector.shape_cast %130 : vector<1x16x16xf32> to vector<16x16xf32>
    %c12 = arith.constant 12 : index
    %132 = memref.load %arg2[%c12] : memref<72xf32, #tpu.memory_space<smem>>
    %133 = vector.broadcast %132 : f32 to vector<16x16xf32>
    %134 = arith.mulf %133, %131 : vector<16x16xf32>
    %135 = arith.addf %125, %134 : vector<16x16xf32>
    %c48 = arith.constant 48 : index
    %136 = memref.load %arg2[%c48] : memref<72xf32, #tpu.memory_space<smem>>
    %137 = vector.broadcast %136 : f32 to vector<16x16xf32>
    %138 = arith.mulf %137, %131 : vector<16x16xf32>
    %139 = arith.addf %129, %138 : vector<16x16xf32>
    %c1_52 = arith.constant 1 : index
    %c1_53 = arith.constant 1 : index
    %c1_54 = arith.constant 1 : index
    %140 = vector.load %arg10[%c1_52, %c1_53, %c1_54] : memref<8x18x18xf32, #tpu.memory_space<vmem>>, vector<1x16x16xf32>
    %141 = vector.shape_cast %140 : vector<1x16x16xf32> to vector<16x16xf32>
    %c13 = arith.constant 13 : index
    %142 = memref.load %arg2[%c13] : memref<72xf32, #tpu.memory_space<smem>>
    %143 = vector.broadcast %142 : f32 to vector<16x16xf32>
    %144 = arith.mulf %143, %141 : vector<16x16xf32>
    %145 = arith.addf %135, %144 : vector<16x16xf32>
    %c49 = arith.constant 49 : index
    %146 = memref.load %arg2[%c49] : memref<72xf32, #tpu.memory_space<smem>>
    %147 = vector.broadcast %146 : f32 to vector<16x16xf32>
    %148 = arith.mulf %147, %141 : vector<16x16xf32>
    %149 = arith.addf %139, %148 : vector<16x16xf32>
    %c1_55 = arith.constant 1 : index
    %c1_56 = arith.constant 1 : index
    %c2_57 = arith.constant 2 : index
    %150 = vector.load %arg10[%c1_55, %c1_56, %c2_57] : memref<8x18x18xf32, #tpu.memory_space<vmem>>, vector<1x16x16xf32>
    %151 = vector.shape_cast %150 : vector<1x16x16xf32> to vector<16x16xf32>
    %c14 = arith.constant 14 : index
    %152 = memref.load %arg2[%c14] : memref<72xf32, #tpu.memory_space<smem>>
    %153 = vector.broadcast %152 : f32 to vector<16x16xf32>
    %154 = arith.mulf %153, %151 : vector<16x16xf32>
    %155 = arith.addf %145, %154 : vector<16x16xf32>
    %c50 = arith.constant 50 : index
    %156 = memref.load %arg2[%c50] : memref<72xf32, #tpu.memory_space<smem>>
    %157 = vector.broadcast %156 : f32 to vector<16x16xf32>
    %158 = arith.mulf %157, %151 : vector<16x16xf32>
    %159 = arith.addf %149, %158 : vector<16x16xf32>
    %c1_58 = arith.constant 1 : index
    %c2_59 = arith.constant 2 : index
    %c0_60 = arith.constant 0 : index
    %160 = vector.load %arg10[%c1_58, %c2_59, %c0_60] : memref<8x18x18xf32, #tpu.memory_space<vmem>>, vector<1x16x16xf32>
    %161 = vector.shape_cast %160 : vector<1x16x16xf32> to vector<16x16xf32>
    %c15 = arith.constant 15 : index
    %162 = memref.load %arg2[%c15] : memref<72xf32, #tpu.memory_space<smem>>
    %163 = vector.broadcast %162 : f32 to vector<16x16xf32>
    %164 = arith.mulf %163, %161 : vector<16x16xf32>
    %165 = arith.addf %155, %164 : vector<16x16xf32>
    %c51 = arith.constant 51 : index
    %166 = memref.load %arg2[%c51] : memref<72xf32, #tpu.memory_space<smem>>
    %167 = vector.broadcast %166 : f32 to vector<16x16xf32>
    %168 = arith.mulf %167, %161 : vector<16x16xf32>
    %169 = arith.addf %159, %168 : vector<16x16xf32>
    %c1_61 = arith.constant 1 : index
    %c2_62 = arith.constant 2 : index
    %c1_63 = arith.constant 1 : index
    %170 = vector.load %arg10[%c1_61, %c2_62, %c1_63] : memref<8x18x18xf32, #tpu.memory_space<vmem>>, vector<1x16x16xf32>
    %171 = vector.shape_cast %170 : vector<1x16x16xf32> to vector<16x16xf32>
    %c16 = arith.constant 16 : index
    %172 = memref.load %arg2[%c16] : memref<72xf32, #tpu.memory_space<smem>>
    %173 = vector.broadcast %172 : f32 to vector<16x16xf32>
    %174 = arith.mulf %173, %171 : vector<16x16xf32>
    %175 = arith.addf %165, %174 : vector<16x16xf32>
    %c52 = arith.constant 52 : index
    %176 = memref.load %arg2[%c52] : memref<72xf32, #tpu.memory_space<smem>>
    %177 = vector.broadcast %176 : f32 to vector<16x16xf32>
    %178 = arith.mulf %177, %171 : vector<16x16xf32>
    %179 = arith.addf %169, %178 : vector<16x16xf32>
    %c1_64 = arith.constant 1 : index
    %c2_65 = arith.constant 2 : index
    %c2_66 = arith.constant 2 : index
    %180 = vector.load %arg10[%c1_64, %c2_65, %c2_66] : memref<8x18x18xf32, #tpu.memory_space<vmem>>, vector<1x16x16xf32>
    %181 = vector.shape_cast %180 : vector<1x16x16xf32> to vector<16x16xf32>
    %c17 = arith.constant 17 : index
    %182 = memref.load %arg2[%c17] : memref<72xf32, #tpu.memory_space<smem>>
    %183 = vector.broadcast %182 : f32 to vector<16x16xf32>
    %184 = arith.mulf %183, %181 : vector<16x16xf32>
    %185 = arith.addf %175, %184 : vector<16x16xf32>
    %c53 = arith.constant 53 : index
    %186 = memref.load %arg2[%c53] : memref<72xf32, #tpu.memory_space<smem>>
    %187 = vector.broadcast %186 : f32 to vector<16x16xf32>
    %188 = arith.mulf %187, %181 : vector<16x16xf32>
    %189 = arith.addf %179, %188 : vector<16x16xf32>
    %c2_67 = arith.constant 2 : index
    %c0_68 = arith.constant 0 : index
    %c0_69 = arith.constant 0 : index
    %190 = vector.load %arg10[%c2_67, %c0_68, %c0_69] : memref<8x18x18xf32, #tpu.memory_space<vmem>>, vector<1x16x16xf32>
    %191 = vector.shape_cast %190 : vector<1x16x16xf32> to vector<16x16xf32>
    %c18 = arith.constant 18 : index
    %192 = memref.load %arg2[%c18] : memref<72xf32, #tpu.memory_space<smem>>
    %193 = vector.broadcast %192 : f32 to vector<16x16xf32>
    %194 = arith.mulf %193, %191 : vector<16x16xf32>
    %195 = arith.addf %185, %194 : vector<16x16xf32>
    %c54 = arith.constant 54 : index
    %196 = memref.load %arg2[%c54] : memref<72xf32, #tpu.memory_space<smem>>
    %197 = vector.broadcast %196 : f32 to vector<16x16xf32>
    %198 = arith.mulf %197, %191 : vector<16x16xf32>
    %199 = arith.addf %189, %198 : vector<16x16xf32>
    %c2_70 = arith.constant 2 : index
    %c0_71 = arith.constant 0 : index
    %c1_72 = arith.constant 1 : index
    %200 = vector.load %arg10[%c2_70, %c0_71, %c1_72] : memref<8x18x18xf32, #tpu.memory_space<vmem>>, vector<1x16x16xf32>
    %201 = vector.shape_cast %200 : vector<1x16x16xf32> to vector<16x16xf32>
    %c19 = arith.constant 19 : index
    %202 = memref.load %arg2[%c19] : memref<72xf32, #tpu.memory_space<smem>>
    %203 = vector.broadcast %202 : f32 to vector<16x16xf32>
    %204 = arith.mulf %203, %201 : vector<16x16xf32>
    %205 = arith.addf %195, %204 : vector<16x16xf32>
    %c55 = arith.constant 55 : index
    %206 = memref.load %arg2[%c55] : memref<72xf32, #tpu.memory_space<smem>>
    %207 = vector.broadcast %206 : f32 to vector<16x16xf32>
    %208 = arith.mulf %207, %201 : vector<16x16xf32>
    %209 = arith.addf %199, %208 : vector<16x16xf32>
    %c2_73 = arith.constant 2 : index
    %c0_74 = arith.constant 0 : index
    %c2_75 = arith.constant 2 : index
    %210 = vector.load %arg10[%c2_73, %c0_74, %c2_75] : memref<8x18x18xf32, #tpu.memory_space<vmem>>, vector<1x16x16xf32>
    %211 = vector.shape_cast %210 : vector<1x16x16xf32> to vector<16x16xf32>
    %c20 = arith.constant 20 : index
    %212 = memref.load %arg2[%c20] : memref<72xf32, #tpu.memory_space<smem>>
    %213 = vector.broadcast %212 : f32 to vector<16x16xf32>
    %214 = arith.mulf %213, %211 : vector<16x16xf32>
    %215 = arith.addf %205, %214 : vector<16x16xf32>
    %c56 = arith.constant 56 : index
    %216 = memref.load %arg2[%c56] : memref<72xf32, #tpu.memory_space<smem>>
    %217 = vector.broadcast %216 : f32 to vector<16x16xf32>
    %218 = arith.mulf %217, %211 : vector<16x16xf32>
    %219 = arith.addf %209, %218 : vector<16x16xf32>
    %c2_76 = arith.constant 2 : index
    %c1_77 = arith.constant 1 : index
    %c0_78 = arith.constant 0 : index
    %220 = vector.load %arg10[%c2_76, %c1_77, %c0_78] : memref<8x18x18xf32, #tpu.memory_space<vmem>>, vector<1x16x16xf32>
    %221 = vector.shape_cast %220 : vector<1x16x16xf32> to vector<16x16xf32>
    %c21 = arith.constant 21 : index
    %222 = memref.load %arg2[%c21] : memref<72xf32, #tpu.memory_space<smem>>
    %223 = vector.broadcast %222 : f32 to vector<16x16xf32>
    %224 = arith.mulf %223, %221 : vector<16x16xf32>
    %225 = arith.addf %215, %224 : vector<16x16xf32>
    %c57 = arith.constant 57 : index
    %226 = memref.load %arg2[%c57] : memref<72xf32, #tpu.memory_space<smem>>
    %227 = vector.broadcast %226 : f32 to vector<16x16xf32>
    %228 = arith.mulf %227, %221 : vector<16x16xf32>
    %229 = arith.addf %219, %228 : vector<16x16xf32>
    %c2_79 = arith.constant 2 : index
    %c1_80 = arith.constant 1 : index
    %c1_81 = arith.constant 1 : index
    %230 = vector.load %arg10[%c2_79, %c1_80, %c1_81] : memref<8x18x18xf32, #tpu.memory_space<vmem>>, vector<1x16x16xf32>
    %231 = vector.shape_cast %230 : vector<1x16x16xf32> to vector<16x16xf32>
    %c22 = arith.constant 22 : index
    %232 = memref.load %arg2[%c22] : memref<72xf32, #tpu.memory_space<smem>>
    %233 = vector.broadcast %232 : f32 to vector<16x16xf32>
    %234 = arith.mulf %233, %231 : vector<16x16xf32>
    %235 = arith.addf %225, %234 : vector<16x16xf32>
    %c58 = arith.constant 58 : index
    %236 = memref.load %arg2[%c58] : memref<72xf32, #tpu.memory_space<smem>>
    %237 = vector.broadcast %236 : f32 to vector<16x16xf32>
    %238 = arith.mulf %237, %231 : vector<16x16xf32>
    %239 = arith.addf %229, %238 : vector<16x16xf32>
    %c2_82 = arith.constant 2 : index
    %c1_83 = arith.constant 1 : index
    %c2_84 = arith.constant 2 : index
    %240 = vector.load %arg10[%c2_82, %c1_83, %c2_84] : memref<8x18x18xf32, #tpu.memory_space<vmem>>, vector<1x16x16xf32>
    %241 = vector.shape_cast %240 : vector<1x16x16xf32> to vector<16x16xf32>
    %c23 = arith.constant 23 : index
    %242 = memref.load %arg2[%c23] : memref<72xf32, #tpu.memory_space<smem>>
    %243 = vector.broadcast %242 : f32 to vector<16x16xf32>
    %244 = arith.mulf %243, %241 : vector<16x16xf32>
    %245 = arith.addf %235, %244 : vector<16x16xf32>
    %c59 = arith.constant 59 : index
    %246 = memref.load %arg2[%c59] : memref<72xf32, #tpu.memory_space<smem>>
    %247 = vector.broadcast %246 : f32 to vector<16x16xf32>
    %248 = arith.mulf %247, %241 : vector<16x16xf32>
    %249 = arith.addf %239, %248 : vector<16x16xf32>
    %c2_85 = arith.constant 2 : index
    %c2_86 = arith.constant 2 : index
    %c0_87 = arith.constant 0 : index
    %250 = vector.load %arg10[%c2_85, %c2_86, %c0_87] : memref<8x18x18xf32, #tpu.memory_space<vmem>>, vector<1x16x16xf32>
    %251 = vector.shape_cast %250 : vector<1x16x16xf32> to vector<16x16xf32>
    %c24 = arith.constant 24 : index
    %252 = memref.load %arg2[%c24] : memref<72xf32, #tpu.memory_space<smem>>
    %253 = vector.broadcast %252 : f32 to vector<16x16xf32>
    %254 = arith.mulf %253, %251 : vector<16x16xf32>
    %255 = arith.addf %245, %254 : vector<16x16xf32>
    %c60 = arith.constant 60 : index
    %256 = memref.load %arg2[%c60] : memref<72xf32, #tpu.memory_space<smem>>
    %257 = vector.broadcast %256 : f32 to vector<16x16xf32>
    %258 = arith.mulf %257, %251 : vector<16x16xf32>
    %259 = arith.addf %249, %258 : vector<16x16xf32>
    %c2_88 = arith.constant 2 : index
    %c2_89 = arith.constant 2 : index
    %c1_90 = arith.constant 1 : index
    %260 = vector.load %arg10[%c2_88, %c2_89, %c1_90] : memref<8x18x18xf32, #tpu.memory_space<vmem>>, vector<1x16x16xf32>
    %261 = vector.shape_cast %260 : vector<1x16x16xf32> to vector<16x16xf32>
    %c25 = arith.constant 25 : index
    %262 = memref.load %arg2[%c25] : memref<72xf32, #tpu.memory_space<smem>>
    %263 = vector.broadcast %262 : f32 to vector<16x16xf32>
    %264 = arith.mulf %263, %261 : vector<16x16xf32>
    %265 = arith.addf %255, %264 : vector<16x16xf32>
    %c61 = arith.constant 61 : index
    %266 = memref.load %arg2[%c61] : memref<72xf32, #tpu.memory_space<smem>>
    %267 = vector.broadcast %266 : f32 to vector<16x16xf32>
    %268 = arith.mulf %267, %261 : vector<16x16xf32>
    %269 = arith.addf %259, %268 : vector<16x16xf32>
    %c2_91 = arith.constant 2 : index
    %c2_92 = arith.constant 2 : index
    %c2_93 = arith.constant 2 : index
    %270 = vector.load %arg10[%c2_91, %c2_92, %c2_93] : memref<8x18x18xf32, #tpu.memory_space<vmem>>, vector<1x16x16xf32>
    %271 = vector.shape_cast %270 : vector<1x16x16xf32> to vector<16x16xf32>
    %c26 = arith.constant 26 : index
    %272 = memref.load %arg2[%c26] : memref<72xf32, #tpu.memory_space<smem>>
    %273 = vector.broadcast %272 : f32 to vector<16x16xf32>
    %274 = arith.mulf %273, %271 : vector<16x16xf32>
    %275 = arith.addf %265, %274 : vector<16x16xf32>
    %c62 = arith.constant 62 : index
    %276 = memref.load %arg2[%c62] : memref<72xf32, #tpu.memory_space<smem>>
    %277 = vector.broadcast %276 : f32 to vector<16x16xf32>
    %278 = arith.mulf %277, %271 : vector<16x16xf32>
    %279 = arith.addf %269, %278 : vector<16x16xf32>
    %c3_94 = arith.constant 3 : index
    %c0_95 = arith.constant 0 : index
    %c0_96 = arith.constant 0 : index
    %280 = vector.load %arg10[%c3_94, %c0_95, %c0_96] : memref<8x18x18xf32, #tpu.memory_space<vmem>>, vector<1x16x16xf32>
    %281 = vector.shape_cast %280 : vector<1x16x16xf32> to vector<16x16xf32>
    %c27 = arith.constant 27 : index
    %282 = memref.load %arg2[%c27] : memref<72xf32, #tpu.memory_space<smem>>
    %283 = vector.broadcast %282 : f32 to vector<16x16xf32>
    %284 = arith.mulf %283, %281 : vector<16x16xf32>
    %285 = arith.addf %275, %284 : vector<16x16xf32>
    %c63 = arith.constant 63 : index
    %286 = memref.load %arg2[%c63] : memref<72xf32, #tpu.memory_space<smem>>
    %287 = vector.broadcast %286 : f32 to vector<16x16xf32>
    %288 = arith.mulf %287, %281 : vector<16x16xf32>
    %289 = arith.addf %279, %288 : vector<16x16xf32>
    %c3_97 = arith.constant 3 : index
    %c0_98 = arith.constant 0 : index
    %c1_99 = arith.constant 1 : index
    %290 = vector.load %arg10[%c3_97, %c0_98, %c1_99] : memref<8x18x18xf32, #tpu.memory_space<vmem>>, vector<1x16x16xf32>
    %291 = vector.shape_cast %290 : vector<1x16x16xf32> to vector<16x16xf32>
    %c28 = arith.constant 28 : index
    %292 = memref.load %arg2[%c28] : memref<72xf32, #tpu.memory_space<smem>>
    %293 = vector.broadcast %292 : f32 to vector<16x16xf32>
    %294 = arith.mulf %293, %291 : vector<16x16xf32>
    %295 = arith.addf %285, %294 : vector<16x16xf32>
    %c64 = arith.constant 64 : index
    %296 = memref.load %arg2[%c64] : memref<72xf32, #tpu.memory_space<smem>>
    %297 = vector.broadcast %296 : f32 to vector<16x16xf32>
    %298 = arith.mulf %297, %291 : vector<16x16xf32>
    %299 = arith.addf %289, %298 : vector<16x16xf32>
    %c3_100 = arith.constant 3 : index
    %c0_101 = arith.constant 0 : index
    %c2_102 = arith.constant 2 : index
    %300 = vector.load %arg10[%c3_100, %c0_101, %c2_102] : memref<8x18x18xf32, #tpu.memory_space<vmem>>, vector<1x16x16xf32>
    %301 = vector.shape_cast %300 : vector<1x16x16xf32> to vector<16x16xf32>
    %c29 = arith.constant 29 : index
    %302 = memref.load %arg2[%c29] : memref<72xf32, #tpu.memory_space<smem>>
    %303 = vector.broadcast %302 : f32 to vector<16x16xf32>
    %304 = arith.mulf %303, %301 : vector<16x16xf32>
    %305 = arith.addf %295, %304 : vector<16x16xf32>
    %c65 = arith.constant 65 : index
    %306 = memref.load %arg2[%c65] : memref<72xf32, #tpu.memory_space<smem>>
    %307 = vector.broadcast %306 : f32 to vector<16x16xf32>
    %308 = arith.mulf %307, %301 : vector<16x16xf32>
    %309 = arith.addf %299, %308 : vector<16x16xf32>
    %c3_103 = arith.constant 3 : index
    %c1_104 = arith.constant 1 : index
    %c0_105 = arith.constant 0 : index
    %310 = vector.load %arg10[%c3_103, %c1_104, %c0_105] : memref<8x18x18xf32, #tpu.memory_space<vmem>>, vector<1x16x16xf32>
    %311 = vector.shape_cast %310 : vector<1x16x16xf32> to vector<16x16xf32>
    %c30 = arith.constant 30 : index
    %312 = memref.load %arg2[%c30] : memref<72xf32, #tpu.memory_space<smem>>
    %313 = vector.broadcast %312 : f32 to vector<16x16xf32>
    %314 = arith.mulf %313, %311 : vector<16x16xf32>
    %315 = arith.addf %305, %314 : vector<16x16xf32>
    %c66 = arith.constant 66 : index
    %316 = memref.load %arg2[%c66] : memref<72xf32, #tpu.memory_space<smem>>
    %317 = vector.broadcast %316 : f32 to vector<16x16xf32>
    %318 = arith.mulf %317, %311 : vector<16x16xf32>
    %319 = arith.addf %309, %318 : vector<16x16xf32>
    %c3_106 = arith.constant 3 : index
    %c1_107 = arith.constant 1 : index
    %c1_108 = arith.constant 1 : index
    %320 = vector.load %arg10[%c3_106, %c1_107, %c1_108] : memref<8x18x18xf32, #tpu.memory_space<vmem>>, vector<1x16x16xf32>
    %321 = vector.shape_cast %320 : vector<1x16x16xf32> to vector<16x16xf32>
    %c31 = arith.constant 31 : index
    %322 = memref.load %arg2[%c31] : memref<72xf32, #tpu.memory_space<smem>>
    %323 = vector.broadcast %322 : f32 to vector<16x16xf32>
    %324 = arith.mulf %323, %321 : vector<16x16xf32>
    %325 = arith.addf %315, %324 : vector<16x16xf32>
    %c67 = arith.constant 67 : index
    %326 = memref.load %arg2[%c67] : memref<72xf32, #tpu.memory_space<smem>>
    %327 = vector.broadcast %326 : f32 to vector<16x16xf32>
    %328 = arith.mulf %327, %321 : vector<16x16xf32>
    %329 = arith.addf %319, %328 : vector<16x16xf32>
    %c3_109 = arith.constant 3 : index
    %c1_110 = arith.constant 1 : index
    %c2_111 = arith.constant 2 : index
    %330 = vector.load %arg10[%c3_109, %c1_110, %c2_111] : memref<8x18x18xf32, #tpu.memory_space<vmem>>, vector<1x16x16xf32>
    %331 = vector.shape_cast %330 : vector<1x16x16xf32> to vector<16x16xf32>
    %c32 = arith.constant 32 : index
    %332 = memref.load %arg2[%c32] : memref<72xf32, #tpu.memory_space<smem>>
    %333 = vector.broadcast %332 : f32 to vector<16x16xf32>
    %334 = arith.mulf %333, %331 : vector<16x16xf32>
    %335 = arith.addf %325, %334 : vector<16x16xf32>
    %c68 = arith.constant 68 : index
    %336 = memref.load %arg2[%c68] : memref<72xf32, #tpu.memory_space<smem>>
    %337 = vector.broadcast %336 : f32 to vector<16x16xf32>
    %338 = arith.mulf %337, %331 : vector<16x16xf32>
    %339 = arith.addf %329, %338 : vector<16x16xf32>
    %c3_112 = arith.constant 3 : index
    %c2_113 = arith.constant 2 : index
    %c0_114 = arith.constant 0 : index
    %340 = vector.load %arg10[%c3_112, %c2_113, %c0_114] : memref<8x18x18xf32, #tpu.memory_space<vmem>>, vector<1x16x16xf32>
    %341 = vector.shape_cast %340 : vector<1x16x16xf32> to vector<16x16xf32>
    %c33 = arith.constant 33 : index
    %342 = memref.load %arg2[%c33] : memref<72xf32, #tpu.memory_space<smem>>
    %343 = vector.broadcast %342 : f32 to vector<16x16xf32>
    %344 = arith.mulf %343, %341 : vector<16x16xf32>
    %345 = arith.addf %335, %344 : vector<16x16xf32>
    %c69 = arith.constant 69 : index
    %346 = memref.load %arg2[%c69] : memref<72xf32, #tpu.memory_space<smem>>
    %347 = vector.broadcast %346 : f32 to vector<16x16xf32>
    %348 = arith.mulf %347, %341 : vector<16x16xf32>
    %349 = arith.addf %339, %348 : vector<16x16xf32>
    %c3_115 = arith.constant 3 : index
    %c2_116 = arith.constant 2 : index
    %c1_117 = arith.constant 1 : index
    %350 = vector.load %arg10[%c3_115, %c2_116, %c1_117] : memref<8x18x18xf32, #tpu.memory_space<vmem>>, vector<1x16x16xf32>
    %351 = vector.shape_cast %350 : vector<1x16x16xf32> to vector<16x16xf32>
    %c34 = arith.constant 34 : index
    %352 = memref.load %arg2[%c34] : memref<72xf32, #tpu.memory_space<smem>>
    %353 = vector.broadcast %352 : f32 to vector<16x16xf32>
    %354 = arith.mulf %353, %351 : vector<16x16xf32>
    %355 = arith.addf %345, %354 : vector<16x16xf32>
    %c70 = arith.constant 70 : index
    %356 = memref.load %arg2[%c70] : memref<72xf32, #tpu.memory_space<smem>>
    %357 = vector.broadcast %356 : f32 to vector<16x16xf32>
    %358 = arith.mulf %357, %351 : vector<16x16xf32>
    %359 = arith.addf %349, %358 : vector<16x16xf32>
    %c3_118 = arith.constant 3 : index
    %c2_119 = arith.constant 2 : index
    %c2_120 = arith.constant 2 : index
    %360 = vector.load %arg10[%c3_118, %c2_119, %c2_120] : memref<8x18x18xf32, #tpu.memory_space<vmem>>, vector<1x16x16xf32>
    %361 = vector.shape_cast %360 : vector<1x16x16xf32> to vector<16x16xf32>
    %c35 = arith.constant 35 : index
    %362 = memref.load %arg2[%c35] : memref<72xf32, #tpu.memory_space<smem>>
    %363 = vector.broadcast %362 : f32 to vector<16x16xf32>
    %364 = arith.mulf %363, %361 : vector<16x16xf32>
    %365 = arith.addf %355, %364 : vector<16x16xf32>
    %c71 = arith.constant 71 : index
    %366 = memref.load %arg2[%c71] : memref<72xf32, #tpu.memory_space<smem>>
    %367 = vector.broadcast %366 : f32 to vector<16x16xf32>
    %368 = arith.mulf %367, %361 : vector<16x16xf32>
    %369 = arith.addf %359, %368 : vector<16x16xf32>
    %cst_121 = arith.constant 0.000000e+00 : f32
    %370 = vector.broadcast %cst_121 : f32 to vector<16x16xf32>
    %371 = arith.cmpf ogt, %365, %370 : vector<16x16xf32>
    %372 = vector.broadcast %5 : f32 to vector<16x16xf32>
    %373 = arith.mulf %372, %365 : vector<16x16xf32>
    %374 = arith.select %371, %365, %373 : vector<16x16xi1>, vector<16x16xf32>
    %cst_122 = arith.constant 0.000000e+00 : f32
    %375 = vector.broadcast %cst_122 : f32 to vector<16x16xf32>
    %376 = arith.cmpf ogt, %369, %375 : vector<16x16xf32>
    %377 = vector.broadcast %5 : f32 to vector<16x16xf32>
    %378 = arith.mulf %377, %369 : vector<16x16xf32>
    %379 = arith.select %376, %369, %378 : vector<16x16xi1>, vector<16x16xf32>
    %c4_123 = arith.constant 4 : index
    %c1_124 = arith.constant 1 : index
    %c1_125 = arith.constant 1 : index
    %380 = vector.load %arg10[%c4_123, %c1_124, %c1_125] : memref<8x18x18xf32, #tpu.memory_space<vmem>>, vector<1x16x16xf32>
    %381 = vector.shape_cast %380 : vector<1x16x16xf32> to vector<16x16xf32>
    %382 = vector.shape_cast %374 : vector<16x16xf32> to vector<1x16x16xf32>
    tpu.vector_store %arg10[%c4_123, %c1_124, %c1_125], %382 {strides = array<i32>} : memref<8x18x18xf32, #tpu.memory_space<vmem>>, vector<1x16x16xf32>,
    %c5_126 = arith.constant 5 : index
    %c1_127 = arith.constant 1 : index
    %c1_128 = arith.constant 1 : index
    %383 = vector.load %arg10[%c5_126, %c1_127, %c1_128] : memref<8x18x18xf32, #tpu.memory_space<vmem>>, vector<1x16x16xf32>
    %384 = vector.shape_cast %383 : vector<1x16x16xf32> to vector<16x16xf32>
    %385 = vector.shape_cast %379 : vector<16x16xf32> to vector<1x16x16xf32>
    tpu.vector_store %arg10[%c5_126, %c1_127, %c1_128], %385 {strides = array<i32>} : memref<8x18x18xf32, #tpu.memory_space<vmem>>, vector<1x16x16xf32>,
    %c1_129 = arith.constant 1 : index
    %386 = memref.load %arg8[%c1_129] : memref<3xf32, #tpu.memory_space<smem>>
    %c0_130 = arith.constant 0 : index
    %387 = memref.load %arg5[%c0_130] : memref<2xf32, #tpu.memory_space<smem>>
    %388 = vector.broadcast %387 : f32 to vector<16x16xf32>
    %c1_131 = arith.constant 1 : index
    %389 = memref.load %arg5[%c1_131] : memref<2xf32, #tpu.memory_space<smem>>
    %390 = vector.broadcast %389 : f32 to vector<16x16xf32>
    %c0_132 = arith.constant 0 : index
    %c0_133 = arith.constant 0 : index
    %c0_134 = arith.constant 0 : index
    %391 = vector.load %arg10[%c0_132, %c0_133, %c0_134] : memref<8x18x18xf32, #tpu.memory_space<vmem>>, vector<1x16x16xf32>
    %392 = vector.shape_cast %391 : vector<1x16x16xf32> to vector<16x16xf32>
    %c0_135 = arith.constant 0 : index
    %393 = memref.load %arg4[%c0_135] : memref<108xf32, #tpu.memory_space<smem>>
    %394 = vector.broadcast %393 : f32 to vector<16x16xf32>
    %395 = arith.mulf %394, %392 : vector<16x16xf32>
    %396 = arith.addf %388, %395 : vector<16x16xf32>
    %c54_136 = arith.constant 54 : index
    %397 = memref.load %arg4[%c54_136] : memref<108xf32, #tpu.memory_space<smem>>
    %398 = vector.broadcast %397 : f32 to vector<16x16xf32>
    %399 = arith.mulf %398, %392 : vector<16x16xf32>
    %400 = arith.addf %390, %399 : vector<16x16xf32>
    %c0_137 = arith.constant 0 : index
    %c0_138 = arith.constant 0 : index
    %c1_139 = arith.constant 1 : index
    %401 = vector.load %arg10[%c0_137, %c0_138, %c1_139] : memref<8x18x18xf32, #tpu.memory_space<vmem>>, vector<1x16x16xf32>
    %402 = vector.shape_cast %401 : vector<1x16x16xf32> to vector<16x16xf32>
    %c1_140 = arith.constant 1 : index
    %403 = memref.load %arg4[%c1_140] : memref<108xf32, #tpu.memory_space<smem>>
    %404 = vector.broadcast %403 : f32 to vector<16x16xf32>
    %405 = arith.mulf %404, %402 : vector<16x16xf32>
    %406 = arith.addf %396, %405 : vector<16x16xf32>
    %c55_141 = arith.constant 55 : index
    %407 = memref.load %arg4[%c55_141] : memref<108xf32, #tpu.memory_space<smem>>
    %408 = vector.broadcast %407 : f32 to vector<16x16xf32>
    %409 = arith.mulf %408, %402 : vector<16x16xf32>
    %410 = arith.addf %400, %409 : vector<16x16xf32>
    %c0_142 = arith.constant 0 : index
    %c0_143 = arith.constant 0 : index
    %c2_144 = arith.constant 2 : index
    %411 = vector.load %arg10[%c0_142, %c0_143, %c2_144] : memref<8x18x18xf32, #tpu.memory_space<vmem>>, vector<1x16x16xf32>
    %412 = vector.shape_cast %411 : vector<1x16x16xf32> to vector<16x16xf32>
    %c2_145 = arith.constant 2 : index
    %413 = memref.load %arg4[%c2_145] : memref<108xf32, #tpu.memory_space<smem>>
    %414 = vector.broadcast %413 : f32 to vector<16x16xf32>
    %415 = arith.mulf %414, %412 : vector<16x16xf32>
    %416 = arith.addf %406, %415 : vector<16x16xf32>
    %c56_146 = arith.constant 56 : index
    %417 = memref.load %arg4[%c56_146] : memref<108xf32, #tpu.memory_space<smem>>
    %418 = vector.broadcast %417 : f32 to vector<16x16xf32>
    %419 = arith.mulf %418, %412 : vector<16x16xf32>
    %420 = arith.addf %410, %419 : vector<16x16xf32>
    %c0_147 = arith.constant 0 : index
    %c1_148 = arith.constant 1 : index
    %c0_149 = arith.constant 0 : index
    %421 = vector.load %arg10[%c0_147, %c1_148, %c0_149] : memref<8x18x18xf32, #tpu.memory_space<vmem>>, vector<1x16x16xf32>
    %422 = vector.shape_cast %421 : vector<1x16x16xf32> to vector<16x16xf32>
    %c3_150 = arith.constant 3 : index
    %423 = memref.load %arg4[%c3_150] : memref<108xf32, #tpu.memory_space<smem>>
    %424 = vector.broadcast %423 : f32 to vector<16x16xf32>
    %425 = arith.mulf %424, %422 : vector<16x16xf32>
    %426 = arith.addf %416, %425 : vector<16x16xf32>
    %c57_151 = arith.constant 57 : index
    %427 = memref.load %arg4[%c57_151] : memref<108xf32, #tpu.memory_space<smem>>
    %428 = vector.broadcast %427 : f32 to vector<16x16xf32>
    %429 = arith.mulf %428, %422 : vector<16x16xf32>
    %430 = arith.addf %420, %429 : vector<16x16xf32>
    %c0_152 = arith.constant 0 : index
    %c1_153 = arith.constant 1 : index
    %c1_154 = arith.constant 1 : index
    %431 = vector.load %arg10[%c0_152, %c1_153, %c1_154] : memref<8x18x18xf32, #tpu.memory_space<vmem>>, vector<1x16x16xf32>
    %432 = vector.shape_cast %431 : vector<1x16x16xf32> to vector<16x16xf32>
    %c4_155 = arith.constant 4 : index
    %433 = memref.load %arg4[%c4_155] : memref<108xf32, #tpu.memory_space<smem>>
    %434 = vector.broadcast %433 : f32 to vector<16x16xf32>
    %435 = arith.mulf %434, %432 : vector<16x16xf32>
    %436 = arith.addf %426, %435 : vector<16x16xf32>
    %c58_156 = arith.constant 58 : index
    %437 = memref.load %arg4[%c58_156] : memref<108xf32, #tpu.memory_space<smem>>
    %438 = vector.broadcast %437 : f32 to vector<16x16xf32>
    %439 = arith.mulf %438, %432 : vector<16x16xf32>
    %440 = arith.addf %430, %439 : vector<16x16xf32>
    %c0_157 = arith.constant 0 : index
    %c1_158 = arith.constant 1 : index
    %c2_159 = arith.constant 2 : index
    %441 = vector.load %arg10[%c0_157, %c1_158, %c2_159] : memref<8x18x18xf32, #tpu.memory_space<vmem>>, vector<1x16x16xf32>
    %442 = vector.shape_cast %441 : vector<1x16x16xf32> to vector<16x16xf32>
    %c5_160 = arith.constant 5 : index
    %443 = memref.load %arg4[%c5_160] : memref<108xf32, #tpu.memory_space<smem>>
    %444 = vector.broadcast %443 : f32 to vector<16x16xf32>
    %445 = arith.mulf %444, %442 : vector<16x16xf32>
    %446 = arith.addf %436, %445 : vector<16x16xf32>
    %c59_161 = arith.constant 59 : index
    %447 = memref.load %arg4[%c59_161] : memref<108xf32, #tpu.memory_space<smem>>
    %448 = vector.broadcast %447 : f32 to vector<16x16xf32>
    %449 = arith.mulf %448, %442 : vector<16x16xf32>
    %450 = arith.addf %440, %449 : vector<16x16xf32>
    %c0_162 = arith.constant 0 : index
    %c2_163 = arith.constant 2 : index
    %c0_164 = arith.constant 0 : index
    %451 = vector.load %arg10[%c0_162, %c2_163, %c0_164] : memref<8x18x18xf32, #tpu.memory_space<vmem>>, vector<1x16x16xf32>
    %452 = vector.shape_cast %451 : vector<1x16x16xf32> to vector<16x16xf32>
    %c6_165 = arith.constant 6 : index
    %453 = memref.load %arg4[%c6_165] : memref<108xf32, #tpu.memory_space<smem>>
    %454 = vector.broadcast %453 : f32 to vector<16x16xf32>
    %455 = arith.mulf %454, %452 : vector<16x16xf32>
    %456 = arith.addf %446, %455 : vector<16x16xf32>
    %c60_166 = arith.constant 60 : index
    %457 = memref.load %arg4[%c60_166] : memref<108xf32, #tpu.memory_space<smem>>
    %458 = vector.broadcast %457 : f32 to vector<16x16xf32>
    %459 = arith.mulf %458, %452 : vector<16x16xf32>
    %460 = arith.addf %450, %459 : vector<16x16xf32>
    %c0_167 = arith.constant 0 : index
    %c2_168 = arith.constant 2 : index
    %c1_169 = arith.constant 1 : index
    %461 = vector.load %arg10[%c0_167, %c2_168, %c1_169] : memref<8x18x18xf32, #tpu.memory_space<vmem>>, vector<1x16x16xf32>
    %462 = vector.shape_cast %461 : vector<1x16x16xf32> to vector<16x16xf32>
    %c7_170 = arith.constant 7 : index
    %463 = memref.load %arg4[%c7_170] : memref<108xf32, #tpu.memory_space<smem>>
    %464 = vector.broadcast %463 : f32 to vector<16x16xf32>
    %465 = arith.mulf %464, %462 : vector<16x16xf32>
    %466 = arith.addf %456, %465 : vector<16x16xf32>
    %c61_171 = arith.constant 61 : index
    %467 = memref.load %arg4[%c61_171] : memref<108xf32, #tpu.memory_space<smem>>
    %468 = vector.broadcast %467 : f32 to vector<16x16xf32>
    %469 = arith.mulf %468, %462 : vector<16x16xf32>
    %470 = arith.addf %460, %469 : vector<16x16xf32>
    %c0_172 = arith.constant 0 : index
    %c2_173 = arith.constant 2 : index
    %c2_174 = arith.constant 2 : index
    %471 = vector.load %arg10[%c0_172, %c2_173, %c2_174] : memref<8x18x18xf32, #tpu.memory_space<vmem>>, vector<1x16x16xf32>
    %472 = vector.shape_cast %471 : vector<1x16x16xf32> to vector<16x16xf32>
    %c8_175 = arith.constant 8 : index
    %473 = memref.load %arg4[%c8_175] : memref<108xf32, #tpu.memory_space<smem>>
    %474 = vector.broadcast %473 : f32 to vector<16x16xf32>
    %475 = arith.mulf %474, %472 : vector<16x16xf32>
    %476 = arith.addf %466, %475 : vector<16x16xf32>
    %c62_176 = arith.constant 62 : index
    %477 = memref.load %arg4[%c62_176] : memref<108xf32, #tpu.memory_space<smem>>
    %478 = vector.broadcast %477 : f32 to vector<16x16xf32>
    %479 = arith.mulf %478, %472 : vector<16x16xf32>
    %480 = arith.addf %470, %479 : vector<16x16xf32>
    %c1_177 = arith.constant 1 : index
    %c0_178 = arith.constant 0 : index
    %c0_179 = arith.constant 0 : index
    %481 = vector.load %arg10[%c1_177, %c0_178, %c0_179] : memref<8x18x18xf32, #tpu.memory_space<vmem>>, vector<1x16x16xf32>
    %482 = vector.shape_cast %481 : vector<1x16x16xf32> to vector<16x16xf32>
    %c9_180 = arith.constant 9 : index
    %483 = memref.load %arg4[%c9_180] : memref<108xf32, #tpu.memory_space<smem>>
    %484 = vector.broadcast %483 : f32 to vector<16x16xf32>
    %485 = arith.mulf %484, %482 : vector<16x16xf32>
    %486 = arith.addf %476, %485 : vector<16x16xf32>
    %c63_181 = arith.constant 63 : index
    %487 = memref.load %arg4[%c63_181] : memref<108xf32, #tpu.memory_space<smem>>
    %488 = vector.broadcast %487 : f32 to vector<16x16xf32>
    %489 = arith.mulf %488, %482 : vector<16x16xf32>
    %490 = arith.addf %480, %489 : vector<16x16xf32>
    %c1_182 = arith.constant 1 : index
    %c0_183 = arith.constant 0 : index
    %c1_184 = arith.constant 1 : index
    %491 = vector.load %arg10[%c1_182, %c0_183, %c1_184] : memref<8x18x18xf32, #tpu.memory_space<vmem>>, vector<1x16x16xf32>
    %492 = vector.shape_cast %491 : vector<1x16x16xf32> to vector<16x16xf32>
    %c10_185 = arith.constant 10 : index
    %493 = memref.load %arg4[%c10_185] : memref<108xf32, #tpu.memory_space<smem>>
    %494 = vector.broadcast %493 : f32 to vector<16x16xf32>
    %495 = arith.mulf %494, %492 : vector<16x16xf32>
    %496 = arith.addf %486, %495 : vector<16x16xf32>
    %c64_186 = arith.constant 64 : index
    %497 = memref.load %arg4[%c64_186] : memref<108xf32, #tpu.memory_space<smem>>
    %498 = vector.broadcast %497 : f32 to vector<16x16xf32>
    %499 = arith.mulf %498, %492 : vector<16x16xf32>
    %500 = arith.addf %490, %499 : vector<16x16xf32>
    %c1_187 = arith.constant 1 : index
    %c0_188 = arith.constant 0 : index
    %c2_189 = arith.constant 2 : index
    %501 = vector.load %arg10[%c1_187, %c0_188, %c2_189] : memref<8x18x18xf32, #tpu.memory_space<vmem>>, vector<1x16x16xf32>
    %502 = vector.shape_cast %501 : vector<1x16x16xf32> to vector<16x16xf32>
    %c11_190 = arith.constant 11 : index
    %503 = memref.load %arg4[%c11_190] : memref<108xf32, #tpu.memory_space<smem>>
    %504 = vector.broadcast %503 : f32 to vector<16x16xf32>
    %505 = arith.mulf %504, %502 : vector<16x16xf32>
    %506 = arith.addf %496, %505 : vector<16x16xf32>
    %c65_191 = arith.constant 65 : index
    %507 = memref.load %arg4[%c65_191] : memref<108xf32, #tpu.memory_space<smem>>
    %508 = vector.broadcast %507 : f32 to vector<16x16xf32>
    %509 = arith.mulf %508, %502 : vector<16x16xf32>
    %510 = arith.addf %500, %509 : vector<16x16xf32>
    %c1_192 = arith.constant 1 : index
    %c1_193 = arith.constant 1 : index
    %c0_194 = arith.constant 0 : index
    %511 = vector.load %arg10[%c1_192, %c1_193, %c0_194] : memref<8x18x18xf32, #tpu.memory_space<vmem>>, vector<1x16x16xf32>
    %512 = vector.shape_cast %511 : vector<1x16x16xf32> to vector<16x16xf32>
    %c12_195 = arith.constant 12 : index
    %513 = memref.load %arg4[%c12_195] : memref<108xf32, #tpu.memory_space<smem>>
    %514 = vector.broadcast %513 : f32 to vector<16x16xf32>
    %515 = arith.mulf %514, %512 : vector<16x16xf32>
    %516 = arith.addf %506, %515 : vector<16x16xf32>
    %c66_196 = arith.constant 66 : index
    %517 = memref.load %arg4[%c66_196] : memref<108xf32, #tpu.memory_space<smem>>
    %518 = vector.broadcast %517 : f32 to vector<16x16xf32>
    %519 = arith.mulf %518, %512 : vector<16x16xf32>
    %520 = arith.addf %510, %519 : vector<16x16xf32>
    %c1_197 = arith.constant 1 : index
    %c1_198 = arith.constant 1 : index
    %c1_199 = arith.constant 1 : index
    %521 = vector.load %arg10[%c1_197, %c1_198, %c1_199] : memref<8x18x18xf32, #tpu.memory_space<vmem>>, vector<1x16x16xf32>
    %522 = vector.shape_cast %521 : vector<1x16x16xf32> to vector<16x16xf32>
    %c13_200 = arith.constant 13 : index
    %523 = memref.load %arg4[%c13_200] : memref<108xf32, #tpu.memory_space<smem>>
    %524 = vector.broadcast %523 : f32 to vector<16x16xf32>
    %525 = arith.mulf %524, %522 : vector<16x16xf32>
    %526 = arith.addf %516, %525 : vector<16x16xf32>
    %c67_201 = arith.constant 67 : index
    %527 = memref.load %arg4[%c67_201] : memref<108xf32, #tpu.memory_space<smem>>
    %528 = vector.broadcast %527 : f32 to vector<16x16xf32>
    %529 = arith.mulf %528, %522 : vector<16x16xf32>
    %530 = arith.addf %520, %529 : vector<16x16xf32>
    %c1_202 = arith.constant 1 : index
    %c1_203 = arith.constant 1 : index
    %c2_204 = arith.constant 2 : index
    %531 = vector.load %arg10[%c1_202, %c1_203, %c2_204] : memref<8x18x18xf32, #tpu.memory_space<vmem>>, vector<1x16x16xf32>
    %532 = vector.shape_cast %531 : vector<1x16x16xf32> to vector<16x16xf32>
    %c14_205 = arith.constant 14 : index
    %533 = memref.load %arg4[%c14_205] : memref<108xf32, #tpu.memory_space<smem>>
    %534 = vector.broadcast %533 : f32 to vector<16x16xf32>
    %535 = arith.mulf %534, %532 : vector<16x16xf32>
    %536 = arith.addf %526, %535 : vector<16x16xf32>
    %c68_206 = arith.constant 68 : index
    %537 = memref.load %arg4[%c68_206] : memref<108xf32, #tpu.memory_space<smem>>
    %538 = vector.broadcast %537 : f32 to vector<16x16xf32>
    %539 = arith.mulf %538, %532 : vector<16x16xf32>
    %540 = arith.addf %530, %539 : vector<16x16xf32>
    %c1_207 = arith.constant 1 : index
    %c2_208 = arith.constant 2 : index
    %c0_209 = arith.constant 0 : index
    %541 = vector.load %arg10[%c1_207, %c2_208, %c0_209] : memref<8x18x18xf32, #tpu.memory_space<vmem>>, vector<1x16x16xf32>
    %542 = vector.shape_cast %541 : vector<1x16x16xf32> to vector<16x16xf32>
    %c15_210 = arith.constant 15 : index
    %543 = memref.load %arg4[%c15_210] : memref<108xf32, #tpu.memory_space<smem>>
    %544 = vector.broadcast %543 : f32 to vector<16x16xf32>
    %545 = arith.mulf %544, %542 : vector<16x16xf32>
    %546 = arith.addf %536, %545 : vector<16x16xf32>
    %c69_211 = arith.constant 69 : index
    %547 = memref.load %arg4[%c69_211] : memref<108xf32, #tpu.memory_space<smem>>
    %548 = vector.broadcast %547 : f32 to vector<16x16xf32>
    %549 = arith.mulf %548, %542 : vector<16x16xf32>
    %550 = arith.addf %540, %549 : vector<16x16xf32>
    %c1_212 = arith.constant 1 : index
    %c2_213 = arith.constant 2 : index
    %c1_214 = arith.constant 1 : index
    %551 = vector.load %arg10[%c1_212, %c2_213, %c1_214] : memref<8x18x18xf32, #tpu.memory_space<vmem>>, vector<1x16x16xf32>
    %552 = vector.shape_cast %551 : vector<1x16x16xf32> to vector<16x16xf32>
    %c16_215 = arith.constant 16 : index
    %553 = memref.load %arg4[%c16_215] : memref<108xf32, #tpu.memory_space<smem>>
    %554 = vector.broadcast %553 : f32 to vector<16x16xf32>
    %555 = arith.mulf %554, %552 : vector<16x16xf32>
    %556 = arith.addf %546, %555 : vector<16x16xf32>
    %c70_216 = arith.constant 70 : index
    %557 = memref.load %arg4[%c70_216] : memref<108xf32, #tpu.memory_space<smem>>
    %558 = vector.broadcast %557 : f32 to vector<16x16xf32>
    %559 = arith.mulf %558, %552 : vector<16x16xf32>
    %560 = arith.addf %550, %559 : vector<16x16xf32>
    %c1_217 = arith.constant 1 : index
    %c2_218 = arith.constant 2 : index
    %c2_219 = arith.constant 2 : index
    %561 = vector.load %arg10[%c1_217, %c2_218, %c2_219] : memref<8x18x18xf32, #tpu.memory_space<vmem>>, vector<1x16x16xf32>
    %562 = vector.shape_cast %561 : vector<1x16x16xf32> to vector<16x16xf32>
    %c17_220 = arith.constant 17 : index
    %563 = memref.load %arg4[%c17_220] : memref<108xf32, #tpu.memory_space<smem>>
    %564 = vector.broadcast %563 : f32 to vector<16x16xf32>
    %565 = arith.mulf %564, %562 : vector<16x16xf32>
    %566 = arith.addf %556, %565 : vector<16x16xf32>
    %c71_221 = arith.constant 71 : index
    %567 = memref.load %arg4[%c71_221] : memref<108xf32, #tpu.memory_space<smem>>
    %568 = vector.broadcast %567 : f32 to vector<16x16xf32>
    %569 = arith.mulf %568, %562 : vector<16x16xf32>
    %570 = arith.addf %560, %569 : vector<16x16xf32>
    %c2_222 = arith.constant 2 : index
    %c0_223 = arith.constant 0 : index
    %c0_224 = arith.constant 0 : index
    %571 = vector.load %arg10[%c2_222, %c0_223, %c0_224] : memref<8x18x18xf32, #tpu.memory_space<vmem>>, vector<1x16x16xf32>
    %572 = vector.shape_cast %571 : vector<1x16x16xf32> to vector<16x16xf32>
    %c18_225 = arith.constant 18 : index
    %573 = memref.load %arg4[%c18_225] : memref<108xf32, #tpu.memory_space<smem>>
    %574 = vector.broadcast %573 : f32 to vector<16x16xf32>
    %575 = arith.mulf %574, %572 : vector<16x16xf32>
    %576 = arith.addf %566, %575 : vector<16x16xf32>
    %c72 = arith.constant 72 : index
    %577 = memref.load %arg4[%c72] : memref<108xf32, #tpu.memory_space<smem>>
    %578 = vector.broadcast %577 : f32 to vector<16x16xf32>
    %579 = arith.mulf %578, %572 : vector<16x16xf32>
    %580 = arith.addf %570, %579 : vector<16x16xf32>
    %c2_226 = arith.constant 2 : index
    %c0_227 = arith.constant 0 : index
    %c1_228 = arith.constant 1 : index
    %581 = vector.load %arg10[%c2_226, %c0_227, %c1_228] : memref<8x18x18xf32, #tpu.memory_space<vmem>>, vector<1x16x16xf32>
    %582 = vector.shape_cast %581 : vector<1x16x16xf32> to vector<16x16xf32>
    %c19_229 = arith.constant 19 : index
    %583 = memref.load %arg4[%c19_229] : memref<108xf32, #tpu.memory_space<smem>>
    %584 = vector.broadcast %583 : f32 to vector<16x16xf32>
    %585 = arith.mulf %584, %582 : vector<16x16xf32>
    %586 = arith.addf %576, %585 : vector<16x16xf32>
    %c73 = arith.constant 73 : index
    %587 = memref.load %arg4[%c73] : memref<108xf32, #tpu.memory_space<smem>>
    %588 = vector.broadcast %587 : f32 to vector<16x16xf32>
    %589 = arith.mulf %588, %582 : vector<16x16xf32>
    %590 = arith.addf %580, %589 : vector<16x16xf32>
    %c2_230 = arith.constant 2 : index
    %c0_231 = arith.constant 0 : index
    %c2_232 = arith.constant 2 : index
    %591 = vector.load %arg10[%c2_230, %c0_231, %c2_232] : memref<8x18x18xf32, #tpu.memory_space<vmem>>, vector<1x16x16xf32>
    %592 = vector.shape_cast %591 : vector<1x16x16xf32> to vector<16x16xf32>
    %c20_233 = arith.constant 20 : index
    %593 = memref.load %arg4[%c20_233] : memref<108xf32, #tpu.memory_space<smem>>
    %594 = vector.broadcast %593 : f32 to vector<16x16xf32>
    %595 = arith.mulf %594, %592 : vector<16x16xf32>
    %596 = arith.addf %586, %595 : vector<16x16xf32>
    %c74 = arith.constant 74 : index
    %597 = memref.load %arg4[%c74] : memref<108xf32, #tpu.memory_space<smem>>
    %598 = vector.broadcast %597 : f32 to vector<16x16xf32>
    %599 = arith.mulf %598, %592 : vector<16x16xf32>
    %600 = arith.addf %590, %599 : vector<16x16xf32>
    %c2_234 = arith.constant 2 : index
    %c1_235 = arith.constant 1 : index
    %c0_236 = arith.constant 0 : index
    %601 = vector.load %arg10[%c2_234, %c1_235, %c0_236] : memref<8x18x18xf32, #tpu.memory_space<vmem>>, vector<1x16x16xf32>
    %602 = vector.shape_cast %601 : vector<1x16x16xf32> to vector<16x16xf32>
    %c21_237 = arith.constant 21 : index
    %603 = memref.load %arg4[%c21_237] : memref<108xf32, #tpu.memory_space<smem>>
    %604 = vector.broadcast %603 : f32 to vector<16x16xf32>
    %605 = arith.mulf %604, %602 : vector<16x16xf32>
    %606 = arith.addf %596, %605 : vector<16x16xf32>
    %c75 = arith.constant 75 : index
    %607 = memref.load %arg4[%c75] : memref<108xf32, #tpu.memory_space<smem>>
    %608 = vector.broadcast %607 : f32 to vector<16x16xf32>
    %609 = arith.mulf %608, %602 : vector<16x16xf32>
    %610 = arith.addf %600, %609 : vector<16x16xf32>
    %c2_238 = arith.constant 2 : index
    %c1_239 = arith.constant 1 : index
    %c1_240 = arith.constant 1 : index
    %611 = vector.load %arg10[%c2_238, %c1_239, %c1_240] : memref<8x18x18xf32, #tpu.memory_space<vmem>>, vector<1x16x16xf32>
    %612 = vector.shape_cast %611 : vector<1x16x16xf32> to vector<16x16xf32>
    %c22_241 = arith.constant 22 : index
    %613 = memref.load %arg4[%c22_241] : memref<108xf32, #tpu.memory_space<smem>>
    %614 = vector.broadcast %613 : f32 to vector<16x16xf32>
    %615 = arith.mulf %614, %612 : vector<16x16xf32>
    %616 = arith.addf %606, %615 : vector<16x16xf32>
    %c76 = arith.constant 76 : index
    %617 = memref.load %arg4[%c76] : memref<108xf32, #tpu.memory_space<smem>>
    %618 = vector.broadcast %617 : f32 to vector<16x16xf32>
    %619 = arith.mulf %618, %612 : vector<16x16xf32>
    %620 = arith.addf %610, %619 : vector<16x16xf32>
    %c2_242 = arith.constant 2 : index
    %c1_243 = arith.constant 1 : index
    %c2_244 = arith.constant 2 : index
    %621 = vector.load %arg10[%c2_242, %c1_243, %c2_244] : memref<8x18x18xf32, #tpu.memory_space<vmem>>, vector<1x16x16xf32>
    %622 = vector.shape_cast %621 : vector<1x16x16xf32> to vector<16x16xf32>
    %c23_245 = arith.constant 23 : index
    %623 = memref.load %arg4[%c23_245] : memref<108xf32, #tpu.memory_space<smem>>
    %624 = vector.broadcast %623 : f32 to vector<16x16xf32>
    %625 = arith.mulf %624, %622 : vector<16x16xf32>
    %626 = arith.addf %616, %625 : vector<16x16xf32>
    %c77 = arith.constant 77 : index
    %627 = memref.load %arg4[%c77] : memref<108xf32, #tpu.memory_space<smem>>
    %628 = vector.broadcast %627 : f32 to vector<16x16xf32>
    %629 = arith.mulf %628, %622 : vector<16x16xf32>
    %630 = arith.addf %620, %629 : vector<16x16xf32>
    %c2_246 = arith.constant 2 : index
    %c2_247 = arith.constant 2 : index
    %c0_248 = arith.constant 0 : index
    %631 = vector.load %arg10[%c2_246, %c2_247, %c0_248] : memref<8x18x18xf32, #tpu.memory_space<vmem>>, vector<1x16x16xf32>
    %632 = vector.shape_cast %631 : vector<1x16x16xf32> to vector<16x16xf32>
    %c24_249 = arith.constant 24 : index
    %633 = memref.load %arg4[%c24_249] : memref<108xf32, #tpu.memory_space<smem>>
    %634 = vector.broadcast %633 : f32 to vector<16x16xf32>
    %635 = arith.mulf %634, %632 : vector<16x16xf32>
    %636 = arith.addf %626, %635 : vector<16x16xf32>
    %c78 = arith.constant 78 : index
    %637 = memref.load %arg4[%c78] : memref<108xf32, #tpu.memory_space<smem>>
    %638 = vector.broadcast %637 : f32 to vector<16x16xf32>
    %639 = arith.mulf %638, %632 : vector<16x16xf32>
    %640 = arith.addf %630, %639 : vector<16x16xf32>
    %c2_250 = arith.constant 2 : index
    %c2_251 = arith.constant 2 : index
    %c1_252 = arith.constant 1 : index
    %641 = vector.load %arg10[%c2_250, %c2_251, %c1_252] : memref<8x18x18xf32, #tpu.memory_space<vmem>>, vector<1x16x16xf32>
    %642 = vector.shape_cast %641 : vector<1x16x16xf32> to vector<16x16xf32>
    %c25_253 = arith.constant 25 : index
    %643 = memref.load %arg4[%c25_253] : memref<108xf32, #tpu.memory_space<smem>>
    %644 = vector.broadcast %643 : f32 to vector<16x16xf32>
    %645 = arith.mulf %644, %642 : vector<16x16xf32>
    %646 = arith.addf %636, %645 : vector<16x16xf32>
    %c79 = arith.constant 79 : index
    %647 = memref.load %arg4[%c79] : memref<108xf32, #tpu.memory_space<smem>>
    %648 = vector.broadcast %647 : f32 to vector<16x16xf32>
    %649 = arith.mulf %648, %642 : vector<16x16xf32>
    %650 = arith.addf %640, %649 : vector<16x16xf32>
    %c2_254 = arith.constant 2 : index
    %c2_255 = arith.constant 2 : index
    %c2_256 = arith.constant 2 : index
    %651 = vector.load %arg10[%c2_254, %c2_255, %c2_256] : memref<8x18x18xf32, #tpu.memory_space<vmem>>, vector<1x16x16xf32>
    %652 = vector.shape_cast %651 : vector<1x16x16xf32> to vector<16x16xf32>
    %c26_257 = arith.constant 26 : index
    %653 = memref.load %arg4[%c26_257] : memref<108xf32, #tpu.memory_space<smem>>
    %654 = vector.broadcast %653 : f32 to vector<16x16xf32>
    %655 = arith.mulf %654, %652 : vector<16x16xf32>
    %656 = arith.addf %646, %655 : vector<16x16xf32>
    %c80 = arith.constant 80 : index
    %657 = memref.load %arg4[%c80] : memref<108xf32, #tpu.memory_space<smem>>
    %658 = vector.broadcast %657 : f32 to vector<16x16xf32>
    %659 = arith.mulf %658, %652 : vector<16x16xf32>
    %660 = arith.addf %650, %659 : vector<16x16xf32>
    %c3_258 = arith.constant 3 : index
    %c0_259 = arith.constant 0 : index
    %c0_260 = arith.constant 0 : index
    %661 = vector.load %arg10[%c3_258, %c0_259, %c0_260] : memref<8x18x18xf32, #tpu.memory_space<vmem>>, vector<1x16x16xf32>
    %662 = vector.shape_cast %661 : vector<1x16x16xf32> to vector<16x16xf32>
    %c27_261 = arith.constant 27 : index
    %663 = memref.load %arg4[%c27_261] : memref<108xf32, #tpu.memory_space<smem>>
    %664 = vector.broadcast %663 : f32 to vector<16x16xf32>
    %665 = arith.mulf %664, %662 : vector<16x16xf32>
    %666 = arith.addf %656, %665 : vector<16x16xf32>
    %c81 = arith.constant 81 : index
    %667 = memref.load %arg4[%c81] : memref<108xf32, #tpu.memory_space<smem>>
    %668 = vector.broadcast %667 : f32 to vector<16x16xf32>
    %669 = arith.mulf %668, %662 : vector<16x16xf32>
    %670 = arith.addf %660, %669 : vector<16x16xf32>
    %c3_262 = arith.constant 3 : index
    %c0_263 = arith.constant 0 : index
    %c1_264 = arith.constant 1 : index
    %671 = vector.load %arg10[%c3_262, %c0_263, %c1_264] : memref<8x18x18xf32, #tpu.memory_space<vmem>>, vector<1x16x16xf32>
    %672 = vector.shape_cast %671 : vector<1x16x16xf32> to vector<16x16xf32>
    %c28_265 = arith.constant 28 : index
    %673 = memref.load %arg4[%c28_265] : memref<108xf32, #tpu.memory_space<smem>>
    %674 = vector.broadcast %673 : f32 to vector<16x16xf32>
    %675 = arith.mulf %674, %672 : vector<16x16xf32>
    %676 = arith.addf %666, %675 : vector<16x16xf32>
    %c82 = arith.constant 82 : index
    %677 = memref.load %arg4[%c82] : memref<108xf32, #tpu.memory_space<smem>>
    %678 = vector.broadcast %677 : f32 to vector<16x16xf32>
    %679 = arith.mulf %678, %672 : vector<16x16xf32>
    %680 = arith.addf %670, %679 : vector<16x16xf32>
    %c3_266 = arith.constant 3 : index
    %c0_267 = arith.constant 0 : index
    %c2_268 = arith.constant 2 : index
    %681 = vector.load %arg10[%c3_266, %c0_267, %c2_268] : memref<8x18x18xf32, #tpu.memory_space<vmem>>, vector<1x16x16xf32>
    %682 = vector.shape_cast %681 : vector<1x16x16xf32> to vector<16x16xf32>
    %c29_269 = arith.constant 29 : index
    %683 = memref.load %arg4[%c29_269] : memref<108xf32, #tpu.memory_space<smem>>
    %684 = vector.broadcast %683 : f32 to vector<16x16xf32>
    %685 = arith.mulf %684, %682 : vector<16x16xf32>
    %686 = arith.addf %676, %685 : vector<16x16xf32>
    %c83 = arith.constant 83 : index
    %687 = memref.load %arg4[%c83] : memref<108xf32, #tpu.memory_space<smem>>
    %688 = vector.broadcast %687 : f32 to vector<16x16xf32>
    %689 = arith.mulf %688, %682 : vector<16x16xf32>
    %690 = arith.addf %680, %689 : vector<16x16xf32>
    %c3_270 = arith.constant 3 : index
    %c1_271 = arith.constant 1 : index
    %c0_272 = arith.constant 0 : index
    %691 = vector.load %arg10[%c3_270, %c1_271, %c0_272] : memref<8x18x18xf32, #tpu.memory_space<vmem>>, vector<1x16x16xf32>
    %692 = vector.shape_cast %691 : vector<1x16x16xf32> to vector<16x16xf32>
    %c30_273 = arith.constant 30 : index
    %693 = memref.load %arg4[%c30_273] : memref<108xf32, #tpu.memory_space<smem>>
    %694 = vector.broadcast %693 : f32 to vector<16x16xf32>
    %695 = arith.mulf %694, %692 : vector<16x16xf32>
    %696 = arith.addf %686, %695 : vector<16x16xf32>
    %c84 = arith.constant 84 : index
    %697 = memref.load %arg4[%c84] : memref<108xf32, #tpu.memory_space<smem>>
    %698 = vector.broadcast %697 : f32 to vector<16x16xf32>
    %699 = arith.mulf %698, %692 : vector<16x16xf32>
    %700 = arith.addf %690, %699 : vector<16x16xf32>
    %c3_274 = arith.constant 3 : index
    %c1_275 = arith.constant 1 : index
    %c1_276 = arith.constant 1 : index
    %701 = vector.load %arg10[%c3_274, %c1_275, %c1_276] : memref<8x18x18xf32, #tpu.memory_space<vmem>>, vector<1x16x16xf32>
    %702 = vector.shape_cast %701 : vector<1x16x16xf32> to vector<16x16xf32>
    %c31_277 = arith.constant 31 : index
    %703 = memref.load %arg4[%c31_277] : memref<108xf32, #tpu.memory_space<smem>>
    %704 = vector.broadcast %703 : f32 to vector<16x16xf32>
    %705 = arith.mulf %704, %702 : vector<16x16xf32>
    %706 = arith.addf %696, %705 : vector<16x16xf32>
    %c85 = arith.constant 85 : index
    %707 = memref.load %arg4[%c85] : memref<108xf32, #tpu.memory_space<smem>>
    %708 = vector.broadcast %707 : f32 to vector<16x16xf32>
    %709 = arith.mulf %708, %702 : vector<16x16xf32>
    %710 = arith.addf %700, %709 : vector<16x16xf32>
    %c3_278 = arith.constant 3 : index
    %c1_279 = arith.constant 1 : index
    %c2_280 = arith.constant 2 : index
    %711 = vector.load %arg10[%c3_278, %c1_279, %c2_280] : memref<8x18x18xf32, #tpu.memory_space<vmem>>, vector<1x16x16xf32>
    %712 = vector.shape_cast %711 : vector<1x16x16xf32> to vector<16x16xf32>
    %c32_281 = arith.constant 32 : index
    %713 = memref.load %arg4[%c32_281] : memref<108xf32, #tpu.memory_space<smem>>
    %714 = vector.broadcast %713 : f32 to vector<16x16xf32>
    %715 = arith.mulf %714, %712 : vector<16x16xf32>
    %716 = arith.addf %706, %715 : vector<16x16xf32>
    %c86 = arith.constant 86 : index
    %717 = memref.load %arg4[%c86] : memref<108xf32, #tpu.memory_space<smem>>
    %718 = vector.broadcast %717 : f32 to vector<16x16xf32>
    %719 = arith.mulf %718, %712 : vector<16x16xf32>
    %720 = arith.addf %710, %719 : vector<16x16xf32>
    %c3_282 = arith.constant 3 : index
    %c2_283 = arith.constant 2 : index
    %c0_284 = arith.constant 0 : index
    %721 = vector.load %arg10[%c3_282, %c2_283, %c0_284] : memref<8x18x18xf32, #tpu.memory_space<vmem>>, vector<1x16x16xf32>
    %722 = vector.shape_cast %721 : vector<1x16x16xf32> to vector<16x16xf32>
    %c33_285 = arith.constant 33 : index
    %723 = memref.load %arg4[%c33_285] : memref<108xf32, #tpu.memory_space<smem>>
    %724 = vector.broadcast %723 : f32 to vector<16x16xf32>
    %725 = arith.mulf %724, %722 : vector<16x16xf32>
    %726 = arith.addf %716, %725 : vector<16x16xf32>
    %c87 = arith.constant 87 : index
    %727 = memref.load %arg4[%c87] : memref<108xf32, #tpu.memory_space<smem>>
    %728 = vector.broadcast %727 : f32 to vector<16x16xf32>
    %729 = arith.mulf %728, %722 : vector<16x16xf32>
    %730 = arith.addf %720, %729 : vector<16x16xf32>
    %c3_286 = arith.constant 3 : index
    %c2_287 = arith.constant 2 : index
    %c1_288 = arith.constant 1 : index
    %731 = vector.load %arg10[%c3_286, %c2_287, %c1_288] : memref<8x18x18xf32, #tpu.memory_space<vmem>>, vector<1x16x16xf32>
    %732 = vector.shape_cast %731 : vector<1x16x16xf32> to vector<16x16xf32>
    %c34_289 = arith.constant 34 : index
    %733 = memref.load %arg4[%c34_289] : memref<108xf32, #tpu.memory_space<smem>>
    %734 = vector.broadcast %733 : f32 to vector<16x16xf32>
    %735 = arith.mulf %734, %732 : vector<16x16xf32>
    %736 = arith.addf %726, %735 : vector<16x16xf32>
    %c88 = arith.constant 88 : index
    %737 = memref.load %arg4[%c88] : memref<108xf32, #tpu.memory_space<smem>>
    %738 = vector.broadcast %737 : f32 to vector<16x16xf32>
    %739 = arith.mulf %738, %732 : vector<16x16xf32>
    %740 = arith.addf %730, %739 : vector<16x16xf32>
    %c3_290 = arith.constant 3 : index
    %c2_291 = arith.constant 2 : index
    %c2_292 = arith.constant 2 : index
    %741 = vector.load %arg10[%c3_290, %c2_291, %c2_292] : memref<8x18x18xf32, #tpu.memory_space<vmem>>, vector<1x16x16xf32>
    %742 = vector.shape_cast %741 : vector<1x16x16xf32> to vector<16x16xf32>
    %c35_293 = arith.constant 35 : index
    %743 = memref.load %arg4[%c35_293] : memref<108xf32, #tpu.memory_space<smem>>
    %744 = vector.broadcast %743 : f32 to vector<16x16xf32>
    %745 = arith.mulf %744, %742 : vector<16x16xf32>
    %746 = arith.addf %736, %745 : vector<16x16xf32>
    %c89 = arith.constant 89 : index
    %747 = memref.load %arg4[%c89] : memref<108xf32, #tpu.memory_space<smem>>
    %748 = vector.broadcast %747 : f32 to vector<16x16xf32>
    %749 = arith.mulf %748, %742 : vector<16x16xf32>
    %750 = arith.addf %740, %749 : vector<16x16xf32>
    %c4_294 = arith.constant 4 : index
    %c0_295 = arith.constant 0 : index
    %c0_296 = arith.constant 0 : index
    %751 = vector.load %arg10[%c4_294, %c0_295, %c0_296] : memref<8x18x18xf32, #tpu.memory_space<vmem>>, vector<1x16x16xf32>
    %752 = vector.shape_cast %751 : vector<1x16x16xf32> to vector<16x16xf32>
    %c36_297 = arith.constant 36 : index
    %753 = memref.load %arg4[%c36_297] : memref<108xf32, #tpu.memory_space<smem>>
    %754 = vector.broadcast %753 : f32 to vector<16x16xf32>
    %755 = arith.mulf %754, %752 : vector<16x16xf32>
    %756 = arith.addf %746, %755 : vector<16x16xf32>
    %c90 = arith.constant 90 : index
    %757 = memref.load %arg4[%c90] : memref<108xf32, #tpu.memory_space<smem>>
    %758 = vector.broadcast %757 : f32 to vector<16x16xf32>
    %759 = arith.mulf %758, %752 : vector<16x16xf32>
    %760 = arith.addf %750, %759 : vector<16x16xf32>
    %c4_298 = arith.constant 4 : index
    %c0_299 = arith.constant 0 : index
    %c1_300 = arith.constant 1 : index
    %761 = vector.load %arg10[%c4_298, %c0_299, %c1_300] : memref<8x18x18xf32, #tpu.memory_space<vmem>>, vector<1x16x16xf32>
    %762 = vector.shape_cast %761 : vector<1x16x16xf32> to vector<16x16xf32>
    %c37_301 = arith.constant 37 : index
    %763 = memref.load %arg4[%c37_301] : memref<108xf32, #tpu.memory_space<smem>>
    %764 = vector.broadcast %763 : f32 to vector<16x16xf32>
    %765 = arith.mulf %764, %762 : vector<16x16xf32>
    %766 = arith.addf %756, %765 : vector<16x16xf32>
    %c91 = arith.constant 91 : index
    %767 = memref.load %arg4[%c91] : memref<108xf32, #tpu.memory_space<smem>>
    %768 = vector.broadcast %767 : f32 to vector<16x16xf32>
    %769 = arith.mulf %768, %762 : vector<16x16xf32>
    %770 = arith.addf %760, %769 : vector<16x16xf32>
    %c4_302 = arith.constant 4 : index
    %c0_303 = arith.constant 0 : index
    %c2_304 = arith.constant 2 : index
    %771 = vector.load %arg10[%c4_302, %c0_303, %c2_304] : memref<8x18x18xf32, #tpu.memory_space<vmem>>, vector<1x16x16xf32>
    %772 = vector.shape_cast %771 : vector<1x16x16xf32> to vector<16x16xf32>
    %c38_305 = arith.constant 38 : index
    %773 = memref.load %arg4[%c38_305] : memref<108xf32, #tpu.memory_space<smem>>
    %774 = vector.broadcast %773 : f32 to vector<16x16xf32>
    %775 = arith.mulf %774, %772 : vector<16x16xf32>
    %776 = arith.addf %766, %775 : vector<16x16xf32>
    %c92 = arith.constant 92 : index
    %777 = memref.load %arg4[%c92] : memref<108xf32, #tpu.memory_space<smem>>
    %778 = vector.broadcast %777 : f32 to vector<16x16xf32>
    %779 = arith.mulf %778, %772 : vector<16x16xf32>
    %780 = arith.addf %770, %779 : vector<16x16xf32>
    %c4_306 = arith.constant 4 : index
    %c1_307 = arith.constant 1 : index
    %c0_308 = arith.constant 0 : index
    %781 = vector.load %arg10[%c4_306, %c1_307, %c0_308] : memref<8x18x18xf32, #tpu.memory_space<vmem>>, vector<1x16x16xf32>
    %782 = vector.shape_cast %781 : vector<1x16x16xf32> to vector<16x16xf32>
    %c39_309 = arith.constant 39 : index
    %783 = memref.load %arg4[%c39_309] : memref<108xf32, #tpu.memory_space<smem>>
    %784 = vector.broadcast %783 : f32 to vector<16x16xf32>
    %785 = arith.mulf %784, %782 : vector<16x16xf32>
    %786 = arith.addf %776, %785 : vector<16x16xf32>
    %c93 = arith.constant 93 : index
    %787 = memref.load %arg4[%c93] : memref<108xf32, #tpu.memory_space<smem>>
    %788 = vector.broadcast %787 : f32 to vector<16x16xf32>
    %789 = arith.mulf %788, %782 : vector<16x16xf32>
    %790 = arith.addf %780, %789 : vector<16x16xf32>
    %c4_310 = arith.constant 4 : index
    %c1_311 = arith.constant 1 : index
    %c1_312 = arith.constant 1 : index
    %791 = vector.load %arg10[%c4_310, %c1_311, %c1_312] : memref<8x18x18xf32, #tpu.memory_space<vmem>>, vector<1x16x16xf32>
    %792 = vector.shape_cast %791 : vector<1x16x16xf32> to vector<16x16xf32>
    %c40_313 = arith.constant 40 : index
    %793 = memref.load %arg4[%c40_313] : memref<108xf32, #tpu.memory_space<smem>>
    %794 = vector.broadcast %793 : f32 to vector<16x16xf32>
    %795 = arith.mulf %794, %792 : vector<16x16xf32>
    %796 = arith.addf %786, %795 : vector<16x16xf32>
    %c94 = arith.constant 94 : index
    %797 = memref.load %arg4[%c94] : memref<108xf32, #tpu.memory_space<smem>>
    %798 = vector.broadcast %797 : f32 to vector<16x16xf32>
    %799 = arith.mulf %798, %792 : vector<16x16xf32>
    %800 = arith.addf %790, %799 : vector<16x16xf32>
    %c4_314 = arith.constant 4 : index
    %c1_315 = arith.constant 1 : index
    %c2_316 = arith.constant 2 : index
    %801 = vector.load %arg10[%c4_314, %c1_315, %c2_316] : memref<8x18x18xf32, #tpu.memory_space<vmem>>, vector<1x16x16xf32>
    %802 = vector.shape_cast %801 : vector<1x16x16xf32> to vector<16x16xf32>
    %c41_317 = arith.constant 41 : index
    %803 = memref.load %arg4[%c41_317] : memref<108xf32, #tpu.memory_space<smem>>
    %804 = vector.broadcast %803 : f32 to vector<16x16xf32>
    %805 = arith.mulf %804, %802 : vector<16x16xf32>
    %806 = arith.addf %796, %805 : vector<16x16xf32>
    %c95 = arith.constant 95 : index
    %807 = memref.load %arg4[%c95] : memref<108xf32, #tpu.memory_space<smem>>
    %808 = vector.broadcast %807 : f32 to vector<16x16xf32>
    %809 = arith.mulf %808, %802 : vector<16x16xf32>
    %810 = arith.addf %800, %809 : vector<16x16xf32>
    %c4_318 = arith.constant 4 : index
    %c2_319 = arith.constant 2 : index
    %c0_320 = arith.constant 0 : index
    %811 = vector.load %arg10[%c4_318, %c2_319, %c0_320] : memref<8x18x18xf32, #tpu.memory_space<vmem>>, vector<1x16x16xf32>
    %812 = vector.shape_cast %811 : vector<1x16x16xf32> to vector<16x16xf32>
    %c42_321 = arith.constant 42 : index
    %813 = memref.load %arg4[%c42_321] : memref<108xf32, #tpu.memory_space<smem>>
    %814 = vector.broadcast %813 : f32 to vector<16x16xf32>
    %815 = arith.mulf %814, %812 : vector<16x16xf32>
    %816 = arith.addf %806, %815 : vector<16x16xf32>
    %c96 = arith.constant 96 : index
    %817 = memref.load %arg4[%c96] : memref<108xf32, #tpu.memory_space<smem>>
    %818 = vector.broadcast %817 : f32 to vector<16x16xf32>
    %819 = arith.mulf %818, %812 : vector<16x16xf32>
    %820 = arith.addf %810, %819 : vector<16x16xf32>
    %c4_322 = arith.constant 4 : index
    %c2_323 = arith.constant 2 : index
    %c1_324 = arith.constant 1 : index
    %821 = vector.load %arg10[%c4_322, %c2_323, %c1_324] : memref<8x18x18xf32, #tpu.memory_space<vmem>>, vector<1x16x16xf32>
    %822 = vector.shape_cast %821 : vector<1x16x16xf32> to vector<16x16xf32>
    %c43_325 = arith.constant 43 : index
    %823 = memref.load %arg4[%c43_325] : memref<108xf32, #tpu.memory_space<smem>>
    %824 = vector.broadcast %823 : f32 to vector<16x16xf32>
    %825 = arith.mulf %824, %822 : vector<16x16xf32>
    %826 = arith.addf %816, %825 : vector<16x16xf32>
    %c97 = arith.constant 97 : index
    %827 = memref.load %arg4[%c97] : memref<108xf32, #tpu.memory_space<smem>>
    %828 = vector.broadcast %827 : f32 to vector<16x16xf32>
    %829 = arith.mulf %828, %822 : vector<16x16xf32>
    %830 = arith.addf %820, %829 : vector<16x16xf32>
    %c4_326 = arith.constant 4 : index
    %c2_327 = arith.constant 2 : index
    %c2_328 = arith.constant 2 : index
    %831 = vector.load %arg10[%c4_326, %c2_327, %c2_328] : memref<8x18x18xf32, #tpu.memory_space<vmem>>, vector<1x16x16xf32>
    %832 = vector.shape_cast %831 : vector<1x16x16xf32> to vector<16x16xf32>
    %c44_329 = arith.constant 44 : index
    %833 = memref.load %arg4[%c44_329] : memref<108xf32, #tpu.memory_space<smem>>
    %834 = vector.broadcast %833 : f32 to vector<16x16xf32>
    %835 = arith.mulf %834, %832 : vector<16x16xf32>
    %836 = arith.addf %826, %835 : vector<16x16xf32>
    %c98 = arith.constant 98 : index
    %837 = memref.load %arg4[%c98] : memref<108xf32, #tpu.memory_space<smem>>
    %838 = vector.broadcast %837 : f32 to vector<16x16xf32>
    %839 = arith.mulf %838, %832 : vector<16x16xf32>
    %840 = arith.addf %830, %839 : vector<16x16xf32>
    %c5_330 = arith.constant 5 : index
    %c0_331 = arith.constant 0 : index
    %c0_332 = arith.constant 0 : index
    %841 = vector.load %arg10[%c5_330, %c0_331, %c0_332] : memref<8x18x18xf32, #tpu.memory_space<vmem>>, vector<1x16x16xf32>
    %842 = vector.shape_cast %841 : vector<1x16x16xf32> to vector<16x16xf32>
    %c45_333 = arith.constant 45 : index
    %843 = memref.load %arg4[%c45_333] : memref<108xf32, #tpu.memory_space<smem>>
    %844 = vector.broadcast %843 : f32 to vector<16x16xf32>
    %845 = arith.mulf %844, %842 : vector<16x16xf32>
    %846 = arith.addf %836, %845 : vector<16x16xf32>
    %c99 = arith.constant 99 : index
    %847 = memref.load %arg4[%c99] : memref<108xf32, #tpu.memory_space<smem>>
    %848 = vector.broadcast %847 : f32 to vector<16x16xf32>
    %849 = arith.mulf %848, %842 : vector<16x16xf32>
    %850 = arith.addf %840, %849 : vector<16x16xf32>
    %c5_334 = arith.constant 5 : index
    %c0_335 = arith.constant 0 : index
    %c1_336 = arith.constant 1 : index
    %851 = vector.load %arg10[%c5_334, %c0_335, %c1_336] : memref<8x18x18xf32, #tpu.memory_space<vmem>>, vector<1x16x16xf32>
    %852 = vector.shape_cast %851 : vector<1x16x16xf32> to vector<16x16xf32>
    %c46_337 = arith.constant 46 : index
    %853 = memref.load %arg4[%c46_337] : memref<108xf32, #tpu.memory_space<smem>>
    %854 = vector.broadcast %853 : f32 to vector<16x16xf32>
    %855 = arith.mulf %854, %852 : vector<16x16xf32>
    %856 = arith.addf %846, %855 : vector<16x16xf32>
    %c100 = arith.constant 100 : index
    %857 = memref.load %arg4[%c100] : memref<108xf32, #tpu.memory_space<smem>>
    %858 = vector.broadcast %857 : f32 to vector<16x16xf32>
    %859 = arith.mulf %858, %852 : vector<16x16xf32>
    %860 = arith.addf %850, %859 : vector<16x16xf32>
    %c5_338 = arith.constant 5 : index
    %c0_339 = arith.constant 0 : index
    %c2_340 = arith.constant 2 : index
    %861 = vector.load %arg10[%c5_338, %c0_339, %c2_340] : memref<8x18x18xf32, #tpu.memory_space<vmem>>, vector<1x16x16xf32>
    %862 = vector.shape_cast %861 : vector<1x16x16xf32> to vector<16x16xf32>
    %c47_341 = arith.constant 47 : index
    %863 = memref.load %arg4[%c47_341] : memref<108xf32, #tpu.memory_space<smem>>
    %864 = vector.broadcast %863 : f32 to vector<16x16xf32>
    %865 = arith.mulf %864, %862 : vector<16x16xf32>
    %866 = arith.addf %856, %865 : vector<16x16xf32>
    %c101 = arith.constant 101 : index
    %867 = memref.load %arg4[%c101] : memref<108xf32, #tpu.memory_space<smem>>
    %868 = vector.broadcast %867 : f32 to vector<16x16xf32>
    %869 = arith.mulf %868, %862 : vector<16x16xf32>
    %870 = arith.addf %860, %869 : vector<16x16xf32>
    %c5_342 = arith.constant 5 : index
    %c1_343 = arith.constant 1 : index
    %c0_344 = arith.constant 0 : index
    %871 = vector.load %arg10[%c5_342, %c1_343, %c0_344] : memref<8x18x18xf32, #tpu.memory_space<vmem>>, vector<1x16x16xf32>
    %872 = vector.shape_cast %871 : vector<1x16x16xf32> to vector<16x16xf32>
    %c48_345 = arith.constant 48 : index
    %873 = memref.load %arg4[%c48_345] : memref<108xf32, #tpu.memory_space<smem>>
    %874 = vector.broadcast %873 : f32 to vector<16x16xf32>
    %875 = arith.mulf %874, %872 : vector<16x16xf32>
    %876 = arith.addf %866, %875 : vector<16x16xf32>
    %c102 = arith.constant 102 : index
    %877 = memref.load %arg4[%c102] : memref<108xf32, #tpu.memory_space<smem>>
    %878 = vector.broadcast %877 : f32 to vector<16x16xf32>
    %879 = arith.mulf %878, %872 : vector<16x16xf32>
    %880 = arith.addf %870, %879 : vector<16x16xf32>
    %c5_346 = arith.constant 5 : index
    %c1_347 = arith.constant 1 : index
    %c1_348 = arith.constant 1 : index
    %881 = vector.load %arg10[%c5_346, %c1_347, %c1_348] : memref<8x18x18xf32, #tpu.memory_space<vmem>>, vector<1x16x16xf32>
    %882 = vector.shape_cast %881 : vector<1x16x16xf32> to vector<16x16xf32>
    %c49_349 = arith.constant 49 : index
    %883 = memref.load %arg4[%c49_349] : memref<108xf32, #tpu.memory_space<smem>>
    %884 = vector.broadcast %883 : f32 to vector<16x16xf32>
    %885 = arith.mulf %884, %882 : vector<16x16xf32>
    %886 = arith.addf %876, %885 : vector<16x16xf32>
    %c103 = arith.constant 103 : index
    %887 = memref.load %arg4[%c103] : memref<108xf32, #tpu.memory_space<smem>>
    %888 = vector.broadcast %887 : f32 to vector<16x16xf32>
    %889 = arith.mulf %888, %882 : vector<16x16xf32>
    %890 = arith.addf %880, %889 : vector<16x16xf32>
    %c5_350 = arith.constant 5 : index
    %c1_351 = arith.constant 1 : index
    %c2_352 = arith.constant 2 : index
    %891 = vector.load %arg10[%c5_350, %c1_351, %c2_352] : memref<8x18x18xf32, #tpu.memory_space<vmem>>, vector<1x16x16xf32>
    %892 = vector.shape_cast %891 : vector<1x16x16xf32> to vector<16x16xf32>
    %c50_353 = arith.constant 50 : index
    %893 = memref.load %arg4[%c50_353] : memref<108xf32, #tpu.memory_space<smem>>
    %894 = vector.broadcast %893 : f32 to vector<16x16xf32>
    %895 = arith.mulf %894, %892 : vector<16x16xf32>
    %896 = arith.addf %886, %895 : vector<16x16xf32>
    %c104 = arith.constant 104 : index
    %897 = memref.load %arg4[%c104] : memref<108xf32, #tpu.memory_space<smem>>
    %898 = vector.broadcast %897 : f32 to vector<16x16xf32>
    %899 = arith.mulf %898, %892 : vector<16x16xf32>
    %900 = arith.addf %890, %899 : vector<16x16xf32>
    %c5_354 = arith.constant 5 : index
    %c2_355 = arith.constant 2 : index
    %c0_356 = arith.constant 0 : index
    %901 = vector.load %arg10[%c5_354, %c2_355, %c0_356] : memref<8x18x18xf32, #tpu.memory_space<vmem>>, vector<1x16x16xf32>
    %902 = vector.shape_cast %901 : vector<1x16x16xf32> to vector<16x16xf32>
    %c51_357 = arith.constant 51 : index
    %903 = memref.load %arg4[%c51_357] : memref<108xf32, #tpu.memory_space<smem>>
    %904 = vector.broadcast %903 : f32 to vector<16x16xf32>
    %905 = arith.mulf %904, %902 : vector<16x16xf32>
    %906 = arith.addf %896, %905 : vector<16x16xf32>
    %c105 = arith.constant 105 : index
    %907 = memref.load %arg4[%c105] : memref<108xf32, #tpu.memory_space<smem>>
    %908 = vector.broadcast %907 : f32 to vector<16x16xf32>
    %909 = arith.mulf %908, %902 : vector<16x16xf32>
    %910 = arith.addf %900, %909 : vector<16x16xf32>
    %c5_358 = arith.constant 5 : index
    %c2_359 = arith.constant 2 : index
    %c1_360 = arith.constant 1 : index
    %911 = vector.load %arg10[%c5_358, %c2_359, %c1_360] : memref<8x18x18xf32, #tpu.memory_space<vmem>>, vector<1x16x16xf32>
    %912 = vector.shape_cast %911 : vector<1x16x16xf32> to vector<16x16xf32>
    %c52_361 = arith.constant 52 : index
    %913 = memref.load %arg4[%c52_361] : memref<108xf32, #tpu.memory_space<smem>>
    %914 = vector.broadcast %913 : f32 to vector<16x16xf32>
    %915 = arith.mulf %914, %912 : vector<16x16xf32>
    %916 = arith.addf %906, %915 : vector<16x16xf32>
    %c106 = arith.constant 106 : index
    %917 = memref.load %arg4[%c106] : memref<108xf32, #tpu.memory_space<smem>>
    %918 = vector.broadcast %917 : f32 to vector<16x16xf32>
    %919 = arith.mulf %918, %912 : vector<16x16xf32>
    %920 = arith.addf %910, %919 : vector<16x16xf32>
    %c5_362 = arith.constant 5 : index
    %c2_363 = arith.constant 2 : index
    %c2_364 = arith.constant 2 : index
    %921 = vector.load %arg10[%c5_362, %c2_363, %c2_364] : memref<8x18x18xf32, #tpu.memory_space<vmem>>, vector<1x16x16xf32>
    %922 = vector.shape_cast %921 : vector<1x16x16xf32> to vector<16x16xf32>
    %c53_365 = arith.constant 53 : index
    %923 = memref.load %arg4[%c53_365] : memref<108xf32, #tpu.memory_space<smem>>
    %924 = vector.broadcast %923 : f32 to vector<16x16xf32>
    %925 = arith.mulf %924, %922 : vector<16x16xf32>
    %926 = arith.addf %916, %925 : vector<16x16xf32>
    %c107 = arith.constant 107 : index
    %927 = memref.load %arg4[%c107] : memref<108xf32, #tpu.memory_space<smem>>
    %928 = vector.broadcast %927 : f32 to vector<16x16xf32>
    %929 = arith.mulf %928, %922 : vector<16x16xf32>
    %930 = arith.addf %920, %929 : vector<16x16xf32>
    %cst_366 = arith.constant 0.000000e+00 : f32
    %931 = vector.broadcast %cst_366 : f32 to vector<16x16xf32>
    %932 = arith.cmpf ogt, %926, %931 : vector<16x16xf32>
    %933 = vector.broadcast %386 : f32 to vector<16x16xf32>
    %934 = arith.mulf %933, %926 : vector<16x16xf32>
    %935 = arith.select %932, %926, %934 : vector<16x16xi1>, vector<16x16xf32>
    %cst_367 = arith.constant 0.000000e+00 : f32
    %936 = vector.broadcast %cst_367 : f32 to vector<16x16xf32>
    %937 = arith.cmpf ogt, %930, %936 : vector<16x16xf32>
    %938 = vector.broadcast %386 : f32 to vector<16x16xf32>
    %939 = arith.mulf %938, %930 : vector<16x16xf32>
    %940 = arith.select %937, %930, %939 : vector<16x16xi1>, vector<16x16xf32>
    %c6_368 = arith.constant 6 : index
    %c1_369 = arith.constant 1 : index
    %c1_370 = arith.constant 1 : index
    %941 = vector.load %arg10[%c6_368, %c1_369, %c1_370] : memref<8x18x18xf32, #tpu.memory_space<vmem>>, vector<1x16x16xf32>
    %942 = vector.shape_cast %941 : vector<1x16x16xf32> to vector<16x16xf32>
    %943 = vector.shape_cast %935 : vector<16x16xf32> to vector<1x16x16xf32>
    tpu.vector_store %arg10[%c6_368, %c1_369, %c1_370], %943 {strides = array<i32>} : memref<8x18x18xf32, #tpu.memory_space<vmem>>, vector<1x16x16xf32>,
    %c7_371 = arith.constant 7 : index
    %c1_372 = arith.constant 1 : index
    %c1_373 = arith.constant 1 : index
    %944 = vector.load %arg10[%c7_371, %c1_372, %c1_373] : memref<8x18x18xf32, #tpu.memory_space<vmem>>, vector<1x16x16xf32>
    %945 = vector.shape_cast %944 : vector<1x16x16xf32> to vector<16x16xf32>
    %946 = vector.shape_cast %940 : vector<16x16xf32> to vector<1x16x16xf32>
    tpu.vector_store %arg10[%c7_371, %c1_372, %c1_373], %946 {strides = array<i32>} : memref<8x18x18xf32, #tpu.memory_space<vmem>>, vector<1x16x16xf32>,
    %c2_374 = arith.constant 2 : index
    %947 = memref.load %arg8[%c2_374] : memref<3xf32, #tpu.memory_space<smem>>
    %c0_375 = arith.constant 0 : index
    %948 = memref.load %arg7[%c0_375] : memref<4xf32, #tpu.memory_space<smem>>
    %949 = vector.broadcast %948 : f32 to vector<16x16xf32>
    %c1_376 = arith.constant 1 : index
    %950 = memref.load %arg7[%c1_376] : memref<4xf32, #tpu.memory_space<smem>>
    %951 = vector.broadcast %950 : f32 to vector<16x16xf32>
    %c2_377 = arith.constant 2 : index
    %952 = memref.load %arg7[%c2_377] : memref<4xf32, #tpu.memory_space<smem>>
    %953 = vector.broadcast %952 : f32 to vector<16x16xf32>
    %c3_378 = arith.constant 3 : index
    %954 = memref.load %arg7[%c3_378] : memref<4xf32, #tpu.memory_space<smem>>
    %955 = vector.broadcast %954 : f32 to vector<16x16xf32>
    %c0_379 = arith.constant 0 : index
    %c0_380 = arith.constant 0 : index
    %c0_381 = arith.constant 0 : index
    %956 = vector.load %arg10[%c0_379, %c0_380, %c0_381] : memref<8x18x18xf32, #tpu.memory_space<vmem>>, vector<1x16x16xf32>
    %957 = vector.shape_cast %956 : vector<1x16x16xf32> to vector<16x16xf32>
    %c0_382 = arith.constant 0 : index
    %958 = memref.load %arg6[%c0_382] : memref<288xf32, #tpu.memory_space<smem>>
    %959 = vector.broadcast %958 : f32 to vector<16x16xf32>
    %960 = arith.mulf %959, %957 : vector<16x16xf32>
    %961 = arith.addf %949, %960 : vector<16x16xf32>
    %c72_383 = arith.constant 72 : index
    %962 = memref.load %arg6[%c72_383] : memref<288xf32, #tpu.memory_space<smem>>
    %963 = vector.broadcast %962 : f32 to vector<16x16xf32>
    %964 = arith.mulf %963, %957 : vector<16x16xf32>
    %965 = arith.addf %951, %964 : vector<16x16xf32>
    %c144 = arith.constant 144 : index
    %966 = memref.load %arg6[%c144] : memref<288xf32, #tpu.memory_space<smem>>
    %967 = vector.broadcast %966 : f32 to vector<16x16xf32>
    %968 = arith.mulf %967, %957 : vector<16x16xf32>
    %969 = arith.addf %953, %968 : vector<16x16xf32>
    %c216 = arith.constant 216 : index
    %970 = memref.load %arg6[%c216] : memref<288xf32, #tpu.memory_space<smem>>
    %971 = vector.broadcast %970 : f32 to vector<16x16xf32>
    %972 = arith.mulf %971, %957 : vector<16x16xf32>
    %973 = arith.addf %955, %972 : vector<16x16xf32>
    %c0_384 = arith.constant 0 : index
    %c0_385 = arith.constant 0 : index
    %c1_386 = arith.constant 1 : index
    %974 = vector.load %arg10[%c0_384, %c0_385, %c1_386] : memref<8x18x18xf32, #tpu.memory_space<vmem>>, vector<1x16x16xf32>
    %975 = vector.shape_cast %974 : vector<1x16x16xf32> to vector<16x16xf32>
    %c1_387 = arith.constant 1 : index
    %976 = memref.load %arg6[%c1_387] : memref<288xf32, #tpu.memory_space<smem>>
    %977 = vector.broadcast %976 : f32 to vector<16x16xf32>
    %978 = arith.mulf %977, %975 : vector<16x16xf32>
    %979 = arith.addf %961, %978 : vector<16x16xf32>
    %c73_388 = arith.constant 73 : index
    %980 = memref.load %arg6[%c73_388] : memref<288xf32, #tpu.memory_space<smem>>
    %981 = vector.broadcast %980 : f32 to vector<16x16xf32>
    %982 = arith.mulf %981, %975 : vector<16x16xf32>
    %983 = arith.addf %965, %982 : vector<16x16xf32>
    %c145 = arith.constant 145 : index
    %984 = memref.load %arg6[%c145] : memref<288xf32, #tpu.memory_space<smem>>
    %985 = vector.broadcast %984 : f32 to vector<16x16xf32>
    %986 = arith.mulf %985, %975 : vector<16x16xf32>
    %987 = arith.addf %969, %986 : vector<16x16xf32>
    %c217 = arith.constant 217 : index
    %988 = memref.load %arg6[%c217] : memref<288xf32, #tpu.memory_space<smem>>
    %989 = vector.broadcast %988 : f32 to vector<16x16xf32>
    %990 = arith.mulf %989, %975 : vector<16x16xf32>
    %991 = arith.addf %973, %990 : vector<16x16xf32>
    %c0_389 = arith.constant 0 : index
    %c0_390 = arith.constant 0 : index
    %c2_391 = arith.constant 2 : index
    %992 = vector.load %arg10[%c0_389, %c0_390, %c2_391] : memref<8x18x18xf32, #tpu.memory_space<vmem>>, vector<1x16x16xf32>
    %993 = vector.shape_cast %992 : vector<1x16x16xf32> to vector<16x16xf32>
    %c2_392 = arith.constant 2 : index
    %994 = memref.load %arg6[%c2_392] : memref<288xf32, #tpu.memory_space<smem>>
    %995 = vector.broadcast %994 : f32 to vector<16x16xf32>
    %996 = arith.mulf %995, %993 : vector<16x16xf32>
    %997 = arith.addf %979, %996 : vector<16x16xf32>
    %c74_393 = arith.constant 74 : index
    %998 = memref.load %arg6[%c74_393] : memref<288xf32, #tpu.memory_space<smem>>
    %999 = vector.broadcast %998 : f32 to vector<16x16xf32>
    %1000 = arith.mulf %999, %993 : vector<16x16xf32>
    %1001 = arith.addf %983, %1000 : vector<16x16xf32>
    %c146 = arith.constant 146 : index
    %1002 = memref.load %arg6[%c146] : memref<288xf32, #tpu.memory_space<smem>>
    %1003 = vector.broadcast %1002 : f32 to vector<16x16xf32>
    %1004 = arith.mulf %1003, %993 : vector<16x16xf32>
    %1005 = arith.addf %987, %1004 : vector<16x16xf32>
    %c218 = arith.constant 218 : index
    %1006 = memref.load %arg6[%c218] : memref<288xf32, #tpu.memory_space<smem>>
    %1007 = vector.broadcast %1006 : f32 to vector<16x16xf32>
    %1008 = arith.mulf %1007, %993 : vector<16x16xf32>
    %1009 = arith.addf %991, %1008 : vector<16x16xf32>
    %c0_394 = arith.constant 0 : index
    %c1_395 = arith.constant 1 : index
    %c0_396 = arith.constant 0 : index
    %1010 = vector.load %arg10[%c0_394, %c1_395, %c0_396] : memref<8x18x18xf32, #tpu.memory_space<vmem>>, vector<1x16x16xf32>
    %1011 = vector.shape_cast %1010 : vector<1x16x16xf32> to vector<16x16xf32>
    %c3_397 = arith.constant 3 : index
    %1012 = memref.load %arg6[%c3_397] : memref<288xf32, #tpu.memory_space<smem>>
    %1013 = vector.broadcast %1012 : f32 to vector<16x16xf32>
    %1014 = arith.mulf %1013, %1011 : vector<16x16xf32>
    %1015 = arith.addf %997, %1014 : vector<16x16xf32>
    %c75_398 = arith.constant 75 : index
    %1016 = memref.load %arg6[%c75_398] : memref<288xf32, #tpu.memory_space<smem>>
    %1017 = vector.broadcast %1016 : f32 to vector<16x16xf32>
    %1018 = arith.mulf %1017, %1011 : vector<16x16xf32>
    %1019 = arith.addf %1001, %1018 : vector<16x16xf32>
    %c147 = arith.constant 147 : index
    %1020 = memref.load %arg6[%c147] : memref<288xf32, #tpu.memory_space<smem>>
    %1021 = vector.broadcast %1020 : f32 to vector<16x16xf32>
    %1022 = arith.mulf %1021, %1011 : vector<16x16xf32>
    %1023 = arith.addf %1005, %1022 : vector<16x16xf32>
    %c219 = arith.constant 219 : index
    %1024 = memref.load %arg6[%c219] : memref<288xf32, #tpu.memory_space<smem>>
    %1025 = vector.broadcast %1024 : f32 to vector<16x16xf32>
    %1026 = arith.mulf %1025, %1011 : vector<16x16xf32>
    %1027 = arith.addf %1009, %1026 : vector<16x16xf32>
    %c0_399 = arith.constant 0 : index
    %c1_400 = arith.constant 1 : index
    %c1_401 = arith.constant 1 : index
    %1028 = vector.load %arg10[%c0_399, %c1_400, %c1_401] : memref<8x18x18xf32, #tpu.memory_space<vmem>>, vector<1x16x16xf32>
    %1029 = vector.shape_cast %1028 : vector<1x16x16xf32> to vector<16x16xf32>
    %c4_402 = arith.constant 4 : index
    %1030 = memref.load %arg6[%c4_402] : memref<288xf32, #tpu.memory_space<smem>>
    %1031 = vector.broadcast %1030 : f32 to vector<16x16xf32>
    %1032 = arith.mulf %1031, %1029 : vector<16x16xf32>
    %1033 = arith.addf %1015, %1032 : vector<16x16xf32>
    %c76_403 = arith.constant 76 : index
    %1034 = memref.load %arg6[%c76_403] : memref<288xf32, #tpu.memory_space<smem>>
    %1035 = vector.broadcast %1034 : f32 to vector<16x16xf32>
    %1036 = arith.mulf %1035, %1029 : vector<16x16xf32>
    %1037 = arith.addf %1019, %1036 : vector<16x16xf32>
    %c148 = arith.constant 148 : index
    %1038 = memref.load %arg6[%c148] : memref<288xf32, #tpu.memory_space<smem>>
    %1039 = vector.broadcast %1038 : f32 to vector<16x16xf32>
    %1040 = arith.mulf %1039, %1029 : vector<16x16xf32>
    %1041 = arith.addf %1023, %1040 : vector<16x16xf32>
    %c220 = arith.constant 220 : index
    %1042 = memref.load %arg6[%c220] : memref<288xf32, #tpu.memory_space<smem>>
    %1043 = vector.broadcast %1042 : f32 to vector<16x16xf32>
    %1044 = arith.mulf %1043, %1029 : vector<16x16xf32>
    %1045 = arith.addf %1027, %1044 : vector<16x16xf32>
    %c0_404 = arith.constant 0 : index
    %c1_405 = arith.constant 1 : index
    %c2_406 = arith.constant 2 : index
    %1046 = vector.load %arg10[%c0_404, %c1_405, %c2_406] : memref<8x18x18xf32, #tpu.memory_space<vmem>>, vector<1x16x16xf32>
    %1047 = vector.shape_cast %1046 : vector<1x16x16xf32> to vector<16x16xf32>
    %c5_407 = arith.constant 5 : index
    %1048 = memref.load %arg6[%c5_407] : memref<288xf32, #tpu.memory_space<smem>>
    %1049 = vector.broadcast %1048 : f32 to vector<16x16xf32>
    %1050 = arith.mulf %1049, %1047 : vector<16x16xf32>
    %1051 = arith.addf %1033, %1050 : vector<16x16xf32>
    %c77_408 = arith.constant 77 : index
    %1052 = memref.load %arg6[%c77_408] : memref<288xf32, #tpu.memory_space<smem>>
    %1053 = vector.broadcast %1052 : f32 to vector<16x16xf32>
    %1054 = arith.mulf %1053, %1047 : vector<16x16xf32>
    %1055 = arith.addf %1037, %1054 : vector<16x16xf32>
    %c149 = arith.constant 149 : index
    %1056 = memref.load %arg6[%c149] : memref<288xf32, #tpu.memory_space<smem>>
    %1057 = vector.broadcast %1056 : f32 to vector<16x16xf32>
    %1058 = arith.mulf %1057, %1047 : vector<16x16xf32>
    %1059 = arith.addf %1041, %1058 : vector<16x16xf32>
    %c221 = arith.constant 221 : index
    %1060 = memref.load %arg6[%c221] : memref<288xf32, #tpu.memory_space<smem>>
    %1061 = vector.broadcast %1060 : f32 to vector<16x16xf32>
    %1062 = arith.mulf %1061, %1047 : vector<16x16xf32>
    %1063 = arith.addf %1045, %1062 : vector<16x16xf32>
    %c0_409 = arith.constant 0 : index
    %c2_410 = arith.constant 2 : index
    %c0_411 = arith.constant 0 : index
    %1064 = vector.load %arg10[%c0_409, %c2_410, %c0_411] : memref<8x18x18xf32, #tpu.memory_space<vmem>>, vector<1x16x16xf32>
    %1065 = vector.shape_cast %1064 : vector<1x16x16xf32> to vector<16x16xf32>
    %c6_412 = arith.constant 6 : index
    %1066 = memref.load %arg6[%c6_412] : memref<288xf32, #tpu.memory_space<smem>>
    %1067 = vector.broadcast %1066 : f32 to vector<16x16xf32>
    %1068 = arith.mulf %1067, %1065 : vector<16x16xf32>
    %1069 = arith.addf %1051, %1068 : vector<16x16xf32>
    %c78_413 = arith.constant 78 : index
    %1070 = memref.load %arg6[%c78_413] : memref<288xf32, #tpu.memory_space<smem>>
    %1071 = vector.broadcast %1070 : f32 to vector<16x16xf32>
    %1072 = arith.mulf %1071, %1065 : vector<16x16xf32>
    %1073 = arith.addf %1055, %1072 : vector<16x16xf32>
    %c150 = arith.constant 150 : index
    %1074 = memref.load %arg6[%c150] : memref<288xf32, #tpu.memory_space<smem>>
    %1075 = vector.broadcast %1074 : f32 to vector<16x16xf32>
    %1076 = arith.mulf %1075, %1065 : vector<16x16xf32>
    %1077 = arith.addf %1059, %1076 : vector<16x16xf32>
    %c222 = arith.constant 222 : index
    %1078 = memref.load %arg6[%c222] : memref<288xf32, #tpu.memory_space<smem>>
    %1079 = vector.broadcast %1078 : f32 to vector<16x16xf32>
    %1080 = arith.mulf %1079, %1065 : vector<16x16xf32>
    %1081 = arith.addf %1063, %1080 : vector<16x16xf32>
    %c0_414 = arith.constant 0 : index
    %c2_415 = arith.constant 2 : index
    %c1_416 = arith.constant 1 : index
    %1082 = vector.load %arg10[%c0_414, %c2_415, %c1_416] : memref<8x18x18xf32, #tpu.memory_space<vmem>>, vector<1x16x16xf32>
    %1083 = vector.shape_cast %1082 : vector<1x16x16xf32> to vector<16x16xf32>
    %c7_417 = arith.constant 7 : index
    %1084 = memref.load %arg6[%c7_417] : memref<288xf32, #tpu.memory_space<smem>>
    %1085 = vector.broadcast %1084 : f32 to vector<16x16xf32>
    %1086 = arith.mulf %1085, %1083 : vector<16x16xf32>
    %1087 = arith.addf %1069, %1086 : vector<16x16xf32>
    %c79_418 = arith.constant 79 : index
    %1088 = memref.load %arg6[%c79_418] : memref<288xf32, #tpu.memory_space<smem>>
    %1089 = vector.broadcast %1088 : f32 to vector<16x16xf32>
    %1090 = arith.mulf %1089, %1083 : vector<16x16xf32>
    %1091 = arith.addf %1073, %1090 : vector<16x16xf32>
    %c151 = arith.constant 151 : index
    %1092 = memref.load %arg6[%c151] : memref<288xf32, #tpu.memory_space<smem>>
    %1093 = vector.broadcast %1092 : f32 to vector<16x16xf32>
    %1094 = arith.mulf %1093, %1083 : vector<16x16xf32>
    %1095 = arith.addf %1077, %1094 : vector<16x16xf32>
    %c223 = arith.constant 223 : index
    %1096 = memref.load %arg6[%c223] : memref<288xf32, #tpu.memory_space<smem>>
    %1097 = vector.broadcast %1096 : f32 to vector<16x16xf32>
    %1098 = arith.mulf %1097, %1083 : vector<16x16xf32>
    %1099 = arith.addf %1081, %1098 : vector<16x16xf32>
    %c0_419 = arith.constant 0 : index
    %c2_420 = arith.constant 2 : index
    %c2_421 = arith.constant 2 : index
    %1100 = vector.load %arg10[%c0_419, %c2_420, %c2_421] : memref<8x18x18xf32, #tpu.memory_space<vmem>>, vector<1x16x16xf32>
    %1101 = vector.shape_cast %1100 : vector<1x16x16xf32> to vector<16x16xf32>
    %c8_422 = arith.constant 8 : index
    %1102 = memref.load %arg6[%c8_422] : memref<288xf32, #tpu.memory_space<smem>>
    %1103 = vector.broadcast %1102 : f32 to vector<16x16xf32>
    %1104 = arith.mulf %1103, %1101 : vector<16x16xf32>
    %1105 = arith.addf %1087, %1104 : vector<16x16xf32>
    %c80_423 = arith.constant 80 : index
    %1106 = memref.load %arg6[%c80_423] : memref<288xf32, #tpu.memory_space<smem>>
    %1107 = vector.broadcast %1106 : f32 to vector<16x16xf32>
    %1108 = arith.mulf %1107, %1101 : vector<16x16xf32>
    %1109 = arith.addf %1091, %1108 : vector<16x16xf32>
    %c152 = arith.constant 152 : index
    %1110 = memref.load %arg6[%c152] : memref<288xf32, #tpu.memory_space<smem>>
    %1111 = vector.broadcast %1110 : f32 to vector<16x16xf32>
    %1112 = arith.mulf %1111, %1101 : vector<16x16xf32>
    %1113 = arith.addf %1095, %1112 : vector<16x16xf32>
    %c224 = arith.constant 224 : index
    %1114 = memref.load %arg6[%c224] : memref<288xf32, #tpu.memory_space<smem>>
    %1115 = vector.broadcast %1114 : f32 to vector<16x16xf32>
    %1116 = arith.mulf %1115, %1101 : vector<16x16xf32>
    %1117 = arith.addf %1099, %1116 : vector<16x16xf32>
    %c1_424 = arith.constant 1 : index
    %c0_425 = arith.constant 0 : index
    %c0_426 = arith.constant 0 : index
    %1118 = vector.load %arg10[%c1_424, %c0_425, %c0_426] : memref<8x18x18xf32, #tpu.memory_space<vmem>>, vector<1x16x16xf32>
    %1119 = vector.shape_cast %1118 : vector<1x16x16xf32> to vector<16x16xf32>
    %c9_427 = arith.constant 9 : index
    %1120 = memref.load %arg6[%c9_427] : memref<288xf32, #tpu.memory_space<smem>>
    %1121 = vector.broadcast %1120 : f32 to vector<16x16xf32>
    %1122 = arith.mulf %1121, %1119 : vector<16x16xf32>
    %1123 = arith.addf %1105, %1122 : vector<16x16xf32>
    %c81_428 = arith.constant 81 : index
    %1124 = memref.load %arg6[%c81_428] : memref<288xf32, #tpu.memory_space<smem>>
    %1125 = vector.broadcast %1124 : f32 to vector<16x16xf32>
    %1126 = arith.mulf %1125, %1119 : vector<16x16xf32>
    %1127 = arith.addf %1109, %1126 : vector<16x16xf32>
    %c153 = arith.constant 153 : index
    %1128 = memref.load %arg6[%c153] : memref<288xf32, #tpu.memory_space<smem>>
    %1129 = vector.broadcast %1128 : f32 to vector<16x16xf32>
    %1130 = arith.mulf %1129, %1119 : vector<16x16xf32>
    %1131 = arith.addf %1113, %1130 : vector<16x16xf32>
    %c225 = arith.constant 225 : index
    %1132 = memref.load %arg6[%c225] : memref<288xf32, #tpu.memory_space<smem>>
    %1133 = vector.broadcast %1132 : f32 to vector<16x16xf32>
    %1134 = arith.mulf %1133, %1119 : vector<16x16xf32>
    %1135 = arith.addf %1117, %1134 : vector<16x16xf32>
    %c1_429 = arith.constant 1 : index
    %c0_430 = arith.constant 0 : index
    %c1_431 = arith.constant 1 : index
    %1136 = vector.load %arg10[%c1_429, %c0_430, %c1_431] : memref<8x18x18xf32, #tpu.memory_space<vmem>>, vector<1x16x16xf32>
    %1137 = vector.shape_cast %1136 : vector<1x16x16xf32> to vector<16x16xf32>
    %c10_432 = arith.constant 10 : index
    %1138 = memref.load %arg6[%c10_432] : memref<288xf32, #tpu.memory_space<smem>>
    %1139 = vector.broadcast %1138 : f32 to vector<16x16xf32>
    %1140 = arith.mulf %1139, %1137 : vector<16x16xf32>
    %1141 = arith.addf %1123, %1140 : vector<16x16xf32>
    %c82_433 = arith.constant 82 : index
    %1142 = memref.load %arg6[%c82_433] : memref<288xf32, #tpu.memory_space<smem>>
    %1143 = vector.broadcast %1142 : f32 to vector<16x16xf32>
    %1144 = arith.mulf %1143, %1137 : vector<16x16xf32>
    %1145 = arith.addf %1127, %1144 : vector<16x16xf32>
    %c154 = arith.constant 154 : index
    %1146 = memref.load %arg6[%c154] : memref<288xf32, #tpu.memory_space<smem>>
    %1147 = vector.broadcast %1146 : f32 to vector<16x16xf32>
    %1148 = arith.mulf %1147, %1137 : vector<16x16xf32>
    %1149 = arith.addf %1131, %1148 : vector<16x16xf32>
    %c226 = arith.constant 226 : index
    %1150 = memref.load %arg6[%c226] : memref<288xf32, #tpu.memory_space<smem>>
    %1151 = vector.broadcast %1150 : f32 to vector<16x16xf32>
    %1152 = arith.mulf %1151, %1137 : vector<16x16xf32>
    %1153 = arith.addf %1135, %1152 : vector<16x16xf32>
    %c1_434 = arith.constant 1 : index
    %c0_435 = arith.constant 0 : index
    %c2_436 = arith.constant 2 : index
    %1154 = vector.load %arg10[%c1_434, %c0_435, %c2_436] : memref<8x18x18xf32, #tpu.memory_space<vmem>>, vector<1x16x16xf32>
    %1155 = vector.shape_cast %1154 : vector<1x16x16xf32> to vector<16x16xf32>
    %c11_437 = arith.constant 11 : index
    %1156 = memref.load %arg6[%c11_437] : memref<288xf32, #tpu.memory_space<smem>>
    %1157 = vector.broadcast %1156 : f32 to vector<16x16xf32>
    %1158 = arith.mulf %1157, %1155 : vector<16x16xf32>
    %1159 = arith.addf %1141, %1158 : vector<16x16xf32>
    %c83_438 = arith.constant 83 : index
    %1160 = memref.load %arg6[%c83_438] : memref<288xf32, #tpu.memory_space<smem>>
    %1161 = vector.broadcast %1160 : f32 to vector<16x16xf32>
    %1162 = arith.mulf %1161, %1155 : vector<16x16xf32>
    %1163 = arith.addf %1145, %1162 : vector<16x16xf32>
    %c155 = arith.constant 155 : index
    %1164 = memref.load %arg6[%c155] : memref<288xf32, #tpu.memory_space<smem>>
    %1165 = vector.broadcast %1164 : f32 to vector<16x16xf32>
    %1166 = arith.mulf %1165, %1155 : vector<16x16xf32>
    %1167 = arith.addf %1149, %1166 : vector<16x16xf32>
    %c227 = arith.constant 227 : index
    %1168 = memref.load %arg6[%c227] : memref<288xf32, #tpu.memory_space<smem>>
    %1169 = vector.broadcast %1168 : f32 to vector<16x16xf32>
    %1170 = arith.mulf %1169, %1155 : vector<16x16xf32>
    %1171 = arith.addf %1153, %1170 : vector<16x16xf32>
    %c1_439 = arith.constant 1 : index
    %c1_440 = arith.constant 1 : index
    %c0_441 = arith.constant 0 : index
    %1172 = vector.load %arg10[%c1_439, %c1_440, %c0_441] : memref<8x18x18xf32, #tpu.memory_space<vmem>>, vector<1x16x16xf32>
    %1173 = vector.shape_cast %1172 : vector<1x16x16xf32> to vector<16x16xf32>
    %c12_442 = arith.constant 12 : index
    %1174 = memref.load %arg6[%c12_442] : memref<288xf32, #tpu.memory_space<smem>>
    %1175 = vector.broadcast %1174 : f32 to vector<16x16xf32>
    %1176 = arith.mulf %1175, %1173 : vector<16x16xf32>
    %1177 = arith.addf %1159, %1176 : vector<16x16xf32>
    %c84_443 = arith.constant 84 : index
    %1178 = memref.load %arg6[%c84_443] : memref<288xf32, #tpu.memory_space<smem>>
    %1179 = vector.broadcast %1178 : f32 to vector<16x16xf32>
    %1180 = arith.mulf %1179, %1173 : vector<16x16xf32>
    %1181 = arith.addf %1163, %1180 : vector<16x16xf32>
    %c156 = arith.constant 156 : index
    %1182 = memref.load %arg6[%c156] : memref<288xf32, #tpu.memory_space<smem>>
    %1183 = vector.broadcast %1182 : f32 to vector<16x16xf32>
    %1184 = arith.mulf %1183, %1173 : vector<16x16xf32>
    %1185 = arith.addf %1167, %1184 : vector<16x16xf32>
    %c228 = arith.constant 228 : index
    %1186 = memref.load %arg6[%c228] : memref<288xf32, #tpu.memory_space<smem>>
    %1187 = vector.broadcast %1186 : f32 to vector<16x16xf32>
    %1188 = arith.mulf %1187, %1173 : vector<16x16xf32>
    %1189 = arith.addf %1171, %1188 : vector<16x16xf32>
    %c1_444 = arith.constant 1 : index
    %c1_445 = arith.constant 1 : index
    %c1_446 = arith.constant 1 : index
    %1190 = vector.load %arg10[%c1_444, %c1_445, %c1_446] : memref<8x18x18xf32, #tpu.memory_space<vmem>>, vector<1x16x16xf32>
    %1191 = vector.shape_cast %1190 : vector<1x16x16xf32> to vector<16x16xf32>
    %c13_447 = arith.constant 13 : index
    %1192 = memref.load %arg6[%c13_447] : memref<288xf32, #tpu.memory_space<smem>>
    %1193 = vector.broadcast %1192 : f32 to vector<16x16xf32>
    %1194 = arith.mulf %1193, %1191 : vector<16x16xf32>
    %1195 = arith.addf %1177, %1194 : vector<16x16xf32>
    %c85_448 = arith.constant 85 : index
    %1196 = memref.load %arg6[%c85_448] : memref<288xf32, #tpu.memory_space<smem>>
    %1197 = vector.broadcast %1196 : f32 to vector<16x16xf32>
    %1198 = arith.mulf %1197, %1191 : vector<16x16xf32>
    %1199 = arith.addf %1181, %1198 : vector<16x16xf32>
    %c157 = arith.constant 157 : index
    %1200 = memref.load %arg6[%c157] : memref<288xf32, #tpu.memory_space<smem>>
    %1201 = vector.broadcast %1200 : f32 to vector<16x16xf32>
    %1202 = arith.mulf %1201, %1191 : vector<16x16xf32>
    %1203 = arith.addf %1185, %1202 : vector<16x16xf32>
    %c229 = arith.constant 229 : index
    %1204 = memref.load %arg6[%c229] : memref<288xf32, #tpu.memory_space<smem>>
    %1205 = vector.broadcast %1204 : f32 to vector<16x16xf32>
    %1206 = arith.mulf %1205, %1191 : vector<16x16xf32>
    %1207 = arith.addf %1189, %1206 : vector<16x16xf32>
    %c1_449 = arith.constant 1 : index
    %c1_450 = arith.constant 1 : index
    %c2_451 = arith.constant 2 : index
    %1208 = vector.load %arg10[%c1_449, %c1_450, %c2_451] : memref<8x18x18xf32, #tpu.memory_space<vmem>>, vector<1x16x16xf32>
    %1209 = vector.shape_cast %1208 : vector<1x16x16xf32> to vector<16x16xf32>
    %c14_452 = arith.constant 14 : index
    %1210 = memref.load %arg6[%c14_452] : memref<288xf32, #tpu.memory_space<smem>>
    %1211 = vector.broadcast %1210 : f32 to vector<16x16xf32>
    %1212 = arith.mulf %1211, %1209 : vector<16x16xf32>
    %1213 = arith.addf %1195, %1212 : vector<16x16xf32>
    %c86_453 = arith.constant 86 : index
    %1214 = memref.load %arg6[%c86_453] : memref<288xf32, #tpu.memory_space<smem>>
    %1215 = vector.broadcast %1214 : f32 to vector<16x16xf32>
    %1216 = arith.mulf %1215, %1209 : vector<16x16xf32>
    %1217 = arith.addf %1199, %1216 : vector<16x16xf32>
    %c158 = arith.constant 158 : index
    %1218 = memref.load %arg6[%c158] : memref<288xf32, #tpu.memory_space<smem>>
    %1219 = vector.broadcast %1218 : f32 to vector<16x16xf32>
    %1220 = arith.mulf %1219, %1209 : vector<16x16xf32>
    %1221 = arith.addf %1203, %1220 : vector<16x16xf32>
    %c230 = arith.constant 230 : index
    %1222 = memref.load %arg6[%c230] : memref<288xf32, #tpu.memory_space<smem>>
    %1223 = vector.broadcast %1222 : f32 to vector<16x16xf32>
    %1224 = arith.mulf %1223, %1209 : vector<16x16xf32>
    %1225 = arith.addf %1207, %1224 : vector<16x16xf32>
    %c1_454 = arith.constant 1 : index
    %c2_455 = arith.constant 2 : index
    %c0_456 = arith.constant 0 : index
    %1226 = vector.load %arg10[%c1_454, %c2_455, %c0_456] : memref<8x18x18xf32, #tpu.memory_space<vmem>>, vector<1x16x16xf32>
    %1227 = vector.shape_cast %1226 : vector<1x16x16xf32> to vector<16x16xf32>
    %c15_457 = arith.constant 15 : index
    %1228 = memref.load %arg6[%c15_457] : memref<288xf32, #tpu.memory_space<smem>>
    %1229 = vector.broadcast %1228 : f32 to vector<16x16xf32>
    %1230 = arith.mulf %1229, %1227 : vector<16x16xf32>
    %1231 = arith.addf %1213, %1230 : vector<16x16xf32>
    %c87_458 = arith.constant 87 : index
    %1232 = memref.load %arg6[%c87_458] : memref<288xf32, #tpu.memory_space<smem>>
    %1233 = vector.broadcast %1232 : f32 to vector<16x16xf32>
    %1234 = arith.mulf %1233, %1227 : vector<16x16xf32>
    %1235 = arith.addf %1217, %1234 : vector<16x16xf32>
    %c159 = arith.constant 159 : index
    %1236 = memref.load %arg6[%c159] : memref<288xf32, #tpu.memory_space<smem>>
    %1237 = vector.broadcast %1236 : f32 to vector<16x16xf32>
    %1238 = arith.mulf %1237, %1227 : vector<16x16xf32>
    %1239 = arith.addf %1221, %1238 : vector<16x16xf32>
    %c231 = arith.constant 231 : index
    %1240 = memref.load %arg6[%c231] : memref<288xf32, #tpu.memory_space<smem>>
    %1241 = vector.broadcast %1240 : f32 to vector<16x16xf32>
    %1242 = arith.mulf %1241, %1227 : vector<16x16xf32>
    %1243 = arith.addf %1225, %1242 : vector<16x16xf32>
    %c1_459 = arith.constant 1 : index
    %c2_460 = arith.constant 2 : index
    %c1_461 = arith.constant 1 : index
    %1244 = vector.load %arg10[%c1_459, %c2_460, %c1_461] : memref<8x18x18xf32, #tpu.memory_space<vmem>>, vector<1x16x16xf32>
    %1245 = vector.shape_cast %1244 : vector<1x16x16xf32> to vector<16x16xf32>
    %c16_462 = arith.constant 16 : index
    %1246 = memref.load %arg6[%c16_462] : memref<288xf32, #tpu.memory_space<smem>>
    %1247 = vector.broadcast %1246 : f32 to vector<16x16xf32>
    %1248 = arith.mulf %1247, %1245 : vector<16x16xf32>
    %1249 = arith.addf %1231, %1248 : vector<16x16xf32>
    %c88_463 = arith.constant 88 : index
    %1250 = memref.load %arg6[%c88_463] : memref<288xf32, #tpu.memory_space<smem>>
    %1251 = vector.broadcast %1250 : f32 to vector<16x16xf32>
    %1252 = arith.mulf %1251, %1245 : vector<16x16xf32>
    %1253 = arith.addf %1235, %1252 : vector<16x16xf32>
    %c160 = arith.constant 160 : index
    %1254 = memref.load %arg6[%c160] : memref<288xf32, #tpu.memory_space<smem>>
    %1255 = vector.broadcast %1254 : f32 to vector<16x16xf32>
    %1256 = arith.mulf %1255, %1245 : vector<16x16xf32>
    %1257 = arith.addf %1239, %1256 : vector<16x16xf32>
    %c232 = arith.constant 232 : index
    %1258 = memref.load %arg6[%c232] : memref<288xf32, #tpu.memory_space<smem>>
    %1259 = vector.broadcast %1258 : f32 to vector<16x16xf32>
    %1260 = arith.mulf %1259, %1245 : vector<16x16xf32>
    %1261 = arith.addf %1243, %1260 : vector<16x16xf32>
    %c1_464 = arith.constant 1 : index
    %c2_465 = arith.constant 2 : index
    %c2_466 = arith.constant 2 : index
    %1262 = vector.load %arg10[%c1_464, %c2_465, %c2_466] : memref<8x18x18xf32, #tpu.memory_space<vmem>>, vector<1x16x16xf32>
    %1263 = vector.shape_cast %1262 : vector<1x16x16xf32> to vector<16x16xf32>
    %c17_467 = arith.constant 17 : index
    %1264 = memref.load %arg6[%c17_467] : memref<288xf32, #tpu.memory_space<smem>>
    %1265 = vector.broadcast %1264 : f32 to vector<16x16xf32>
    %1266 = arith.mulf %1265, %1263 : vector<16x16xf32>
    %1267 = arith.addf %1249, %1266 : vector<16x16xf32>
    %c89_468 = arith.constant 89 : index
    %1268 = memref.load %arg6[%c89_468] : memref<288xf32, #tpu.memory_space<smem>>
    %1269 = vector.broadcast %1268 : f32 to vector<16x16xf32>
    %1270 = arith.mulf %1269, %1263 : vector<16x16xf32>
    %1271 = arith.addf %1253, %1270 : vector<16x16xf32>
    %c161 = arith.constant 161 : index
    %1272 = memref.load %arg6[%c161] : memref<288xf32, #tpu.memory_space<smem>>
    %1273 = vector.broadcast %1272 : f32 to vector<16x16xf32>
    %1274 = arith.mulf %1273, %1263 : vector<16x16xf32>
    %1275 = arith.addf %1257, %1274 : vector<16x16xf32>
    %c233 = arith.constant 233 : index
    %1276 = memref.load %arg6[%c233] : memref<288xf32, #tpu.memory_space<smem>>
    %1277 = vector.broadcast %1276 : f32 to vector<16x16xf32>
    %1278 = arith.mulf %1277, %1263 : vector<16x16xf32>
    %1279 = arith.addf %1261, %1278 : vector<16x16xf32>
    %c2_469 = arith.constant 2 : index
    %c0_470 = arith.constant 0 : index
    %c0_471 = arith.constant 0 : index
    %1280 = vector.load %arg10[%c2_469, %c0_470, %c0_471] : memref<8x18x18xf32, #tpu.memory_space<vmem>>, vector<1x16x16xf32>
    %1281 = vector.shape_cast %1280 : vector<1x16x16xf32> to vector<16x16xf32>
    %c18_472 = arith.constant 18 : index
    %1282 = memref.load %arg6[%c18_472] : memref<288xf32, #tpu.memory_space<smem>>
    %1283 = vector.broadcast %1282 : f32 to vector<16x16xf32>
    %1284 = arith.mulf %1283, %1281 : vector<16x16xf32>
    %1285 = arith.addf %1267, %1284 : vector<16x16xf32>
    %c90_473 = arith.constant 90 : index
    %1286 = memref.load %arg6[%c90_473] : memref<288xf32, #tpu.memory_space<smem>>
    %1287 = vector.broadcast %1286 : f32 to vector<16x16xf32>
    %1288 = arith.mulf %1287, %1281 : vector<16x16xf32>
    %1289 = arith.addf %1271, %1288 : vector<16x16xf32>
    %c162 = arith.constant 162 : index
    %1290 = memref.load %arg6[%c162] : memref<288xf32, #tpu.memory_space<smem>>
    %1291 = vector.broadcast %1290 : f32 to vector<16x16xf32>
    %1292 = arith.mulf %1291, %1281 : vector<16x16xf32>
    %1293 = arith.addf %1275, %1292 : vector<16x16xf32>
    %c234 = arith.constant 234 : index
    %1294 = memref.load %arg6[%c234] : memref<288xf32, #tpu.memory_space<smem>>
    %1295 = vector.broadcast %1294 : f32 to vector<16x16xf32>
    %1296 = arith.mulf %1295, %1281 : vector<16x16xf32>
    %1297 = arith.addf %1279, %1296 : vector<16x16xf32>
    %c2_474 = arith.constant 2 : index
    %c0_475 = arith.constant 0 : index
    %c1_476 = arith.constant 1 : index
    %1298 = vector.load %arg10[%c2_474, %c0_475, %c1_476] : memref<8x18x18xf32, #tpu.memory_space<vmem>>, vector<1x16x16xf32>
    %1299 = vector.shape_cast %1298 : vector<1x16x16xf32> to vector<16x16xf32>
    %c19_477 = arith.constant 19 : index
    %1300 = memref.load %arg6[%c19_477] : memref<288xf32, #tpu.memory_space<smem>>
    %1301 = vector.broadcast %1300 : f32 to vector<16x16xf32>
    %1302 = arith.mulf %1301, %1299 : vector<16x16xf32>
    %1303 = arith.addf %1285, %1302 : vector<16x16xf32>
    %c91_478 = arith.constant 91 : index
    %1304 = memref.load %arg6[%c91_478] : memref<288xf32, #tpu.memory_space<smem>>
    %1305 = vector.broadcast %1304 : f32 to vector<16x16xf32>
    %1306 = arith.mulf %1305, %1299 : vector<16x16xf32>
    %1307 = arith.addf %1289, %1306 : vector<16x16xf32>
    %c163 = arith.constant 163 : index
    %1308 = memref.load %arg6[%c163] : memref<288xf32, #tpu.memory_space<smem>>
    %1309 = vector.broadcast %1308 : f32 to vector<16x16xf32>
    %1310 = arith.mulf %1309, %1299 : vector<16x16xf32>
    %1311 = arith.addf %1293, %1310 : vector<16x16xf32>
    %c235 = arith.constant 235 : index
    %1312 = memref.load %arg6[%c235] : memref<288xf32, #tpu.memory_space<smem>>
    %1313 = vector.broadcast %1312 : f32 to vector<16x16xf32>
    %1314 = arith.mulf %1313, %1299 : vector<16x16xf32>
    %1315 = arith.addf %1297, %1314 : vector<16x16xf32>
    %c2_479 = arith.constant 2 : index
    %c0_480 = arith.constant 0 : index
    %c2_481 = arith.constant 2 : index
    %1316 = vector.load %arg10[%c2_479, %c0_480, %c2_481] : memref<8x18x18xf32, #tpu.memory_space<vmem>>, vector<1x16x16xf32>
    %1317 = vector.shape_cast %1316 : vector<1x16x16xf32> to vector<16x16xf32>
    %c20_482 = arith.constant 20 : index
    %1318 = memref.load %arg6[%c20_482] : memref<288xf32, #tpu.memory_space<smem>>
    %1319 = vector.broadcast %1318 : f32 to vector<16x16xf32>
    %1320 = arith.mulf %1319, %1317 : vector<16x16xf32>
    %1321 = arith.addf %1303, %1320 : vector<16x16xf32>
    %c92_483 = arith.constant 92 : index
    %1322 = memref.load %arg6[%c92_483] : memref<288xf32, #tpu.memory_space<smem>>
    %1323 = vector.broadcast %1322 : f32 to vector<16x16xf32>
    %1324 = arith.mulf %1323, %1317 : vector<16x16xf32>
    %1325 = arith.addf %1307, %1324 : vector<16x16xf32>
    %c164 = arith.constant 164 : index
    %1326 = memref.load %arg6[%c164] : memref<288xf32, #tpu.memory_space<smem>>
    %1327 = vector.broadcast %1326 : f32 to vector<16x16xf32>
    %1328 = arith.mulf %1327, %1317 : vector<16x16xf32>
    %1329 = arith.addf %1311, %1328 : vector<16x16xf32>
    %c236 = arith.constant 236 : index
    %1330 = memref.load %arg6[%c236] : memref<288xf32, #tpu.memory_space<smem>>
    %1331 = vector.broadcast %1330 : f32 to vector<16x16xf32>
    %1332 = arith.mulf %1331, %1317 : vector<16x16xf32>
    %1333 = arith.addf %1315, %1332 : vector<16x16xf32>
    %c2_484 = arith.constant 2 : index
    %c1_485 = arith.constant 1 : index
    %c0_486 = arith.constant 0 : index
    %1334 = vector.load %arg10[%c2_484, %c1_485, %c0_486] : memref<8x18x18xf32, #tpu.memory_space<vmem>>, vector<1x16x16xf32>
    %1335 = vector.shape_cast %1334 : vector<1x16x16xf32> to vector<16x16xf32>
    %c21_487 = arith.constant 21 : index
    %1336 = memref.load %arg6[%c21_487] : memref<288xf32, #tpu.memory_space<smem>>
    %1337 = vector.broadcast %1336 : f32 to vector<16x16xf32>
    %1338 = arith.mulf %1337, %1335 : vector<16x16xf32>
    %1339 = arith.addf %1321, %1338 : vector<16x16xf32>
    %c93_488 = arith.constant 93 : index
    %1340 = memref.load %arg6[%c93_488] : memref<288xf32, #tpu.memory_space<smem>>
    %1341 = vector.broadcast %1340 : f32 to vector<16x16xf32>
    %1342 = arith.mulf %1341, %1335 : vector<16x16xf32>
    %1343 = arith.addf %1325, %1342 : vector<16x16xf32>
    %c165 = arith.constant 165 : index
    %1344 = memref.load %arg6[%c165] : memref<288xf32, #tpu.memory_space<smem>>
    %1345 = vector.broadcast %1344 : f32 to vector<16x16xf32>
    %1346 = arith.mulf %1345, %1335 : vector<16x16xf32>
    %1347 = arith.addf %1329, %1346 : vector<16x16xf32>
    %c237 = arith.constant 237 : index
    %1348 = memref.load %arg6[%c237] : memref<288xf32, #tpu.memory_space<smem>>
    %1349 = vector.broadcast %1348 : f32 to vector<16x16xf32>
    %1350 = arith.mulf %1349, %1335 : vector<16x16xf32>
    %1351 = arith.addf %1333, %1350 : vector<16x16xf32>
    %c2_489 = arith.constant 2 : index
    %c1_490 = arith.constant 1 : index
    %c1_491 = arith.constant 1 : index
    %1352 = vector.load %arg10[%c2_489, %c1_490, %c1_491] : memref<8x18x18xf32, #tpu.memory_space<vmem>>, vector<1x16x16xf32>
    %1353 = vector.shape_cast %1352 : vector<1x16x16xf32> to vector<16x16xf32>
    %c22_492 = arith.constant 22 : index
    %1354 = memref.load %arg6[%c22_492] : memref<288xf32, #tpu.memory_space<smem>>
    %1355 = vector.broadcast %1354 : f32 to vector<16x16xf32>
    %1356 = arith.mulf %1355, %1353 : vector<16x16xf32>
    %1357 = arith.addf %1339, %1356 : vector<16x16xf32>
    %c94_493 = arith.constant 94 : index
    %1358 = memref.load %arg6[%c94_493] : memref<288xf32, #tpu.memory_space<smem>>
    %1359 = vector.broadcast %1358 : f32 to vector<16x16xf32>
    %1360 = arith.mulf %1359, %1353 : vector<16x16xf32>
    %1361 = arith.addf %1343, %1360 : vector<16x16xf32>
    %c166 = arith.constant 166 : index
    %1362 = memref.load %arg6[%c166] : memref<288xf32, #tpu.memory_space<smem>>
    %1363 = vector.broadcast %1362 : f32 to vector<16x16xf32>
    %1364 = arith.mulf %1363, %1353 : vector<16x16xf32>
    %1365 = arith.addf %1347, %1364 : vector<16x16xf32>
    %c238 = arith.constant 238 : index
    %1366 = memref.load %arg6[%c238] : memref<288xf32, #tpu.memory_space<smem>>
    %1367 = vector.broadcast %1366 : f32 to vector<16x16xf32>
    %1368 = arith.mulf %1367, %1353 : vector<16x16xf32>
    %1369 = arith.addf %1351, %1368 : vector<16x16xf32>
    %c2_494 = arith.constant 2 : index
    %c1_495 = arith.constant 1 : index
    %c2_496 = arith.constant 2 : index
    %1370 = vector.load %arg10[%c2_494, %c1_495, %c2_496] : memref<8x18x18xf32, #tpu.memory_space<vmem>>, vector<1x16x16xf32>
    %1371 = vector.shape_cast %1370 : vector<1x16x16xf32> to vector<16x16xf32>
    %c23_497 = arith.constant 23 : index
    %1372 = memref.load %arg6[%c23_497] : memref<288xf32, #tpu.memory_space<smem>>
    %1373 = vector.broadcast %1372 : f32 to vector<16x16xf32>
    %1374 = arith.mulf %1373, %1371 : vector<16x16xf32>
    %1375 = arith.addf %1357, %1374 : vector<16x16xf32>
    %c95_498 = arith.constant 95 : index
    %1376 = memref.load %arg6[%c95_498] : memref<288xf32, #tpu.memory_space<smem>>
    %1377 = vector.broadcast %1376 : f32 to vector<16x16xf32>
    %1378 = arith.mulf %1377, %1371 : vector<16x16xf32>
    %1379 = arith.addf %1361, %1378 : vector<16x16xf32>
    %c167 = arith.constant 167 : index
    %1380 = memref.load %arg6[%c167] : memref<288xf32, #tpu.memory_space<smem>>
    %1381 = vector.broadcast %1380 : f32 to vector<16x16xf32>
    %1382 = arith.mulf %1381, %1371 : vector<16x16xf32>
    %1383 = arith.addf %1365, %1382 : vector<16x16xf32>
    %c239 = arith.constant 239 : index
    %1384 = memref.load %arg6[%c239] : memref<288xf32, #tpu.memory_space<smem>>
    %1385 = vector.broadcast %1384 : f32 to vector<16x16xf32>
    %1386 = arith.mulf %1385, %1371 : vector<16x16xf32>
    %1387 = arith.addf %1369, %1386 : vector<16x16xf32>
    %c2_499 = arith.constant 2 : index
    %c2_500 = arith.constant 2 : index
    %c0_501 = arith.constant 0 : index
    %1388 = vector.load %arg10[%c2_499, %c2_500, %c0_501] : memref<8x18x18xf32, #tpu.memory_space<vmem>>, vector<1x16x16xf32>
    %1389 = vector.shape_cast %1388 : vector<1x16x16xf32> to vector<16x16xf32>
    %c24_502 = arith.constant 24 : index
    %1390 = memref.load %arg6[%c24_502] : memref<288xf32, #tpu.memory_space<smem>>
    %1391 = vector.broadcast %1390 : f32 to vector<16x16xf32>
    %1392 = arith.mulf %1391, %1389 : vector<16x16xf32>
    %1393 = arith.addf %1375, %1392 : vector<16x16xf32>
    %c96_503 = arith.constant 96 : index
    %1394 = memref.load %arg6[%c96_503] : memref<288xf32, #tpu.memory_space<smem>>
    %1395 = vector.broadcast %1394 : f32 to vector<16x16xf32>
    %1396 = arith.mulf %1395, %1389 : vector<16x16xf32>
    %1397 = arith.addf %1379, %1396 : vector<16x16xf32>
    %c168 = arith.constant 168 : index
    %1398 = memref.load %arg6[%c168] : memref<288xf32, #tpu.memory_space<smem>>
    %1399 = vector.broadcast %1398 : f32 to vector<16x16xf32>
    %1400 = arith.mulf %1399, %1389 : vector<16x16xf32>
    %1401 = arith.addf %1383, %1400 : vector<16x16xf32>
    %c240 = arith.constant 240 : index
    %1402 = memref.load %arg6[%c240] : memref<288xf32, #tpu.memory_space<smem>>
    %1403 = vector.broadcast %1402 : f32 to vector<16x16xf32>
    %1404 = arith.mulf %1403, %1389 : vector<16x16xf32>
    %1405 = arith.addf %1387, %1404 : vector<16x16xf32>
    %c2_504 = arith.constant 2 : index
    %c2_505 = arith.constant 2 : index
    %c1_506 = arith.constant 1 : index
    %1406 = vector.load %arg10[%c2_504, %c2_505, %c1_506] : memref<8x18x18xf32, #tpu.memory_space<vmem>>, vector<1x16x16xf32>
    %1407 = vector.shape_cast %1406 : vector<1x16x16xf32> to vector<16x16xf32>
    %c25_507 = arith.constant 25 : index
    %1408 = memref.load %arg6[%c25_507] : memref<288xf32, #tpu.memory_space<smem>>
    %1409 = vector.broadcast %1408 : f32 to vector<16x16xf32>
    %1410 = arith.mulf %1409, %1407 : vector<16x16xf32>
    %1411 = arith.addf %1393, %1410 : vector<16x16xf32>
    %c97_508 = arith.constant 97 : index
    %1412 = memref.load %arg6[%c97_508] : memref<288xf32, #tpu.memory_space<smem>>
    %1413 = vector.broadcast %1412 : f32 to vector<16x16xf32>
    %1414 = arith.mulf %1413, %1407 : vector<16x16xf32>
    %1415 = arith.addf %1397, %1414 : vector<16x16xf32>
    %c169 = arith.constant 169 : index
    %1416 = memref.load %arg6[%c169] : memref<288xf32, #tpu.memory_space<smem>>
    %1417 = vector.broadcast %1416 : f32 to vector<16x16xf32>
    %1418 = arith.mulf %1417, %1407 : vector<16x16xf32>
    %1419 = arith.addf %1401, %1418 : vector<16x16xf32>
    %c241 = arith.constant 241 : index
    %1420 = memref.load %arg6[%c241] : memref<288xf32, #tpu.memory_space<smem>>
    %1421 = vector.broadcast %1420 : f32 to vector<16x16xf32>
    %1422 = arith.mulf %1421, %1407 : vector<16x16xf32>
    %1423 = arith.addf %1405, %1422 : vector<16x16xf32>
    %c2_509 = arith.constant 2 : index
    %c2_510 = arith.constant 2 : index
    %c2_511 = arith.constant 2 : index
    %1424 = vector.load %arg10[%c2_509, %c2_510, %c2_511] : memref<8x18x18xf32, #tpu.memory_space<vmem>>, vector<1x16x16xf32>
    %1425 = vector.shape_cast %1424 : vector<1x16x16xf32> to vector<16x16xf32>
    %c26_512 = arith.constant 26 : index
    %1426 = memref.load %arg6[%c26_512] : memref<288xf32, #tpu.memory_space<smem>>
    %1427 = vector.broadcast %1426 : f32 to vector<16x16xf32>
    %1428 = arith.mulf %1427, %1425 : vector<16x16xf32>
    %1429 = arith.addf %1411, %1428 : vector<16x16xf32>
    %c98_513 = arith.constant 98 : index
    %1430 = memref.load %arg6[%c98_513] : memref<288xf32, #tpu.memory_space<smem>>
    %1431 = vector.broadcast %1430 : f32 to vector<16x16xf32>
    %1432 = arith.mulf %1431, %1425 : vector<16x16xf32>
    %1433 = arith.addf %1415, %1432 : vector<16x16xf32>
    %c170 = arith.constant 170 : index
    %1434 = memref.load %arg6[%c170] : memref<288xf32, #tpu.memory_space<smem>>
    %1435 = vector.broadcast %1434 : f32 to vector<16x16xf32>
    %1436 = arith.mulf %1435, %1425 : vector<16x16xf32>
    %1437 = arith.addf %1419, %1436 : vector<16x16xf32>
    %c242 = arith.constant 242 : index
    %1438 = memref.load %arg6[%c242] : memref<288xf32, #tpu.memory_space<smem>>
    %1439 = vector.broadcast %1438 : f32 to vector<16x16xf32>
    %1440 = arith.mulf %1439, %1425 : vector<16x16xf32>
    %1441 = arith.addf %1423, %1440 : vector<16x16xf32>
    %c3_514 = arith.constant 3 : index
    %c0_515 = arith.constant 0 : index
    %c0_516 = arith.constant 0 : index
    %1442 = vector.load %arg10[%c3_514, %c0_515, %c0_516] : memref<8x18x18xf32, #tpu.memory_space<vmem>>, vector<1x16x16xf32>
    %1443 = vector.shape_cast %1442 : vector<1x16x16xf32> to vector<16x16xf32>
    %c27_517 = arith.constant 27 : index
    %1444 = memref.load %arg6[%c27_517] : memref<288xf32, #tpu.memory_space<smem>>
    %1445 = vector.broadcast %1444 : f32 to vector<16x16xf32>
    %1446 = arith.mulf %1445, %1443 : vector<16x16xf32>
    %1447 = arith.addf %1429, %1446 : vector<16x16xf32>
    %c99_518 = arith.constant 99 : index
    %1448 = memref.load %arg6[%c99_518] : memref<288xf32, #tpu.memory_space<smem>>
    %1449 = vector.broadcast %1448 : f32 to vector<16x16xf32>
    %1450 = arith.mulf %1449, %1443 : vector<16x16xf32>
    %1451 = arith.addf %1433, %1450 : vector<16x16xf32>
    %c171 = arith.constant 171 : index
    %1452 = memref.load %arg6[%c171] : memref<288xf32, #tpu.memory_space<smem>>
    %1453 = vector.broadcast %1452 : f32 to vector<16x16xf32>
    %1454 = arith.mulf %1453, %1443 : vector<16x16xf32>
    %1455 = arith.addf %1437, %1454 : vector<16x16xf32>
    %c243 = arith.constant 243 : index
    %1456 = memref.load %arg6[%c243] : memref<288xf32, #tpu.memory_space<smem>>
    %1457 = vector.broadcast %1456 : f32 to vector<16x16xf32>
    %1458 = arith.mulf %1457, %1443 : vector<16x16xf32>
    %1459 = arith.addf %1441, %1458 : vector<16x16xf32>
    %c3_519 = arith.constant 3 : index
    %c0_520 = arith.constant 0 : index
    %c1_521 = arith.constant 1 : index
    %1460 = vector.load %arg10[%c3_519, %c0_520, %c1_521] : memref<8x18x18xf32, #tpu.memory_space<vmem>>, vector<1x16x16xf32>
    %1461 = vector.shape_cast %1460 : vector<1x16x16xf32> to vector<16x16xf32>
    %c28_522 = arith.constant 28 : index
    %1462 = memref.load %arg6[%c28_522] : memref<288xf32, #tpu.memory_space<smem>>
    %1463 = vector.broadcast %1462 : f32 to vector<16x16xf32>
    %1464 = arith.mulf %1463, %1461 : vector<16x16xf32>
    %1465 = arith.addf %1447, %1464 : vector<16x16xf32>
    %c100_523 = arith.constant 100 : index
    %1466 = memref.load %arg6[%c100_523] : memref<288xf32, #tpu.memory_space<smem>>
    %1467 = vector.broadcast %1466 : f32 to vector<16x16xf32>
    %1468 = arith.mulf %1467, %1461 : vector<16x16xf32>
    %1469 = arith.addf %1451, %1468 : vector<16x16xf32>
    %c172 = arith.constant 172 : index
    %1470 = memref.load %arg6[%c172] : memref<288xf32, #tpu.memory_space<smem>>
    %1471 = vector.broadcast %1470 : f32 to vector<16x16xf32>
    %1472 = arith.mulf %1471, %1461 : vector<16x16xf32>
    %1473 = arith.addf %1455, %1472 : vector<16x16xf32>
    %c244 = arith.constant 244 : index
    %1474 = memref.load %arg6[%c244] : memref<288xf32, #tpu.memory_space<smem>>
    %1475 = vector.broadcast %1474 : f32 to vector<16x16xf32>
    %1476 = arith.mulf %1475, %1461 : vector<16x16xf32>
    %1477 = arith.addf %1459, %1476 : vector<16x16xf32>
    %c3_524 = arith.constant 3 : index
    %c0_525 = arith.constant 0 : index
    %c2_526 = arith.constant 2 : index
    %1478 = vector.load %arg10[%c3_524, %c0_525, %c2_526] : memref<8x18x18xf32, #tpu.memory_space<vmem>>, vector<1x16x16xf32>
    %1479 = vector.shape_cast %1478 : vector<1x16x16xf32> to vector<16x16xf32>
    %c29_527 = arith.constant 29 : index
    %1480 = memref.load %arg6[%c29_527] : memref<288xf32, #tpu.memory_space<smem>>
    %1481 = vector.broadcast %1480 : f32 to vector<16x16xf32>
    %1482 = arith.mulf %1481, %1479 : vector<16x16xf32>
    %1483 = arith.addf %1465, %1482 : vector<16x16xf32>
    %c101_528 = arith.constant 101 : index
    %1484 = memref.load %arg6[%c101_528] : memref<288xf32, #tpu.memory_space<smem>>
    %1485 = vector.broadcast %1484 : f32 to vector<16x16xf32>
    %1486 = arith.mulf %1485, %1479 : vector<16x16xf32>
    %1487 = arith.addf %1469, %1486 : vector<16x16xf32>
    %c173 = arith.constant 173 : index
    %1488 = memref.load %arg6[%c173] : memref<288xf32, #tpu.memory_space<smem>>
    %1489 = vector.broadcast %1488 : f32 to vector<16x16xf32>
    %1490 = arith.mulf %1489, %1479 : vector<16x16xf32>
    %1491 = arith.addf %1473, %1490 : vector<16x16xf32>
    %c245 = arith.constant 245 : index
    %1492 = memref.load %arg6[%c245] : memref<288xf32, #tpu.memory_space<smem>>
    %1493 = vector.broadcast %1492 : f32 to vector<16x16xf32>
    %1494 = arith.mulf %1493, %1479 : vector<16x16xf32>
    %1495 = arith.addf %1477, %1494 : vector<16x16xf32>
    %c3_529 = arith.constant 3 : index
    %c1_530 = arith.constant 1 : index
    %c0_531 = arith.constant 0 : index
    %1496 = vector.load %arg10[%c3_529, %c1_530, %c0_531] : memref<8x18x18xf32, #tpu.memory_space<vmem>>, vector<1x16x16xf32>
    %1497 = vector.shape_cast %1496 : vector<1x16x16xf32> to vector<16x16xf32>
    %c30_532 = arith.constant 30 : index
    %1498 = memref.load %arg6[%c30_532] : memref<288xf32, #tpu.memory_space<smem>>
    %1499 = vector.broadcast %1498 : f32 to vector<16x16xf32>
    %1500 = arith.mulf %1499, %1497 : vector<16x16xf32>
    %1501 = arith.addf %1483, %1500 : vector<16x16xf32>
    %c102_533 = arith.constant 102 : index
    %1502 = memref.load %arg6[%c102_533] : memref<288xf32, #tpu.memory_space<smem>>
    %1503 = vector.broadcast %1502 : f32 to vector<16x16xf32>
    %1504 = arith.mulf %1503, %1497 : vector<16x16xf32>
    %1505 = arith.addf %1487, %1504 : vector<16x16xf32>
    %c174 = arith.constant 174 : index
    %1506 = memref.load %arg6[%c174] : memref<288xf32, #tpu.memory_space<smem>>
    %1507 = vector.broadcast %1506 : f32 to vector<16x16xf32>
    %1508 = arith.mulf %1507, %1497 : vector<16x16xf32>
    %1509 = arith.addf %1491, %1508 : vector<16x16xf32>
    %c246 = arith.constant 246 : index
    %1510 = memref.load %arg6[%c246] : memref<288xf32, #tpu.memory_space<smem>>
    %1511 = vector.broadcast %1510 : f32 to vector<16x16xf32>
    %1512 = arith.mulf %1511, %1497 : vector<16x16xf32>
    %1513 = arith.addf %1495, %1512 : vector<16x16xf32>
    %c3_534 = arith.constant 3 : index
    %c1_535 = arith.constant 1 : index
    %c1_536 = arith.constant 1 : index
    %1514 = vector.load %arg10[%c3_534, %c1_535, %c1_536] : memref<8x18x18xf32, #tpu.memory_space<vmem>>, vector<1x16x16xf32>
    %1515 = vector.shape_cast %1514 : vector<1x16x16xf32> to vector<16x16xf32>
    %c31_537 = arith.constant 31 : index
    %1516 = memref.load %arg6[%c31_537] : memref<288xf32, #tpu.memory_space<smem>>
    %1517 = vector.broadcast %1516 : f32 to vector<16x16xf32>
    %1518 = arith.mulf %1517, %1515 : vector<16x16xf32>
    %1519 = arith.addf %1501, %1518 : vector<16x16xf32>
    %c103_538 = arith.constant 103 : index
    %1520 = memref.load %arg6[%c103_538] : memref<288xf32, #tpu.memory_space<smem>>
    %1521 = vector.broadcast %1520 : f32 to vector<16x16xf32>
    %1522 = arith.mulf %1521, %1515 : vector<16x16xf32>
    %1523 = arith.addf %1505, %1522 : vector<16x16xf32>
    %c175 = arith.constant 175 : index
    %1524 = memref.load %arg6[%c175] : memref<288xf32, #tpu.memory_space<smem>>
    %1525 = vector.broadcast %1524 : f32 to vector<16x16xf32>
    %1526 = arith.mulf %1525, %1515 : vector<16x16xf32>
    %1527 = arith.addf %1509, %1526 : vector<16x16xf32>
    %c247 = arith.constant 247 : index
    %1528 = memref.load %arg6[%c247] : memref<288xf32, #tpu.memory_space<smem>>
    %1529 = vector.broadcast %1528 : f32 to vector<16x16xf32>
    %1530 = arith.mulf %1529, %1515 : vector<16x16xf32>
    %1531 = arith.addf %1513, %1530 : vector<16x16xf32>
    %c3_539 = arith.constant 3 : index
    %c1_540 = arith.constant 1 : index
    %c2_541 = arith.constant 2 : index
    %1532 = vector.load %arg10[%c3_539, %c1_540, %c2_541] : memref<8x18x18xf32, #tpu.memory_space<vmem>>, vector<1x16x16xf32>
    %1533 = vector.shape_cast %1532 : vector<1x16x16xf32> to vector<16x16xf32>
    %c32_542 = arith.constant 32 : index
    %1534 = memref.load %arg6[%c32_542] : memref<288xf32, #tpu.memory_space<smem>>
    %1535 = vector.broadcast %1534 : f32 to vector<16x16xf32>
    %1536 = arith.mulf %1535, %1533 : vector<16x16xf32>
    %1537 = arith.addf %1519, %1536 : vector<16x16xf32>
    %c104_543 = arith.constant 104 : index
    %1538 = memref.load %arg6[%c104_543] : memref<288xf32, #tpu.memory_space<smem>>
    %1539 = vector.broadcast %1538 : f32 to vector<16x16xf32>
    %1540 = arith.mulf %1539, %1533 : vector<16x16xf32>
    %1541 = arith.addf %1523, %1540 : vector<16x16xf32>
    %c176 = arith.constant 176 : index
    %1542 = memref.load %arg6[%c176] : memref<288xf32, #tpu.memory_space<smem>>
    %1543 = vector.broadcast %1542 : f32 to vector<16x16xf32>
    %1544 = arith.mulf %1543, %1533 : vector<16x16xf32>
    %1545 = arith.addf %1527, %1544 : vector<16x16xf32>
    %c248 = arith.constant 248 : index
    %1546 = memref.load %arg6[%c248] : memref<288xf32, #tpu.memory_space<smem>>
    %1547 = vector.broadcast %1546 : f32 to vector<16x16xf32>
    %1548 = arith.mulf %1547, %1533 : vector<16x16xf32>
    %1549 = arith.addf %1531, %1548 : vector<16x16xf32>
    %c3_544 = arith.constant 3 : index
    %c2_545 = arith.constant 2 : index
    %c0_546 = arith.constant 0 : index
    %1550 = vector.load %arg10[%c3_544, %c2_545, %c0_546] : memref<8x18x18xf32, #tpu.memory_space<vmem>>, vector<1x16x16xf32>
    %1551 = vector.shape_cast %1550 : vector<1x16x16xf32> to vector<16x16xf32>
    %c33_547 = arith.constant 33 : index
    %1552 = memref.load %arg6[%c33_547] : memref<288xf32, #tpu.memory_space<smem>>
    %1553 = vector.broadcast %1552 : f32 to vector<16x16xf32>
    %1554 = arith.mulf %1553, %1551 : vector<16x16xf32>
    %1555 = arith.addf %1537, %1554 : vector<16x16xf32>
    %c105_548 = arith.constant 105 : index
    %1556 = memref.load %arg6[%c105_548] : memref<288xf32, #tpu.memory_space<smem>>
    %1557 = vector.broadcast %1556 : f32 to vector<16x16xf32>
    %1558 = arith.mulf %1557, %1551 : vector<16x16xf32>
    %1559 = arith.addf %1541, %1558 : vector<16x16xf32>
    %c177 = arith.constant 177 : index
    %1560 = memref.load %arg6[%c177] : memref<288xf32, #tpu.memory_space<smem>>
    %1561 = vector.broadcast %1560 : f32 to vector<16x16xf32>
    %1562 = arith.mulf %1561, %1551 : vector<16x16xf32>
    %1563 = arith.addf %1545, %1562 : vector<16x16xf32>
    %c249 = arith.constant 249 : index
    %1564 = memref.load %arg6[%c249] : memref<288xf32, #tpu.memory_space<smem>>
    %1565 = vector.broadcast %1564 : f32 to vector<16x16xf32>
    %1566 = arith.mulf %1565, %1551 : vector<16x16xf32>
    %1567 = arith.addf %1549, %1566 : vector<16x16xf32>
    %c3_549 = arith.constant 3 : index
    %c2_550 = arith.constant 2 : index
    %c1_551 = arith.constant 1 : index
    %1568 = vector.load %arg10[%c3_549, %c2_550, %c1_551] : memref<8x18x18xf32, #tpu.memory_space<vmem>>, vector<1x16x16xf32>
    %1569 = vector.shape_cast %1568 : vector<1x16x16xf32> to vector<16x16xf32>
    %c34_552 = arith.constant 34 : index
    %1570 = memref.load %arg6[%c34_552] : memref<288xf32, #tpu.memory_space<smem>>
    %1571 = vector.broadcast %1570 : f32 to vector<16x16xf32>
    %1572 = arith.mulf %1571, %1569 : vector<16x16xf32>
    %1573 = arith.addf %1555, %1572 : vector<16x16xf32>
    %c106_553 = arith.constant 106 : index
    %1574 = memref.load %arg6[%c106_553] : memref<288xf32, #tpu.memory_space<smem>>
    %1575 = vector.broadcast %1574 : f32 to vector<16x16xf32>
    %1576 = arith.mulf %1575, %1569 : vector<16x16xf32>
    %1577 = arith.addf %1559, %1576 : vector<16x16xf32>
    %c178 = arith.constant 178 : index
    %1578 = memref.load %arg6[%c178] : memref<288xf32, #tpu.memory_space<smem>>
    %1579 = vector.broadcast %1578 : f32 to vector<16x16xf32>
    %1580 = arith.mulf %1579, %1569 : vector<16x16xf32>
    %1581 = arith.addf %1563, %1580 : vector<16x16xf32>
    %c250 = arith.constant 250 : index
    %1582 = memref.load %arg6[%c250] : memref<288xf32, #tpu.memory_space<smem>>
    %1583 = vector.broadcast %1582 : f32 to vector<16x16xf32>
    %1584 = arith.mulf %1583, %1569 : vector<16x16xf32>
    %1585 = arith.addf %1567, %1584 : vector<16x16xf32>
    %c3_554 = arith.constant 3 : index
    %c2_555 = arith.constant 2 : index
    %c2_556 = arith.constant 2 : index
    %1586 = vector.load %arg10[%c3_554, %c2_555, %c2_556] : memref<8x18x18xf32, #tpu.memory_space<vmem>>, vector<1x16x16xf32>
    %1587 = vector.shape_cast %1586 : vector<1x16x16xf32> to vector<16x16xf32>
    %c35_557 = arith.constant 35 : index
    %1588 = memref.load %arg6[%c35_557] : memref<288xf32, #tpu.memory_space<smem>>
    %1589 = vector.broadcast %1588 : f32 to vector<16x16xf32>
    %1590 = arith.mulf %1589, %1587 : vector<16x16xf32>
    %1591 = arith.addf %1573, %1590 : vector<16x16xf32>
    %c107_558 = arith.constant 107 : index
    %1592 = memref.load %arg6[%c107_558] : memref<288xf32, #tpu.memory_space<smem>>
    %1593 = vector.broadcast %1592 : f32 to vector<16x16xf32>
    %1594 = arith.mulf %1593, %1587 : vector<16x16xf32>
    %1595 = arith.addf %1577, %1594 : vector<16x16xf32>
    %c179 = arith.constant 179 : index
    %1596 = memref.load %arg6[%c179] : memref<288xf32, #tpu.memory_space<smem>>
    %1597 = vector.broadcast %1596 : f32 to vector<16x16xf32>
    %1598 = arith.mulf %1597, %1587 : vector<16x16xf32>
    %1599 = arith.addf %1581, %1598 : vector<16x16xf32>
    %c251 = arith.constant 251 : index
    %1600 = memref.load %arg6[%c251] : memref<288xf32, #tpu.memory_space<smem>>
    %1601 = vector.broadcast %1600 : f32 to vector<16x16xf32>
    %1602 = arith.mulf %1601, %1587 : vector<16x16xf32>
    %1603 = arith.addf %1585, %1602 : vector<16x16xf32>
    %c4_559 = arith.constant 4 : index
    %c0_560 = arith.constant 0 : index
    %c0_561 = arith.constant 0 : index
    %1604 = vector.load %arg10[%c4_559, %c0_560, %c0_561] : memref<8x18x18xf32, #tpu.memory_space<vmem>>, vector<1x16x16xf32>
    %1605 = vector.shape_cast %1604 : vector<1x16x16xf32> to vector<16x16xf32>
    %c36_562 = arith.constant 36 : index
    %1606 = memref.load %arg6[%c36_562] : memref<288xf32, #tpu.memory_space<smem>>
    %1607 = vector.broadcast %1606 : f32 to vector<16x16xf32>
    %1608 = arith.mulf %1607, %1605 : vector<16x16xf32>
    %1609 = arith.addf %1591, %1608 : vector<16x16xf32>
    %c108 = arith.constant 108 : index
    %1610 = memref.load %arg6[%c108] : memref<288xf32, #tpu.memory_space<smem>>
    %1611 = vector.broadcast %1610 : f32 to vector<16x16xf32>
    %1612 = arith.mulf %1611, %1605 : vector<16x16xf32>
    %1613 = arith.addf %1595, %1612 : vector<16x16xf32>
    %c180 = arith.constant 180 : index
    %1614 = memref.load %arg6[%c180] : memref<288xf32, #tpu.memory_space<smem>>
    %1615 = vector.broadcast %1614 : f32 to vector<16x16xf32>
    %1616 = arith.mulf %1615, %1605 : vector<16x16xf32>
    %1617 = arith.addf %1599, %1616 : vector<16x16xf32>
    %c252 = arith.constant 252 : index
    %1618 = memref.load %arg6[%c252] : memref<288xf32, #tpu.memory_space<smem>>
    %1619 = vector.broadcast %1618 : f32 to vector<16x16xf32>
    %1620 = arith.mulf %1619, %1605 : vector<16x16xf32>
    %1621 = arith.addf %1603, %1620 : vector<16x16xf32>
    %c4_563 = arith.constant 4 : index
    %c0_564 = arith.constant 0 : index
    %c1_565 = arith.constant 1 : index
    %1622 = vector.load %arg10[%c4_563, %c0_564, %c1_565] : memref<8x18x18xf32, #tpu.memory_space<vmem>>, vector<1x16x16xf32>
    %1623 = vector.shape_cast %1622 : vector<1x16x16xf32> to vector<16x16xf32>
    %c37_566 = arith.constant 37 : index
    %1624 = memref.load %arg6[%c37_566] : memref<288xf32, #tpu.memory_space<smem>>
    %1625 = vector.broadcast %1624 : f32 to vector<16x16xf32>
    %1626 = arith.mulf %1625, %1623 : vector<16x16xf32>
    %1627 = arith.addf %1609, %1626 : vector<16x16xf32>
    %c109 = arith.constant 109 : index
    %1628 = memref.load %arg6[%c109] : memref<288xf32, #tpu.memory_space<smem>>
    %1629 = vector.broadcast %1628 : f32 to vector<16x16xf32>
    %1630 = arith.mulf %1629, %1623 : vector<16x16xf32>
    %1631 = arith.addf %1613, %1630 : vector<16x16xf32>
    %c181 = arith.constant 181 : index
    %1632 = memref.load %arg6[%c181] : memref<288xf32, #tpu.memory_space<smem>>
    %1633 = vector.broadcast %1632 : f32 to vector<16x16xf32>
    %1634 = arith.mulf %1633, %1623 : vector<16x16xf32>
    %1635 = arith.addf %1617, %1634 : vector<16x16xf32>
    %c253 = arith.constant 253 : index
    %1636 = memref.load %arg6[%c253] : memref<288xf32, #tpu.memory_space<smem>>
    %1637 = vector.broadcast %1636 : f32 to vector<16x16xf32>
    %1638 = arith.mulf %1637, %1623 : vector<16x16xf32>
    %1639 = arith.addf %1621, %1638 : vector<16x16xf32>
    %c4_567 = arith.constant 4 : index
    %c0_568 = arith.constant 0 : index
    %c2_569 = arith.constant 2 : index
    %1640 = vector.load %arg10[%c4_567, %c0_568, %c2_569] : memref<8x18x18xf32, #tpu.memory_space<vmem>>, vector<1x16x16xf32>
    %1641 = vector.shape_cast %1640 : vector<1x16x16xf32> to vector<16x16xf32>
    %c38_570 = arith.constant 38 : index
    %1642 = memref.load %arg6[%c38_570] : memref<288xf32, #tpu.memory_space<smem>>
    %1643 = vector.broadcast %1642 : f32 to vector<16x16xf32>
    %1644 = arith.mulf %1643, %1641 : vector<16x16xf32>
    %1645 = arith.addf %1627, %1644 : vector<16x16xf32>
    %c110 = arith.constant 110 : index
    %1646 = memref.load %arg6[%c110] : memref<288xf32, #tpu.memory_space<smem>>
    %1647 = vector.broadcast %1646 : f32 to vector<16x16xf32>
    %1648 = arith.mulf %1647, %1641 : vector<16x16xf32>
    %1649 = arith.addf %1631, %1648 : vector<16x16xf32>
    %c182 = arith.constant 182 : index
    %1650 = memref.load %arg6[%c182] : memref<288xf32, #tpu.memory_space<smem>>
    %1651 = vector.broadcast %1650 : f32 to vector<16x16xf32>
    %1652 = arith.mulf %1651, %1641 : vector<16x16xf32>
    %1653 = arith.addf %1635, %1652 : vector<16x16xf32>
    %c254 = arith.constant 254 : index
    %1654 = memref.load %arg6[%c254] : memref<288xf32, #tpu.memory_space<smem>>
    %1655 = vector.broadcast %1654 : f32 to vector<16x16xf32>
    %1656 = arith.mulf %1655, %1641 : vector<16x16xf32>
    %1657 = arith.addf %1639, %1656 : vector<16x16xf32>
    %c4_571 = arith.constant 4 : index
    %c1_572 = arith.constant 1 : index
    %c0_573 = arith.constant 0 : index
    %1658 = vector.load %arg10[%c4_571, %c1_572, %c0_573] : memref<8x18x18xf32, #tpu.memory_space<vmem>>, vector<1x16x16xf32>
    %1659 = vector.shape_cast %1658 : vector<1x16x16xf32> to vector<16x16xf32>
    %c39_574 = arith.constant 39 : index
    %1660 = memref.load %arg6[%c39_574] : memref<288xf32, #tpu.memory_space<smem>>
    %1661 = vector.broadcast %1660 : f32 to vector<16x16xf32>
    %1662 = arith.mulf %1661, %1659 : vector<16x16xf32>
    %1663 = arith.addf %1645, %1662 : vector<16x16xf32>
    %c111 = arith.constant 111 : index
    %1664 = memref.load %arg6[%c111] : memref<288xf32, #tpu.memory_space<smem>>
    %1665 = vector.broadcast %1664 : f32 to vector<16x16xf32>
    %1666 = arith.mulf %1665, %1659 : vector<16x16xf32>
    %1667 = arith.addf %1649, %1666 : vector<16x16xf32>
    %c183 = arith.constant 183 : index
    %1668 = memref.load %arg6[%c183] : memref<288xf32, #tpu.memory_space<smem>>
    %1669 = vector.broadcast %1668 : f32 to vector<16x16xf32>
    %1670 = arith.mulf %1669, %1659 : vector<16x16xf32>
    %1671 = arith.addf %1653, %1670 : vector<16x16xf32>
    %c255 = arith.constant 255 : index
    %1672 = memref.load %arg6[%c255] : memref<288xf32, #tpu.memory_space<smem>>
    %1673 = vector.broadcast %1672 : f32 to vector<16x16xf32>
    %1674 = arith.mulf %1673, %1659 : vector<16x16xf32>
    %1675 = arith.addf %1657, %1674 : vector<16x16xf32>
    %c4_575 = arith.constant 4 : index
    %c1_576 = arith.constant 1 : index
    %c1_577 = arith.constant 1 : index
    %1676 = vector.load %arg10[%c4_575, %c1_576, %c1_577] : memref<8x18x18xf32, #tpu.memory_space<vmem>>, vector<1x16x16xf32>
    %1677 = vector.shape_cast %1676 : vector<1x16x16xf32> to vector<16x16xf32>
    %c40_578 = arith.constant 40 : index
    %1678 = memref.load %arg6[%c40_578] : memref<288xf32, #tpu.memory_space<smem>>
    %1679 = vector.broadcast %1678 : f32 to vector<16x16xf32>
    %1680 = arith.mulf %1679, %1677 : vector<16x16xf32>
    %1681 = arith.addf %1663, %1680 : vector<16x16xf32>
    %c112 = arith.constant 112 : index
    %1682 = memref.load %arg6[%c112] : memref<288xf32, #tpu.memory_space<smem>>
    %1683 = vector.broadcast %1682 : f32 to vector<16x16xf32>
    %1684 = arith.mulf %1683, %1677 : vector<16x16xf32>
    %1685 = arith.addf %1667, %1684 : vector<16x16xf32>
    %c184 = arith.constant 184 : index
    %1686 = memref.load %arg6[%c184] : memref<288xf32, #tpu.memory_space<smem>>
    %1687 = vector.broadcast %1686 : f32 to vector<16x16xf32>
    %1688 = arith.mulf %1687, %1677 : vector<16x16xf32>
    %1689 = arith.addf %1671, %1688 : vector<16x16xf32>
    %c256 = arith.constant 256 : index
    %1690 = memref.load %arg6[%c256] : memref<288xf32, #tpu.memory_space<smem>>
    %1691 = vector.broadcast %1690 : f32 to vector<16x16xf32>
    %1692 = arith.mulf %1691, %1677 : vector<16x16xf32>
    %1693 = arith.addf %1675, %1692 : vector<16x16xf32>
    %c4_579 = arith.constant 4 : index
    %c1_580 = arith.constant 1 : index
    %c2_581 = arith.constant 2 : index
    %1694 = vector.load %arg10[%c4_579, %c1_580, %c2_581] : memref<8x18x18xf32, #tpu.memory_space<vmem>>, vector<1x16x16xf32>
    %1695 = vector.shape_cast %1694 : vector<1x16x16xf32> to vector<16x16xf32>
    %c41_582 = arith.constant 41 : index
    %1696 = memref.load %arg6[%c41_582] : memref<288xf32, #tpu.memory_space<smem>>
    %1697 = vector.broadcast %1696 : f32 to vector<16x16xf32>
    %1698 = arith.mulf %1697, %1695 : vector<16x16xf32>
    %1699 = arith.addf %1681, %1698 : vector<16x16xf32>
    %c113 = arith.constant 113 : index
    %1700 = memref.load %arg6[%c113] : memref<288xf32, #tpu.memory_space<smem>>
    %1701 = vector.broadcast %1700 : f32 to vector<16x16xf32>
    %1702 = arith.mulf %1701, %1695 : vector<16x16xf32>
    %1703 = arith.addf %1685, %1702 : vector<16x16xf32>
    %c185 = arith.constant 185 : index
    %1704 = memref.load %arg6[%c185] : memref<288xf32, #tpu.memory_space<smem>>
    %1705 = vector.broadcast %1704 : f32 to vector<16x16xf32>
    %1706 = arith.mulf %1705, %1695 : vector<16x16xf32>
    %1707 = arith.addf %1689, %1706 : vector<16x16xf32>
    %c257 = arith.constant 257 : index
    %1708 = memref.load %arg6[%c257] : memref<288xf32, #tpu.memory_space<smem>>
    %1709 = vector.broadcast %1708 : f32 to vector<16x16xf32>
    %1710 = arith.mulf %1709, %1695 : vector<16x16xf32>
    %1711 = arith.addf %1693, %1710 : vector<16x16xf32>
    %c4_583 = arith.constant 4 : index
    %c2_584 = arith.constant 2 : index
    %c0_585 = arith.constant 0 : index
    %1712 = vector.load %arg10[%c4_583, %c2_584, %c0_585] : memref<8x18x18xf32, #tpu.memory_space<vmem>>, vector<1x16x16xf32>
    %1713 = vector.shape_cast %1712 : vector<1x16x16xf32> to vector<16x16xf32>
    %c42_586 = arith.constant 42 : index
    %1714 = memref.load %arg6[%c42_586] : memref<288xf32, #tpu.memory_space<smem>>
    %1715 = vector.broadcast %1714 : f32 to vector<16x16xf32>
    %1716 = arith.mulf %1715, %1713 : vector<16x16xf32>
    %1717 = arith.addf %1699, %1716 : vector<16x16xf32>
    %c114 = arith.constant 114 : index
    %1718 = memref.load %arg6[%c114] : memref<288xf32, #tpu.memory_space<smem>>
    %1719 = vector.broadcast %1718 : f32 to vector<16x16xf32>
    %1720 = arith.mulf %1719, %1713 : vector<16x16xf32>
    %1721 = arith.addf %1703, %1720 : vector<16x16xf32>
    %c186 = arith.constant 186 : index
    %1722 = memref.load %arg6[%c186] : memref<288xf32, #tpu.memory_space<smem>>
    %1723 = vector.broadcast %1722 : f32 to vector<16x16xf32>
    %1724 = arith.mulf %1723, %1713 : vector<16x16xf32>
    %1725 = arith.addf %1707, %1724 : vector<16x16xf32>
    %c258 = arith.constant 258 : index
    %1726 = memref.load %arg6[%c258] : memref<288xf32, #tpu.memory_space<smem>>
    %1727 = vector.broadcast %1726 : f32 to vector<16x16xf32>
    %1728 = arith.mulf %1727, %1713 : vector<16x16xf32>
    %1729 = arith.addf %1711, %1728 : vector<16x16xf32>
    %c4_587 = arith.constant 4 : index
    %c2_588 = arith.constant 2 : index
    %c1_589 = arith.constant 1 : index
    %1730 = vector.load %arg10[%c4_587, %c2_588, %c1_589] : memref<8x18x18xf32, #tpu.memory_space<vmem>>, vector<1x16x16xf32>
    %1731 = vector.shape_cast %1730 : vector<1x16x16xf32> to vector<16x16xf32>
    %c43_590 = arith.constant 43 : index
    %1732 = memref.load %arg6[%c43_590] : memref<288xf32, #tpu.memory_space<smem>>
    %1733 = vector.broadcast %1732 : f32 to vector<16x16xf32>
    %1734 = arith.mulf %1733, %1731 : vector<16x16xf32>
    %1735 = arith.addf %1717, %1734 : vector<16x16xf32>
    %c115 = arith.constant 115 : index
    %1736 = memref.load %arg6[%c115] : memref<288xf32, #tpu.memory_space<smem>>
    %1737 = vector.broadcast %1736 : f32 to vector<16x16xf32>
    %1738 = arith.mulf %1737, %1731 : vector<16x16xf32>
    %1739 = arith.addf %1721, %1738 : vector<16x16xf32>
    %c187 = arith.constant 187 : index
    %1740 = memref.load %arg6[%c187] : memref<288xf32, #tpu.memory_space<smem>>
    %1741 = vector.broadcast %1740 : f32 to vector<16x16xf32>
    %1742 = arith.mulf %1741, %1731 : vector<16x16xf32>
    %1743 = arith.addf %1725, %1742 : vector<16x16xf32>
    %c259 = arith.constant 259 : index
    %1744 = memref.load %arg6[%c259] : memref<288xf32, #tpu.memory_space<smem>>
    %1745 = vector.broadcast %1744 : f32 to vector<16x16xf32>
    %1746 = arith.mulf %1745, %1731 : vector<16x16xf32>
    %1747 = arith.addf %1729, %1746 : vector<16x16xf32>
    %c4_591 = arith.constant 4 : index
    %c2_592 = arith.constant 2 : index
    %c2_593 = arith.constant 2 : index
    %1748 = vector.load %arg10[%c4_591, %c2_592, %c2_593] : memref<8x18x18xf32, #tpu.memory_space<vmem>>, vector<1x16x16xf32>
    %1749 = vector.shape_cast %1748 : vector<1x16x16xf32> to vector<16x16xf32>
    %c44_594 = arith.constant 44 : index
    %1750 = memref.load %arg6[%c44_594] : memref<288xf32, #tpu.memory_space<smem>>
    %1751 = vector.broadcast %1750 : f32 to vector<16x16xf32>
    %1752 = arith.mulf %1751, %1749 : vector<16x16xf32>
    %1753 = arith.addf %1735, %1752 : vector<16x16xf32>
    %c116 = arith.constant 116 : index
    %1754 = memref.load %arg6[%c116] : memref<288xf32, #tpu.memory_space<smem>>
    %1755 = vector.broadcast %1754 : f32 to vector<16x16xf32>
    %1756 = arith.mulf %1755, %1749 : vector<16x16xf32>
    %1757 = arith.addf %1739, %1756 : vector<16x16xf32>
    %c188 = arith.constant 188 : index
    %1758 = memref.load %arg6[%c188] : memref<288xf32, #tpu.memory_space<smem>>
    %1759 = vector.broadcast %1758 : f32 to vector<16x16xf32>
    %1760 = arith.mulf %1759, %1749 : vector<16x16xf32>
    %1761 = arith.addf %1743, %1760 : vector<16x16xf32>
    %c260 = arith.constant 260 : index
    %1762 = memref.load %arg6[%c260] : memref<288xf32, #tpu.memory_space<smem>>
    %1763 = vector.broadcast %1762 : f32 to vector<16x16xf32>
    %1764 = arith.mulf %1763, %1749 : vector<16x16xf32>
    %1765 = arith.addf %1747, %1764 : vector<16x16xf32>
    %c5_595 = arith.constant 5 : index
    %c0_596 = arith.constant 0 : index
    %c0_597 = arith.constant 0 : index
    %1766 = vector.load %arg10[%c5_595, %c0_596, %c0_597] : memref<8x18x18xf32, #tpu.memory_space<vmem>>, vector<1x16x16xf32>
    %1767 = vector.shape_cast %1766 : vector<1x16x16xf32> to vector<16x16xf32>
    %c45_598 = arith.constant 45 : index
    %1768 = memref.load %arg6[%c45_598] : memref<288xf32, #tpu.memory_space<smem>>
    %1769 = vector.broadcast %1768 : f32 to vector<16x16xf32>
    %1770 = arith.mulf %1769, %1767 : vector<16x16xf32>
    %1771 = arith.addf %1753, %1770 : vector<16x16xf32>
    %c117 = arith.constant 117 : index
    %1772 = memref.load %arg6[%c117] : memref<288xf32, #tpu.memory_space<smem>>
    %1773 = vector.broadcast %1772 : f32 to vector<16x16xf32>
    %1774 = arith.mulf %1773, %1767 : vector<16x16xf32>
    %1775 = arith.addf %1757, %1774 : vector<16x16xf32>
    %c189 = arith.constant 189 : index
    %1776 = memref.load %arg6[%c189] : memref<288xf32, #tpu.memory_space<smem>>
    %1777 = vector.broadcast %1776 : f32 to vector<16x16xf32>
    %1778 = arith.mulf %1777, %1767 : vector<16x16xf32>
    %1779 = arith.addf %1761, %1778 : vector<16x16xf32>
    %c261 = arith.constant 261 : index
    %1780 = memref.load %arg6[%c261] : memref<288xf32, #tpu.memory_space<smem>>
    %1781 = vector.broadcast %1780 : f32 to vector<16x16xf32>
    %1782 = arith.mulf %1781, %1767 : vector<16x16xf32>
    %1783 = arith.addf %1765, %1782 : vector<16x16xf32>
    %c5_599 = arith.constant 5 : index
    %c0_600 = arith.constant 0 : index
    %c1_601 = arith.constant 1 : index
    %1784 = vector.load %arg10[%c5_599, %c0_600, %c1_601] : memref<8x18x18xf32, #tpu.memory_space<vmem>>, vector<1x16x16xf32>
    %1785 = vector.shape_cast %1784 : vector<1x16x16xf32> to vector<16x16xf32>
    %c46_602 = arith.constant 46 : index
    %1786 = memref.load %arg6[%c46_602] : memref<288xf32, #tpu.memory_space<smem>>
    %1787 = vector.broadcast %1786 : f32 to vector<16x16xf32>
    %1788 = arith.mulf %1787, %1785 : vector<16x16xf32>
    %1789 = arith.addf %1771, %1788 : vector<16x16xf32>
    %c118 = arith.constant 118 : index
    %1790 = memref.load %arg6[%c118] : memref<288xf32, #tpu.memory_space<smem>>
    %1791 = vector.broadcast %1790 : f32 to vector<16x16xf32>
    %1792 = arith.mulf %1791, %1785 : vector<16x16xf32>
    %1793 = arith.addf %1775, %1792 : vector<16x16xf32>
    %c190 = arith.constant 190 : index
    %1794 = memref.load %arg6[%c190] : memref<288xf32, #tpu.memory_space<smem>>
    %1795 = vector.broadcast %1794 : f32 to vector<16x16xf32>
    %1796 = arith.mulf %1795, %1785 : vector<16x16xf32>
    %1797 = arith.addf %1779, %1796 : vector<16x16xf32>
    %c262 = arith.constant 262 : index
    %1798 = memref.load %arg6[%c262] : memref<288xf32, #tpu.memory_space<smem>>
    %1799 = vector.broadcast %1798 : f32 to vector<16x16xf32>
    %1800 = arith.mulf %1799, %1785 : vector<16x16xf32>
    %1801 = arith.addf %1783, %1800 : vector<16x16xf32>
    %c5_603 = arith.constant 5 : index
    %c0_604 = arith.constant 0 : index
    %c2_605 = arith.constant 2 : index
    %1802 = vector.load %arg10[%c5_603, %c0_604, %c2_605] : memref<8x18x18xf32, #tpu.memory_space<vmem>>, vector<1x16x16xf32>
    %1803 = vector.shape_cast %1802 : vector<1x16x16xf32> to vector<16x16xf32>
    %c47_606 = arith.constant 47 : index
    %1804 = memref.load %arg6[%c47_606] : memref<288xf32, #tpu.memory_space<smem>>
    %1805 = vector.broadcast %1804 : f32 to vector<16x16xf32>
    %1806 = arith.mulf %1805, %1803 : vector<16x16xf32>
    %1807 = arith.addf %1789, %1806 : vector<16x16xf32>
    %c119 = arith.constant 119 : index
    %1808 = memref.load %arg6[%c119] : memref<288xf32, #tpu.memory_space<smem>>
    %1809 = vector.broadcast %1808 : f32 to vector<16x16xf32>
    %1810 = arith.mulf %1809, %1803 : vector<16x16xf32>
    %1811 = arith.addf %1793, %1810 : vector<16x16xf32>
    %c191 = arith.constant 191 : index
    %1812 = memref.load %arg6[%c191] : memref<288xf32, #tpu.memory_space<smem>>
    %1813 = vector.broadcast %1812 : f32 to vector<16x16xf32>
    %1814 = arith.mulf %1813, %1803 : vector<16x16xf32>
    %1815 = arith.addf %1797, %1814 : vector<16x16xf32>
    %c263 = arith.constant 263 : index
    %1816 = memref.load %arg6[%c263] : memref<288xf32, #tpu.memory_space<smem>>
    %1817 = vector.broadcast %1816 : f32 to vector<16x16xf32>
    %1818 = arith.mulf %1817, %1803 : vector<16x16xf32>
    %1819 = arith.addf %1801, %1818 : vector<16x16xf32>
    %c5_607 = arith.constant 5 : index
    %c1_608 = arith.constant 1 : index
    %c0_609 = arith.constant 0 : index
    %1820 = vector.load %arg10[%c5_607, %c1_608, %c0_609] : memref<8x18x18xf32, #tpu.memory_space<vmem>>, vector<1x16x16xf32>
    %1821 = vector.shape_cast %1820 : vector<1x16x16xf32> to vector<16x16xf32>
    %c48_610 = arith.constant 48 : index
    %1822 = memref.load %arg6[%c48_610] : memref<288xf32, #tpu.memory_space<smem>>
    %1823 = vector.broadcast %1822 : f32 to vector<16x16xf32>
    %1824 = arith.mulf %1823, %1821 : vector<16x16xf32>
    %1825 = arith.addf %1807, %1824 : vector<16x16xf32>
    %c120 = arith.constant 120 : index
    %1826 = memref.load %arg6[%c120] : memref<288xf32, #tpu.memory_space<smem>>
    %1827 = vector.broadcast %1826 : f32 to vector<16x16xf32>
    %1828 = arith.mulf %1827, %1821 : vector<16x16xf32>
    %1829 = arith.addf %1811, %1828 : vector<16x16xf32>
    %c192 = arith.constant 192 : index
    %1830 = memref.load %arg6[%c192] : memref<288xf32, #tpu.memory_space<smem>>
    %1831 = vector.broadcast %1830 : f32 to vector<16x16xf32>
    %1832 = arith.mulf %1831, %1821 : vector<16x16xf32>
    %1833 = arith.addf %1815, %1832 : vector<16x16xf32>
    %c264 = arith.constant 264 : index
    %1834 = memref.load %arg6[%c264] : memref<288xf32, #tpu.memory_space<smem>>
    %1835 = vector.broadcast %1834 : f32 to vector<16x16xf32>
    %1836 = arith.mulf %1835, %1821 : vector<16x16xf32>
    %1837 = arith.addf %1819, %1836 : vector<16x16xf32>
    %c5_611 = arith.constant 5 : index
    %c1_612 = arith.constant 1 : index
    %c1_613 = arith.constant 1 : index
    %1838 = vector.load %arg10[%c5_611, %c1_612, %c1_613] : memref<8x18x18xf32, #tpu.memory_space<vmem>>, vector<1x16x16xf32>
    %1839 = vector.shape_cast %1838 : vector<1x16x16xf32> to vector<16x16xf32>
    %c49_614 = arith.constant 49 : index
    %1840 = memref.load %arg6[%c49_614] : memref<288xf32, #tpu.memory_space<smem>>
    %1841 = vector.broadcast %1840 : f32 to vector<16x16xf32>
    %1842 = arith.mulf %1841, %1839 : vector<16x16xf32>
    %1843 = arith.addf %1825, %1842 : vector<16x16xf32>
    %c121 = arith.constant 121 : index
    %1844 = memref.load %arg6[%c121] : memref<288xf32, #tpu.memory_space<smem>>
    %1845 = vector.broadcast %1844 : f32 to vector<16x16xf32>
    %1846 = arith.mulf %1845, %1839 : vector<16x16xf32>
    %1847 = arith.addf %1829, %1846 : vector<16x16xf32>
    %c193 = arith.constant 193 : index
    %1848 = memref.load %arg6[%c193] : memref<288xf32, #tpu.memory_space<smem>>
    %1849 = vector.broadcast %1848 : f32 to vector<16x16xf32>
    %1850 = arith.mulf %1849, %1839 : vector<16x16xf32>
    %1851 = arith.addf %1833, %1850 : vector<16x16xf32>
    %c265 = arith.constant 265 : index
    %1852 = memref.load %arg6[%c265] : memref<288xf32, #tpu.memory_space<smem>>
    %1853 = vector.broadcast %1852 : f32 to vector<16x16xf32>
    %1854 = arith.mulf %1853, %1839 : vector<16x16xf32>
    %1855 = arith.addf %1837, %1854 : vector<16x16xf32>
    %c5_615 = arith.constant 5 : index
    %c1_616 = arith.constant 1 : index
    %c2_617 = arith.constant 2 : index
    %1856 = vector.load %arg10[%c5_615, %c1_616, %c2_617] : memref<8x18x18xf32, #tpu.memory_space<vmem>>, vector<1x16x16xf32>
    %1857 = vector.shape_cast %1856 : vector<1x16x16xf32> to vector<16x16xf32>
    %c50_618 = arith.constant 50 : index
    %1858 = memref.load %arg6[%c50_618] : memref<288xf32, #tpu.memory_space<smem>>
    %1859 = vector.broadcast %1858 : f32 to vector<16x16xf32>
    %1860 = arith.mulf %1859, %1857 : vector<16x16xf32>
    %1861 = arith.addf %1843, %1860 : vector<16x16xf32>
    %c122 = arith.constant 122 : index
    %1862 = memref.load %arg6[%c122] : memref<288xf32, #tpu.memory_space<smem>>
    %1863 = vector.broadcast %1862 : f32 to vector<16x16xf32>
    %1864 = arith.mulf %1863, %1857 : vector<16x16xf32>
    %1865 = arith.addf %1847, %1864 : vector<16x16xf32>
    %c194 = arith.constant 194 : index
    %1866 = memref.load %arg6[%c194] : memref<288xf32, #tpu.memory_space<smem>>
    %1867 = vector.broadcast %1866 : f32 to vector<16x16xf32>
    %1868 = arith.mulf %1867, %1857 : vector<16x16xf32>
    %1869 = arith.addf %1851, %1868 : vector<16x16xf32>
    %c266 = arith.constant 266 : index
    %1870 = memref.load %arg6[%c266] : memref<288xf32, #tpu.memory_space<smem>>
    %1871 = vector.broadcast %1870 : f32 to vector<16x16xf32>
    %1872 = arith.mulf %1871, %1857 : vector<16x16xf32>
    %1873 = arith.addf %1855, %1872 : vector<16x16xf32>
    %c5_619 = arith.constant 5 : index
    %c2_620 = arith.constant 2 : index
    %c0_621 = arith.constant 0 : index
    %1874 = vector.load %arg10[%c5_619, %c2_620, %c0_621] : memref<8x18x18xf32, #tpu.memory_space<vmem>>, vector<1x16x16xf32>
    %1875 = vector.shape_cast %1874 : vector<1x16x16xf32> to vector<16x16xf32>
    %c51_622 = arith.constant 51 : index
    %1876 = memref.load %arg6[%c51_622] : memref<288xf32, #tpu.memory_space<smem>>
    %1877 = vector.broadcast %1876 : f32 to vector<16x16xf32>
    %1878 = arith.mulf %1877, %1875 : vector<16x16xf32>
    %1879 = arith.addf %1861, %1878 : vector<16x16xf32>
    %c123 = arith.constant 123 : index
    %1880 = memref.load %arg6[%c123] : memref<288xf32, #tpu.memory_space<smem>>
    %1881 = vector.broadcast %1880 : f32 to vector<16x16xf32>
    %1882 = arith.mulf %1881, %1875 : vector<16x16xf32>
    %1883 = arith.addf %1865, %1882 : vector<16x16xf32>
    %c195 = arith.constant 195 : index
    %1884 = memref.load %arg6[%c195] : memref<288xf32, #tpu.memory_space<smem>>
    %1885 = vector.broadcast %1884 : f32 to vector<16x16xf32>
    %1886 = arith.mulf %1885, %1875 : vector<16x16xf32>
    %1887 = arith.addf %1869, %1886 : vector<16x16xf32>
    %c267 = arith.constant 267 : index
    %1888 = memref.load %arg6[%c267] : memref<288xf32, #tpu.memory_space<smem>>
    %1889 = vector.broadcast %1888 : f32 to vector<16x16xf32>
    %1890 = arith.mulf %1889, %1875 : vector<16x16xf32>
    %1891 = arith.addf %1873, %1890 : vector<16x16xf32>
    %c5_623 = arith.constant 5 : index
    %c2_624 = arith.constant 2 : index
    %c1_625 = arith.constant 1 : index
    %1892 = vector.load %arg10[%c5_623, %c2_624, %c1_625] : memref<8x18x18xf32, #tpu.memory_space<vmem>>, vector<1x16x16xf32>
    %1893 = vector.shape_cast %1892 : vector<1x16x16xf32> to vector<16x16xf32>
    %c52_626 = arith.constant 52 : index
    %1894 = memref.load %arg6[%c52_626] : memref<288xf32, #tpu.memory_space<smem>>
    %1895 = vector.broadcast %1894 : f32 to vector<16x16xf32>
    %1896 = arith.mulf %1895, %1893 : vector<16x16xf32>
    %1897 = arith.addf %1879, %1896 : vector<16x16xf32>
    %c124 = arith.constant 124 : index
    %1898 = memref.load %arg6[%c124] : memref<288xf32, #tpu.memory_space<smem>>
    %1899 = vector.broadcast %1898 : f32 to vector<16x16xf32>
    %1900 = arith.mulf %1899, %1893 : vector<16x16xf32>
    %1901 = arith.addf %1883, %1900 : vector<16x16xf32>
    %c196 = arith.constant 196 : index
    %1902 = memref.load %arg6[%c196] : memref<288xf32, #tpu.memory_space<smem>>
    %1903 = vector.broadcast %1902 : f32 to vector<16x16xf32>
    %1904 = arith.mulf %1903, %1893 : vector<16x16xf32>
    %1905 = arith.addf %1887, %1904 : vector<16x16xf32>
    %c268 = arith.constant 268 : index
    %1906 = memref.load %arg6[%c268] : memref<288xf32, #tpu.memory_space<smem>>
    %1907 = vector.broadcast %1906 : f32 to vector<16x16xf32>
    %1908 = arith.mulf %1907, %1893 : vector<16x16xf32>
    %1909 = arith.addf %1891, %1908 : vector<16x16xf32>
    %c5_627 = arith.constant 5 : index
    %c2_628 = arith.constant 2 : index
    %c2_629 = arith.constant 2 : index
    %1910 = vector.load %arg10[%c5_627, %c2_628, %c2_629] : memref<8x18x18xf32, #tpu.memory_space<vmem>>, vector<1x16x16xf32>
    %1911 = vector.shape_cast %1910 : vector<1x16x16xf32> to vector<16x16xf32>
    %c53_630 = arith.constant 53 : index
    %1912 = memref.load %arg6[%c53_630] : memref<288xf32, #tpu.memory_space<smem>>
    %1913 = vector.broadcast %1912 : f32 to vector<16x16xf32>
    %1914 = arith.mulf %1913, %1911 : vector<16x16xf32>
    %1915 = arith.addf %1897, %1914 : vector<16x16xf32>
    %c125 = arith.constant 125 : index
    %1916 = memref.load %arg6[%c125] : memref<288xf32, #tpu.memory_space<smem>>
    %1917 = vector.broadcast %1916 : f32 to vector<16x16xf32>
    %1918 = arith.mulf %1917, %1911 : vector<16x16xf32>
    %1919 = arith.addf %1901, %1918 : vector<16x16xf32>
    %c197 = arith.constant 197 : index
    %1920 = memref.load %arg6[%c197] : memref<288xf32, #tpu.memory_space<smem>>
    %1921 = vector.broadcast %1920 : f32 to vector<16x16xf32>
    %1922 = arith.mulf %1921, %1911 : vector<16x16xf32>
    %1923 = arith.addf %1905, %1922 : vector<16x16xf32>
    %c269 = arith.constant 269 : index
    %1924 = memref.load %arg6[%c269] : memref<288xf32, #tpu.memory_space<smem>>
    %1925 = vector.broadcast %1924 : f32 to vector<16x16xf32>
    %1926 = arith.mulf %1925, %1911 : vector<16x16xf32>
    %1927 = arith.addf %1909, %1926 : vector<16x16xf32>
    %c6_631 = arith.constant 6 : index
    %c0_632 = arith.constant 0 : index
    %c0_633 = arith.constant 0 : index
    %1928 = vector.load %arg10[%c6_631, %c0_632, %c0_633] : memref<8x18x18xf32, #tpu.memory_space<vmem>>, vector<1x16x16xf32>
    %1929 = vector.shape_cast %1928 : vector<1x16x16xf32> to vector<16x16xf32>
    %c54_634 = arith.constant 54 : index
    %1930 = memref.load %arg6[%c54_634] : memref<288xf32, #tpu.memory_space<smem>>
    %1931 = vector.broadcast %1930 : f32 to vector<16x16xf32>
    %1932 = arith.mulf %1931, %1929 : vector<16x16xf32>
    %1933 = arith.addf %1915, %1932 : vector<16x16xf32>
    %c126 = arith.constant 126 : index
    %1934 = memref.load %arg6[%c126] : memref<288xf32, #tpu.memory_space<smem>>
    %1935 = vector.broadcast %1934 : f32 to vector<16x16xf32>
    %1936 = arith.mulf %1935, %1929 : vector<16x16xf32>
    %1937 = arith.addf %1919, %1936 : vector<16x16xf32>
    %c198 = arith.constant 198 : index
    %1938 = memref.load %arg6[%c198] : memref<288xf32, #tpu.memory_space<smem>>
    %1939 = vector.broadcast %1938 : f32 to vector<16x16xf32>
    %1940 = arith.mulf %1939, %1929 : vector<16x16xf32>
    %1941 = arith.addf %1923, %1940 : vector<16x16xf32>
    %c270 = arith.constant 270 : index
    %1942 = memref.load %arg6[%c270] : memref<288xf32, #tpu.memory_space<smem>>
    %1943 = vector.broadcast %1942 : f32 to vector<16x16xf32>
    %1944 = arith.mulf %1943, %1929 : vector<16x16xf32>
    %1945 = arith.addf %1927, %1944 : vector<16x16xf32>
    %c6_635 = arith.constant 6 : index
    %c0_636 = arith.constant 0 : index
    %c1_637 = arith.constant 1 : index
    %1946 = vector.load %arg10[%c6_635, %c0_636, %c1_637] : memref<8x18x18xf32, #tpu.memory_space<vmem>>, vector<1x16x16xf32>
    %1947 = vector.shape_cast %1946 : vector<1x16x16xf32> to vector<16x16xf32>
    %c55_638 = arith.constant 55 : index
    %1948 = memref.load %arg6[%c55_638] : memref<288xf32, #tpu.memory_space<smem>>
    %1949 = vector.broadcast %1948 : f32 to vector<16x16xf32>
    %1950 = arith.mulf %1949, %1947 : vector<16x16xf32>
    %1951 = arith.addf %1933, %1950 : vector<16x16xf32>
    %c127 = arith.constant 127 : index
    %1952 = memref.load %arg6[%c127] : memref<288xf32, #tpu.memory_space<smem>>
    %1953 = vector.broadcast %1952 : f32 to vector<16x16xf32>
    %1954 = arith.mulf %1953, %1947 : vector<16x16xf32>
    %1955 = arith.addf %1937, %1954 : vector<16x16xf32>
    %c199 = arith.constant 199 : index
    %1956 = memref.load %arg6[%c199] : memref<288xf32, #tpu.memory_space<smem>>
    %1957 = vector.broadcast %1956 : f32 to vector<16x16xf32>
    %1958 = arith.mulf %1957, %1947 : vector<16x16xf32>
    %1959 = arith.addf %1941, %1958 : vector<16x16xf32>
    %c271 = arith.constant 271 : index
    %1960 = memref.load %arg6[%c271] : memref<288xf32, #tpu.memory_space<smem>>
    %1961 = vector.broadcast %1960 : f32 to vector<16x16xf32>
    %1962 = arith.mulf %1961, %1947 : vector<16x16xf32>
    %1963 = arith.addf %1945, %1962 : vector<16x16xf32>
    %c6_639 = arith.constant 6 : index
    %c0_640 = arith.constant 0 : index
    %c2_641 = arith.constant 2 : index
    %1964 = vector.load %arg10[%c6_639, %c0_640, %c2_641] : memref<8x18x18xf32, #tpu.memory_space<vmem>>, vector<1x16x16xf32>
    %1965 = vector.shape_cast %1964 : vector<1x16x16xf32> to vector<16x16xf32>
    %c56_642 = arith.constant 56 : index
    %1966 = memref.load %arg6[%c56_642] : memref<288xf32, #tpu.memory_space<smem>>
    %1967 = vector.broadcast %1966 : f32 to vector<16x16xf32>
    %1968 = arith.mulf %1967, %1965 : vector<16x16xf32>
    %1969 = arith.addf %1951, %1968 : vector<16x16xf32>
    %c128 = arith.constant 128 : index
    %1970 = memref.load %arg6[%c128] : memref<288xf32, #tpu.memory_space<smem>>
    %1971 = vector.broadcast %1970 : f32 to vector<16x16xf32>
    %1972 = arith.mulf %1971, %1965 : vector<16x16xf32>
    %1973 = arith.addf %1955, %1972 : vector<16x16xf32>
    %c200 = arith.constant 200 : index
    %1974 = memref.load %arg6[%c200] : memref<288xf32, #tpu.memory_space<smem>>
    %1975 = vector.broadcast %1974 : f32 to vector<16x16xf32>
    %1976 = arith.mulf %1975, %1965 : vector<16x16xf32>
    %1977 = arith.addf %1959, %1976 : vector<16x16xf32>
    %c272 = arith.constant 272 : index
    %1978 = memref.load %arg6[%c272] : memref<288xf32, #tpu.memory_space<smem>>
    %1979 = vector.broadcast %1978 : f32 to vector<16x16xf32>
    %1980 = arith.mulf %1979, %1965 : vector<16x16xf32>
    %1981 = arith.addf %1963, %1980 : vector<16x16xf32>
    %c6_643 = arith.constant 6 : index
    %c1_644 = arith.constant 1 : index
    %c0_645 = arith.constant 0 : index
    %1982 = vector.load %arg10[%c6_643, %c1_644, %c0_645] : memref<8x18x18xf32, #tpu.memory_space<vmem>>, vector<1x16x16xf32>
    %1983 = vector.shape_cast %1982 : vector<1x16x16xf32> to vector<16x16xf32>
    %c57_646 = arith.constant 57 : index
    %1984 = memref.load %arg6[%c57_646] : memref<288xf32, #tpu.memory_space<smem>>
    %1985 = vector.broadcast %1984 : f32 to vector<16x16xf32>
    %1986 = arith.mulf %1985, %1983 : vector<16x16xf32>
    %1987 = arith.addf %1969, %1986 : vector<16x16xf32>
    %c129 = arith.constant 129 : index
    %1988 = memref.load %arg6[%c129] : memref<288xf32, #tpu.memory_space<smem>>
    %1989 = vector.broadcast %1988 : f32 to vector<16x16xf32>
    %1990 = arith.mulf %1989, %1983 : vector<16x16xf32>
    %1991 = arith.addf %1973, %1990 : vector<16x16xf32>
    %c201 = arith.constant 201 : index
    %1992 = memref.load %arg6[%c201] : memref<288xf32, #tpu.memory_space<smem>>
    %1993 = vector.broadcast %1992 : f32 to vector<16x16xf32>
    %1994 = arith.mulf %1993, %1983 : vector<16x16xf32>
    %1995 = arith.addf %1977, %1994 : vector<16x16xf32>
    %c273 = arith.constant 273 : index
    %1996 = memref.load %arg6[%c273] : memref<288xf32, #tpu.memory_space<smem>>
    %1997 = vector.broadcast %1996 : f32 to vector<16x16xf32>
    %1998 = arith.mulf %1997, %1983 : vector<16x16xf32>
    %1999 = arith.addf %1981, %1998 : vector<16x16xf32>
    %c6_647 = arith.constant 6 : index
    %c1_648 = arith.constant 1 : index
    %c1_649 = arith.constant 1 : index
    %2000 = vector.load %arg10[%c6_647, %c1_648, %c1_649] : memref<8x18x18xf32, #tpu.memory_space<vmem>>, vector<1x16x16xf32>
    %2001 = vector.shape_cast %2000 : vector<1x16x16xf32> to vector<16x16xf32>
    %c58_650 = arith.constant 58 : index
    %2002 = memref.load %arg6[%c58_650] : memref<288xf32, #tpu.memory_space<smem>>
    %2003 = vector.broadcast %2002 : f32 to vector<16x16xf32>
    %2004 = arith.mulf %2003, %2001 : vector<16x16xf32>
    %2005 = arith.addf %1987, %2004 : vector<16x16xf32>
    %c130 = arith.constant 130 : index
    %2006 = memref.load %arg6[%c130] : memref<288xf32, #tpu.memory_space<smem>>
    %2007 = vector.broadcast %2006 : f32 to vector<16x16xf32>
    %2008 = arith.mulf %2007, %2001 : vector<16x16xf32>
    %2009 = arith.addf %1991, %2008 : vector<16x16xf32>
    %c202 = arith.constant 202 : index
    %2010 = memref.load %arg6[%c202] : memref<288xf32, #tpu.memory_space<smem>>
    %2011 = vector.broadcast %2010 : f32 to vector<16x16xf32>
    %2012 = arith.mulf %2011, %2001 : vector<16x16xf32>
    %2013 = arith.addf %1995, %2012 : vector<16x16xf32>
    %c274 = arith.constant 274 : index
    %2014 = memref.load %arg6[%c274] : memref<288xf32, #tpu.memory_space<smem>>
    %2015 = vector.broadcast %2014 : f32 to vector<16x16xf32>
    %2016 = arith.mulf %2015, %2001 : vector<16x16xf32>
    %2017 = arith.addf %1999, %2016 : vector<16x16xf32>
    %c6_651 = arith.constant 6 : index
    %c1_652 = arith.constant 1 : index
    %c2_653 = arith.constant 2 : index
    %2018 = vector.load %arg10[%c6_651, %c1_652, %c2_653] : memref<8x18x18xf32, #tpu.memory_space<vmem>>, vector<1x16x16xf32>
    %2019 = vector.shape_cast %2018 : vector<1x16x16xf32> to vector<16x16xf32>
    %c59_654 = arith.constant 59 : index
    %2020 = memref.load %arg6[%c59_654] : memref<288xf32, #tpu.memory_space<smem>>
    %2021 = vector.broadcast %2020 : f32 to vector<16x16xf32>
    %2022 = arith.mulf %2021, %2019 : vector<16x16xf32>
    %2023 = arith.addf %2005, %2022 : vector<16x16xf32>
    %c131 = arith.constant 131 : index
    %2024 = memref.load %arg6[%c131] : memref<288xf32, #tpu.memory_space<smem>>
    %2025 = vector.broadcast %2024 : f32 to vector<16x16xf32>
    %2026 = arith.mulf %2025, %2019 : vector<16x16xf32>
    %2027 = arith.addf %2009, %2026 : vector<16x16xf32>
    %c203 = arith.constant 203 : index
    %2028 = memref.load %arg6[%c203] : memref<288xf32, #tpu.memory_space<smem>>
    %2029 = vector.broadcast %2028 : f32 to vector<16x16xf32>
    %2030 = arith.mulf %2029, %2019 : vector<16x16xf32>
    %2031 = arith.addf %2013, %2030 : vector<16x16xf32>
    %c275 = arith.constant 275 : index
    %2032 = memref.load %arg6[%c275] : memref<288xf32, #tpu.memory_space<smem>>
    %2033 = vector.broadcast %2032 : f32 to vector<16x16xf32>
    %2034 = arith.mulf %2033, %2019 : vector<16x16xf32>
    %2035 = arith.addf %2017, %2034 : vector<16x16xf32>
    %c6_655 = arith.constant 6 : index
    %c2_656 = arith.constant 2 : index
    %c0_657 = arith.constant 0 : index
    %2036 = vector.load %arg10[%c6_655, %c2_656, %c0_657] : memref<8x18x18xf32, #tpu.memory_space<vmem>>, vector<1x16x16xf32>
    %2037 = vector.shape_cast %2036 : vector<1x16x16xf32> to vector<16x16xf32>
    %c60_658 = arith.constant 60 : index
    %2038 = memref.load %arg6[%c60_658] : memref<288xf32, #tpu.memory_space<smem>>
    %2039 = vector.broadcast %2038 : f32 to vector<16x16xf32>
    %2040 = arith.mulf %2039, %2037 : vector<16x16xf32>
    %2041 = arith.addf %2023, %2040 : vector<16x16xf32>
    %c132 = arith.constant 132 : index
    %2042 = memref.load %arg6[%c132] : memref<288xf32, #tpu.memory_space<smem>>
    %2043 = vector.broadcast %2042 : f32 to vector<16x16xf32>
    %2044 = arith.mulf %2043, %2037 : vector<16x16xf32>
    %2045 = arith.addf %2027, %2044 : vector<16x16xf32>
    %c204 = arith.constant 204 : index
    %2046 = memref.load %arg6[%c204] : memref<288xf32, #tpu.memory_space<smem>>
    %2047 = vector.broadcast %2046 : f32 to vector<16x16xf32>
    %2048 = arith.mulf %2047, %2037 : vector<16x16xf32>
    %2049 = arith.addf %2031, %2048 : vector<16x16xf32>
    %c276 = arith.constant 276 : index
    %2050 = memref.load %arg6[%c276] : memref<288xf32, #tpu.memory_space<smem>>
    %2051 = vector.broadcast %2050 : f32 to vector<16x16xf32>
    %2052 = arith.mulf %2051, %2037 : vector<16x16xf32>
    %2053 = arith.addf %2035, %2052 : vector<16x16xf32>
    %c6_659 = arith.constant 6 : index
    %c2_660 = arith.constant 2 : index
    %c1_661 = arith.constant 1 : index
    %2054 = vector.load %arg10[%c6_659, %c2_660, %c1_661] : memref<8x18x18xf32, #tpu.memory_space<vmem>>, vector<1x16x16xf32>
    %2055 = vector.shape_cast %2054 : vector<1x16x16xf32> to vector<16x16xf32>
    %c61_662 = arith.constant 61 : index
    %2056 = memref.load %arg6[%c61_662] : memref<288xf32, #tpu.memory_space<smem>>
    %2057 = vector.broadcast %2056 : f32 to vector<16x16xf32>
    %2058 = arith.mulf %2057, %2055 : vector<16x16xf32>
    %2059 = arith.addf %2041, %2058 : vector<16x16xf32>
    %c133 = arith.constant 133 : index
    %2060 = memref.load %arg6[%c133] : memref<288xf32, #tpu.memory_space<smem>>
    %2061 = vector.broadcast %2060 : f32 to vector<16x16xf32>
    %2062 = arith.mulf %2061, %2055 : vector<16x16xf32>
    %2063 = arith.addf %2045, %2062 : vector<16x16xf32>
    %c205 = arith.constant 205 : index
    %2064 = memref.load %arg6[%c205] : memref<288xf32, #tpu.memory_space<smem>>
    %2065 = vector.broadcast %2064 : f32 to vector<16x16xf32>
    %2066 = arith.mulf %2065, %2055 : vector<16x16xf32>
    %2067 = arith.addf %2049, %2066 : vector<16x16xf32>
    %c277 = arith.constant 277 : index
    %2068 = memref.load %arg6[%c277] : memref<288xf32, #tpu.memory_space<smem>>
    %2069 = vector.broadcast %2068 : f32 to vector<16x16xf32>
    %2070 = arith.mulf %2069, %2055 : vector<16x16xf32>
    %2071 = arith.addf %2053, %2070 : vector<16x16xf32>
    %c6_663 = arith.constant 6 : index
    %c2_664 = arith.constant 2 : index
    %c2_665 = arith.constant 2 : index
    %2072 = vector.load %arg10[%c6_663, %c2_664, %c2_665] : memref<8x18x18xf32, #tpu.memory_space<vmem>>, vector<1x16x16xf32>
    %2073 = vector.shape_cast %2072 : vector<1x16x16xf32> to vector<16x16xf32>
    %c62_666 = arith.constant 62 : index
    %2074 = memref.load %arg6[%c62_666] : memref<288xf32, #tpu.memory_space<smem>>
    %2075 = vector.broadcast %2074 : f32 to vector<16x16xf32>
    %2076 = arith.mulf %2075, %2073 : vector<16x16xf32>
    %2077 = arith.addf %2059, %2076 : vector<16x16xf32>
    %c134 = arith.constant 134 : index
    %2078 = memref.load %arg6[%c134] : memref<288xf32, #tpu.memory_space<smem>>
    %2079 = vector.broadcast %2078 : f32 to vector<16x16xf32>
    %2080 = arith.mulf %2079, %2073 : vector<16x16xf32>
    %2081 = arith.addf %2063, %2080 : vector<16x16xf32>
    %c206 = arith.constant 206 : index
    %2082 = memref.load %arg6[%c206] : memref<288xf32, #tpu.memory_space<smem>>
    %2083 = vector.broadcast %2082 : f32 to vector<16x16xf32>
    %2084 = arith.mulf %2083, %2073 : vector<16x16xf32>
    %2085 = arith.addf %2067, %2084 : vector<16x16xf32>
    %c278 = arith.constant 278 : index
    %2086 = memref.load %arg6[%c278] : memref<288xf32, #tpu.memory_space<smem>>
    %2087 = vector.broadcast %2086 : f32 to vector<16x16xf32>
    %2088 = arith.mulf %2087, %2073 : vector<16x16xf32>
    %2089 = arith.addf %2071, %2088 : vector<16x16xf32>
    %c7_667 = arith.constant 7 : index
    %c0_668 = arith.constant 0 : index
    %c0_669 = arith.constant 0 : index
    %2090 = vector.load %arg10[%c7_667, %c0_668, %c0_669] : memref<8x18x18xf32, #tpu.memory_space<vmem>>, vector<1x16x16xf32>
    %2091 = vector.shape_cast %2090 : vector<1x16x16xf32> to vector<16x16xf32>
    %c63_670 = arith.constant 63 : index
    %2092 = memref.load %arg6[%c63_670] : memref<288xf32, #tpu.memory_space<smem>>
    %2093 = vector.broadcast %2092 : f32 to vector<16x16xf32>
    %2094 = arith.mulf %2093, %2091 : vector<16x16xf32>
    %2095 = arith.addf %2077, %2094 : vector<16x16xf32>
    %c135 = arith.constant 135 : index
    %2096 = memref.load %arg6[%c135] : memref<288xf32, #tpu.memory_space<smem>>
    %2097 = vector.broadcast %2096 : f32 to vector<16x16xf32>
    %2098 = arith.mulf %2097, %2091 : vector<16x16xf32>
    %2099 = arith.addf %2081, %2098 : vector<16x16xf32>
    %c207 = arith.constant 207 : index
    %2100 = memref.load %arg6[%c207] : memref<288xf32, #tpu.memory_space<smem>>
    %2101 = vector.broadcast %2100 : f32 to vector<16x16xf32>
    %2102 = arith.mulf %2101, %2091 : vector<16x16xf32>
    %2103 = arith.addf %2085, %2102 : vector<16x16xf32>
    %c279 = arith.constant 279 : index
    %2104 = memref.load %arg6[%c279] : memref<288xf32, #tpu.memory_space<smem>>
    %2105 = vector.broadcast %2104 : f32 to vector<16x16xf32>
    %2106 = arith.mulf %2105, %2091 : vector<16x16xf32>
    %2107 = arith.addf %2089, %2106 : vector<16x16xf32>
    %c7_671 = arith.constant 7 : index
    %c0_672 = arith.constant 0 : index
    %c1_673 = arith.constant 1 : index
    %2108 = vector.load %arg10[%c7_671, %c0_672, %c1_673] : memref<8x18x18xf32, #tpu.memory_space<vmem>>, vector<1x16x16xf32>
    %2109 = vector.shape_cast %2108 : vector<1x16x16xf32> to vector<16x16xf32>
    %c64_674 = arith.constant 64 : index
    %2110 = memref.load %arg6[%c64_674] : memref<288xf32, #tpu.memory_space<smem>>
    %2111 = vector.broadcast %2110 : f32 to vector<16x16xf32>
    %2112 = arith.mulf %2111, %2109 : vector<16x16xf32>
    %2113 = arith.addf %2095, %2112 : vector<16x16xf32>
    %c136 = arith.constant 136 : index
    %2114 = memref.load %arg6[%c136] : memref<288xf32, #tpu.memory_space<smem>>
    %2115 = vector.broadcast %2114 : f32 to vector<16x16xf32>
    %2116 = arith.mulf %2115, %2109 : vector<16x16xf32>
    %2117 = arith.addf %2099, %2116 : vector<16x16xf32>
    %c208 = arith.constant 208 : index
    %2118 = memref.load %arg6[%c208] : memref<288xf32, #tpu.memory_space<smem>>
    %2119 = vector.broadcast %2118 : f32 to vector<16x16xf32>
    %2120 = arith.mulf %2119, %2109 : vector<16x16xf32>
    %2121 = arith.addf %2103, %2120 : vector<16x16xf32>
    %c280 = arith.constant 280 : index
    %2122 = memref.load %arg6[%c280] : memref<288xf32, #tpu.memory_space<smem>>
    %2123 = vector.broadcast %2122 : f32 to vector<16x16xf32>
    %2124 = arith.mulf %2123, %2109 : vector<16x16xf32>
    %2125 = arith.addf %2107, %2124 : vector<16x16xf32>
    %c7_675 = arith.constant 7 : index
    %c0_676 = arith.constant 0 : index
    %c2_677 = arith.constant 2 : index
    %2126 = vector.load %arg10[%c7_675, %c0_676, %c2_677] : memref<8x18x18xf32, #tpu.memory_space<vmem>>, vector<1x16x16xf32>
    %2127 = vector.shape_cast %2126 : vector<1x16x16xf32> to vector<16x16xf32>
    %c65_678 = arith.constant 65 : index
    %2128 = memref.load %arg6[%c65_678] : memref<288xf32, #tpu.memory_space<smem>>
    %2129 = vector.broadcast %2128 : f32 to vector<16x16xf32>
    %2130 = arith.mulf %2129, %2127 : vector<16x16xf32>
    %2131 = arith.addf %2113, %2130 : vector<16x16xf32>
    %c137 = arith.constant 137 : index
    %2132 = memref.load %arg6[%c137] : memref<288xf32, #tpu.memory_space<smem>>
    %2133 = vector.broadcast %2132 : f32 to vector<16x16xf32>
    %2134 = arith.mulf %2133, %2127 : vector<16x16xf32>
    %2135 = arith.addf %2117, %2134 : vector<16x16xf32>
    %c209 = arith.constant 209 : index
    %2136 = memref.load %arg6[%c209] : memref<288xf32, #tpu.memory_space<smem>>
    %2137 = vector.broadcast %2136 : f32 to vector<16x16xf32>
    %2138 = arith.mulf %2137, %2127 : vector<16x16xf32>
    %2139 = arith.addf %2121, %2138 : vector<16x16xf32>
    %c281 = arith.constant 281 : index
    %2140 = memref.load %arg6[%c281] : memref<288xf32, #tpu.memory_space<smem>>
    %2141 = vector.broadcast %2140 : f32 to vector<16x16xf32>
    %2142 = arith.mulf %2141, %2127 : vector<16x16xf32>
    %2143 = arith.addf %2125, %2142 : vector<16x16xf32>
    %c7_679 = arith.constant 7 : index
    %c1_680 = arith.constant 1 : index
    %c0_681 = arith.constant 0 : index
    %2144 = vector.load %arg10[%c7_679, %c1_680, %c0_681] : memref<8x18x18xf32, #tpu.memory_space<vmem>>, vector<1x16x16xf32>
    %2145 = vector.shape_cast %2144 : vector<1x16x16xf32> to vector<16x16xf32>
    %c66_682 = arith.constant 66 : index
    %2146 = memref.load %arg6[%c66_682] : memref<288xf32, #tpu.memory_space<smem>>
    %2147 = vector.broadcast %2146 : f32 to vector<16x16xf32>
    %2148 = arith.mulf %2147, %2145 : vector<16x16xf32>
    %2149 = arith.addf %2131, %2148 : vector<16x16xf32>
    %c138 = arith.constant 138 : index
    %2150 = memref.load %arg6[%c138] : memref<288xf32, #tpu.memory_space<smem>>
    %2151 = vector.broadcast %2150 : f32 to vector<16x16xf32>
    %2152 = arith.mulf %2151, %2145 : vector<16x16xf32>
    %2153 = arith.addf %2135, %2152 : vector<16x16xf32>
    %c210 = arith.constant 210 : index
    %2154 = memref.load %arg6[%c210] : memref<288xf32, #tpu.memory_space<smem>>
    %2155 = vector.broadcast %2154 : f32 to vector<16x16xf32>
    %2156 = arith.mulf %2155, %2145 : vector<16x16xf32>
    %2157 = arith.addf %2139, %2156 : vector<16x16xf32>
    %c282 = arith.constant 282 : index
    %2158 = memref.load %arg6[%c282] : memref<288xf32, #tpu.memory_space<smem>>
    %2159 = vector.broadcast %2158 : f32 to vector<16x16xf32>
    %2160 = arith.mulf %2159, %2145 : vector<16x16xf32>
    %2161 = arith.addf %2143, %2160 : vector<16x16xf32>
    %c7_683 = arith.constant 7 : index
    %c1_684 = arith.constant 1 : index
    %c1_685 = arith.constant 1 : index
    %2162 = vector.load %arg10[%c7_683, %c1_684, %c1_685] : memref<8x18x18xf32, #tpu.memory_space<vmem>>, vector<1x16x16xf32>
    %2163 = vector.shape_cast %2162 : vector<1x16x16xf32> to vector<16x16xf32>
    %c67_686 = arith.constant 67 : index
    %2164 = memref.load %arg6[%c67_686] : memref<288xf32, #tpu.memory_space<smem>>
    %2165 = vector.broadcast %2164 : f32 to vector<16x16xf32>
    %2166 = arith.mulf %2165, %2163 : vector<16x16xf32>
    %2167 = arith.addf %2149, %2166 : vector<16x16xf32>
    %c139 = arith.constant 139 : index
    %2168 = memref.load %arg6[%c139] : memref<288xf32, #tpu.memory_space<smem>>
    %2169 = vector.broadcast %2168 : f32 to vector<16x16xf32>
    %2170 = arith.mulf %2169, %2163 : vector<16x16xf32>
    %2171 = arith.addf %2153, %2170 : vector<16x16xf32>
    %c211 = arith.constant 211 : index
    %2172 = memref.load %arg6[%c211] : memref<288xf32, #tpu.memory_space<smem>>
    %2173 = vector.broadcast %2172 : f32 to vector<16x16xf32>
    %2174 = arith.mulf %2173, %2163 : vector<16x16xf32>
    %2175 = arith.addf %2157, %2174 : vector<16x16xf32>
    %c283 = arith.constant 283 : index
    %2176 = memref.load %arg6[%c283] : memref<288xf32, #tpu.memory_space<smem>>
    %2177 = vector.broadcast %2176 : f32 to vector<16x16xf32>
    %2178 = arith.mulf %2177, %2163 : vector<16x16xf32>
    %2179 = arith.addf %2161, %2178 : vector<16x16xf32>
    %c7_687 = arith.constant 7 : index
    %c1_688 = arith.constant 1 : index
    %c2_689 = arith.constant 2 : index
    %2180 = vector.load %arg10[%c7_687, %c1_688, %c2_689] : memref<8x18x18xf32, #tpu.memory_space<vmem>>, vector<1x16x16xf32>
    %2181 = vector.shape_cast %2180 : vector<1x16x16xf32> to vector<16x16xf32>
    %c68_690 = arith.constant 68 : index
    %2182 = memref.load %arg6[%c68_690] : memref<288xf32, #tpu.memory_space<smem>>
    %2183 = vector.broadcast %2182 : f32 to vector<16x16xf32>
    %2184 = arith.mulf %2183, %2181 : vector<16x16xf32>
    %2185 = arith.addf %2167, %2184 : vector<16x16xf32>
    %c140 = arith.constant 140 : index
    %2186 = memref.load %arg6[%c140] : memref<288xf32, #tpu.memory_space<smem>>
    %2187 = vector.broadcast %2186 : f32 to vector<16x16xf32>
    %2188 = arith.mulf %2187, %2181 : vector<16x16xf32>
    %2189 = arith.addf %2171, %2188 : vector<16x16xf32>
    %c212 = arith.constant 212 : index
    %2190 = memref.load %arg6[%c212] : memref<288xf32, #tpu.memory_space<smem>>
    %2191 = vector.broadcast %2190 : f32 to vector<16x16xf32>
    %2192 = arith.mulf %2191, %2181 : vector<16x16xf32>
    %2193 = arith.addf %2175, %2192 : vector<16x16xf32>
    %c284 = arith.constant 284 : index
    %2194 = memref.load %arg6[%c284] : memref<288xf32, #tpu.memory_space<smem>>
    %2195 = vector.broadcast %2194 : f32 to vector<16x16xf32>
    %2196 = arith.mulf %2195, %2181 : vector<16x16xf32>
    %2197 = arith.addf %2179, %2196 : vector<16x16xf32>
    %c7_691 = arith.constant 7 : index
    %c2_692 = arith.constant 2 : index
    %c0_693 = arith.constant 0 : index
    %2198 = vector.load %arg10[%c7_691, %c2_692, %c0_693] : memref<8x18x18xf32, #tpu.memory_space<vmem>>, vector<1x16x16xf32>
    %2199 = vector.shape_cast %2198 : vector<1x16x16xf32> to vector<16x16xf32>
    %c69_694 = arith.constant 69 : index
    %2200 = memref.load %arg6[%c69_694] : memref<288xf32, #tpu.memory_space<smem>>
    %2201 = vector.broadcast %2200 : f32 to vector<16x16xf32>
    %2202 = arith.mulf %2201, %2199 : vector<16x16xf32>
    %2203 = arith.addf %2185, %2202 : vector<16x16xf32>
    %c141 = arith.constant 141 : index
    %2204 = memref.load %arg6[%c141] : memref<288xf32, #tpu.memory_space<smem>>
    %2205 = vector.broadcast %2204 : f32 to vector<16x16xf32>
    %2206 = arith.mulf %2205, %2199 : vector<16x16xf32>
    %2207 = arith.addf %2189, %2206 : vector<16x16xf32>
    %c213 = arith.constant 213 : index
    %2208 = memref.load %arg6[%c213] : memref<288xf32, #tpu.memory_space<smem>>
    %2209 = vector.broadcast %2208 : f32 to vector<16x16xf32>
    %2210 = arith.mulf %2209, %2199 : vector<16x16xf32>
    %2211 = arith.addf %2193, %2210 : vector<16x16xf32>
    %c285 = arith.constant 285 : index
    %2212 = memref.load %arg6[%c285] : memref<288xf32, #tpu.memory_space<smem>>
    %2213 = vector.broadcast %2212 : f32 to vector<16x16xf32>
    %2214 = arith.mulf %2213, %2199 : vector<16x16xf32>
    %2215 = arith.addf %2197, %2214 : vector<16x16xf32>
    %c7_695 = arith.constant 7 : index
    %c2_696 = arith.constant 2 : index
    %c1_697 = arith.constant 1 : index
    %2216 = vector.load %arg10[%c7_695, %c2_696, %c1_697] : memref<8x18x18xf32, #tpu.memory_space<vmem>>, vector<1x16x16xf32>
    %2217 = vector.shape_cast %2216 : vector<1x16x16xf32> to vector<16x16xf32>
    %c70_698 = arith.constant 70 : index
    %2218 = memref.load %arg6[%c70_698] : memref<288xf32, #tpu.memory_space<smem>>
    %2219 = vector.broadcast %2218 : f32 to vector<16x16xf32>
    %2220 = arith.mulf %2219, %2217 : vector<16x16xf32>
    %2221 = arith.addf %2203, %2220 : vector<16x16xf32>
    %c142 = arith.constant 142 : index
    %2222 = memref.load %arg6[%c142] : memref<288xf32, #tpu.memory_space<smem>>
    %2223 = vector.broadcast %2222 : f32 to vector<16x16xf32>
    %2224 = arith.mulf %2223, %2217 : vector<16x16xf32>
    %2225 = arith.addf %2207, %2224 : vector<16x16xf32>
    %c214 = arith.constant 214 : index
    %2226 = memref.load %arg6[%c214] : memref<288xf32, #tpu.memory_space<smem>>
    %2227 = vector.broadcast %2226 : f32 to vector<16x16xf32>
    %2228 = arith.mulf %2227, %2217 : vector<16x16xf32>
    %2229 = arith.addf %2211, %2228 : vector<16x16xf32>
    %c286 = arith.constant 286 : index
    %2230 = memref.load %arg6[%c286] : memref<288xf32, #tpu.memory_space<smem>>
    %2231 = vector.broadcast %2230 : f32 to vector<16x16xf32>
    %2232 = arith.mulf %2231, %2217 : vector<16x16xf32>
    %2233 = arith.addf %2215, %2232 : vector<16x16xf32>
    %c7_699 = arith.constant 7 : index
    %c2_700 = arith.constant 2 : index
    %c2_701 = arith.constant 2 : index
    %2234 = vector.load %arg10[%c7_699, %c2_700, %c2_701] : memref<8x18x18xf32, #tpu.memory_space<vmem>>, vector<1x16x16xf32>
    %2235 = vector.shape_cast %2234 : vector<1x16x16xf32> to vector<16x16xf32>
    %c71_702 = arith.constant 71 : index
    %2236 = memref.load %arg6[%c71_702] : memref<288xf32, #tpu.memory_space<smem>>
    %2237 = vector.broadcast %2236 : f32 to vector<16x16xf32>
    %2238 = arith.mulf %2237, %2235 : vector<16x16xf32>
    %2239 = arith.addf %2221, %2238 : vector<16x16xf32>
    %c143 = arith.constant 143 : index
    %2240 = memref.load %arg6[%c143] : memref<288xf32, #tpu.memory_space<smem>>
    %2241 = vector.broadcast %2240 : f32 to vector<16x16xf32>
    %2242 = arith.mulf %2241, %2235 : vector<16x16xf32>
    %2243 = arith.addf %2225, %2242 : vector<16x16xf32>
    %c215 = arith.constant 215 : index
    %2244 = memref.load %arg6[%c215] : memref<288xf32, #tpu.memory_space<smem>>
    %2245 = vector.broadcast %2244 : f32 to vector<16x16xf32>
    %2246 = arith.mulf %2245, %2235 : vector<16x16xf32>
    %2247 = arith.addf %2229, %2246 : vector<16x16xf32>
    %c287 = arith.constant 287 : index
    %2248 = memref.load %arg6[%c287] : memref<288xf32, #tpu.memory_space<smem>>
    %2249 = vector.broadcast %2248 : f32 to vector<16x16xf32>
    %2250 = arith.mulf %2249, %2235 : vector<16x16xf32>
    %2251 = arith.addf %2233, %2250 : vector<16x16xf32>
    %cst_703 = arith.constant 0.000000e+00 : f32
    %2252 = vector.broadcast %cst_703 : f32 to vector<16x16xf32>
    %2253 = arith.cmpf ogt, %2239, %2252 : vector<16x16xf32>
    %2254 = vector.broadcast %947 : f32 to vector<16x16xf32>
    %2255 = arith.mulf %2254, %2239 : vector<16x16xf32>
    %2256 = arith.select %2253, %2239, %2255 : vector<16x16xi1>, vector<16x16xf32>
    %cst_704 = arith.constant 0.000000e+00 : f32
    %2257 = vector.broadcast %cst_704 : f32 to vector<16x16xf32>
    %2258 = arith.cmpf ogt, %2243, %2257 : vector<16x16xf32>
    %2259 = vector.broadcast %947 : f32 to vector<16x16xf32>
    %2260 = arith.mulf %2259, %2243 : vector<16x16xf32>
    %2261 = arith.select %2258, %2243, %2260 : vector<16x16xi1>, vector<16x16xf32>
    %cst_705 = arith.constant 0.000000e+00 : f32
    %2262 = vector.broadcast %cst_705 : f32 to vector<16x16xf32>
    %2263 = arith.cmpf ogt, %2247, %2262 : vector<16x16xf32>
    %2264 = vector.broadcast %947 : f32 to vector<16x16xf32>
    %2265 = arith.mulf %2264, %2247 : vector<16x16xf32>
    %2266 = arith.select %2263, %2247, %2265 : vector<16x16xi1>, vector<16x16xf32>
    %cst_706 = arith.constant 0.000000e+00 : f32
    %2267 = vector.broadcast %cst_706 : f32 to vector<16x16xf32>
    %2268 = arith.cmpf ogt, %2251, %2267 : vector<16x16xf32>
    %2269 = vector.broadcast %947 : f32 to vector<16x16xf32>
    %2270 = arith.mulf %2269, %2251 : vector<16x16xf32>
    %2271 = arith.select %2268, %2251, %2270 : vector<16x16xi1>, vector<16x16xf32>
    %c0_707 = arith.constant 0 : index
    %c0_708 = arith.constant 0 : index
    %c0_709 = arith.constant 0 : index
    %c0_710 = arith.constant 0 : index
    %2272 = vector.load %arg1[%c0_707, %c0_708, %c0_709, %c0_710] : memref<1x4x16x16xf32, #tpu.memory_space<vmem>>, vector<1x1x16x16xf32>
    %2273 = vector.shape_cast %2272 : vector<1x1x16x16xf32> to vector<16x16xf32>
    %2274 = arith.addf %2256, %2273 : vector<16x16xf32>
    %c0_711 = arith.constant 0 : index
    %c0_712 = arith.constant 0 : index
    %c0_713 = arith.constant 0 : index
    %c0_714 = arith.constant 0 : index
    %2275 = vector.load %arg9[%c0_711, %c0_712, %c0_713, %c0_714] : memref<1x4x16x16xf32, #tpu.memory_space<vmem>>, vector<1x1x16x16xf32>
    %2276 = vector.shape_cast %2275 : vector<1x1x16x16xf32> to vector<16x16xf32>
    %2277 = vector.shape_cast %2274 : vector<16x16xf32> to vector<1x1x16x16xf32>
    tpu.vector_store %arg9[%c0_711, %c0_712, %c0_713, %c0_714], %2277 {strides = array<i32>} : memref<1x4x16x16xf32, #tpu.memory_space<vmem>>, vector<1x1x16x16xf32>,
    %c0_715 = arith.constant 0 : index
    %c1_716 = arith.constant 1 : index
    %c0_717 = arith.constant 0 : index
    %c0_718 = arith.constant 0 : index
    %2278 = vector.load %arg1[%c0_715, %c1_716, %c0_717, %c0_718] : memref<1x4x16x16xf32, #tpu.memory_space<vmem>>, vector<1x1x16x16xf32>
    %2279 = vector.shape_cast %2278 : vector<1x1x16x16xf32> to vector<16x16xf32>
    %2280 = arith.addf %2261, %2279 : vector<16x16xf32>
    %c0_719 = arith.constant 0 : index
    %c1_720 = arith.constant 1 : index
    %c0_721 = arith.constant 0 : index
    %c0_722 = arith.constant 0 : index
    %2281 = vector.load %arg9[%c0_719, %c1_720, %c0_721, %c0_722] : memref<1x4x16x16xf32, #tpu.memory_space<vmem>>, vector<1x1x16x16xf32>
    %2282 = vector.shape_cast %2281 : vector<1x1x16x16xf32> to vector<16x16xf32>
    %2283 = vector.shape_cast %2280 : vector<16x16xf32> to vector<1x1x16x16xf32>
    tpu.vector_store %arg9[%c0_719, %c1_720, %c0_721, %c0_722], %2283 {strides = array<i32>} : memref<1x4x16x16xf32, #tpu.memory_space<vmem>>, vector<1x1x16x16xf32>,
    %c0_723 = arith.constant 0 : index
    %c2_724 = arith.constant 2 : index
    %c0_725 = arith.constant 0 : index
    %c0_726 = arith.constant 0 : index
    %2284 = vector.load %arg1[%c0_723, %c2_724, %c0_725, %c0_726] : memref<1x4x16x16xf32, #tpu.memory_space<vmem>>, vector<1x1x16x16xf32>
    %2285 = vector.shape_cast %2284 : vector<1x1x16x16xf32> to vector<16x16xf32>
    %2286 = arith.addf %2266, %2285 : vector<16x16xf32>
    %c0_727 = arith.constant 0 : index
    %c2_728 = arith.constant 2 : index
    %c0_729 = arith.constant 0 : index
    %c0_730 = arith.constant 0 : index
    %2287 = vector.load %arg9[%c0_727, %c2_728, %c0_729, %c0_730] : memref<1x4x16x16xf32, #tpu.memory_space<vmem>>, vector<1x1x16x16xf32>
    %2288 = vector.shape_cast %2287 : vector<1x1x16x16xf32> to vector<16x16xf32>
    %2289 = vector.shape_cast %2286 : vector<16x16xf32> to vector<1x1x16x16xf32>
    tpu.vector_store %arg9[%c0_727, %c2_728, %c0_729, %c0_730], %2289 {strides = array<i32>} : memref<1x4x16x16xf32, #tpu.memory_space<vmem>>, vector<1x1x16x16xf32>,
    %c0_731 = arith.constant 0 : index
    %c3_732 = arith.constant 3 : index
    %c0_733 = arith.constant 0 : index
    %c0_734 = arith.constant 0 : index
    %2290 = vector.load %arg1[%c0_731, %c3_732, %c0_733, %c0_734] : memref<1x4x16x16xf32, #tpu.memory_space<vmem>>, vector<1x1x16x16xf32>
    %2291 = vector.shape_cast %2290 : vector<1x1x16x16xf32> to vector<16x16xf32>
    %2292 = arith.addf %2271, %2291 : vector<16x16xf32>
    %c0_735 = arith.constant 0 : index
    %c3_736 = arith.constant 3 : index
    %c0_737 = arith.constant 0 : index
    %c0_738 = arith.constant 0 : index
    %2293 = vector.load %arg9[%c0_735, %c3_736, %c0_737, %c0_738] : memref<1x4x16x16xf32, #tpu.memory_space<vmem>>, vector<1x1x16x16xf32>
    %2294 = vector.shape_cast %2293 : vector<1x1x16x16xf32> to vector<16x16xf32>
    %2295 = vector.shape_cast %2292 : vector<16x16xf32> to vector<1x1x16x16xf32>
    tpu.vector_store %arg9[%c0_735, %c3_736, %c0_737, %c0_738], %2295 {strides = array<i32>} : memref<1x4x16x16xf32, #tpu.memory_space<vmem>>, vector<1x1x16x16xf32>,
    return
  }
  func.func @transform_0(%arg0: i32) -> (i32, i32, i32, i32) {
    %c0_i32 = arith.constant 0 : i32
    %c0_i32_0 = arith.constant 0 : i32
    %c0_i32_1 = arith.constant 0 : i32
    %c0_i32_2 = arith.constant 0 : i32
    return %arg0, %c0_i32, %c0_i32_0, %c0_i32_1 : i32, i32, i32, i32
  }
  func.func @transform_1(%arg0: i32) -> i32 {
    %c0_i32 = arith.constant 0 : i32
    %c0_i32_0 = arith.constant 0 : i32
    return %c0_i32 : i32
  }
  func.func @transform_2(%arg0: i32) -> i32 {
    %c0_i32 = arith.constant 0 : i32
    %c0_i32_0 = arith.constant 0 : i32
    return %c0_i32 : i32
  }
  func.func @transform_3(%arg0: i32) -> i32 {
    %c0_i32 = arith.constant 0 : i32
    %c0_i32_0 = arith.constant 0 : i32
    return %c0_i32 : i32
  }
  func.func @transform_4(%arg0: i32) -> i32 {
    %c0_i32 = arith.constant 0 : i32
    %c0_i32_0 = arith.constant 0 : i32
    return %c0_i32 : i32
  }
  func.func @transform_5(%arg0: i32) -> i32 {
    %c0_i32 = arith.constant 0 : i32
    %c0_i32_0 = arith.constant 0 : i32
    return %c0_i32 : i32
  }
  func.func @transform_6(%arg0: i32) -> i32 {
    %c0_i32 = arith.constant 0 : i32
    %c0_i32_0 = arith.constant 0 : i32
    return %c0_i32 : i32
  }
  func.func @transform_7(%arg0: i32) -> i32 {
    %c0_i32 = arith.constant 0 : i32
    %c0_i32_0 = arith.constant 0 : i32
    return %c0_i32 : i32
  }
  func.func @transform_8(%arg0: i32) -> (i32, i32, i32, i32) {
    %c0_i32 = arith.constant 0 : i32
    %c0_i32_0 = arith.constant 0 : i32
    %c0_i32_1 = arith.constant 0 : i32
    %c0_i32_2 = arith.constant 0 : i32
    return %arg0, %c0_i32, %c0_i32_0, %c0_i32_1 : i32, i32, i32, i32
  }
}

</mosaic_0001>

<llo_original>
// kernel: dc_block_forward.1
$region0: #{dc_block_forward.1}
  #allocation0 [shape = 'u32[]', space=smem, size = 0x4, offset = 0x4, fixed_abs, tag = 'smem constant byte address 0x4 - core index']
  #allocation1 [shape = 'u32[144,128]{1,0:T(1,128)}', space=vmem, size = 0x12000, scoped, tag = 'internal scratch']
  #allocation2 [shape = 'f32[8,18,18]{2,1,0:T(8,128)}', space=vmem, size = 0x18000, scoped, tag = 'scratch operand']
  %s0 = inlined_call_operand.vmem [shape: f32[2,4,16,16], index: 0, kind: input, shape index: {}]
  %s1 = inlined_call_operand.vmem [shape: f32[72], index: 1, kind: input, shape index: {}]
  %s2 = inlined_call_operand.vmem [shape: f32[2], index: 2, kind: input, shape index: {}]
  %s3 = inlined_call_operand.vmem [shape: f32[108], index: 3, kind: input, shape index: {}]
  %s4 = inlined_call_operand.vmem [shape: f32[2], index: 4, kind: input, shape index: {}]
  %s5 = inlined_call_operand.vmem [shape: f32[288], index: 5, kind: input, shape index: {}]
  %s6 = inlined_call_operand.vmem [shape: f32[4], index: 6, kind: input, shape index: {}]
  %s7 = inlined_call_operand.vmem [shape: f32[3], index: 7, kind: input, shape index: {}]
  %s8 = inlined_call_operand.hbm [shape: f32[2,4,16,16], index: 8, kind: output, shape index: {}]
  %s9 = sld [smem:[#allocation0]]
  $region93: #{dc_block_forward.1} parent=0
    _
  %s11 = ssub.s32 1, %s9
  %s12 = scalar_select 0, %s11, %s9
  $region1: #{dc_block_forward.1} parent=0
    #allocation3 [shape = 'u8[512]{0}', space=smem, size = 0x200, scoped, tag = 'input window, operand 1, single buffered']
    #allocation4 [shape = 's32[2]{0}', space=sflag, size = 0x8, scoped, tag = 'scoped memory for dc_block_forward.1']
    #allocation5 [shape = 's32[2]{0}', space=sflag, size = 0x8, scoped, tag = 'scoped memory for dc_block_forward.1']
    #allocation6 [shape = 'u8[512]{0}', space=smem, size = 0x200, scoped, tag = 'input window, operand 2, single buffered']
    #allocation7 [shape = 's32[1]{0}', space=sflag, size = 0x4, scoped, tag = 'scoped memory for dc_block_forward.1']
    #allocation8 [shape = 'u8[512]{0}', space=smem, size = 0x200, scoped, tag = 'input window, operand 3, single buffered']
    #allocation9 [shape = 'u8[512]{0}', space=smem, size = 0x200, scoped, tag = 'input window, operand 4, single buffered']
    #allocation10 [shape = 's32[1]{0}', space=sflag, size = 0x4, scoped, tag = 'scoped memory for dc_block_forward.1']
    #allocation11 [shape = 'u8[1536]{0}', space=smem, size = 0x600, scoped, tag = 'input window, operand 5, single buffered']
    #allocation12 [shape = 'u8[512]{0}', space=smem, size = 0x200, scoped, tag = 'input window, operand 6, single buffered']
    #allocation13 [shape = 's32[1]{0}', space=sflag, size = 0x4, scoped, tag = 'scoped memory for dc_block_forward.1']
    #allocation14 [shape = 'u8[512]{0}', space=smem, size = 0x200, scoped, tag = 'input window, operand 7, single buffered']
    #allocation15 [shape = 'u8[65536]{0}', space=vmem, size = 0x10000, scoped, tag = 'output window, operand 0']
    %13 = vsyncpa [#allocation5], 0
    %14 = vsyncpa [#allocation7], 0
    %15 = vsyncpa [#allocation10], 0
    %16 = vsyncpa [#allocation13], 0
    %17 = vsyncpa [#allocation4], 0
    %s18 = scalar_lea.sflag [#allocation4], 1
    %19 = vsyncpa %s18, 0
    loop: start=0, step=1, limit=4
    $region2: #{dc_block_forward.1} parent=1 // loop_pre_header
      _
    $region3: #{dc_block_forward.1} parent=1 // loop_header
      %s21 = sphi 0, %s25
      %p22 = scmp.ge.s32.totalorder %s21, 4
      %s31 = sphi 0, %s33
      %s34 = sphi 0, %s31
      %s35 = sphi 0, %s34
      %s51 = sphi 0, %s35
      %s55 = sphi 0, %s55
      %s57 = sphi 0, %s55
      %s58 = sphi 0, %s57
      %s72 = sphi 0, %s58
      %s76 = sphi 0, %s76
      %s78 = sphi 0, %s76
      %s79 = sphi 0, %s78
      %s93 = sphi 0, %s79
      %s97 = sphi 0, %s97
      %s99 = sphi 0, %s97
      %s100 = sphi 0, %s99
      %s114 = sphi 0, %s100
      %s118 = sphi 0, %s118
      %s120 = sphi 0, %s118
      %s121 = sphi 0, %s120
      %s135 = sphi 0, %s121
      %s139 = sphi 0, %s139
      %s141 = sphi 0, %s139
      %s142 = sphi 0, %s141
      %s156 = sphi 0, %s142
      %s160 = sphi 0, %s160
      %s162 = sphi 0, %s160
      %s163 = sphi 0, %s162
      %s177 = sphi 0, %s163
      %s181 = sphi 0, %s181
      %s183 = sphi 0, %s181
      %s184 = sphi 0, %s183
      %s198 = sphi 0, %s184
      %s204 = sphi 0, %s206
      %s207 = sphi 0, %s204
      %s208 = sphi 0, %s207
      %s224 = sphi 0, %s208
    $region4: #{dc_block_forward.1} parent=1 // loop_header_branch
      %24 = sbr.rel (%p22) target = $region8
    $region5: #{dc_block_forward.1} parent=1 // loop_body
      %s26 = ssub.s32 %s21, 1
      %s27 = ssub.s32 %s21, 2
      %s28 = sadd.s32 %s21, 1
      %s29 = ssub.s32 %s21, %s28
      %p30 = scmp.eq.s32.totalorder %s29, 0
      %s32 = sadd.s32 %s31, 1
      %s33 = scalar_select %p30, %s31, %s32
      %p36 = pneg %p30
      %p37 = scmp.eq.s32.totalorder %s21, 1
      %p38 = por %p36, %p37
      %p39 = scmp.ne.s32.totalorder %s31, %s34
      %p40 = scmp.eq.s32.totalorder %s21, 0
      %p41 = por %p39, %p40
      %p42 = scmp.ne.s32.totalorder %s31, %s34
      %p43 = scmp.eq.s32.totalorder %s26, 1
      %p44 = por %p42, %p43
      %p45 = scmp.ne.s32.totalorder %s34, %s35
      %p46 = scmp.eq.s32.totalorder %s26, 0
      %p47 = por %p45, %p46
      %p48 = scmp.ne.s32.totalorder %s34, %s35
      %p49 = scmp.eq.s32.totalorder %s27, 1
      %p50 = por %p48, %p49
      %p52 = scmp.ne.s32.totalorder %s35, %s51
      %p53 = scmp.eq.s32.totalorder %s27, 0
      %p54 = por %p52, %p53
      %s56 = sadd.s32 %s55, 1
      %p59 = scmp.eq.s32.totalorder %s21, 1
      %p60 = scmp.ne.s32.totalorder %s55, %s57
      %p61 = scmp.eq.s32.totalorder %s21, 0
      %p62 = por %p60, %p61
      %p63 = scmp.ne.s32.totalorder %s55, %s57
      %p64 = scmp.eq.s32.totalorder %s26, 1
      %p65 = por %p63, %p64
      %p66 = scmp.ne.s32.totalorder %s57, %s58
      %p67 = scmp.eq.s32.totalorder %s26, 0
      %p68 = por %p66, %p67
      %p69 = scmp.ne.s32.totalorder %s57, %s58
      %p70 = scmp.eq.s32.totalorder %s27, 1
      %p71 = por %p69, %p70
      %p73 = scmp.ne.s32.totalorder %s58, %s72
      %p74 = scmp.eq.s32.totalorder %s27, 0
      %p75 = por %p73, %p74
      %s77 = sadd.s32 %s76, 1
      %p80 = scmp.eq.s32.totalorder %s21, 1
      %p81 = scmp.ne.s32.totalorder %s76, %s78
      %p82 = scmp.eq.s32.totalorder %s21, 0
      %p83 = por %p81, %p82
      %p84 = scmp.ne.s32.totalorder %s76, %s78
      %p85 = scmp.eq.s32.totalorder %s26, 1
      %p86 = por %p84, %p85
      %p87 = scmp.ne.s32.totalorder %s78, %s79
      %p88 = scmp.eq.s32.totalorder %s26, 0
      %p89 = por %p87, %p88
      %p90 = scmp.ne.s32.totalorder %s78, %s79
      %p91 = scmp.eq.s32.totalorder %s27, 1
      %p92 = por %p90, %p91
      %p94 = scmp.ne.s32.totalorder %s79, %s93
      %p95 = scmp.eq.s32.totalorder %s27, 0
      %p96 = por %p94, %p95
      %s98 = sadd.s32 %s97, 1
      %p101 = scmp.eq.s32.totalorder %s21, 1
      %p102 = scmp.ne.s32.totalorder %s97, %s99
      %p103 = scmp.eq.s32.totalorder %s21, 0
      %p104 = por %p102, %p103
      %p105 = scmp.ne.s32.totalorder %s97, %s99
      %p106 = scmp.eq.s32.totalorder %s26, 1
      %p107 = por %p105, %p106
      %p108 = scmp.ne.s32.totalorder %s99, %s100
      %p109 = scmp.eq.s32.totalorder %s26, 0
      %p110 = por %p108, %p109
      %p111 = scmp.ne.s32.totalorder %s99, %s100
      %p112 = scmp.eq.s32.totalorder %s27, 1
      %p113 = por %p111, %p112
      %p115 = scmp.ne.s32.totalorder %s100, %s114
      %p116 = scmp.eq.s32.totalorder %s27, 0
      %p117 = por %p115, %p116
      %s119 = sadd.s32 %s118, 1
      %p122 = scmp.eq.s32.totalorder %s21, 1
      %p123 = scmp.ne.s32.totalorder %s118, %s120
      %p124 = scmp.eq.s32.totalorder %s21, 0
      %p125 = por %p123, %p124
      %p126 = scmp.ne.s32.totalorder %s118, %s120
      %p127 = scmp.eq.s32.totalorder %s26, 1
      %p128 = por %p126, %p127
      %p129 = scmp.ne.s32.totalorder %s120, %s121
      %p130 = scmp.eq.s32.totalorder %s26, 0
      %p131 = por %p129, %p130
      %p132 = scmp.ne.s32.totalorder %s120, %s121
      %p133 = scmp.eq.s32.totalorder %s27, 1
      %p134 = por %p132, %p133
      %p136 = scmp.ne.s32.totalorder %s121, %s135
      %p137 = scmp.eq.s32.totalorder %s27, 0
      %p138 = por %p136, %p137
      %s140 = sadd.s32 %s139, 1
      %p143 = scmp.eq.s32.totalorder %s21, 1
      %p144 = scmp.ne.s32.totalorder %s139, %s141
      %p145 = scmp.eq.s32.totalorder %s21, 0
      %p146 = por %p144, %p145
      %p147 = scmp.ne.s32.totalorder %s139, %s141
      %p148 = scmp.eq.s32.totalorder %s26, 1
      %p149 = por %p147, %p148
      %p150 = scmp.ne.s32.totalorder %s141, %s142
      %p151 = scmp.eq.s32.totalorder %s26, 0
      %p152 = por %p150, %p151
      %p153 = scmp.ne.s32.totalorder %s141, %s142
      %p154 = scmp.eq.s32.totalorder %s27, 1
      %p155 = por %p153, %p154
      %p157 = scmp.ne.s32.totalorder %s142, %s156
      %p158 = scmp.eq.s32.totalorder %s27, 0
      %p159 = por %p157, %p158
      %s161 = sadd.s32 %s160, 1
      %p164 = scmp.eq.s32.totalorder %s21, 1
      %p165 = scmp.ne.s32.totalorder %s160, %s162
      %p166 = scmp.eq.s32.totalorder %s21, 0
      %p167 = por %p165, %p166
      %p168 = scmp.ne.s32.totalorder %s160, %s162
      %p169 = scmp.eq.s32.totalorder %s26, 1
      %p170 = por %p168, %p169
      %p171 = scmp.ne.s32.totalorder %s162, %s163
      %p172 = scmp.eq.s32.totalorder %s26, 0
      %p173 = por %p171, %p172
      %p174 = scmp.ne.s32.totalorder %s162, %s163
      %p175 = scmp.eq.s32.totalorder %s27, 1
      %p176 = por %p174, %p175
      %p178 = scmp.ne.s32.totalorder %s163, %s177
      %p179 = scmp.eq.s32.totalorder %s27, 0
      %p180 = por %p178, %p179
      %s182 = sadd.s32 %s181, 1
      %p185 = scmp.eq.s32.totalorder %s21, 1
      %p186 = scmp.ne.s32.totalorder %s181, %s183
      %p187 = scmp.eq.s32.totalorder %s21, 0
      %p188 = por %p186, %p187
      %p189 = scmp.ne.s32.totalorder %s181, %s183
      %p190 = scmp.eq.s32.totalorder %s26, 1
      %p191 = por %p189, %p190
      %p192 = scmp.ne.s32.totalorder %s183, %s184
      %p193 = scmp.eq.s32.totalorder %s26, 0
      %p194 = por %p192, %p193
      %p195 = scmp.ne.s32.totalorder %s183, %s184
      %p196 = scmp.eq.s32.totalorder %s27, 1
      %p197 = por %p195, %p196
      %p199 = scmp.ne.s32.totalorder %s184, %s198
      %p200 = scmp.eq.s32.totalorder %s27, 0
      %p201 = por %p199, %p200
      %s202 = ssub.s32 %s21, %s28
      %p203 = scmp.eq.s32.totalorder %s202, 0
      %s205 = sadd.s32 %s204, 1
      %s206 = scalar_select %p203, %s204, %s205
      %p209 = pneg %p203
      %p210 = scmp.eq.s32.totalorder %s21, 1
      %p211 = por %p209, %p210
      %p212 = scmp.ne.s32.totalorder %s204, %s207
      %p213 = scmp.eq.s32.totalorder %s21, 0
      %p214 = por %p212, %p213
      %p215 = scmp.ne.s32.totalorder %s204, %s207
      %p216 = scmp.eq.s32.totalorder %s26, 1
      %p217 = por %p215, %p216
      %p218 = scmp.ne.s32.totalorder %s207, %s208
      %p219 = scmp.eq.s32.totalorder %s26, 0
      %p220 = por %p218, %p219
      %p221 = scmp.ne.s32.totalorder %s207, %s208
      %p222 = scmp.eq.s32.totalorder %s27, 1
      %p223 = por %p221, %p222
      %p225 = scmp.ne.s32.totalorder %s208, %s224
      %p226 = scmp.eq.s32.totalorder %s27, 0
      %p227 = por %p225, %p226
      %p228 = scmp.le.s32.totalorder 1, %s21
      %p229 = scmp.lt.s32.totalorder %s21, 3
      %p230 = pnand %p228, %p229
      %p231 = pneg %p230
      // Predicated region
      $region9: #{dc_block_forward.1} parent=5 // pred_check
        _
      $region10: #{dc_block_forward.1} parent=5 // pred_check_branch
        %233 = sbr.rel (%p230) target = $region12
      $region11: #{dc_block_forward.1} parent=5 // pred_region
        %s234 = ssub.s32 %s21, 1
        // Predicated region
        $region13: #{dc_block_forward.1} parent=11 // pred_check
          %p235 = pneg %p68
        $region14: #{dc_block_forward.1} parent=11 // pred_check_branch
          %237 = sbr.rel (%p235) target = $region16
        $region15: #{dc_block_forward.1} parent=11 // pred_region
          %s239 = ssub.s32 16, 16
          %240 = vsyncadd [#allocation5], %s239
          %s242 = sshll.u32 %s1, 4
          %s243 = int_to_ptr.vmem [resolvable:$true] %s242
          %245 = dma.vmem_to_smem %s243, 16, [#allocation3], [#allocation5]
        $region16: #{dc_block_forward.1} parent=11 // pred_fallthru
          _
        // Predicated region
        $region17: #{dc_block_forward.1} parent=11 // pred_check
          %p246 = pneg %p89
        $region18: #{dc_block_forward.1} parent=11 // pred_check_branch
          %248 = sbr.rel (%p246) target = $region20
        $region19: #{dc_block_forward.1} parent=11 // pred_region
          %s250 = ssub.s32 16, 16
          %251 = vsyncadd [#allocation7], %s250
          %s253 = sshll.u32 %s2, 4
          %s254 = int_to_ptr.vmem [resolvable:$true] %s253
          %256 = dma.vmem_to_smem %s254, 16, [#allocation6], [#allocation7]
        $region20: #{dc_block_forward.1} parent=11 // pred_fallthru
          _
        // Predicated region
        $region21: #{dc_block_forward.1} parent=11 // pred_check
          %p257 = pneg %p110
        $region22: #{dc_block_forward.1} parent=11 // pred_check_branch
          %259 = sbr.rel (%p257) target = $region24
        $region23: #{dc_block_forward.1} parent=11 // pred_region
          %s261 = ssub.s32 16, 16
          %262 = vsyncadd [#allocation7], %s261
          %s264 = sshll.u32 %s3, 4
          %s265 = int_to_ptr.vmem [resolvable:$true] %s264
          %267 = dma.vmem_to_smem %s265, 16, [#allocation8], [#allocation7]
        $region24: #{dc_block_forward.1} parent=11 // pred_fallthru
          _
        // Predicated region
        $region25: #{dc_block_forward.1} parent=11 // pred_check
          %p268 = pneg %p131
        $region26: #{dc_block_forward.1} parent=11 // pred_check_branch
          %270 = sbr.rel (%p268) target = $region28
        $region27: #{dc_block_forward.1} parent=11 // pred_region
          %s272 = ssub.s32 16, 16
          %273 = vsyncadd [#allocation10], %s272
          %s275 = sshll.u32 %s4, 4
          %s276 = int_to_ptr.vmem [resolvable:$true] %s275
          %278 = dma.vmem_to_smem %s276, 16, [#allocation9], [#allocation10]
        $region28: #{dc_block_forward.1} parent=11 // pred_fallthru
          _
        // Predicated region
        $region29: #{dc_block_forward.1} parent=11 // pred_check
          %p279 = pneg %p152
        $region30: #{dc_block_forward.1} parent=11 // pred_check_branch
          %281 = sbr.rel (%p279) target = $region32
        $region31: #{dc_block_forward.1} parent=11 // pred_region
          %s283 = ssub.s32 48, 48
          %284 = vsyncadd [#allocation10], %s283
          %s286 = sshll.u32 %s5, 4
          %s287 = int_to_ptr.vmem [resolvable:$true] %s286
          %289 = dma.vmem_to_smem %s287, 48, [#allocation11], [#allocation10]
        $region32: #{dc_block_forward.1} parent=11 // pred_fallthru
          _
        // Predicated region
        $region33: #{dc_block_forward.1} parent=11 // pred_check
          %p290 = pneg %p173
        $region34: #{dc_block_forward.1} parent=11 // pred_check_branch
          %292 = sbr.rel (%p290) target = $region36
        $region35: #{dc_block_forward.1} parent=11 // pred_region
          %s294 = ssub.s32 16, 16
          %295 = vsyncadd [#allocation13], %s294
          %s297 = sshll.u32 %s6, 4
          %s298 = int_to_ptr.vmem [resolvable:$true] %s297
          %300 = dma.vmem_to_smem %s298, 16, [#allocation12], [#allocation13]
        $region36: #{dc_block_forward.1} parent=11 // pred_fallthru
          _
        // Predicated region
        $region37: #{dc_block_forward.1} parent=11 // pred_check
          %p301 = pneg %p194
        $region38: #{dc_block_forward.1} parent=11 // pred_check_branch
          %303 = sbr.rel (%p301) target = $region40
        $region39: #{dc_block_forward.1} parent=11 // pred_region
          %s305 = ssub.s32 16, 16
          %306 = vsyncadd [#allocation13], %s305
          %s308 = sshll.u32 %s7, 4
          %s309 = int_to_ptr.vmem [resolvable:$true] %s308
          %311 = dma.vmem_to_smem %s309, 16, [#allocation14], [#allocation13]
        $region40: #{dc_block_forward.1} parent=11 // pred_fallthru
          _
      $region12: #{dc_block_forward.1} parent=5 // pred_fallthru
        _
      %p312 = scmp.lt.s32.totalorder %s21, 2
      // Predicated region
      $region41: #{dc_block_forward.1} parent=5 // pred_check
        %p313 = pneg %p312
      $region42: #{dc_block_forward.1} parent=5 // pred_check_branch
        %315 = sbr.rel (%p313) target = $region44
      $region43: #{dc_block_forward.1} parent=5 // pred_region
        // Predicated region
        $region45: #{dc_block_forward.1} parent=43 // pred_check
          %p316 = pneg %p41
        $region46: #{dc_block_forward.1} parent=43 // pred_check_branch
          %318 = sbr.rel (%p316) target = $region48
        $region47: #{dc_block_forward.1} parent=43 // pred_region
          %p319 = scmp.lt.s32.totalorder %s21, 1
          %s320 = scalar_select %p319, %s21, 1
          %s321 = smul.addr %s320, 8
          %s322 = smul.addr %s321, 8
          %s323 = scalar_lea.vmem %s0, %s322
        $region48: #{dc_block_forward.1} parent=43 // pred_fallthru
          _
      $region44: #{dc_block_forward.1} parent=5 // pred_fallthru
        _
      %p324 = scmp.le.s32.totalorder 1, %s21
      %p325 = scmp.lt.s32.totalorder %s21, 3
      %p326 = pnand %p324, %p325
      %p327 = pneg %p326
      // Predicated region
      $region49: #{dc_block_forward.1} parent=5 // pred_check
        _
      $region50: #{dc_block_forward.1} parent=5 // pred_check_branch
        %329 = sbr.rel (%p326) target = $region52
      $region51: #{dc_block_forward.1} parent=5 // pred_region
        %s330 = ssub.s32 %s21, 1
        // Predicated region
        $region53: #{dc_block_forward.1} parent=51 // pred_check
          %p331 = pneg %p68
        $region54: #{dc_block_forward.1} parent=51 // pred_check_branch
          %333 = sbr.rel (%p331) target = $region56
        $region55: #{dc_block_forward.1} parent=51 // pred_region
          %334 = dma.done [#allocation5], 16
        $region56: #{dc_block_forward.1} parent=51 // pred_fallthru
          _
        // Predicated region
        $region57: #{dc_block_forward.1} parent=51 // pred_check
          %p335 = pneg %p89
        $region58: #{dc_block_forward.1} parent=51 // pred_check_branch
          %337 = sbr.rel (%p335) target = $region60
        $region59: #{dc_block_forward.1} parent=51 // pred_region
          %338 = dma.done [#allocation7], 16
        $region60: #{dc_block_forward.1} parent=51 // pred_fallthru
          _
        // Predicated region
        $region61: #{dc_block_forward.1} parent=51 // pred_check
          %p339 = pneg %p110
        $region62: #{dc_block_forward.1} parent=51 // pred_check_branch
          %341 = sbr.rel (%p339) target = $region64
        $region63: #{dc_block_forward.1} parent=51 // pred_region
          %342 = dma.done [#allocation7], 16
        $region64: #{dc_block_forward.1} parent=51 // pred_fallthru
          _
        // Predicated region
        $region65: #{dc_block_forward.1} parent=51 // pred_check
          %p343 = pneg %p131
        $region66: #{dc_block_forward.1} parent=51 // pred_check_branch
          %345 = sbr.rel (%p343) target = $region68
        $region67: #{dc_block_forward.1} parent=51 // pred_region
          %346 = dma.done [#allocation10], 16
        $region68: #{dc_block_forward.1} parent=51 // pred_fallthru
          _
        // Predicated region
        $region69: #{dc_block_forward.1} parent=51 // pred_check
          %p347 = pneg %p152
        $region70: #{dc_block_forward.1} parent=51 // pred_check_branch
          %349 = sbr.rel (%p347) target = $region72
        $region71: #{dc_block_forward.1} parent=51 // pred_region
          %350 = dma.done [#allocation10], 48
        $region72: #{dc_block_forward.1} parent=51 // pred_fallthru
          _
        // Predicated region
        $region73: #{dc_block_forward.1} parent=51 // pred_check
          %p351 = pneg %p173
        $region74: #{dc_block_forward.1} parent=51 // pred_check_branch
          %353 = sbr.rel (%p351) target = $region76
        $region75: #{dc_block_forward.1} parent=51 // pred_region
          %354 = dma.done [#allocation13], 16
        $region76: #{dc_block_forward.1} parent=51 // pred_fallthru
          _
        // Predicated region
        $region77: #{dc_block_forward.1} parent=51 // pred_check
          %p355 = pneg %p194
        $region78: #{dc_block_forward.1} parent=51 // pred_check_branch
          %357 = sbr.rel (%p355) target = $region80
        $region79: #{dc_block_forward.1} parent=51 // pred_region
          %358 = dma.done [#allocation13], 16
        $region80: #{dc_block_forward.1} parent=51 // pred_fallthru
          _
        %359 = sfence
        %p360 = scmp.lt.s32.totalorder %s26, 1
        %s361 = scalar_select %p360, %s26, 1
        %s362 = smul.addr %s361, 8
        %s363 = smul.addr %s362, 8
        %s364 = scalar_lea.vmem %s0, %s363
        %p365 = pneg %p47
        %p366 = pneg %p44
        %p367 = pneg %p68
        %p368 = pneg %p65
        %p369 = pneg %p89
        %p370 = pneg %p86
        %p371 = pneg %p110
        %p372 = pneg %p107
        %p373 = pneg %p131
        %p374 = pneg %p128
        %p375 = pneg %p152
        %p376 = pneg %p149
        %p377 = pneg %p173
        %p378 = pneg %p170
        %p379 = pneg %p194
        %p380 = pneg %p191
        %p381 = pneg %p220
        %p382 = pneg %p217
        %s383 = sand.u32 %s207, 1
        %s384 = scalar_lea.sflag [#allocation4], %s383
        %s385 = sand.u32 %s207, 1
        %s386 = smul.addr %s385, 64
        %s387 = scalar_lea.vmem [#allocation15], %s386
        %p388 = scmp.lt.s32.totalorder %s26, 1
        %s389 = scalar_select %p388, %s26, 1
        %s390 = smul.addr %s389, 8
        %s391 = smul.addr %s390, 8
        %s392 = scalar_lea.vmem %s0, %s391
        %vm393 = vcmask 146432
        %394 = vst.msk [vmem:[#allocation2] sm:$0xff] %vm393, 0.0
        %395 = vst.msk [vmem:[#allocation2 + $0x8] sm:$0xff] %vm393, 0.0
        %vm396 = vcmask 140288
        %397 = vst.msk [vmem:[#allocation2 + $0x10] sm:$0x3] %vm396, 0.0
        %398 = vst.msk [vmem:[#allocation2 + $0x18] sm:$0xff] %vm393, 0.0
        %399 = vst.msk [vmem:[#allocation2 + $0x20] sm:$0xff] %vm393, 0.0
        %400 = vst.msk [vmem:[#allocation2 + $0x28] sm:$0x3] %vm396, 0.0
        %401 = vst.msk [vmem:[#allocation2 + $0x30] sm:$0xff] %vm393, 0.0
        %402 = vst.msk [vmem:[#allocation2 + $0x38] sm:$0xff] %vm393, 0.0
        %403 = vst.msk [vmem:[#allocation2 + $0x40] sm:$0x3] %vm396, 0.0
        %404 = vst.msk [vmem:[#allocation2 + $0x48] sm:$0xff] %vm393, 0.0
        %405 = vst.msk [vmem:[#allocation2 + $0x50] sm:$0xff] %vm393, 0.0
        %406 = vst.msk [vmem:[#allocation2 + $0x58] sm:$0x3] %vm396, 0.0
        %407 = vst.msk [vmem:[#allocation2 + $0x60] sm:$0xff] %vm393, 0.0
        %408 = vst.msk [vmem:[#allocation2 + $0x68] sm:$0xff] %vm393, 0.0
        %409 = vst.msk [vmem:[#allocation2 + $0x70] sm:$0x3] %vm396, 0.0
        %410 = vst.msk [vmem:[#allocation2 + $0x78] sm:$0xff] %vm393, 0.0
        %411 = vst.msk [vmem:[#allocation2 + $0x80] sm:$0xff] %vm393, 0.0
        %412 = vst.msk [vmem:[#allocation2 + $0x88] sm:$0x3] %vm396, 0.0
        %413 = vst.msk [vmem:[#allocation2 + $0x90] sm:$0xff] %vm393, 0.0
        %414 = vst.msk [vmem:[#allocation2 + $0x98] sm:$0xff] %vm393, 0.0
        %415 = vst.msk [vmem:[#allocation2 + $0xa0] sm:$0x3] %vm396, 0.0
        %416 = vst.msk [vmem:[#allocation2 + $0xa8] sm:$0xff] %vm393, 0.0
        %417 = vst.msk [vmem:[#allocation2 + $0xb0] sm:$0xff] %vm393, 0.0
        %418 = vst.msk [vmem:[#allocation2 + $0xb8] sm:$0x3] %vm396, 0.0
        %v419 = vld [vmem:[%s392] sm:$0xff]
        %v420 = vld [vmem:[%s392 + $0x8] sm:$0xff]
        %v421 = vld [vmem:[%s392 + $0x10] sm:$0xff]
        %v422 = vld [vmem:[%s392 + $0x18] sm:$0xff]
        %v423 = vld [vmem:[%s392 + $0x20] sm:$0xff]
        %v424 = vld [vmem:[%s392 + $0x28] sm:$0xff]
        %v425 = vld [vmem:[%s392 + $0x30] sm:$0xff]
        %v426 = vld [vmem:[%s392 + $0x38] sm:$0xff]
        %435 = vrot.lane.b32.xlu0 %v419, 1
        %v436 = vpop.permute.xlu0 %435
        %437 = vrot.lane.b32.xlu0 %v420, 1
        %v438 = vpop.permute.xlu0 %437
        %439 = vrot.lane.b32.xlu0 %v421, 1
        %v440 = vpop.permute.xlu0 %439
        %441 = vrot.lane.b32.xlu0 %v422, 1
        %v442 = vpop.permute.xlu0 %441
        %443 = vrot.lane.b32.xlu0 %v423, 1
        %v444 = vpop.permute.xlu0 %443
        %445 = vrot.lane.b32.xlu0 %v424, 1
        %v446 = vpop.permute.xlu0 %445
        %447 = vrot.lane.b32.xlu0 %v425, 1
        %v448 = vpop.permute.xlu0 %447
        %449 = vrot.lane.b32.xlu0 %v426, 1
        %v450 = vpop.permute.xlu0 %449
        %vm459 = vcmask 138248
        %460 = vst.msk [vmem:[#allocation2 + $0x1] sm:$0xff] %vm459, %v436
        %461 = vst.msk [vmem:[#allocation2 + $0x9] sm:$0xff] %vm459, %v438
        %462 = vst.msk [vmem:[#allocation2 + $0x19] sm:$0xff] %vm459, %v440
        %463 = vst.msk [vmem:[#allocation2 + $0x21] sm:$0xff] %vm459, %v442
        %464 = vst.msk [vmem:[#allocation2 + $0x31] sm:$0xff] %vm459, %v444
        %465 = vst.msk [vmem:[#allocation2 + $0x39] sm:$0xff] %vm459, %v446
        %466 = vst.msk [vmem:[#allocation2 + $0x49] sm:$0xff] %vm459, %v448
        %467 = vst.msk [vmem:[#allocation2 + $0x51] sm:$0xff] %vm459, %v450
        %s468 = sld [smem:[#allocation14]]
        %s469 = sld [smem:[#allocation6]]
        %v470 = vstv %s469
        %s471 = sld [smem:[#allocation6 + $0x1]]
        %v472 = vstv %s471
        %v473 = vld [vmem:[#allocation2] sm:$0xff]
        %v474 = vld [vmem:[#allocation2 + $0x8] sm:$0xff]
        %s475 = sld [smem:[#allocation3]]
        %v476 = vstv %s475
        %v477 = vmul.f32 %v476, %v473
        %v478 = vmul.f32 %v476, %v474
        %v479 = vadd.f32 %v470, %v477
        %v480 = vadd.f32 %v470, %v478
        %s481 = sld [smem:[#allocation3 + $0x24]]
        %v482 = vstv %s481
        %v483 = vmul.f32 %v482, %v473
        %v484 = vmul.f32 %v482, %v474
        %v485 = vadd.f32 %v472, %v483
        %v486 = vadd.f32 %v472, %v484
        %s487 = sld [smem:[#allocation3 + $0x1]]
        %v488 = vstv %s487
        %v489 = vmul.f32 %v488, %v473
        %v490 = vmul.f32 %v488, %v474
        %493 = vrot.lane.b32.xlu0 %v489, 127
        %v494 = vpop.permute.xlu0 %493
        %495 = vrot.lane.b32.xlu0 %v490, 127
        %v496 = vpop.permute.xlu0 %495
        %v499 = vadd.f32 %v479, %v494
        %v500 = vadd.f32 %v480, %v496
        %s501 = sld [smem:[#allocation3 + $0x25]]
        %v502 = vstv %s501
        %v503 = vmul.f32 %v502, %v473
        %v504 = vmul.f32 %v502, %v474
        %507 = vrot.lane.b32.xlu0 %v503, 127
        %v508 = vpop.permute.xlu0 %507
        %509 = vrot.lane.b32.xlu0 %v504, 127
        %v510 = vpop.permute.xlu0 %509
        %v513 = vadd.f32 %v485, %v508
        %v514 = vadd.f32 %v486, %v510
        %s515 = sld [smem:[#allocation3 + $0x2]]
        %v516 = vstv %s515
        %v517 = vmul.f32 %v516, %v473
        %v518 = vmul.f32 %v516, %v474
        %521 = vrot.lane.b32.xlu0 %v517, 126
        %v522 = vpop.permute.xlu0 %521
        %523 = vrot.lane.b32.xlu0 %v518, 126
        %v524 = vpop.permute.xlu0 %523
        %v527 = vadd.f32 %v499, %v522
        %v528 = vadd.f32 %v500, %v524
        %s529 = sld [smem:[#allocation3 + $0x26]]
        %v530 = vstv %s529
        %v531 = vmul.f32 %v530, %v473
        %v532 = vmul.f32 %v530, %v474
        %535 = vrot.lane.b32.xlu0 %v531, 126
        %v536 = vpop.permute.xlu0 %535
        %537 = vrot.lane.b32.xlu0 %v532, 126
        %v538 = vpop.permute.xlu0 %537
        %v541 = vadd.f32 %v513, %v536
        %v542 = vadd.f32 %v514, %v538
        %v543 = vld [vmem:[#allocation2 + $0x1] sm:$0xff]
        %v544 = vld [vmem:[#allocation2 + $0x9] sm:$0xff]
        %s545 = sld [smem:[#allocation3 + $0x3]]
        %v546 = vstv %s545
        %v547 = vmul.f32 %v546, %v543
        %v548 = vmul.f32 %v546, %v544
        %v549 = vadd.f32 %v527, %v547
        %v550 = vadd.f32 %v528, %v548
        %s551 = sld [smem:[#allocation3 + $0x27]]
        %v552 = vstv %s551
        %v553 = vmul.f32 %v552, %v543
        %v554 = vmul.f32 %v552, %v544
        %v555 = vadd.f32 %v541, %v553
        %v556 = vadd.f32 %v542, %v554
        %s557 = sld [smem:[#allocation3 + $0x4]]
        %v558 = vstv %s557
        %v559 = vmul.f32 %v558, %v543
        %v560 = vmul.f32 %v558, %v544
        %563 = vrot.lane.b32.xlu0 %v559, 127
        %v564 = vpop.permute.xlu0 %563
        %565 = vrot.lane.b32.xlu0 %v560, 127
        %v566 = vpop.permute.xlu0 %565
        %v569 = vadd.f32 %v549, %v564
        %v570 = vadd.f32 %v550, %v566
        %s571 = sld [smem:[#allocation3 + $0x28]]
        %v572 = vstv %s571
        %v573 = vmul.f32 %v572, %v543
        %v574 = vmul.f32 %v572, %v544
        %577 = vrot.lane.b32.xlu0 %v573, 127
        %v578 = vpop.permute.xlu0 %577
        %579 = vrot.lane.b32.xlu0 %v574, 127
        %v580 = vpop.permute.xlu0 %579
        %v583 = vadd.f32 %v555, %v578
        %v584 = vadd.f32 %v556, %v580
        %s585 = sld [smem:[#allocation3 + $0x5]]
        %v586 = vstv %s585
        %v587 = vmul.f32 %v586, %v543
        %v588 = vmul.f32 %v586, %v544
        %591 = vrot.lane.b32.xlu0 %v587, 126
        %v592 = vpop.permute.xlu0 %591
        %593 = vrot.lane.b32.xlu0 %v588, 126
        %v594 = vpop.permute.xlu0 %593
        %v597 = vadd.f32 %v569, %v592
        %v598 = vadd.f32 %v570, %v594
        %s599 = sld [smem:[#allocation3 + $0x29]]
        %v600 = vstv %s599
        %v601 = vmul.f32 %v600, %v543
        %v602 = vmul.f32 %v600, %v544
        %605 = vrot.lane.b32.xlu0 %v601, 126
        %v606 = vpop.permute.xlu0 %605
        %607 = vrot.lane.b32.xlu0 %v602, 126
        %v608 = vpop.permute.xlu0 %607
        %v611 = vadd.f32 %v583, %v606
        %v612 = vadd.f32 %v584, %v608
        %v613 = vld [vmem:[#allocation2 + $0x2] sm:$0xff]
        %v614 = vld [vmem:[#allocation2 + $0xa] sm:$0xff]
        %s615 = sld [smem:[#allocation3 + $0x6]]
        %v616 = vstv %s615
        %v617 = vmul.f32 %v616, %v613
        %v618 = vmul.f32 %v616, %v614
        %v619 = vadd.f32 %v597, %v617
        %v620 = vadd.f32 %v598, %v618
        %s621 = sld [smem:[#allocation3 + $0x2a]]
        %v622 = vstv %s621
        %v623 = vmul.f32 %v622, %v613
        %v624 = vmul.f32 %v622, %v614
        %v625 = vadd.f32 %v611, %v623
        %v626 = vadd.f32 %v612, %v624
        %s627 = sld [smem:[#allocation3 + $0x7]]
        %v628 = vstv %s627
        %v629 = vmul.f32 %v628, %v613
        %v630 = vmul.f32 %v628, %v614
        %633 = vrot.lane.b32.xlu0 %v629, 127
        %v634 = vpop.permute.xlu0 %633
        %635 = vrot.lane.b32.xlu0 %v630, 127
        %v636 = vpop.permute.xlu0 %635
        %v639 = vadd.f32 %v619, %v634
        %v640 = vadd.f32 %v620, %v636
        %s641 = sld [smem:[#allocation3 + $0x2b]]
        %v642 = vstv %s641
        %v643 = vmul.f32 %v642, %v613
        %v644 = vmul.f32 %v642, %v614
        %647 = vrot.lane.b32.xlu0 %v643, 127
        %v648 = vpop.permute.xlu0 %647
        %649 = vrot.lane.b32.xlu0 %v644, 127
        %v650 = vpop.permute.xlu0 %649
        %v653 = vadd.f32 %v625, %v648
        %v654 = vadd.f32 %v626, %v650
        %s655 = sld [smem:[#allocation3 + $0x8]]
        %v656 = vstv %s655
        %v657 = vmul.f32 %v656, %v613
        %v658 = vmul.f32 %v656, %v614
        %661 = vrot.lane.b32.xlu0 %v657, 126
        %v662 = vpop.permute.xlu0 %661
        %663 = vrot.lane.b32.xlu0 %v658, 126
        %v664 = vpop.permute.xlu0 %663
        %v667 = vadd.f32 %v639, %v662
        %v668 = vadd.f32 %v640, %v664
        %s669 = sld [smem:[#allocation3 + $0x2c]]
        %v670 = vstv %s669
        %v671 = vmul.f32 %v670, %v613
        %v672 = vmul.f32 %v670, %v614
        %675 = vrot.lane.b32.xlu0 %v671, 126
        %v676 = vpop.permute.xlu0 %675
        %677 = vrot.lane.b32.xlu0 %v672, 126
        %v678 = vpop.permute.xlu0 %677
        %v681 = vadd.f32 %v653, %v676
        %v682 = vadd.f32 %v654, %v678
        %s683 = scalar_lea.vmem [#allocation2], 24
        %v684 = vld [vmem:[%s683] sm:$0xff]
        %v685 = vld [vmem:[%s683 + $0x8] sm:$0xff]
        %s686 = sld [smem:[#allocation3 + $0x9]]
        %v687 = vstv %s686
        %v688 = vmul.f32 %v687, %v684
        %v689 = vmul.f32 %v687, %v685
        %v690 = vadd.f32 %v667, %v688
        %v691 = vadd.f32 %v668, %v689
        %s692 = sld [smem:[#allocation3 + $0x2d]]
        %v693 = vstv %s692
        %v694 = vmul.f32 %v693, %v684
        %v695 = vmul.f32 %v693, %v685
        %v696 = vadd.f32 %v681, %v694
        %v697 = vadd.f32 %v682, %v695
        %s698 = sld [smem:[#allocation3 + $0xa]]
        %v699 = vstv %s698
        %v700 = vmul.f32 %v699, %v684
        %v701 = vmul.f32 %v699, %v685
        %704 = vrot.lane.b32.xlu0 %v700, 127
        %v705 = vpop.permute.xlu0 %704
        %706 = vrot.lane.b32.xlu0 %v701, 127
        %v707 = vpop.permute.xlu0 %706
        %v710 = vadd.f32 %v690, %v705
        %v711 = vadd.f32 %v691, %v707
        %s712 = sld [smem:[#allocation3 + $0x2e]]
        %v713 = vstv %s712
        %v714 = vmul.f32 %v713, %v684
        %v715 = vmul.f32 %v713, %v685
        %718 = vrot.lane.b32.xlu0 %v714, 127
        %v719 = vpop.permute.xlu0 %718
        %720 = vrot.lane.b32.xlu0 %v715, 127
        %v721 = vpop.permute.xlu0 %720
        %v724 = vadd.f32 %v696, %v719
        %v725 = vadd.f32 %v697, %v721
        %s726 = sld [smem:[#allocation3 + $0xb]]
        %v727 = vstv %s726
        %v728 = vmul.f32 %v727, %v684
        %v729 = vmul.f32 %v727, %v685
        %732 = vrot.lane.b32.xlu0 %v728, 126
        %v733 = vpop.permute.xlu0 %732
        %734 = vrot.lane.b32.xlu0 %v729, 126
        %v735 = vpop.permute.xlu0 %734
        %v738 = vadd.f32 %v710, %v733
        %v739 = vadd.f32 %v711, %v735
        %s740 = sld [smem:[#allocation3 + $0x2f]]
        %v741 = vstv %s740
        %v742 = vmul.f32 %v741, %v684
        %v743 = vmul.f32 %v741, %v685
        %746 = vrot.lane.b32.xlu0 %v742, 126
        %v747 = vpop.permute.xlu0 %746
        %748 = vrot.lane.b32.xlu0 %v743, 126
        %v749 = vpop.permute.xlu0 %748
        %v752 = vadd.f32 %v724, %v747
        %v753 = vadd.f32 %v725, %v749
        %v754 = vld [vmem:[%s683 + $0x1] sm:$0xff]
        %v755 = vld [vmem:[%s683 + $0x9] sm:$0xff]
        %s756 = sld [smem:[#allocation3 + $0xc]]
        %v757 = vstv %s756
        %v758 = vmul.f32 %v757, %v754
        %v759 = vmul.f32 %v757, %v755
        %v760 = vadd.f32 %v738, %v758
        %v761 = vadd.f32 %v739, %v759
        %s762 = sld [smem:[#allocation3 + $0x30]]
        %v763 = vstv %s762
        %v764 = vmul.f32 %v763, %v754
        %v765 = vmul.f32 %v763, %v755
        %v766 = vadd.f32 %v752, %v764
        %v767 = vadd.f32 %v753, %v765
        %s768 = sld [smem:[#allocation3 + $0xd]]
        %v769 = vstv %s768
        %v770 = vmul.f32 %v769, %v754
        %v771 = vmul.f32 %v769, %v755
        %774 = vrot.lane.b32.xlu0 %v770, 127
        %v775 = vpop.permute.xlu0 %774
        %776 = vrot.lane.b32.xlu0 %v771, 127
        %v777 = vpop.permute.xlu0 %776
        %v780 = vadd.f32 %v760, %v775
        %v781 = vadd.f32 %v761, %v777
        %s782 = sld [smem:[#allocation3 + $0x31]]
        %v783 = vstv %s782
        %v784 = vmul.f32 %v783, %v754
        %v785 = vmul.f32 %v783, %v755
        %788 = vrot.lane.b32.xlu0 %v784, 127
        %v789 = vpop.permute.xlu0 %788
        %790 = vrot.lane.b32.xlu0 %v785, 127
        %v791 = vpop.permute.xlu0 %790
        %v794 = vadd.f32 %v766, %v789
        %v795 = vadd.f32 %v767, %v791
        %s796 = sld [smem:[#allocation3 + $0xe]]
        %v797 = vstv %s796
        %v798 = vmul.f32 %v797, %v754
        %v799 = vmul.f32 %v797, %v755
        %802 = vrot.lane.b32.xlu0 %v798, 126
        %v803 = vpop.permute.xlu0 %802
        %804 = vrot.lane.b32.xlu0 %v799, 126
        %v805 = vpop.permute.xlu0 %804
        %v808 = vadd.f32 %v780, %v803
        %v809 = vadd.f32 %v781, %v805
        %s810 = sld [smem:[#allocation3 + $0x32]]
        %v811 = vstv %s810
        %v812 = vmul.f32 %v811, %v754
        %v813 = vmul.f32 %v811, %v755
        %816 = vrot.lane.b32.xlu0 %v812, 126
        %v817 = vpop.permute.xlu0 %816
        %818 = vrot.lane.b32.xlu0 %v813, 126
        %v819 = vpop.permute.xlu0 %818
        %v822 = vadd.f32 %v794, %v817
        %v823 = vadd.f32 %v795, %v819
        %v824 = vld [vmem:[%s683 + $0x2] sm:$0xff]
        %v825 = vld [vmem:[%s683 + $0xa] sm:$0xff]
        %s826 = sld [smem:[#allocation3 + $0xf]]
        %v827 = vstv %s826
        %v828 = vmul.f32 %v827, %v824
        %v829 = vmul.f32 %v827, %v825
        %v830 = vadd.f32 %v808, %v828
        %v831 = vadd.f32 %v809, %v829
        %s832 = sld [smem:[#allocation3 + $0x33]]
        %v833 = vstv %s832
        %v834 = vmul.f32 %v833, %v824
        %v835 = vmul.f32 %v833, %v825
        %v836 = vadd.f32 %v822, %v834
        %v837 = vadd.f32 %v823, %v835
        %s838 = sld [smem:[#allocation3 + $0x10]]
        %v839 = vstv %s838
        %v840 = vmul.f32 %v839, %v824
        %v841 = vmul.f32 %v839, %v825
        %844 = vrot.lane.b32.xlu0 %v840, 127
        %v845 = vpop.permute.xlu0 %844
        %846 = vrot.lane.b32.xlu0 %v841, 127
        %v847 = vpop.permute.xlu0 %846
        %v850 = vadd.f32 %v830, %v845
        %v851 = vadd.f32 %v831, %v847
        %s852 = sld [smem:[#allocation3 + $0x34]]
        %v853 = vstv %s852
        %v854 = vmul.f32 %v853, %v824
        %v855 = vmul.f32 %v853, %v825
        %858 = vrot.lane.b32.xlu0 %v854, 127
        %v859 = vpop.permute.xlu0 %858
        %860 = vrot.lane.b32.xlu0 %v855, 127
        %v861 = vpop.permute.xlu0 %860
        %v864 = vadd.f32 %v836, %v859
        %v865 = vadd.f32 %v837, %v861
        %s866 = sld [smem:[#allocation3 + $0x11]]
        %v867 = vstv %s866
        %v868 = vmul.f32 %v867, %v824
        %v869 = vmul.f32 %v867, %v825
        %872 = vrot.lane.b32.xlu0 %v868, 126
        %v873 = vpop.permute.xlu0 %872
        %874 = vrot.lane.b32.xlu0 %v869, 126
        %v875 = vpop.permute.xlu0 %874
        %v878 = vadd.f32 %v850, %v873
        %v879 = vadd.f32 %v851, %v875
        %s880 = sld [smem:[#allocation3 + $0x35]]
        %v881 = vstv %s880
        %v882 = vmul.f32 %v881, %v824
        %v883 = vmul.f32 %v881, %v825
        %886 = vrot.lane.b32.xlu0 %v882, 126
        %v887 = vpop.permute.xlu0 %886
        %888 = vrot.lane.b32.xlu0 %v883, 126
        %v889 = vpop.permute.xlu0 %888
        %v892 = vadd.f32 %v864, %v887
        %v893 = vadd.f32 %v865, %v889
        %s894 = scalar_lea.vmem [#allocation2], 48
        %v895 = vld [vmem:[%s894] sm:$0xff]
        %v896 = vld [vmem:[%s894 + $0x8] sm:$0xff]
        %s897 = sld [smem:[#allocation3 + $0x12]]
        %v898 = vstv %s897
        %v899 = vmul.f32 %v898, %v895
        %v900 = vmul.f32 %v898, %v896
        %v901 = vadd.f32 %v878, %v899
        %v902 = vadd.f32 %v879, %v900
        %s903 = sld [smem:[#allocation3 + $0x36]]
        %v904 = vstv %s903
        %v905 = vmul.f32 %v904, %v895
        %v906 = vmul.f32 %v904, %v896
        %v907 = vadd.f32 %v892, %v905
        %v908 = vadd.f32 %v893, %v906
        %s909 = sld [smem:[#allocation3 + $0x13]]
        %v910 = vstv %s909
        %v911 = vmul.f32 %v910, %v895
        %v912 = vmul.f32 %v910, %v896
        %915 = vrot.lane.b32.xlu0 %v911, 127
        %v916 = vpop.permute.xlu0 %915
        %917 = vrot.lane.b32.xlu0 %v912, 127
        %v918 = vpop.permute.xlu0 %917
        %v921 = vadd.f32 %v901, %v916
        %v922 = vadd.f32 %v902, %v918
        %s923 = sld [smem:[#allocation3 + $0x37]]
        %v924 = vstv %s923
        %v925 = vmul.f32 %v924, %v895
        %v926 = vmul.f32 %v924, %v896
        %929 = vrot.lane.b32.xlu0 %v925, 127
        %v930 = vpop.permute.xlu0 %929
        %931 = vrot.lane.b32.xlu0 %v926, 127
        %v932 = vpop.permute.xlu0 %931
        %v935 = vadd.f32 %v907, %v930
        %v936 = vadd.f32 %v908, %v932
        %s937 = sld [smem:[#allocation3 + $0x14]]
        %v938 = vstv %s937
        %v939 = vmul.f32 %v938, %v895
        %v940 = vmul.f32 %v938, %v896
        %943 = vrot.lane.b32.xlu0 %v939, 126
        %v944 = vpop.permute.xlu0 %943
        %945 = vrot.lane.b32.xlu0 %v940, 126
        %v946 = vpop.permute.xlu0 %945
        %v949 = vadd.f32 %v921, %v944
        %v950 = vadd.f32 %v922, %v946
        %s951 = sld [smem:[#allocation3 + $0x38]]
        %v952 = vstv %s951
        %v953 = vmul.f32 %v952, %v895
        %v954 = vmul.f32 %v952, %v896
        %957 = vrot.lane.b32.xlu0 %v953, 126
        %v958 = vpop.permute.xlu0 %957
        %959 = vrot.lane.b32.xlu0 %v954, 126
        %v960 = vpop.permute.xlu0 %959
        %v963 = vadd.f32 %v935, %v958
        %v964 = vadd.f32 %v936, %v960
        %v965 = vld [vmem:[%s894 + $0x1] sm:$0xff]
        %v966 = vld [vmem:[%s894 + $0x9] sm:$0xff]
        %s967 = sld [smem:[#allocation3 + $0x15]]
        %v968 = vstv %s967
        %v969 = vmul.f32 %v968, %v965
        %v970 = vmul.f32 %v968, %v966
        %v971 = vadd.f32 %v949, %v969
        %v972 = vadd.f32 %v950, %v970
        %s973 = sld [smem:[#allocation3 + $0x39]]
        %v974 = vstv %s973
        %v975 = vmul.f32 %v974, %v965
        %v976 = vmul.f32 %v974, %v966
        %v977 = vadd.f32 %v963, %v975
        %v978 = vadd.f32 %v964, %v976
        %s979 = sld [smem:[#allocation3 + $0x16]]
        %v980 = vstv %s979
        %v981 = vmul.f32 %v980, %v965
        %v982 = vmul.f32 %v980, %v966
        %985 = vrot.lane.b32.xlu0 %v981, 127
        %v986 = vpop.permute.xlu0 %985
        %987 = vrot.lane.b32.xlu0 %v982, 127
        %v988 = vpop.permute.xlu0 %987
        %v991 = vadd.f32 %v971, %v986
        %v992 = vadd.f32 %v972, %v988
        %s993 = sld [smem:[#allocation3 + $0x3a]]
        %v994 = vstv %s993
        %v995 = vmul.f32 %v994, %v965
        %v996 = vmul.f32 %v994, %v966
        %999 = vrot.lane.b32.xlu0 %v995, 127
        %v1000 = vpop.permute.xlu0 %999
        %1001 = vrot.lane.b32.xlu0 %v996, 127
        %v1002 = vpop.permute.xlu0 %1001
        %v1005 = vadd.f32 %v977, %v1000
        %v1006 = vadd.f32 %v978, %v1002
        %s1007 = sld [smem:[#allocation3 + $0x17]]
        %v1008 = vstv %s1007
        %v1009 = vmul.f32 %v1008, %v965
        %v1010 = vmul.f32 %v1008, %v966
        %1013 = vrot.lane.b32.xlu0 %v1009, 126
        %v1014 = vpop.permute.xlu0 %1013
        %1015 = vrot.lane.b32.xlu0 %v1010, 126
        %v1016 = vpop.permute.xlu0 %1015
        %v1019 = vadd.f32 %v991, %v1014
        %v1020 = vadd.f32 %v992, %v1016
        %s1021 = sld [smem:[#allocation3 + $0x3b]]
        %v1022 = vstv %s1021
        %v1023 = vmul.f32 %v1022, %v965
        %v1024 = vmul.f32 %v1022, %v966
        %1027 = vrot.lane.b32.xlu0 %v1023, 126
        %v1028 = vpop.permute.xlu0 %1027
        %1029 = vrot.lane.b32.xlu0 %v1024, 126
        %v1030 = vpop.permute.xlu0 %1029
        %v1033 = vadd.f32 %v1005, %v1028
        %v1034 = vadd.f32 %v1006, %v1030
        %v1035 = vld [vmem:[%s894 + $0x2] sm:$0xff]
        %v1036 = vld [vmem:[%s894 + $0xa] sm:$0xff]
        %s1037 = sld [smem:[#allocation3 + $0x18]]
        %v1038 = vstv %s1037
        %v1039 = vmul.f32 %v1038, %v1035
        %v1040 = vmul.f32 %v1038, %v1036
        %v1041 = vadd.f32 %v1019, %v1039
        %v1042 = vadd.f32 %v1020, %v1040
        %s1043 = sld [smem:[#allocation3 + $0x3c]]
        %v1044 = vstv %s1043
        %v1045 = vmul.f32 %v1044, %v1035
        %v1046 = vmul.f32 %v1044, %v1036
        %v1047 = vadd.f32 %v1033, %v1045
        %v1048 = vadd.f32 %v1034, %v1046
        %s1049 = sld [smem:[#allocation3 + $0x19]]
        %v1050 = vstv %s1049
        %v1051 = vmul.f32 %v1050, %v1035
        %v1052 = vmul.f32 %v1050, %v1036
        %1055 = vrot.lane.b32.xlu0 %v1051, 127
        %v1056 = vpop.permute.xlu0 %1055
        %1057 = vrot.lane.b32.xlu0 %v1052, 127
        %v1058 = vpop.permute.xlu0 %1057
        %v1061 = vadd.f32 %v1041, %v1056
        %v1062 = vadd.f32 %v1042, %v1058
        %s1063 = sld [smem:[#allocation3 + $0x3d]]
        %v1064 = vstv %s1063
        %v1065 = vmul.f32 %v1064, %v1035
        %v1066 = vmul.f32 %v1064, %v1036
        %1069 = vrot.lane.b32.xlu0 %v1065, 127
        %v1070 = vpop.permute.xlu0 %1069
        %1071 = vrot.lane.b32.xlu0 %v1066, 127
        %v1072 = vpop.permute.xlu0 %1071
        %v1075 = vadd.f32 %v1047, %v1070
        %v1076 = vadd.f32 %v1048, %v1072
        %s1077 = sld [smem:[#allocation3 + $0x1a]]
        %v1078 = vstv %s1077
        %v1079 = vmul.f32 %v1078, %v1035
        %v1080 = vmul.f32 %v1078, %v1036
        %1083 = vrot.lane.b32.xlu0 %v1079, 126
        %v1084 = vpop.permute.xlu0 %1083
        %1085 = vrot.lane.b32.xlu0 %v1080, 126
        %v1086 = vpop.permute.xlu0 %1085
        %v1089 = vadd.f32 %v1061, %v1084
        %v1090 = vadd.f32 %v1062, %v1086
        %s1091 = sld [smem:[#allocation3 + $0x3e]]
        %v1092 = vstv %s1091
        %v1093 = vmul.f32 %v1092, %v1035
        %v1094 = vmul.f32 %v1092, %v1036
        %1097 = vrot.lane.b32.xlu0 %v1093, 126
        %v1098 = vpop.permute.xlu0 %1097
        %1099 = vrot.lane.b32.xlu0 %v1094, 126
        %v1100 = vpop.permute.xlu0 %1099
        %v1103 = vadd.f32 %v1075, %v1098
        %v1104 = vadd.f32 %v1076, %v1100
        %s1105 = scalar_lea.vmem [#allocation2], 72
        %v1106 = vld [vmem:[%s1105] sm:$0xff]
        %v1107 = vld [vmem:[%s1105 + $0x8] sm:$0xff]
        %s1108 = sld [smem:[#allocation3 + $0x1b]]
        %v1109 = vstv %s1108
        %v1110 = vmul.f32 %v1109, %v1106
        %v1111 = vmul.f32 %v1109, %v1107
        %v1112 = vadd.f32 %v1089, %v1110
        %v1113 = vadd.f32 %v1090, %v1111
        %s1114 = sld [smem:[#allocation3 + $0x3f]]
        %v1115 = vstv %s1114
        %v1116 = vmul.f32 %v1115, %v1106
        %v1117 = vmul.f32 %v1115, %v1107
        %v1118 = vadd.f32 %v1103, %v1116
        %v1119 = vadd.f32 %v1104, %v1117
        %s1120 = sld [smem:[#allocation3 + $0x1c]]
        %v1121 = vstv %s1120
        %v1122 = vmul.f32 %v1121, %v1106
        %v1123 = vmul.f32 %v1121, %v1107
        %1126 = vrot.lane.b32.xlu0 %v1122, 127
        %v1127 = vpop.permute.xlu0 %1126
        %1128 = vrot.lane.b32.xlu0 %v1123, 127
        %v1129 = vpop.permute.xlu0 %1128
        %v1132 = vadd.f32 %v1112, %v1127
        %v1133 = vadd.f32 %v1113, %v1129
        %s1134 = sld [smem:[#allocation3 + $0x40]]
        %v1135 = vstv %s1134
        %v1136 = vmul.f32 %v1135, %v1106
        %v1137 = vmul.f32 %v1135, %v1107
        %1140 = vrot.lane.b32.xlu0 %v1136, 127
        %v1141 = vpop.permute.xlu0 %1140
        %1142 = vrot.lane.b32.xlu0 %v1137, 127
        %v1143 = vpop.permute.xlu0 %1142
        %v1146 = vadd.f32 %v1118, %v1141
        %v1147 = vadd.f32 %v1119, %v1143
        %s1148 = sld [smem:[#allocation3 + $0x1d]]
        %v1149 = vstv %s1148
        %v1150 = vmul.f32 %v1149, %v1106
        %v1151 = vmul.f32 %v1149, %v1107
        %1154 = vrot.lane.b32.xlu0 %v1150, 126
        %v1155 = vpop.permute.xlu0 %1154
        %1156 = vrot.lane.b32.xlu0 %v1151, 126
        %v1157 = vpop.permute.xlu0 %1156
        %v1160 = vadd.f32 %v1132, %v1155
        %v1161 = vadd.f32 %v1133, %v1157
        %s1162 = sld [smem:[#allocation3 + $0x41]]
        %v1163 = vstv %s1162
        %v1164 = vmul.f32 %v1163, %v1106
        %v1165 = vmul.f32 %v1163, %v1107
        %1168 = vrot.lane.b32.xlu0 %v1164, 126
        %v1169 = vpop.permute.xlu0 %1168
        %1170 = vrot.lane.b32.xlu0 %v1165, 126
        %v1171 = vpop.permute.xlu0 %1170
        %v1174 = vadd.f32 %v1146, %v1169
        %v1175 = vadd.f32 %v1147, %v1171
        %v1176 = vld [vmem:[%s1105 + $0x1] sm:$0xff]
        %v1177 = vld [vmem:[%s1105 + $0x9] sm:$0xff]
        %s1178 = sld [smem:[#allocation3 + $0x1e]]
        %v1179 = vstv %s1178
        %v1180 = vmul.f32 %v1179, %v1176
        %v1181 = vmul.f32 %v1179, %v1177
        %v1182 = vadd.f32 %v1160, %v1180
        %v1183 = vadd.f32 %v1161, %v1181
        %s1184 = sld [smem:[#allocation3 + $0x42]]
        %v1185 = vstv %s1184
        %v1186 = vmul.f32 %v1185, %v1176
        %v1187 = vmul.f32 %v1185, %v1177
        %v1188 = vadd.f32 %v1174, %v1186
        %v1189 = vadd.f32 %v1175, %v1187
        %s1190 = sld [smem:[#allocation3 + $0x1f]]
        %v1191 = vstv %s1190
        %v1192 = vmul.f32 %v1191, %v1176
        %v1193 = vmul.f32 %v1191, %v1177
        %1196 = vrot.lane.b32.xlu0 %v1192, 127
        %v1197 = vpop.permute.xlu0 %1196
        %1198 = vrot.lane.b32.xlu0 %v1193, 127
        %v1199 = vpop.permute.xlu0 %1198
        %v1202 = vadd.f32 %v1182, %v1197
        %v1203 = vadd.f32 %v1183, %v1199
        %s1204 = sld [smem:[#allocation3 + $0x43]]
        %v1205 = vstv %s1204
        %v1206 = vmul.f32 %v1205, %v1176
        %v1207 = vmul.f32 %v1205, %v1177
        %1210 = vrot.lane.b32.xlu0 %v1206, 127
        %v1211 = vpop.permute.xlu0 %1210
        %1212 = vrot.lane.b32.xlu0 %v1207, 127
        %v1213 = vpop.permute.xlu0 %1212
        %v1216 = vadd.f32 %v1188, %v1211
        %v1217 = vadd.f32 %v1189, %v1213
        %s1218 = sld [smem:[#allocation3 + $0x20]]
        %v1219 = vstv %s1218
        %v1220 = vmul.f32 %v1219, %v1176
        %v1221 = vmul.f32 %v1219, %v1177
        %1224 = vrot.lane.b32.xlu0 %v1220, 126
        %v1225 = vpop.permute.xlu0 %1224
        %1226 = vrot.lane.b32.xlu0 %v1221, 126
        %v1227 = vpop.permute.xlu0 %1226
        %v1230 = vadd.f32 %v1202, %v1225
        %v1231 = vadd.f32 %v1203, %v1227
        %s1232 = sld [smem:[#allocation3 + $0x44]]
        %v1233 = vstv %s1232
        %v1234 = vmul.f32 %v1233, %v1176
        %v1235 = vmul.f32 %v1233, %v1177
        %1238 = vrot.lane.b32.xlu0 %v1234, 126
        %v1239 = vpop.permute.xlu0 %1238
        %1240 = vrot.lane.b32.xlu0 %v1235, 126
        %v1241 = vpop.permute.xlu0 %1240
        %v1244 = vadd.f32 %v1216, %v1239
        %v1245 = vadd.f32 %v1217, %v1241
        %v1246 = vld [vmem:[%s1105 + $0x2] sm:$0xff]
        %v1247 = vld [vmem:[%s1105 + $0xa] sm:$0xff]
        %s1248 = sld [smem:[#allocation3 + $0x21]]
        %v1249 = vstv %s1248
        %v1250 = vmul.f32 %v1249, %v1246
        %v1251 = vmul.f32 %v1249, %v1247
        %v1252 = vadd.f32 %v1230, %v1250
        %v1253 = vadd.f32 %v1231, %v1251
        %s1254 = sld [smem:[#allocation3 + $0x45]]
        %v1255 = vstv %s1254
        %v1256 = vmul.f32 %v1255, %v1246
        %v1257 = vmul.f32 %v1255, %v1247
        %v1258 = vadd.f32 %v1244, %v1256
        %v1259 = vadd.f32 %v1245, %v1257
        %s1260 = sld [smem:[#allocation3 + $0x22]]
        %v1261 = vstv %s1260
        %v1262 = vmul.f32 %v1261, %v1246
        %v1263 = vmul.f32 %v1261, %v1247
        %1266 = vrot.lane.b32.xlu0 %v1262, 127
        %v1267 = vpop.permute.xlu0 %1266
        %1268 = vrot.lane.b32.xlu0 %v1263, 127
        %v1269 = vpop.permute.xlu0 %1268
        %v1272 = vadd.f32 %v1252, %v1267
        %v1273 = vadd.f32 %v1253, %v1269
        %s1274 = sld [smem:[#allocation3 + $0x46]]
        %v1275 = vstv %s1274
        %v1276 = vmul.f32 %v1275, %v1246
        %v1277 = vmul.f32 %v1275, %v1247
        %1280 = vrot.lane.b32.xlu0 %v1276, 127
        %v1281 = vpop.permute.xlu0 %1280
        %1282 = vrot.lane.b32.xlu0 %v1277, 127
        %v1283 = vpop.permute.xlu0 %1282
        %v1286 = vadd.f32 %v1258, %v1281
        %v1287 = vadd.f32 %v1259, %v1283
        %s1288 = sld [smem:[#allocation3 + $0x23]]
        %v1289 = vstv %s1288
        %v1290 = vmul.f32 %v1289, %v1246
        %v1291 = vmul.f32 %v1289, %v1247
        %1294 = vrot.lane.b32.xlu0 %v1290, 126
        %v1295 = vpop.permute.xlu0 %1294
        %1296 = vrot.lane.b32.xlu0 %v1291, 126
        %v1297 = vpop.permute.xlu0 %1296
        %v1300 = vadd.f32 %v1272, %v1295
        %v1301 = vadd.f32 %v1273, %v1297
        %s1302 = sld [smem:[#allocation3 + $0x47]]
        %v1303 = vstv %s1302
        %v1304 = vmul.f32 %v1303, %v1246
        %v1305 = vmul.f32 %v1303, %v1247
        %1308 = vrot.lane.b32.xlu0 %v1304, 126
        %v1309 = vpop.permute.xlu0 %1308
        %1310 = vrot.lane.b32.xlu0 %v1305, 126
        %v1311 = vpop.permute.xlu0 %1310
        %v1314 = vadd.f32 %v1286, %v1309
        %v1315 = vadd.f32 %v1287, %v1311
        %vm1316 = vcmp.gt.f32.partialorder %v1300, 0.0
        %vm1317 = vcmp.gt.f32.partialorder %v1301, 0.0
        %v1318 = vstv %s468
        %v1319 = vmul.f32 %v1318, %v1300
        %v1320 = vmul.f32 %v1318, %v1301
        %v1321 = vsel %vm1316, %v1300, %v1319
        %v1322 = vsel %vm1317, %v1301, %v1320
        %vm1323 = vcmp.gt.f32.partialorder %v1314, 0.0
        %vm1324 = vcmp.gt.f32.partialorder %v1315, 0.0
        %v1325 = vmul.f32 %v1318, %v1314
        %v1326 = vmul.f32 %v1318, %v1315
        %v1327 = vsel %vm1323, %v1314, %v1325
        %v1328 = vsel %vm1324, %v1315, %v1326
        %1331 = vrot.lane.b32.xlu0 %v1321, 1
        %v1332 = vpop.permute.xlu0 %1331
        %1333 = vrot.lane.b32.xlu0 %v1322, 1
        %v1334 = vpop.permute.xlu0 %1333
        %s1337 = scalar_lea.vmem [#allocation2], 96
        %1338 = vst.msk [vmem:[%s1337 + $0x1] sm:$0xff] %vm459, %v1332
        %1339 = vst.msk [vmem:[%s1337 + $0x9] sm:$0xff] %vm459, %v1334
        %1342 = vrot.lane.b32.xlu0 %v1327, 1
        %v1343 = vpop.permute.xlu0 %1342
        %1344 = vrot.lane.b32.xlu0 %v1328, 1
        %v1345 = vpop.permute.xlu0 %1344
        %s1348 = scalar_lea.vmem [#allocation2], 120
        %1349 = vst.msk [vmem:[%s1348 + $0x1] sm:$0xff] %vm459, %v1343
        %1350 = vst.msk [vmem:[%s1348 + $0x9] sm:$0xff] %vm459, %v1345
        %s1351 = sld [smem:[#allocation14 + $0x1]]
        %s1352 = sld [smem:[#allocation9]]
        %v1353 = vstv %s1352
        %s1354 = sld [smem:[#allocation9 + $0x1]]
        %v1355 = vstv %s1354
        %v1356 = vld [vmem:[#allocation2] sm:$0xff]
        %v1357 = vld [vmem:[#allocation2 + $0x8] sm:$0xff]
        %s1358 = sld [smem:[#allocation8]]
        %v1359 = vstv %s1358
        %v1360 = vmul.f32 %v1359, %v1356
        %v1361 = vmul.f32 %v1359, %v1357
        %v1362 = vadd.f32 %v1353, %v1360
        %v1363 = vadd.f32 %v1353, %v1361
        %s1364 = sld [smem:[#allocation8 + $0x36]]
        %v1365 = vstv %s1364
        %v1366 = vmul.f32 %v1365, %v1356
        %v1367 = vmul.f32 %v1365, %v1357
        %v1368 = vadd.f32 %v1355, %v1366
        %v1369 = vadd.f32 %v1355, %v1367
        %s1370 = sld [smem:[#allocation8 + $0x1]]
        %v1371 = vstv %s1370
        %v1372 = vmul.f32 %v1371, %v1356
        %v1373 = vmul.f32 %v1371, %v1357
        %1376 = vrot.lane.b32.xlu0 %v1372, 127
        %v1377 = vpop.permute.xlu0 %1376
        %1378 = vrot.lane.b32.xlu0 %v1373, 127
        %v1379 = vpop.permute.xlu0 %1378
        %v1382 = vadd.f32 %v1362, %v1377
        %v1383 = vadd.f32 %v1363, %v1379
        %s1384 = sld [smem:[#allocation8 + $0x37]]
        %v1385 = vstv %s1384
        %v1386 = vmul.f32 %v1385, %v1356
        %v1387 = vmul.f32 %v1385, %v1357
        %1390 = vrot.lane.b32.xlu0 %v1386, 127
        %v1391 = vpop.permute.xlu0 %1390
        %1392 = vrot.lane.b32.xlu0 %v1387, 127
        %v1393 = vpop.permute.xlu0 %1392
        %v1396 = vadd.f32 %v1368, %v1391
        %v1397 = vadd.f32 %v1369, %v1393
        %s1398 = sld [smem:[#allocation8 + $0x2]]
        %v1399 = vstv %s1398
        %v1400 = vmul.f32 %v1399, %v1356
        %v1401 = vmul.f32 %v1399, %v1357
        %1404 = vrot.lane.b32.xlu0 %v1400, 126
        %v1405 = vpop.permute.xlu0 %1404
        %1406 = vrot.lane.b32.xlu0 %v1401, 126
        %v1407 = vpop.permute.xlu0 %1406
        %v1410 = vadd.f32 %v1382, %v1405
        %v1411 = vadd.f32 %v1383, %v1407
        %s1412 = sld [smem:[#allocation8 + $0x38]]
        %v1413 = vstv %s1412
        %v1414 = vmul.f32 %v1413, %v1356
        %v1415 = vmul.f32 %v1413, %v1357
        %1418 = vrot.lane.b32.xlu0 %v1414, 126
        %v1419 = vpop.permute.xlu0 %1418
        %1420 = vrot.lane.b32.xlu0 %v1415, 126
        %v1421 = vpop.permute.xlu0 %1420
        %v1424 = vadd.f32 %v1396, %v1419
        %v1425 = vadd.f32 %v1397, %v1421
        %v1426 = vld [vmem:[#allocation2 + $0x1] sm:$0xff]
        %v1427 = vld [vmem:[#allocation2 + $0x9] sm:$0xff]
        %s1428 = sld [smem:[#allocation8 + $0x3]]
        %v1429 = vstv %s1428
        %v1430 = vmul.f32 %v1429, %v1426
        %v1431 = vmul.f32 %v1429, %v1427
        %v1432 = vadd.f32 %v1410, %v1430
        %v1433 = vadd.f32 %v1411, %v1431
        %s1434 = sld [smem:[#allocation8 + $0x39]]
        %v1435 = vstv %s1434
        %v1436 = vmul.f32 %v1435, %v1426
        %v1437 = vmul.f32 %v1435, %v1427
        %v1438 = vadd.f32 %v1424, %v1436
        %v1439 = vadd.f32 %v1425, %v1437
        %s1440 = sld [smem:[#allocation8 + $0x4]]
        %v1441 = vstv %s1440
        %v1442 = vmul.f32 %v1441, %v1426
        %v1443 = vmul.f32 %v1441, %v1427
        %1446 = vrot.lane.b32.xlu0 %v1442, 127
        %v1447 = vpop.permute.xlu0 %1446
        %1448 = vrot.lane.b32.xlu0 %v1443, 127
        %v1449 = vpop.permute.xlu0 %1448
        %v1452 = vadd.f32 %v1432, %v1447
        %v1453 = vadd.f32 %v1433, %v1449
        %s1454 = sld [smem:[#allocation8 + $0x3a]]
        %v1455 = vstv %s1454
        %v1456 = vmul.f32 %v1455, %v1426
        %v1457 = vmul.f32 %v1455, %v1427
        %1460 = vrot.lane.b32.xlu0 %v1456, 127
        %v1461 = vpop.permute.xlu0 %1460
        %1462 = vrot.lane.b32.xlu0 %v1457, 127
        %v1463 = vpop.permute.xlu0 %1462
        %v1466 = vadd.f32 %v1438, %v1461
        %v1467 = vadd.f32 %v1439, %v1463
        %s1468 = sld [smem:[#allocation8 + $0x5]]
        %v1469 = vstv %s1468
        %v1470 = vmul.f32 %v1469, %v1426
        %v1471 = vmul.f32 %v1469, %v1427
        %1474 = vrot.lane.b32.xlu0 %v1470, 126
        %v1475 = vpop.permute.xlu0 %1474
        %1476 = vrot.lane.b32.xlu0 %v1471, 126
        %v1477 = vpop.permute.xlu0 %1476
        %v1480 = vadd.f32 %v1452, %v1475
        %v1481 = vadd.f32 %v1453, %v1477
        %s1482 = sld [smem:[#allocation8 + $0x3b]]
        %v1483 = vstv %s1482
        %v1484 = vmul.f32 %v1483, %v1426
        %v1485 = vmul.f32 %v1483, %v1427
        %1488 = vrot.lane.b32.xlu0 %v1484, 126
        %v1489 = vpop.permute.xlu0 %1488
        %1490 = vrot.lane.b32.xlu0 %v1485, 126
        %v1491 = vpop.permute.xlu0 %1490
        %v1494 = vadd.f32 %v1466, %v1489
        %v1495 = vadd.f32 %v1467, %v1491
        %v1496 = vld [vmem:[#allocation2 + $0x2] sm:$0xff]
        %v1497 = vld [vmem:[#allocation2 + $0xa] sm:$0xff]
        %s1498 = sld [smem:[#allocation8 + $0x6]]
        %v1499 = vstv %s1498
        %v1500 = vmul.f32 %v1499, %v1496
        %v1501 = vmul.f32 %v1499, %v1497
        %v1502 = vadd.f32 %v1480, %v1500
        %v1503 = vadd.f32 %v1481, %v1501
        %s1504 = sld [smem:[#allocation8 + $0x3c]]
        %v1505 = vstv %s1504
        %v1506 = vmul.f32 %v1505, %v1496
        %v1507 = vmul.f32 %v1505, %v1497
        %v1508 = vadd.f32 %v1494, %v1506
        %v1509 = vadd.f32 %v1495, %v1507
        %s1510 = sld [smem:[#allocation8 + $0x7]]
        %v1511 = vstv %s1510
        %v1512 = vmul.f32 %v1511, %v1496
        %v1513 = vmul.f32 %v1511, %v1497
        %1516 = vrot.lane.b32.xlu0 %v1512, 127
        %v1517 = vpop.permute.xlu0 %1516
        %1518 = vrot.lane.b32.xlu0 %v1513, 127
        %v1519 = vpop.permute.xlu0 %1518
        %v1522 = vadd.f32 %v1502, %v1517
        %v1523 = vadd.f32 %v1503, %v1519
        %s1524 = sld [smem:[#allocation8 + $0x3d]]
        %v1525 = vstv %s1524
        %v1526 = vmul.f32 %v1525, %v1496
        %v1527 = vmul.f32 %v1525, %v1497
        %1530 = vrot.lane.b32.xlu0 %v1526, 127
        %v1531 = vpop.permute.xlu0 %1530
        %1532 = vrot.lane.b32.xlu0 %v1527, 127
        %v1533 = vpop.permute.xlu0 %1532
        %v1536 = vadd.f32 %v1508, %v1531
        %v1537 = vadd.f32 %v1509, %v1533
        %s1538 = sld [smem:[#allocation8 + $0x8]]
        %v1539 = vstv %s1538
        %v1540 = vmul.f32 %v1539, %v1496
        %v1541 = vmul.f32 %v1539, %v1497
        %1544 = vrot.lane.b32.xlu0 %v1540, 126
        %v1545 = vpop.permute.xlu0 %1544
        %1546 = vrot.lane.b32.xlu0 %v1541, 126
        %v1547 = vpop.permute.xlu0 %1546
        %v1550 = vadd.f32 %v1522, %v1545
        %v1551 = vadd.f32 %v1523, %v1547
        %s1552 = sld [smem:[#allocation8 + $0x3e]]
        %v1553 = vstv %s1552
        %v1554 = vmul.f32 %v1553, %v1496
        %v1555 = vmul.f32 %v1553, %v1497
        %1558 = vrot.lane.b32.xlu0 %v1554, 126
        %v1559 = vpop.permute.xlu0 %1558
        %1560 = vrot.lane.b32.xlu0 %v1555, 126
        %v1561 = vpop.permute.xlu0 %1560
        %v1564 = vadd.f32 %v1536, %v1559
        %v1565 = vadd.f32 %v1537, %v1561
        %v1566 = vld [vmem:[%s683] sm:$0xff]
        %v1567 = vld [vmem:[%s683 + $0x8] sm:$0xff]
        %s1568 = sld [smem:[#allocation8 + $0x9]]
        %v1569 = vstv %s1568
        %v1570 = vmul.f32 %v1569, %v1566
        %v1571 = vmul.f32 %v1569, %v1567
        %v1572 = vadd.f32 %v1550, %v1570
        %v1573 = vadd.f32 %v1551, %v1571
        %s1574 = sld [smem:[#allocation8 + $0x3f]]
        %v1575 = vstv %s1574
        %v1576 = vmul.f32 %v1575, %v1566
        %v1577 = vmul.f32 %v1575, %v1567
        %v1578 = vadd.f32 %v1564, %v1576
        %v1579 = vadd.f32 %v1565, %v1577
        %s1580 = sld [smem:[#allocation8 + $0xa]]
        %v1581 = vstv %s1580
        %v1582 = vmul.f32 %v1581, %v1566
        %v1583 = vmul.f32 %v1581, %v1567
        %1586 = vrot.lane.b32.xlu0 %v1582, 127
        %v1587 = vpop.permute.xlu0 %1586
        %1588 = vrot.lane.b32.xlu0 %v1583, 127
        %v1589 = vpop.permute.xlu0 %1588
        %v1592 = vadd.f32 %v1572, %v1587
        %v1593 = vadd.f32 %v1573, %v1589
        %s1594 = sld [smem:[#allocation8 + $0x40]]
        %v1595 = vstv %s1594
        %v1596 = vmul.f32 %v1595, %v1566
        %v1597 = vmul.f32 %v1595, %v1567
        %1600 = vrot.lane.b32.xlu0 %v1596, 127
        %v1601 = vpop.permute.xlu0 %1600
        %1602 = vrot.lane.b32.xlu0 %v1597, 127
        %v1603 = vpop.permute.xlu0 %1602
        %v1606 = vadd.f32 %v1578, %v1601
        %v1607 = vadd.f32 %v1579, %v1603
        %s1608 = sld [smem:[#allocation8 + $0xb]]
        %v1609 = vstv %s1608
        %v1610 = vmul.f32 %v1609, %v1566
        %v1611 = vmul.f32 %v1609, %v1567
        %1614 = vrot.lane.b32.xlu0 %v1610, 126
        %v1615 = vpop.permute.xlu0 %1614
        %1616 = vrot.lane.b32.xlu0 %v1611, 126
        %v1617 = vpop.permute.xlu0 %1616
        %v1620 = vadd.f32 %v1592, %v1615
        %v1621 = vadd.f32 %v1593, %v1617
        %s1622 = sld [smem:[#allocation8 + $0x41]]
        %v1623 = vstv %s1622
        %v1624 = vmul.f32 %v1623, %v1566
        %v1625 = vmul.f32 %v1623, %v1567
        %1628 = vrot.lane.b32.xlu0 %v1624, 126
        %v1629 = vpop.permute.xlu0 %1628
        %1630 = vrot.lane.b32.xlu0 %v1625, 126
        %v1631 = vpop.permute.xlu0 %1630
        %v1634 = vadd.f32 %v1606, %v1629
        %v1635 = vadd.f32 %v1607, %v1631
        %v1636 = vld [vmem:[%s683 + $0x1] sm:$0xff]
        %v1637 = vld [vmem:[%s683 + $0x9] sm:$0xff]
        %s1638 = sld [smem:[#allocation8 + $0xc]]
        %v1639 = vstv %s1638
        %v1640 = vmul.f32 %v1639, %v1636
        %v1641 = vmul.f32 %v1639, %v1637
        %v1642 = vadd.f32 %v1620, %v1640
        %v1643 = vadd.f32 %v1621, %v1641
        %s1644 = sld [smem:[#allocation8 + $0x42]]
        %v1645 = vstv %s1644
        %v1646 = vmul.f32 %v1645, %v1636
        %v1647 = vmul.f32 %v1645, %v1637
        %v1648 = vadd.f32 %v1634, %v1646
        %v1649 = vadd.f32 %v1635, %v1647
        %s1650 = sld [smem:[#allocation8 + $0xd]]
        %v1651 = vstv %s1650
        %v1652 = vmul.f32 %v1651, %v1636
        %v1653 = vmul.f32 %v1651, %v1637
        %1656 = vrot.lane.b32.xlu0 %v1652, 127
        %v1657 = vpop.permute.xlu0 %1656
        %1658 = vrot.lane.b32.xlu0 %v1653, 127
        %v1659 = vpop.permute.xlu0 %1658
        %v1662 = vadd.f32 %v1642, %v1657
        %v1663 = vadd.f32 %v1643, %v1659
        %s1664 = sld [smem:[#allocation8 + $0x43]]
        %v1665 = vstv %s1664
        %v1666 = vmul.f32 %v1665, %v1636
        %v1667 = vmul.f32 %v1665, %v1637
        %1670 = vrot.lane.b32.xlu0 %v1666, 127
        %v1671 = vpop.permute.xlu0 %1670
        %1672 = vrot.lane.b32.xlu0 %v1667, 127
        %v1673 = vpop.permute.xlu0 %1672
        %v1676 = vadd.f32 %v1648, %v1671
        %v1677 = vadd.f32 %v1649, %v1673
        %s1678 = sld [smem:[#allocation8 + $0xe]]
        %v1679 = vstv %s1678
        %v1680 = vmul.f32 %v1679, %v1636
        %v1681 = vmul.f32 %v1679, %v1637
        %1684 = vrot.lane.b32.xlu0 %v1680, 126
        %v1685 = vpop.permute.xlu0 %1684
        %1686 = vrot.lane.b32.xlu0 %v1681, 126
        %v1687 = vpop.permute.xlu0 %1686
        %v1690 = vadd.f32 %v1662, %v1685
        %v1691 = vadd.f32 %v1663, %v1687
        %s1692 = sld [smem:[#allocation8 + $0x44]]
        %v1693 = vstv %s1692
        %v1694 = vmul.f32 %v1693, %v1636
        %v1695 = vmul.f32 %v1693, %v1637
        %1698 = vrot.lane.b32.xlu0 %v1694, 126
        %v1699 = vpop.permute.xlu0 %1698
        %1700 = vrot.lane.b32.xlu0 %v1695, 126
        %v1701 = vpop.permute.xlu0 %1700
        %v1704 = vadd.f32 %v1676, %v1699
        %v1705 = vadd.f32 %v1677, %v1701
        %v1706 = vld [vmem:[%s683 + $0x2] sm:$0xff]
        %v1707 = vld [vmem:[%s683 + $0xa] sm:$0xff]
        %s1708 = sld [smem:[#allocation8 + $0xf]]
        %v1709 = vstv %s1708
        %v1710 = vmul.f32 %v1709, %v1706
        %v1711 = vmul.f32 %v1709, %v1707
        %v1712 = vadd.f32 %v1690, %v1710
        %v1713 = vadd.f32 %v1691, %v1711
        %s1714 = sld [smem:[#allocation8 + $0x45]]
        %v1715 = vstv %s1714
        %v1716 = vmul.f32 %v1715, %v1706
        %v1717 = vmul.f32 %v1715, %v1707
        %v1718 = vadd.f32 %v1704, %v1716
        %v1719 = vadd.f32 %v1705, %v1717
        %s1720 = sld [smem:[#allocation8 + $0x10]]
        %v1721 = vstv %s1720
        %v1722 = vmul.f32 %v1721, %v1706
        %v1723 = vmul.f32 %v1721, %v1707
        %1726 = vrot.lane.b32.xlu0 %v1722, 127
        %v1727 = vpop.permute.xlu0 %1726
        %1728 = vrot.lane.b32.xlu0 %v1723, 127
        %v1729 = vpop.permute.xlu0 %1728
        %v1732 = vadd.f32 %v1712, %v1727
        %v1733 = vadd.f32 %v1713, %v1729
        %s1734 = sld [smem:[#allocation8 + $0x46]]
        %v1735 = vstv %s1734
        %v1736 = vmul.f32 %v1735, %v1706
        %v1737 = vmul.f32 %v1735, %v1707
        %1740 = vrot.lane.b32.xlu0 %v1736, 127
        %v1741 = vpop.permute.xlu0 %1740
        %1742 = vrot.lane.b32.xlu0 %v1737, 127
        %v1743 = vpop.permute.xlu0 %1742
        %v1746 = vadd.f32 %v1718, %v1741
        %v1747 = vadd.f32 %v1719, %v1743
        %s1748 = sld [smem:[#allocation8 + $0x11]]
        %v1749 = vstv %s1748
        %v1750 = vmul.f32 %v1749, %v1706
        %v1751 = vmul.f32 %v1749, %v1707
        %1754 = vrot.lane.b32.xlu0 %v1750, 126
        %v1755 = vpop.permute.xlu0 %1754
        %1756 = vrot.lane.b32.xlu0 %v1751, 126
        %v1757 = vpop.permute.xlu0 %1756
        %v1760 = vadd.f32 %v1732, %v1755
        %v1761 = vadd.f32 %v1733, %v1757
        %s1762 = sld [smem:[#allocation8 + $0x47]]
        %v1763 = vstv %s1762
        %v1764 = vmul.f32 %v1763, %v1706
        %v1765 = vmul.f32 %v1763, %v1707
        %1768 = vrot.lane.b32.xlu0 %v1764, 126
        %v1769 = vpop.permute.xlu0 %1768
        %1770 = vrot.lane.b32.xlu0 %v1765, 126
        %v1771 = vpop.permute.xlu0 %1770
        %v1774 = vadd.f32 %v1746, %v1769
        %v1775 = vadd.f32 %v1747, %v1771
        %v1776 = vld [vmem:[%s894] sm:$0xff]
        %v1777 = vld [vmem:[%s894 + $0x8] sm:$0xff]
        %s1778 = sld [smem:[#allocation8 + $0x12]]
        %v1779 = vstv %s1778
        %v1780 = vmul.f32 %v1779, %v1776
        %v1781 = vmul.f32 %v1779, %v1777
        %v1782 = vadd.f32 %v1760, %v1780
        %v1783 = vadd.f32 %v1761, %v1781
        %s1784 = sld [smem:[#allocation8 + $0x48]]
        %v1785 = vstv %s1784
        %v1786 = vmul.f32 %v1785, %v1776
        %v1787 = vmul.f32 %v1785, %v1777
        %v1788 = vadd.f32 %v1774, %v1786
        %v1789 = vadd.f32 %v1775, %v1787
        %s1790 = sld [smem:[#allocation8 + $0x13]]
        %v1791 = vstv %s1790
        %v1792 = vmul.f32 %v1791, %v1776
        %v1793 = vmul.f32 %v1791, %v1777
        %1796 = vrot.lane.b32.xlu0 %v1792, 127
        %v1797 = vpop.permute.xlu0 %1796
        %1798 = vrot.lane.b32.xlu0 %v1793, 127
        %v1799 = vpop.permute.xlu0 %1798
        %v1802 = vadd.f32 %v1782, %v1797
        %v1803 = vadd.f32 %v1783, %v1799
        %s1804 = sld [smem:[#allocation8 + $0x49]]
        %v1805 = vstv %s1804
        %v1806 = vmul.f32 %v1805, %v1776
        %v1807 = vmul.f32 %v1805, %v1777
        %1810 = vrot.lane.b32.xlu0 %v1806, 127
        %v1811 = vpop.permute.xlu0 %1810
        %1812 = vrot.lane.b32.xlu0 %v1807, 127
        %v1813 = vpop.permute.xlu0 %1812
        %v1816 = vadd.f32 %v1788, %v1811
        %v1817 = vadd.f32 %v1789, %v1813
        %s1818 = sld [smem:[#allocation8 + $0x14]]
        %v1819 = vstv %s1818
        %v1820 = vmul.f32 %v1819, %v1776
        %v1821 = vmul.f32 %v1819, %v1777
        %1824 = vrot.lane.b32.xlu0 %v1820, 126
        %v1825 = vpop.permute.xlu0 %1824
        %1826 = vrot.lane.b32.xlu0 %v1821, 126
        %v1827 = vpop.permute.xlu0 %1826
        %v1830 = vadd.f32 %v1802, %v1825
        %v1831 = vadd.f32 %v1803, %v1827
        %s1832 = sld [smem:[#allocation8 + $0x4a]]
        %v1833 = vstv %s1832
        %v1834 = vmul.f32 %v1833, %v1776
        %v1835 = vmul.f32 %v1833, %v1777
        %1838 = vrot.lane.b32.xlu0 %v1834, 126
        %v1839 = vpop.permute.xlu0 %1838
        %1840 = vrot.lane.b32.xlu0 %v1835, 126
        %v1841 = vpop.permute.xlu0 %1840
        %v1844 = vadd.f32 %v1816, %v1839
        %v1845 = vadd.f32 %v1817, %v1841
        %v1846 = vld [vmem:[%s894 + $0x1] sm:$0xff]
        %v1847 = vld [vmem:[%s894 + $0x9] sm:$0xff]
        %s1848 = sld [smem:[#allocation8 + $0x15]]
        %v1849 = vstv %s1848
        %v1850 = vmul.f32 %v1849, %v1846
        %v1851 = vmul.f32 %v1849, %v1847
        %v1852 = vadd.f32 %v1830, %v1850
        %v1853 = vadd.f32 %v1831, %v1851
        %s1854 = sld [smem:[#allocation8 + $0x4b]]
        %v1855 = vstv %s1854
        %v1856 = vmul.f32 %v1855, %v1846
        %v1857 = vmul.f32 %v1855, %v1847
        %v1858 = vadd.f32 %v1844, %v1856
        %v1859 = vadd.f32 %v1845, %v1857
        %s1860 = sld [smem:[#allocation8 + $0x16]]
        %v1861 = vstv %s1860
        %v1862 = vmul.f32 %v1861, %v1846
        %v1863 = vmul.f32 %v1861, %v1847
        %1866 = vrot.lane.b32.xlu0 %v1862, 127
        %v1867 = vpop.permute.xlu0 %1866
        %1868 = vrot.lane.b32.xlu0 %v1863, 127
        %v1869 = vpop.permute.xlu0 %1868
        %v1872 = vadd.f32 %v1852, %v1867
        %v1873 = vadd.f32 %v1853, %v1869
        %s1874 = sld [smem:[#allocation8 + $0x4c]]
        %v1875 = vstv %s1874
        %v1876 = vmul.f32 %v1875, %v1846
        %v1877 = vmul.f32 %v1875, %v1847
        %1880 = vrot.lane.b32.xlu0 %v1876, 127
        %v1881 = vpop.permute.xlu0 %1880
        %1882 = vrot.lane.b32.xlu0 %v1877, 127
        %v1883 = vpop.permute.xlu0 %1882
        %v1886 = vadd.f32 %v1858, %v1881
        %v1887 = vadd.f32 %v1859, %v1883
        %s1888 = sld [smem:[#allocation8 + $0x17]]
        %v1889 = vstv %s1888
        %v1890 = vmul.f32 %v1889, %v1846
        %v1891 = vmul.f32 %v1889, %v1847
        %1894 = vrot.lane.b32.xlu0 %v1890, 126
        %v1895 = vpop.permute.xlu0 %1894
        %1896 = vrot.lane.b32.xlu0 %v1891, 126
        %v1897 = vpop.permute.xlu0 %1896
        %v1900 = vadd.f32 %v1872, %v1895
        %v1901 = vadd.f32 %v1873, %v1897
        %s1902 = sld [smem:[#allocation8 + $0x4d]]
        %v1903 = vstv %s1902
        %v1904 = vmul.f32 %v1903, %v1846
        %v1905 = vmul.f32 %v1903, %v1847
        %1908 = vrot.lane.b32.xlu0 %v1904, 126
        %v1909 = vpop.permute.xlu0 %1908
        %1910 = vrot.lane.b32.xlu0 %v1905, 126
        %v1911 = vpop.permute.xlu0 %1910
        %v1914 = vadd.f32 %v1886, %v1909
        %v1915 = vadd.f32 %v1887, %v1911
        %v1916 = vld [vmem:[%s894 + $0x2] sm:$0xff]
        %v1917 = vld [vmem:[%s894 + $0xa] sm:$0xff]
        %s1918 = sld [smem:[#allocation8 + $0x18]]
        %v1919 = vstv %s1918
        %v1920 = vmul.f32 %v1919, %v1916
        %v1921 = vmul.f32 %v1919, %v1917
        %v1922 = vadd.f32 %v1900, %v1920
        %v1923 = vadd.f32 %v1901, %v1921
        %s1924 = sld [smem:[#allocation8 + $0x4e]]
        %v1925 = vstv %s1924
        %v1926 = vmul.f32 %v1925, %v1916
        %v1927 = vmul.f32 %v1925, %v1917
        %v1928 = vadd.f32 %v1914, %v1926
        %v1929 = vadd.f32 %v1915, %v1927
        %s1930 = sld [smem:[#allocation8 + $0x19]]
        %v1931 = vstv %s1930
        %v1932 = vmul.f32 %v1931, %v1916
        %v1933 = vmul.f32 %v1931, %v1917
        %1936 = vrot.lane.b32.xlu0 %v1932, 127
        %v1937 = vpop.permute.xlu0 %1936
        %1938 = vrot.lane.b32.xlu0 %v1933, 127
        %v1939 = vpop.permute.xlu0 %1938
        %v1942 = vadd.f32 %v1922, %v1937
        %v1943 = vadd.f32 %v1923, %v1939
        %s1944 = sld [smem:[#allocation8 + $0x4f]]
        %v1945 = vstv %s1944
        %v1946 = vmul.f32 %v1945, %v1916
        %v1947 = vmul.f32 %v1945, %v1917
        %1950 = vrot.lane.b32.xlu0 %v1946, 127
        %v1951 = vpop.permute.xlu0 %1950
        %1952 = vrot.lane.b32.xlu0 %v1947, 127
        %v1953 = vpop.permute.xlu0 %1952
        %v1956 = vadd.f32 %v1928, %v1951
        %v1957 = vadd.f32 %v1929, %v1953
        %s1958 = sld [smem:[#allocation8 + $0x1a]]
        %v1959 = vstv %s1958
        %v1960 = vmul.f32 %v1959, %v1916
        %v1961 = vmul.f32 %v1959, %v1917
        %1964 = vrot.lane.b32.xlu0 %v1960, 126
        %v1965 = vpop.permute.xlu0 %1964
        %1966 = vrot.lane.b32.xlu0 %v1961, 126
        %v1967 = vpop.permute.xlu0 %1966
        %v1970 = vadd.f32 %v1942, %v1965
        %v1971 = vadd.f32 %v1943, %v1967
        %s1972 = sld [smem:[#allocation8 + $0x50]]
        %v1973 = vstv %s1972
        %v1974 = vmul.f32 %v1973, %v1916
        %v1975 = vmul.f32 %v1973, %v1917
        %1978 = vrot.lane.b32.xlu0 %v1974, 126
        %v1979 = vpop.permute.xlu0 %1978
        %1980 = vrot.lane.b32.xlu0 %v1975, 126
        %v1981 = vpop.permute.xlu0 %1980
        %v1984 = vadd.f32 %v1956, %v1979
        %v1985 = vadd.f32 %v1957, %v1981
        %v1986 = vld [vmem:[%s1105] sm:$0xff]
        %v1987 = vld [vmem:[%s1105 + $0x8] sm:$0xff]
        %s1988 = sld [smem:[#allocation8 + $0x1b]]
        %v1989 = vstv %s1988
        %v1990 = vmul.f32 %v1989, %v1986
        %v1991 = vmul.f32 %v1989, %v1987
        %v1992 = vadd.f32 %v1970, %v1990
        %v1993 = vadd.f32 %v1971, %v1991
        %s1994 = sld [smem:[#allocation8 + $0x51]]
        %v1995 = vstv %s1994
        %v1996 = vmul.f32 %v1995, %v1986
        %v1997 = vmul.f32 %v1995, %v1987
        %v1998 = vadd.f32 %v1984, %v1996
        %v1999 = vadd.f32 %v1985, %v1997
        %s2000 = sld [smem:[#allocation8 + $0x1c]]
        %v2001 = vstv %s2000
        %v2002 = vmul.f32 %v2001, %v1986
        %v2003 = vmul.f32 %v2001, %v1987
        %2006 = vrot.lane.b32.xlu0 %v2002, 127
        %v2007 = vpop.permute.xlu0 %2006
        %2008 = vrot.lane.b32.xlu0 %v2003, 127
        %v2009 = vpop.permute.xlu0 %2008
        %v2012 = vadd.f32 %v1992, %v2007
        %v2013 = vadd.f32 %v1993, %v2009
        %s2014 = sld [smem:[#allocation8 + $0x52]]
        %v2015 = vstv %s2014
        %v2016 = vmul.f32 %v2015, %v1986
        %v2017 = vmul.f32 %v2015, %v1987
        %2020 = vrot.lane.b32.xlu0 %v2016, 127
        %v2021 = vpop.permute.xlu0 %2020
        %2022 = vrot.lane.b32.xlu0 %v2017, 127
        %v2023 = vpop.permute.xlu0 %2022
        %v2026 = vadd.f32 %v1998, %v2021
        %v2027 = vadd.f32 %v1999, %v2023
        %s2028 = sld [smem:[#allocation8 + $0x1d]]
        %v2029 = vstv %s2028
        %v2030 = vmul.f32 %v2029, %v1986
        %v2031 = vmul.f32 %v2029, %v1987
        %2034 = vrot.lane.b32.xlu0 %v2030, 126
        %v2035 = vpop.permute.xlu0 %2034
        %2036 = vrot.lane.b32.xlu0 %v2031, 126
        %v2037 = vpop.permute.xlu0 %2036
        %v2040 = vadd.f32 %v2012, %v2035
        %v2041 = vadd.f32 %v2013, %v2037
        %s2042 = sld [smem:[#allocation8 + $0x53]]
        %v2043 = vstv %s2042
        %v2044 = vmul.f32 %v2043, %v1986
        %v2045 = vmul.f32 %v2043, %v1987
        %2048 = vrot.lane.b32.xlu0 %v2044, 126
        %v2049 = vpop.permute.xlu0 %2048
        %2050 = vrot.lane.b32.xlu0 %v2045, 126
        %v2051 = vpop.permute.xlu0 %2050
        %v2054 = vadd.f32 %v2026, %v2049
        %v2055 = vadd.f32 %v2027, %v2051
        %v2056 = vld [vmem:[%s1105 + $0x1] sm:$0xff]
        %v2057 = vld [vmem:[%s1105 + $0x9] sm:$0xff]
        %s2058 = sld [smem:[#allocation8 + $0x1e]]
        %v2059 = vstv %s2058
        %v2060 = vmul.f32 %v2059, %v2056
        %v2061 = vmul.f32 %v2059, %v2057
        %v2062 = vadd.f32 %v2040, %v2060
        %v2063 = vadd.f32 %v2041, %v2061
        %s2064 = sld [smem:[#allocation8 + $0x54]]
        %v2065 = vstv %s2064
        %v2066 = vmul.f32 %v2065, %v2056
        %v2067 = vmul.f32 %v2065, %v2057
        %v2068 = vadd.f32 %v2054, %v2066
        %v2069 = vadd.f32 %v2055, %v2067
        %s2070 = sld [smem:[#allocation8 + $0x1f]]
        %v2071 = vstv %s2070
        %v2072 = vmul.f32 %v2071, %v2056
        %v2073 = vmul.f32 %v2071, %v2057
        %2076 = vrot.lane.b32.xlu0 %v2072, 127
        %v2077 = vpop.permute.xlu0 %2076
        %2078 = vrot.lane.b32.xlu0 %v2073, 127
        %v2079 = vpop.permute.xlu0 %2078
        %v2082 = vadd.f32 %v2062, %v2077
        %v2083 = vadd.f32 %v2063, %v2079
        %s2084 = sld [smem:[#allocation8 + $0x55]]
        %v2085 = vstv %s2084
        %v2086 = vmul.f32 %v2085, %v2056
        %v2087 = vmul.f32 %v2085, %v2057
        %2090 = vrot.lane.b32.xlu0 %v2086, 127
        %v2091 = vpop.permute.xlu0 %2090
        %2092 = vrot.lane.b32.xlu0 %v2087, 127
        %v2093 = vpop.permute.xlu0 %2092
        %v2096 = vadd.f32 %v2068, %v2091
        %v2097 = vadd.f32 %v2069, %v2093
        %s2098 = sld [smem:[#allocation8 + $0x20]]
        %v2099 = vstv %s2098
        %v2100 = vmul.f32 %v2099, %v2056
        %v2101 = vmul.f32 %v2099, %v2057
        %2104 = vrot.lane.b32.xlu0 %v2100, 126
        %v2105 = vpop.permute.xlu0 %2104
        %2106 = vrot.lane.b32.xlu0 %v2101, 126
        %v2107 = vpop.permute.xlu0 %2106
        %v2110 = vadd.f32 %v2082, %v2105
        %v2111 = vadd.f32 %v2083, %v2107
        %s2112 = sld [smem:[#allocation8 + $0x56]]
        %v2113 = vstv %s2112
        %v2114 = vmul.f32 %v2113, %v2056
        %v2115 = vmul.f32 %v2113, %v2057
        %2118 = vrot.lane.b32.xlu0 %v2114, 126
        %v2119 = vpop.permute.xlu0 %2118
        %2120 = vrot.lane.b32.xlu0 %v2115, 126
        %v2121 = vpop.permute.xlu0 %2120
        %v2124 = vadd.f32 %v2096, %v2119
        %v2125 = vadd.f32 %v2097, %v2121
        %v2126 = vld [vmem:[%s1105 + $0x2] sm:$0xff]
        %v2127 = vld [vmem:[%s1105 + $0xa] sm:$0xff]
        %s2128 = sld [smem:[#allocation8 + $0x21]]
        %v2129 = vstv %s2128
        %v2130 = vmul.f32 %v2129, %v2126
        %v2131 = vmul.f32 %v2129, %v2127
        %v2132 = vadd.f32 %v2110, %v2130
        %v2133 = vadd.f32 %v2111, %v2131
        %s2134 = sld [smem:[#allocation8 + $0x57]]
        %v2135 = vstv %s2134
        %v2136 = vmul.f32 %v2135, %v2126
        %v2137 = vmul.f32 %v2135, %v2127
        %v2138 = vadd.f32 %v2124, %v2136
        %v2139 = vadd.f32 %v2125, %v2137
        %s2140 = sld [smem:[#allocation8 + $0x22]]
        %v2141 = vstv %s2140
        %v2142 = vmul.f32 %v2141, %v2126
        %v2143 = vmul.f32 %v2141, %v2127
        %2146 = vrot.lane.b32.xlu0 %v2142, 127
        %v2147 = vpop.permute.xlu0 %2146
        %2148 = vrot.lane.b32.xlu0 %v2143, 127
        %v2149 = vpop.permute.xlu0 %2148
        %v2152 = vadd.f32 %v2132, %v2147
        %v2153 = vadd.f32 %v2133, %v2149
        %s2154 = sld [smem:[#allocation8 + $0x58]]
        %v2155 = vstv %s2154
        %v2156 = vmul.f32 %v2155, %v2126
        %v2157 = vmul.f32 %v2155, %v2127
        %2160 = vrot.lane.b32.xlu0 %v2156, 127
        %v2161 = vpop.permute.xlu0 %2160
        %2162 = vrot.lane.b32.xlu0 %v2157, 127
        %v2163 = vpop.permute.xlu0 %2162
        %v2166 = vadd.f32 %v2138, %v2161
        %v2167 = vadd.f32 %v2139, %v2163
        %s2168 = sld [smem:[#allocation8 + $0x23]]
        %v2169 = vstv %s2168
        %v2170 = vmul.f32 %v2169, %v2126
        %v2171 = vmul.f32 %v2169, %v2127
        %2174 = vrot.lane.b32.xlu0 %v2170, 126
        %v2175 = vpop.permute.xlu0 %2174
        %2176 = vrot.lane.b32.xlu0 %v2171, 126
        %v2177 = vpop.permute.xlu0 %2176
        %v2180 = vadd.f32 %v2152, %v2175
        %v2181 = vadd.f32 %v2153, %v2177
        %s2182 = sld [smem:[#allocation8 + $0x59]]
        %v2183 = vstv %s2182
        %v2184 = vmul.f32 %v2183, %v2126
        %v2185 = vmul.f32 %v2183, %v2127
        %2188 = vrot.lane.b32.xlu0 %v2184, 126
        %v2189 = vpop.permute.xlu0 %2188
        %2190 = vrot.lane.b32.xlu0 %v2185, 126
        %v2191 = vpop.permute.xlu0 %2190
        %v2194 = vadd.f32 %v2166, %v2189
        %v2195 = vadd.f32 %v2167, %v2191
        %v2196 = vld [vmem:[%s1337] sm:$0xff]
        %v2197 = vld [vmem:[%s1337 + $0x8] sm:$0xff]
        %s2198 = sld [smem:[#allocation8 + $0x24]]
        %v2199 = vstv %s2198
        %v2200 = vmul.f32 %v2199, %v2196
        %v2201 = vmul.f32 %v2199, %v2197
        %v2202 = vadd.f32 %v2180, %v2200
        %v2203 = vadd.f32 %v2181, %v2201
        %s2204 = sld [smem:[#allocation8 + $0x5a]]
        %v2205 = vstv %s2204
        %v2206 = vmul.f32 %v2205, %v2196
        %v2207 = vmul.f32 %v2205, %v2197
        %v2208 = vadd.f32 %v2194, %v2206
        %v2209 = vadd.f32 %v2195, %v2207
        %s2210 = sld [smem:[#allocation8 + $0x25]]
        %v2211 = vstv %s2210
        %v2212 = vmul.f32 %v2211, %v2196
        %v2213 = vmul.f32 %v2211, %v2197
        %2216 = vrot.lane.b32.xlu0 %v2212, 127
        %v2217 = vpop.permute.xlu0 %2216
        %2218 = vrot.lane.b32.xlu0 %v2213, 127
        %v2219 = vpop.permute.xlu0 %2218
        %v2222 = vadd.f32 %v2202, %v2217
        %v2223 = vadd.f32 %v2203, %v2219
        %s2224 = sld [smem:[#allocation8 + $0x5b]]
        %v2225 = vstv %s2224
        %v2226 = vmul.f32 %v2225, %v2196
        %v2227 = vmul.f32 %v2225, %v2197
        %2230 = vrot.lane.b32.xlu0 %v2226, 127
        %v2231 = vpop.permute.xlu0 %2230
        %2232 = vrot.lane.b32.xlu0 %v2227, 127
        %v2233 = vpop.permute.xlu0 %2232
        %v2236 = vadd.f32 %v2208, %v2231
        %v2237 = vadd.f32 %v2209, %v2233
        %s2238 = sld [smem:[#allocation8 + $0x26]]
        %v2239 = vstv %s2238
        %v2240 = vmul.f32 %v2239, %v2196
        %v2241 = vmul.f32 %v2239, %v2197
        %2244 = vrot.lane.b32.xlu0 %v2240, 126
        %v2245 = vpop.permute.xlu0 %2244
        %2246 = vrot.lane.b32.xlu0 %v2241, 126
        %v2247 = vpop.permute.xlu0 %2246
        %v2250 = vadd.f32 %v2222, %v2245
        %v2251 = vadd.f32 %v2223, %v2247
        %s2252 = sld [smem:[#allocation8 + $0x5c]]
        %v2253 = vstv %s2252
        %v2254 = vmul.f32 %v2253, %v2196
        %v2255 = vmul.f32 %v2253, %v2197
        %2258 = vrot.lane.b32.xlu0 %v2254, 126
        %v2259 = vpop.permute.xlu0 %2258
        %2260 = vrot.lane.b32.xlu0 %v2255, 126
        %v2261 = vpop.permute.xlu0 %2260
        %v2264 = vadd.f32 %v2236, %v2259
        %v2265 = vadd.f32 %v2237, %v2261
        %v2266 = vld [vmem:[%s1337 + $0x1] sm:$0xff]
        %v2267 = vld [vmem:[%s1337 + $0x9] sm:$0xff]
        %s2268 = sld [smem:[#allocation8 + $0x27]]
        %v2269 = vstv %s2268
        %v2270 = vmul.f32 %v2269, %v2266
        %v2271 = vmul.f32 %v2269, %v2267
        %v2272 = vadd.f32 %v2250, %v2270
        %v2273 = vadd.f32 %v2251, %v2271
        %s2274 = sld [smem:[#allocation8 + $0x5d]]
        %v2275 = vstv %s2274
        %v2276 = vmul.f32 %v2275, %v2266
        %v2277 = vmul.f32 %v2275, %v2267
        %v2278 = vadd.f32 %v2264, %v2276
        %v2279 = vadd.f32 %v2265, %v2277
        %s2280 = sld [smem:[#allocation8 + $0x28]]
        %v2281 = vstv %s2280
        %v2282 = vmul.f32 %v2281, %v2266
        %v2283 = vmul.f32 %v2281, %v2267
        %2286 = vrot.lane.b32.xlu0 %v2282, 127
        %v2287 = vpop.permute.xlu0 %2286
        %2288 = vrot.lane.b32.xlu0 %v2283, 127
        %v2289 = vpop.permute.xlu0 %2288
        %v2292 = vadd.f32 %v2272, %v2287
        %v2293 = vadd.f32 %v2273, %v2289
        %s2294 = sld [smem:[#allocation8 + $0x5e]]
        %v2295 = vstv %s2294
        %v2296 = vmul.f32 %v2295, %v2266
        %v2297 = vmul.f32 %v2295, %v2267
        %2300 = vrot.lane.b32.xlu0 %v2296, 127
        %v2301 = vpop.permute.xlu0 %2300
        %2302 = vrot.lane.b32.xlu0 %v2297, 127
        %v2303 = vpop.permute.xlu0 %2302
        %v2306 = vadd.f32 %v2278, %v2301
        %v2307 = vadd.f32 %v2279, %v2303
        %s2308 = sld [smem:[#allocation8 + $0x29]]
        %v2309 = vstv %s2308
        %v2310 = vmul.f32 %v2309, %v2266
        %v2311 = vmul.f32 %v2309, %v2267
        %2314 = vrot.lane.b32.xlu0 %v2310, 126
        %v2315 = vpop.permute.xlu0 %2314
        %2316 = vrot.lane.b32.xlu0 %v2311, 126
        %v2317 = vpop.permute.xlu0 %2316
        %v2320 = vadd.f32 %v2292, %v2315
        %v2321 = vadd.f32 %v2293, %v2317
        %s2322 = sld [smem:[#allocation8 + $0x5f]]
        %v2323 = vstv %s2322
        %v2324 = vmul.f32 %v2323, %v2266
        %v2325 = vmul.f32 %v2323, %v2267
        %2328 = vrot.lane.b32.xlu0 %v2324, 126
        %v2329 = vpop.permute.xlu0 %2328
        %2330 = vrot.lane.b32.xlu0 %v2325, 126
        %v2331 = vpop.permute.xlu0 %2330
        %v2334 = vadd.f32 %v2306, %v2329
        %v2335 = vadd.f32 %v2307, %v2331
        %v2336 = vld [vmem:[%s1337 + $0x2] sm:$0xff]
        %v2337 = vld [vmem:[%s1337 + $0xa] sm:$0xff]
        %s2338 = sld [smem:[#allocation8 + $0x2a]]
        %v2339 = vstv %s2338
        %v2340 = vmul.f32 %v2339, %v2336
        %v2341 = vmul.f32 %v2339, %v2337
        %v2342 = vadd.f32 %v2320, %v2340
        %v2343 = vadd.f32 %v2321, %v2341
        %s2344 = sld [smem:[#allocation8 + $0x60]]
        %v2345 = vstv %s2344
        %v2346 = vmul.f32 %v2345, %v2336
        %v2347 = vmul.f32 %v2345, %v2337
        %v2348 = vadd.f32 %v2334, %v2346
        %v2349 = vadd.f32 %v2335, %v2347
        %s2350 = sld [smem:[#allocation8 + $0x2b]]
        %v2351 = vstv %s2350
        %v2352 = vmul.f32 %v2351, %v2336
        %v2353 = vmul.f32 %v2351, %v2337
        %2356 = vrot.lane.b32.xlu0 %v2352, 127
        %v2357 = vpop.permute.xlu0 %2356
        %2358 = vrot.lane.b32.xlu0 %v2353, 127
        %v2359 = vpop.permute.xlu0 %2358
        %v2362 = vadd.f32 %v2342, %v2357
        %v2363 = vadd.f32 %v2343, %v2359
        %s2364 = sld [smem:[#allocation8 + $0x61]]
        %v2365 = vstv %s2364
        %v2366 = vmul.f32 %v2365, %v2336
        %v2367 = vmul.f32 %v2365, %v2337
        %2370 = vrot.lane.b32.xlu0 %v2366, 127
        %v2371 = vpop.permute.xlu0 %2370
        %2372 = vrot.lane.b32.xlu0 %v2367, 127
        %v2373 = vpop.permute.xlu0 %2372
        %v2376 = vadd.f32 %v2348, %v2371
        %v2377 = vadd.f32 %v2349, %v2373
        %s2378 = sld [smem:[#allocation8 + $0x2c]]
        %v2379 = vstv %s2378
        %v2380 = vmul.f32 %v2379, %v2336
        %v2381 = vmul.f32 %v2379, %v2337
        %2384 = vrot.lane.b32.xlu0 %v2380, 126
        %v2385 = vpop.permute.xlu0 %2384
        %2386 = vrot.lane.b32.xlu0 %v2381, 126
        %v2387 = vpop.permute.xlu0 %2386
        %v2390 = vadd.f32 %v2362, %v2385
        %v2391 = vadd.f32 %v2363, %v2387
        %s2392 = sld [smem:[#allocation8 + $0x62]]
        %v2393 = vstv %s2392
        %v2394 = vmul.f32 %v2393, %v2336
        %v2395 = vmul.f32 %v2393, %v2337
        %2398 = vrot.lane.b32.xlu0 %v2394, 126
        %v2399 = vpop.permute.xlu0 %2398
        %2400 = vrot.lane.b32.xlu0 %v2395, 126
        %v2401 = vpop.permute.xlu0 %2400
        %v2404 = vadd.f32 %v2376, %v2399
        %v2405 = vadd.f32 %v2377, %v2401
        %v2406 = vld [vmem:[%s1348] sm:$0xff]
        %v2407 = vld [vmem:[%s1348 + $0x8] sm:$0xff]
        %s2408 = sld [smem:[#allocation8 + $0x2d]]
        %v2409 = vstv %s2408
        %v2410 = vmul.f32 %v2409, %v2406
        %v2411 = vmul.f32 %v2409, %v2407
        %v2412 = vadd.f32 %v2390, %v2410
        %v2413 = vadd.f32 %v2391, %v2411
        %s2414 = sld [smem:[#allocation8 + $0x63]]
        %v2415 = vstv %s2414
        %v2416 = vmul.f32 %v2415, %v2406
        %v2417 = vmul.f32 %v2415, %v2407
        %v2418 = vadd.f32 %v2404, %v2416
        %v2419 = vadd.f32 %v2405, %v2417
        %s2420 = sld [smem:[#allocation8 + $0x2e]]
        %v2421 = vstv %s2420
        %v2422 = vmul.f32 %v2421, %v2406
        %v2423 = vmul.f32 %v2421, %v2407
        %2426 = vrot.lane.b32.xlu0 %v2422, 127
        %v2427 = vpop.permute.xlu0 %2426
        %2428 = vrot.lane.b32.xlu0 %v2423, 127
        %v2429 = vpop.permute.xlu0 %2428
        %v2432 = vadd.f32 %v2412, %v2427
        %v2433 = vadd.f32 %v2413, %v2429
        %s2434 = sld [smem:[#allocation8 + $0x64]]
        %v2435 = vstv %s2434
        %v2436 = vmul.f32 %v2435, %v2406
        %v2437 = vmul.f32 %v2435, %v2407
        %2440 = vrot.lane.b32.xlu0 %v2436, 127
        %v2441 = vpop.permute.xlu0 %2440
        %2442 = vrot.lane.b32.xlu0 %v2437, 127
        %v2443 = vpop.permute.xlu0 %2442
        %v2446 = vadd.f32 %v2418, %v2441
        %v2447 = vadd.f32 %v2419, %v2443
        %s2448 = sld [smem:[#allocation8 + $0x2f]]
        %v2449 = vstv %s2448
        %v2450 = vmul.f32 %v2449, %v2406
        %v2451 = vmul.f32 %v2449, %v2407
        %2454 = vrot.lane.b32.xlu0 %v2450, 126
        %v2455 = vpop.permute.xlu0 %2454
        %2456 = vrot.lane.b32.xlu0 %v2451, 126
        %v2457 = vpop.permute.xlu0 %2456
        %v2460 = vadd.f32 %v2432, %v2455
        %v2461 = vadd.f32 %v2433, %v2457
        %s2462 = sld [smem:[#allocation8 + $0x65]]
        %v2463 = vstv %s2462
        %v2464 = vmul.f32 %v2463, %v2406
        %v2465 = vmul.f32 %v2463, %v2407
        %2468 = vrot.lane.b32.xlu0 %v2464, 126
        %v2469 = vpop.permute.xlu0 %2468
        %2470 = vrot.lane.b32.xlu0 %v2465, 126
        %v2471 = vpop.permute.xlu0 %2470
        %v2474 = vadd.f32 %v2446, %v2469
        %v2475 = vadd.f32 %v2447, %v2471
        %v2476 = vld [vmem:[%s1348 + $0x1] sm:$0xff]
        %v2477 = vld [vmem:[%s1348 + $0x9] sm:$0xff]
        %s2478 = sld [smem:[#allocation8 + $0x30]]
        %v2479 = vstv %s2478
        %v2480 = vmul.f32 %v2479, %v2476
        %v2481 = vmul.f32 %v2479, %v2477
        %v2482 = vadd.f32 %v2460, %v2480
        %v2483 = vadd.f32 %v2461, %v2481
        %s2484 = sld [smem:[#allocation8 + $0x66]]
        %v2485 = vstv %s2484
        %v2486 = vmul.f32 %v2485, %v2476
        %v2487 = vmul.f32 %v2485, %v2477
        %v2488 = vadd.f32 %v2474, %v2486
        %v2489 = vadd.f32 %v2475, %v2487
        %s2490 = sld [smem:[#allocation8 + $0x31]]
        %v2491 = vstv %s2490
        %v2492 = vmul.f32 %v2491, %v2476
        %v2493 = vmul.f32 %v2491, %v2477
        %2496 = vrot.lane.b32.xlu0 %v2492, 127
        %v2497 = vpop.permute.xlu0 %2496
        %2498 = vrot.lane.b32.xlu0 %v2493, 127
        %v2499 = vpop.permute.xlu0 %2498
        %v2502 = vadd.f32 %v2482, %v2497
        %v2503 = vadd.f32 %v2483, %v2499
        %s2504 = sld [smem:[#allocation8 + $0x67]]
        %v2505 = vstv %s2504
        %v2506 = vmul.f32 %v2505, %v2476
        %v2507 = vmul.f32 %v2505, %v2477
        %2510 = vrot.lane.b32.xlu0 %v2506, 127
        %v2511 = vpop.permute.xlu0 %2510
        %2512 = vrot.lane.b32.xlu0 %v2507, 127
        %v2513 = vpop.permute.xlu0 %2512
        %v2516 = vadd.f32 %v2488, %v2511
        %v2517 = vadd.f32 %v2489, %v2513
        %s2518 = sld [smem:[#allocation8 + $0x32]]
        %v2519 = vstv %s2518
        %v2520 = vmul.f32 %v2519, %v2476
        %v2521 = vmul.f32 %v2519, %v2477
        %2524 = vrot.lane.b32.xlu0 %v2520, 126
        %v2525 = vpop.permute.xlu0 %2524
        %2526 = vrot.lane.b32.xlu0 %v2521, 126
        %v2527 = vpop.permute.xlu0 %2526
        %v2530 = vadd.f32 %v2502, %v2525
        %v2531 = vadd.f32 %v2503, %v2527
        %s2532 = sld [smem:[#allocation8 + $0x68]]
        %v2533 = vstv %s2532
        %v2534 = vmul.f32 %v2533, %v2476
        %v2535 = vmul.f32 %v2533, %v2477
        %2538 = vrot.lane.b32.xlu0 %v2534, 126
        %v2539 = vpop.permute.xlu0 %2538
        %2540 = vrot.lane.b32.xlu0 %v2535, 126
        %v2541 = vpop.permute.xlu0 %2540
        %v2544 = vadd.f32 %v2516, %v2539
        %v2545 = vadd.f32 %v2517, %v2541
        %v2546 = vld [vmem:[%s1348 + $0x2] sm:$0xff]
        %v2547 = vld [vmem:[%s1348 + $0xa] sm:$0xff]
        %s2548 = sld [smem:[#allocation8 + $0x33]]
        %v2549 = vstv %s2548
        %v2550 = vmul.f32 %v2549, %v2546
        %v2551 = vmul.f32 %v2549, %v2547
        %v2552 = vadd.f32 %v2530, %v2550
        %v2553 = vadd.f32 %v2531, %v2551
        %s2554 = sld [smem:[#allocation8 + $0x69]]
        %v2555 = vstv %s2554
        %v2556 = vmul.f32 %v2555, %v2546
        %v2557 = vmul.f32 %v2555, %v2547
        %v2558 = vadd.f32 %v2544, %v2556
        %v2559 = vadd.f32 %v2545, %v2557
        %s2560 = sld [smem:[#allocation8 + $0x34]]
        %v2561 = vstv %s2560
        %v2562 = vmul.f32 %v2561, %v2546
        %v2563 = vmul.f32 %v2561, %v2547
        %2566 = vrot.lane.b32.xlu0 %v2562, 127
        %v2567 = vpop.permute.xlu0 %2566
        %2568 = vrot.lane.b32.xlu0 %v2563, 127
        %v2569 = vpop.permute.xlu0 %2568
        %v2572 = vadd.f32 %v2552, %v2567
        %v2573 = vadd.f32 %v2553, %v2569
        %s2574 = sld [smem:[#allocation8 + $0x6a]]
        %v2575 = vstv %s2574
        %v2576 = vmul.f32 %v2575, %v2546
        %v2577 = vmul.f32 %v2575, %v2547
        %2580 = vrot.lane.b32.xlu0 %v2576, 127
        %v2581 = vpop.permute.xlu0 %2580
        %2582 = vrot.lane.b32.xlu0 %v2577, 127
        %v2583 = vpop.permute.xlu0 %2582
        %v2586 = vadd.f32 %v2558, %v2581
        %v2587 = vadd.f32 %v2559, %v2583
        %s2588 = sld [smem:[#allocation8 + $0x35]]
        %v2589 = vstv %s2588
        %v2590 = vmul.f32 %v2589, %v2546
        %v2591 = vmul.f32 %v2589, %v2547
        %2594 = vrot.lane.b32.xlu0 %v2590, 126
        %v2595 = vpop.permute.xlu0 %2594
        %2596 = vrot.lane.b32.xlu0 %v2591, 126
        %v2597 = vpop.permute.xlu0 %2596
        %v2600 = vadd.f32 %v2572, %v2595
        %v2601 = vadd.f32 %v2573, %v2597
        %s2602 = sld [smem:[#allocation8 + $0x6b]]
        %v2603 = vstv %s2602
        %v2604 = vmul.f32 %v2603, %v2546
        %v2605 = vmul.f32 %v2603, %v2547
        %2608 = vrot.lane.b32.xlu0 %v2604, 126
        %v2609 = vpop.permute.xlu0 %2608
        %2610 = vrot.lane.b32.xlu0 %v2605, 126
        %v2611 = vpop.permute.xlu0 %2610
        %v2614 = vadd.f32 %v2586, %v2609
        %v2615 = vadd.f32 %v2587, %v2611
        %vm2616 = vcmp.gt.f32.partialorder %v2600, 0.0
        %vm2617 = vcmp.gt.f32.partialorder %v2601, 0.0
        %v2618 = vstv %s1351
        %v2619 = vmul.f32 %v2618, %v2600
        %v2620 = vmul.f32 %v2618, %v2601
        %v2621 = vsel %vm2616, %v2600, %v2619
        %v2622 = vsel %vm2617, %v2601, %v2620
        %vm2623 = vcmp.gt.f32.partialorder %v2614, 0.0
        %vm2624 = vcmp.gt.f32.partialorder %v2615, 0.0
        %v2625 = vmul.f32 %v2618, %v2614
        %v2626 = vmul.f32 %v2618, %v2615
        %v2627 = vsel %vm2623, %v2614, %v2625
        %v2628 = vsel %vm2624, %v2615, %v2626
        %2631 = vrot.lane.b32.xlu0 %v2621, 1
        %v2632 = vpop.permute.xlu0 %2631
        %2633 = vrot.lane.b32.xlu0 %v2622, 1
        %v2634 = vpop.permute.xlu0 %2633
        %s2637 = scalar_lea.vmem [#allocation2], 144
        %2638 = vst.msk [vmem:[%s2637 + $0x1] sm:$0xff] %vm459, %v2632
        %2639 = vst.msk [vmem:[%s2637 + $0x9] sm:$0xff] %vm459, %v2634
        %2642 = vrot.lane.b32.xlu0 %v2627, 1
        %v2643 = vpop.permute.xlu0 %2642
        %2644 = vrot.lane.b32.xlu0 %v2628, 1
        %v2645 = vpop.permute.xlu0 %2644
        %s2648 = scalar_lea.vmem [#allocation2], 168
        %2649 = vst.msk [vmem:[%s2648 + $0x1] sm:$0xff] %vm459, %v2643
        %2650 = vst.msk [vmem:[%s2648 + $0x9] sm:$0xff] %vm459, %v2645
        %s2651 = sld [smem:[#allocation14 + $0x2]]
        %s2652 = sld [smem:[#allocation12]]
        %v2653 = vstv %s2652
        %s2654 = sld [smem:[#allocation12 + $0x1]]
        %v2655 = vstv %s2654
        %s2656 = sld [smem:[#allocation12 + $0x2]]
        %v2657 = vstv %s2656
        %s2658 = sld [smem:[#allocation12 + $0x3]]
        %v2659 = vstv %s2658
        %v2660 = vld [vmem:[#allocation2] sm:$0xff]
        %v2661 = vld [vmem:[#allocation2 + $0x8] sm:$0xff]
        %s2662 = sld [smem:[#allocation11]]
        %v2663 = vstv %s2662
        %v2664 = vmul.f32 %v2663, %v2660
        %v2665 = vmul.f32 %v2663, %v2661
        %v2666 = vadd.f32 %v2653, %v2664
        %v2667 = vadd.f32 %v2653, %v2665
        %s2668 = sld [smem:[#allocation11 + $0x48]]
        %v2669 = vstv %s2668
        %v2670 = vmul.f32 %v2669, %v2660
        %v2671 = vmul.f32 %v2669, %v2661
        %v2672 = vadd.f32 %v2655, %v2670
        %v2673 = vadd.f32 %v2655, %v2671
        %s2674 = sld [smem:[#allocation11 + $0x90]]
        %v2675 = vstv %s2674
        %v2676 = vmul.f32 %v2675, %v2660
        %v2677 = vmul.f32 %v2675, %v2661
        %v2678 = vadd.f32 %v2657, %v2676
        %v2679 = vadd.f32 %v2657, %v2677
        %s2680 = sld [smem:[#allocation11 + $0xd8]]
        %v2681 = vstv %s2680
        %v2682 = vmul.f32 %v2681, %v2660
        %v2683 = vmul.f32 %v2681, %v2661
        %v2684 = vadd.f32 %v2659, %v2682
        %v2685 = vadd.f32 %v2659, %v2683
        %s2686 = sld [smem:[#allocation11 + $0x1]]
        %v2687 = vstv %s2686
        %v2688 = vmul.f32 %v2687, %v2660
        %v2689 = vmul.f32 %v2687, %v2661
        %2692 = vrot.lane.b32.xlu0 %v2688, 127
        %v2693 = vpop.permute.xlu0 %2692
        %2694 = vrot.lane.b32.xlu0 %v2689, 127
        %v2695 = vpop.permute.xlu0 %2694
        %v2698 = vadd.f32 %v2666, %v2693
        %v2699 = vadd.f32 %v2667, %v2695
        %s2700 = sld [smem:[#allocation11 + $0x49]]
        %v2701 = vstv %s2700
        %v2702 = vmul.f32 %v2701, %v2660
        %v2703 = vmul.f32 %v2701, %v2661
        %2706 = vrot.lane.b32.xlu0 %v2702, 127
        %v2707 = vpop.permute.xlu0 %2706
        %2708 = vrot.lane.b32.xlu0 %v2703, 127
        %v2709 = vpop.permute.xlu0 %2708
        %v2712 = vadd.f32 %v2672, %v2707
        %v2713 = vadd.f32 %v2673, %v2709
        %s2714 = sld [smem:[#allocation11 + $0x91]]
        %v2715 = vstv %s2714
        %v2716 = vmul.f32 %v2715, %v2660
        %v2717 = vmul.f32 %v2715, %v2661
        %2720 = vrot.lane.b32.xlu0 %v2716, 127
        %v2721 = vpop.permute.xlu0 %2720
        %2722 = vrot.lane.b32.xlu0 %v2717, 127
        %v2723 = vpop.permute.xlu0 %2722
        %v2726 = vadd.f32 %v2678, %v2721
        %v2727 = vadd.f32 %v2679, %v2723
        %s2728 = sld [smem:[#allocation11 + $0xd9]]
        %v2729 = vstv %s2728
        %v2730 = vmul.f32 %v2729, %v2660
        %v2731 = vmul.f32 %v2729, %v2661
        %2734 = vrot.lane.b32.xlu0 %v2730, 127
        %v2735 = vpop.permute.xlu0 %2734
        %2736 = vrot.lane.b32.xlu0 %v2731, 127
        %v2737 = vpop.permute.xlu0 %2736
        %v2740 = vadd.f32 %v2684, %v2735
        %v2741 = vadd.f32 %v2685, %v2737
        %s2742 = sld [smem:[#allocation11 + $0x2]]
        %v2743 = vstv %s2742
        %v2744 = vmul.f32 %v2743, %v2660
        %v2745 = vmul.f32 %v2743, %v2661
        %2748 = vrot.lane.b32.xlu0 %v2744, 126
        %v2749 = vpop.permute.xlu0 %2748
        %2750 = vrot.lane.b32.xlu0 %v2745, 126
        %v2751 = vpop.permute.xlu0 %2750
        %v2754 = vadd.f32 %v2698, %v2749
        %v2755 = vadd.f32 %v2699, %v2751
        %s2756 = sld [smem:[#allocation11 + $0x4a]]
        %v2757 = vstv %s2756
        %v2758 = vmul.f32 %v2757, %v2660
        %v2759 = vmul.f32 %v2757, %v2661
        %2762 = vrot.lane.b32.xlu0 %v2758, 126
        %v2763 = vpop.permute.xlu0 %2762
        %2764 = vrot.lane.b32.xlu0 %v2759, 126
        %v2765 = vpop.permute.xlu0 %2764
        %v2768 = vadd.f32 %v2712, %v2763
        %v2769 = vadd.f32 %v2713, %v2765
        %s2770 = sld [smem:[#allocation11 + $0x92]]
        %v2771 = vstv %s2770
        %v2772 = vmul.f32 %v2771, %v2660
        %v2773 = vmul.f32 %v2771, %v2661
        %2776 = vrot.lane.b32.xlu0 %v2772, 126
        %v2777 = vpop.permute.xlu0 %2776
        %2778 = vrot.lane.b32.xlu0 %v2773, 126
        %v2779 = vpop.permute.xlu0 %2778
        %v2782 = vadd.f32 %v2726, %v2777
        %v2783 = vadd.f32 %v2727, %v2779
        %s2784 = sld [smem:[#allocation11 + $0xda]]
        %v2785 = vstv %s2784
        %v2786 = vmul.f32 %v2785, %v2660
        %v2787 = vmul.f32 %v2785, %v2661
        %2790 = vrot.lane.b32.xlu0 %v2786, 126
        %v2791 = vpop.permute.xlu0 %2790
        %2792 = vrot.lane.b32.xlu0 %v2787, 126
        %v2793 = vpop.permute.xlu0 %2792
        %v2796 = vadd.f32 %v2740, %v2791
        %v2797 = vadd.f32 %v2741, %v2793
        %v2798 = vld [vmem:[#allocation2 + $0x1] sm:$0xff]
        %v2799 = vld [vmem:[#allocation2 + $0x9] sm:$0xff]
        %s2800 = sld [smem:[#allocation11 + $0x3]]
        %v2801 = vstv %s2800
        %v2802 = vmul.f32 %v2801, %v2798
        %v2803 = vmul.f32 %v2801, %v2799
        %v2804 = vadd.f32 %v2754, %v2802
        %v2805 = vadd.f32 %v2755, %v2803
        %s2806 = sld [smem:[#allocation11 + $0x4b]]
        %v2807 = vstv %s2806
        %v2808 = vmul.f32 %v2807, %v2798
        %v2809 = vmul.f32 %v2807, %v2799
        %v2810 = vadd.f32 %v2768, %v2808
        %v2811 = vadd.f32 %v2769, %v2809
        %s2812 = sld [smem:[#allocation11 + $0x93]]
        %v2813 = vstv %s2812
        %v2814 = vmul.f32 %v2813, %v2798
        %v2815 = vmul.f32 %v2813, %v2799
        %v2816 = vadd.f32 %v2782, %v2814
        %v2817 = vadd.f32 %v2783, %v2815
        %s2818 = sld [smem:[#allocation11 + $0xdb]]
        %v2819 = vstv %s2818
        %v2820 = vmul.f32 %v2819, %v2798
        %v2821 = vmul.f32 %v2819, %v2799
        %v2822 = vadd.f32 %v2796, %v2820
        %v2823 = vadd.f32 %v2797, %v2821
        %s2824 = sld [smem:[#allocation11 + $0x4]]
        %v2825 = vstv %s2824
        %v2826 = vmul.f32 %v2825, %v2798
        %v2827 = vmul.f32 %v2825, %v2799
        %2830 = vrot.lane.b32.xlu0 %v2826, 127
        %v2831 = vpop.permute.xlu0 %2830
        %2832 = vrot.lane.b32.xlu0 %v2827, 127
        %v2833 = vpop.permute.xlu0 %2832
        %v2836 = vadd.f32 %v2804, %v2831
        %v2837 = vadd.f32 %v2805, %v2833
        %s2838 = sld [smem:[#allocation11 + $0x4c]]
        %v2839 = vstv %s2838
        %v2840 = vmul.f32 %v2839, %v2798
        %v2841 = vmul.f32 %v2839, %v2799
        %2844 = vrot.lane.b32.xlu0 %v2840, 127
        %v2845 = vpop.permute.xlu0 %2844
        %2846 = vrot.lane.b32.xlu0 %v2841, 127
        %v2847 = vpop.permute.xlu0 %2846
        %v2850 = vadd.f32 %v2810, %v2845
        %v2851 = vadd.f32 %v2811, %v2847
        %s2852 = sld [smem:[#allocation11 + $0x94]]
        %v2853 = vstv %s2852
        %v2854 = vmul.f32 %v2853, %v2798
        %v2855 = vmul.f32 %v2853, %v2799
        %2858 = vrot.lane.b32.xlu0 %v2854, 127
        %v2859 = vpop.permute.xlu0 %2858
        %2860 = vrot.lane.b32.xlu0 %v2855, 127
        %v2861 = vpop.permute.xlu0 %2860
        %v2864 = vadd.f32 %v2816, %v2859
        %v2865 = vadd.f32 %v2817, %v2861
        %s2866 = sld [smem:[#allocation11 + $0xdc]]
        %v2867 = vstv %s2866
        %v2868 = vmul.f32 %v2867, %v2798
        %v2869 = vmul.f32 %v2867, %v2799
        %2872 = vrot.lane.b32.xlu0 %v2868, 127
        %v2873 = vpop.permute.xlu0 %2872
        %2874 = vrot.lane.b32.xlu0 %v2869, 127
        %v2875 = vpop.permute.xlu0 %2874
        %v2878 = vadd.f32 %v2822, %v2873
        %v2879 = vadd.f32 %v2823, %v2875
        %s2880 = sld [smem:[#allocation11 + $0x5]]
        %v2881 = vstv %s2880
        %v2882 = vmul.f32 %v2881, %v2798
        %v2883 = vmul.f32 %v2881, %v2799
        %2886 = vrot.lane.b32.xlu0 %v2882, 126
        %v2887 = vpop.permute.xlu0 %2886
        %2888 = vrot.lane.b32.xlu0 %v2883, 126
        %v2889 = vpop.permute.xlu0 %2888
        %v2892 = vadd.f32 %v2836, %v2887
        %v2893 = vadd.f32 %v2837, %v2889
        %s2894 = sld [smem:[#allocation11 + $0x4d]]
        %v2895 = vstv %s2894
        %v2896 = vmul.f32 %v2895, %v2798
        %v2897 = vmul.f32 %v2895, %v2799
        %2900 = vrot.lane.b32.xlu0 %v2896, 126
        %v2901 = vpop.permute.xlu0 %2900
        %2902 = vrot.lane.b32.xlu0 %v2897, 126
        %v2903 = vpop.permute.xlu0 %2902
        %v2906 = vadd.f32 %v2850, %v2901
        %v2907 = vadd.f32 %v2851, %v2903
        %s2908 = sld [smem:[#allocation11 + $0x95]]
        %v2909 = vstv %s2908
        %v2910 = vmul.f32 %v2909, %v2798
        %v2911 = vmul.f32 %v2909, %v2799
        %2914 = vrot.lane.b32.xlu0 %v2910, 126
        %v2915 = vpop.permute.xlu0 %2914
        %2916 = vrot.lane.b32.xlu0 %v2911, 126
        %v2917 = vpop.permute.xlu0 %2916
        %v2920 = vadd.f32 %v2864, %v2915
        %v2921 = vadd.f32 %v2865, %v2917
        %s2922 = sld [smem:[#allocation11 + $0xdd]]
        %v2923 = vstv %s2922
        %v2924 = vmul.f32 %v2923, %v2798
        %v2925 = vmul.f32 %v2923, %v2799
        %2928 = vrot.lane.b32.xlu0 %v2924, 126
        %v2929 = vpop.permute.xlu0 %2928
        %2930 = vrot.lane.b32.xlu0 %v2925, 126
        %v2931 = vpop.permute.xlu0 %2930
        %v2934 = vadd.f32 %v2878, %v2929
        %v2935 = vadd.f32 %v2879, %v2931
        %v2936 = vld [vmem:[#allocation2 + $0x2] sm:$0xff]
        %v2937 = vld [vmem:[#allocation2 + $0xa] sm:$0xff]
        %s2938 = sld [smem:[#allocation11 + $0x6]]
        %v2939 = vstv %s2938
        %v2940 = vmul.f32 %v2939, %v2936
        %v2941 = vmul.f32 %v2939, %v2937
        %v2942 = vadd.f32 %v2892, %v2940
        %v2943 = vadd.f32 %v2893, %v2941
        %s2944 = sld [smem:[#allocation11 + $0x4e]]
        %v2945 = vstv %s2944
        %v2946 = vmul.f32 %v2945, %v2936
        %v2947 = vmul.f32 %v2945, %v2937
        %v2948 = vadd.f32 %v2906, %v2946
        %v2949 = vadd.f32 %v2907, %v2947
        %s2950 = sld [smem:[#allocation11 + $0x96]]
        %v2951 = vstv %s2950
        %v2952 = vmul.f32 %v2951, %v2936
        %v2953 = vmul.f32 %v2951, %v2937
        %v2954 = vadd.f32 %v2920, %v2952
        %v2955 = vadd.f32 %v2921, %v2953
        %s2956 = sld [smem:[#allocation11 + $0xde]]
        %v2957 = vstv %s2956
        %v2958 = vmul.f32 %v2957, %v2936
        %v2959 = vmul.f32 %v2957, %v2937
        %v2960 = vadd.f32 %v2934, %v2958
        %v2961 = vadd.f32 %v2935, %v2959
        %s2962 = sld [smem:[#allocation11 + $0x7]]
        %v2963 = vstv %s2962
        %v2964 = vmul.f32 %v2963, %v2936
        %v2965 = vmul.f32 %v2963, %v2937
        %2968 = vrot.lane.b32.xlu0 %v2964, 127
        %v2969 = vpop.permute.xlu0 %2968
        %2970 = vrot.lane.b32.xlu0 %v2965, 127
        %v2971 = vpop.permute.xlu0 %2970
        %v2974 = vadd.f32 %v2942, %v2969
        %v2975 = vadd.f32 %v2943, %v2971
        %s2976 = sld [smem:[#allocation11 + $0x4f]]
        %v2977 = vstv %s2976
        %v2978 = vmul.f32 %v2977, %v2936
        %v2979 = vmul.f32 %v2977, %v2937
        %2982 = vrot.lane.b32.xlu0 %v2978, 127
        %v2983 = vpop.permute.xlu0 %2982
        %2984 = vrot.lane.b32.xlu0 %v2979, 127
        %v2985 = vpop.permute.xlu0 %2984
        %v2988 = vadd.f32 %v2948, %v2983
        %v2989 = vadd.f32 %v2949, %v2985
        %s2990 = sld [smem:[#allocation11 + $0x97]]
        %v2991 = vstv %s2990
        %v2992 = vmul.f32 %v2991, %v2936
        %v2993 = vmul.f32 %v2991, %v2937
        %2996 = vrot.lane.b32.xlu0 %v2992, 127
        %v2997 = vpop.permute.xlu0 %2996
        %2998 = vrot.lane.b32.xlu0 %v2993, 127
        %v2999 = vpop.permute.xlu0 %2998
        %v3002 = vadd.f32 %v2954, %v2997
        %v3003 = vadd.f32 %v2955, %v2999
        %s3004 = sld [smem:[#allocation11 + $0xdf]]
        %v3005 = vstv %s3004
        %v3006 = vmul.f32 %v3005, %v2936
        %v3007 = vmul.f32 %v3005, %v2937
        %3010 = vrot.lane.b32.xlu0 %v3006, 127
        %v3011 = vpop.permute.xlu0 %3010
        %3012 = vrot.lane.b32.xlu0 %v3007, 127
        %v3013 = vpop.permute.xlu0 %3012
        %v3016 = vadd.f32 %v2960, %v3011
        %v3017 = vadd.f32 %v2961, %v3013
        %s3018 = sld [smem:[#allocation11 + $0x8]]
        %v3019 = vstv %s3018
        %v3020 = vmul.f32 %v3019, %v2936
        %v3021 = vmul.f32 %v3019, %v2937
        %3024 = vrot.lane.b32.xlu0 %v3020, 126
        %v3025 = vpop.permute.xlu0 %3024
        %3026 = vrot.lane.b32.xlu0 %v3021, 126
        %v3027 = vpop.permute.xlu0 %3026
        %v3030 = vadd.f32 %v2974, %v3025
        %v3031 = vadd.f32 %v2975, %v3027
        %s3032 = sld [smem:[#allocation11 + $0x50]]
        %v3033 = vstv %s3032
        %v3034 = vmul.f32 %v3033, %v2936
        %v3035 = vmul.f32 %v3033, %v2937
        %3038 = vrot.lane.b32.xlu0 %v3034, 126
        %v3039 = vpop.permute.xlu0 %3038
        %3040 = vrot.lane.b32.xlu0 %v3035, 126
        %v3041 = vpop.permute.xlu0 %3040
        %v3044 = vadd.f32 %v2988, %v3039
        %v3045 = vadd.f32 %v2989, %v3041
        %s3046 = sld [smem:[#allocation11 + $0x98]]
        %v3047 = vstv %s3046
        %v3048 = vmul.f32 %v3047, %v2936
        %v3049 = vmul.f32 %v3047, %v2937
        %3052 = vrot.lane.b32.xlu0 %v3048, 126
        %v3053 = vpop.permute.xlu0 %3052
        %3054 = vrot.lane.b32.xlu0 %v3049, 126
        %v3055 = vpop.permute.xlu0 %3054
        %v3058 = vadd.f32 %v3002, %v3053
        %v3059 = vadd.f32 %v3003, %v3055
        %s3060 = sld [smem:[#allocation11 + $0xe0]]
        %v3061 = vstv %s3060
        %v3062 = vmul.f32 %v3061, %v2936
        %v3063 = vmul.f32 %v3061, %v2937
        %3066 = vrot.lane.b32.xlu0 %v3062, 126
        %v3067 = vpop.permute.xlu0 %3066
        %3068 = vrot.lane.b32.xlu0 %v3063, 126
        %v3069 = vpop.permute.xlu0 %3068
        %v3072 = vadd.f32 %v3016, %v3067
        %v3073 = vadd.f32 %v3017, %v3069
        %v3074 = vld [vmem:[%s683] sm:$0xff]
        %v3075 = vld [vmem:[%s683 + $0x8] sm:$0xff]
        %s3076 = sld [smem:[#allocation11 + $0x9]]
        %v3077 = vstv %s3076
        %v3078 = vmul.f32 %v3077, %v3074
        %v3079 = vmul.f32 %v3077, %v3075
        %v3080 = vadd.f32 %v3030, %v3078
        %v3081 = vadd.f32 %v3031, %v3079
        %s3082 = sld [smem:[#allocation11 + $0x51]]
        %v3083 = vstv %s3082
        %v3084 = vmul.f32 %v3083, %v3074
        %v3085 = vmul.f32 %v3083, %v3075
        %v3086 = vadd.f32 %v3044, %v3084
        %v3087 = vadd.f32 %v3045, %v3085
        %s3088 = sld [smem:[#allocation11 + $0x99]]
        %v3089 = vstv %s3088
        %v3090 = vmul.f32 %v3089, %v3074
        %v3091 = vmul.f32 %v3089, %v3075
        %v3092 = vadd.f32 %v3058, %v3090
        %v3093 = vadd.f32 %v3059, %v3091
        %s3094 = sld [smem:[#allocation11 + $0xe1]]
        %v3095 = vstv %s3094
        %v3096 = vmul.f32 %v3095, %v3074
        %v3097 = vmul.f32 %v3095, %v3075
        %v3098 = vadd.f32 %v3072, %v3096
        %v3099 = vadd.f32 %v3073, %v3097
        %s3100 = sld [smem:[#allocation11 + $0xa]]
        %v3101 = vstv %s3100
        %v3102 = vmul.f32 %v3101, %v3074
        %v3103 = vmul.f32 %v3101, %v3075
        %3106 = vrot.lane.b32.xlu0 %v3102, 127
        %v3107 = vpop.permute.xlu0 %3106
        %3108 = vrot.lane.b32.xlu0 %v3103, 127
        %v3109 = vpop.permute.xlu0 %3108
        %v3112 = vadd.f32 %v3080, %v3107
        %v3113 = vadd.f32 %v3081, %v3109
        %s3114 = sld [smem:[#allocation11 + $0x52]]
        %v3115 = vstv %s3114
        %v3116 = vmul.f32 %v3115, %v3074
        %v3117 = vmul.f32 %v3115, %v3075
        %3120 = vrot.lane.b32.xlu0 %v3116, 127
        %v3121 = vpop.permute.xlu0 %3120
        %3122 = vrot.lane.b32.xlu0 %v3117, 127
        %v3123 = vpop.permute.xlu0 %3122
        %v3126 = vadd.f32 %v3086, %v3121
        %v3127 = vadd.f32 %v3087, %v3123
        %s3128 = sld [smem:[#allocation11 + $0x9a]]
        %v3129 = vstv %s3128
        %v3130 = vmul.f32 %v3129, %v3074
        %v3131 = vmul.f32 %v3129, %v3075
        %3134 = vrot.lane.b32.xlu0 %v3130, 127
        %v3135 = vpop.permute.xlu0 %3134
        %3136 = vrot.lane.b32.xlu0 %v3131, 127
        %v3137 = vpop.permute.xlu0 %3136
        %v3140 = vadd.f32 %v3092, %v3135
        %v3141 = vadd.f32 %v3093, %v3137
        %s3142 = sld [smem:[#allocation11 + $0xe2]]
        %v3143 = vstv %s3142
        %v3144 = vmul.f32 %v3143, %v3074
        %v3145 = vmul.f32 %v3143, %v3075
        %3148 = vrot.lane.b32.xlu0 %v3144, 127
        %v3149 = vpop.permute.xlu0 %3148
        %3150 = vrot.lane.b32.xlu0 %v3145, 127
        %v3151 = vpop.permute.xlu0 %3150
        %v3154 = vadd.f32 %v3098, %v3149
        %v3155 = vadd.f32 %v3099, %v3151
        %s3156 = sld [smem:[#allocation11 + $0xb]]
        %v3157 = vstv %s3156
        %v3158 = vmul.f32 %v3157, %v3074
        %v3159 = vmul.f32 %v3157, %v3075
        %3162 = vrot.lane.b32.xlu0 %v3158, 126
        %v3163 = vpop.permute.xlu0 %3162
        %3164 = vrot.lane.b32.xlu0 %v3159, 126
        %v3165 = vpop.permute.xlu0 %3164
        %v3168 = vadd.f32 %v3112, %v3163
        %v3169 = vadd.f32 %v3113, %v3165
        %s3170 = sld [smem:[#allocation11 + $0x53]]
        %v3171 = vstv %s3170
        %v3172 = vmul.f32 %v3171, %v3074
        %v3173 = vmul.f32 %v3171, %v3075
        %3176 = vrot.lane.b32.xlu0 %v3172, 126
        %v3177 = vpop.permute.xlu0 %3176
        %3178 = vrot.lane.b32.xlu0 %v3173, 126
        %v3179 = vpop.permute.xlu0 %3178
        %v3182 = vadd.f32 %v3126, %v3177
        %v3183 = vadd.f32 %v3127, %v3179
        %s3184 = sld [smem:[#allocation11 + $0x9b]]
        %v3185 = vstv %s3184
        %v3186 = vmul.f32 %v3185, %v3074
        %v3187 = vmul.f32 %v3185, %v3075
        %3190 = vrot.lane.b32.xlu0 %v3186, 126
        %v3191 = vpop.permute.xlu0 %3190
        %3192 = vrot.lane.b32.xlu0 %v3187, 126
        %v3193 = vpop.permute.xlu0 %3192
        %v3196 = vadd.f32 %v3140, %v3191
        %v3197 = vadd.f32 %v3141, %v3193
        %s3198 = sld [smem:[#allocation11 + $0xe3]]
        %v3199 = vstv %s3198
        %v3200 = vmul.f32 %v3199, %v3074
        %v3201 = vmul.f32 %v3199, %v3075
        %3204 = vrot.lane.b32.xlu0 %v3200, 126
        %v3205 = vpop.permute.xlu0 %3204
        %3206 = vrot.lane.b32.xlu0 %v3201, 126
        %v3207 = vpop.permute.xlu0 %3206
        %v3210 = vadd.f32 %v3154, %v3205
        %v3211 = vadd.f32 %v3155, %v3207
        %v3212 = vld [vmem:[%s683 + $0x1] sm:$0xff]
        %v3213 = vld [vmem:[%s683 + $0x9] sm:$0xff]
        %s3214 = sld [smem:[#allocation11 + $0xc]]
        %v3215 = vstv %s3214
        %v3216 = vmul.f32 %v3215, %v3212
        %v3217 = vmul.f32 %v3215, %v3213
        %v3218 = vadd.f32 %v3168, %v3216
        %v3219 = vadd.f32 %v3169, %v3217
        %s3220 = sld [smem:[#allocation11 + $0x54]]
        %v3221 = vstv %s3220
        %v3222 = vmul.f32 %v3221, %v3212
        %v3223 = vmul.f32 %v3221, %v3213
        %v3224 = vadd.f32 %v3182, %v3222
        %v3225 = vadd.f32 %v3183, %v3223
        %s3226 = sld [smem:[#allocation11 + $0x9c]]
        %v3227 = vstv %s3226
        %v3228 = vmul.f32 %v3227, %v3212
        %v3229 = vmul.f32 %v3227, %v3213
        %v3230 = vadd.f32 %v3196, %v3228
        %v3231 = vadd.f32 %v3197, %v3229
        %s3232 = sld [smem:[#allocation11 + $0xe4]]
        %v3233 = vstv %s3232
        %v3234 = vmul.f32 %v3233, %v3212
        %v3235 = vmul.f32 %v3233, %v3213
        %v3236 = vadd.f32 %v3210, %v3234
        %v3237 = vadd.f32 %v3211, %v3235
        %s3238 = sld [smem:[#allocation11 + $0xd]]
        %v3239 = vstv %s3238
        %v3240 = vmul.f32 %v3239, %v3212
        %v3241 = vmul.f32 %v3239, %v3213
        %3244 = vrot.lane.b32.xlu0 %v3240, 127
        %v3245 = vpop.permute.xlu0 %3244
        %3246 = vrot.lane.b32.xlu0 %v3241, 127
        %v3247 = vpop.permute.xlu0 %3246
        %v3250 = vadd.f32 %v3218, %v3245
        %v3251 = vadd.f32 %v3219, %v3247
        %s3252 = sld [smem:[#allocation11 + $0x55]]
        %v3253 = vstv %s3252
        %v3254 = vmul.f32 %v3253, %v3212
        %v3255 = vmul.f32 %v3253, %v3213
        %3258 = vrot.lane.b32.xlu0 %v3254, 127
        %v3259 = vpop.permute.xlu0 %3258
        %3260 = vrot.lane.b32.xlu0 %v3255, 127
        %v3261 = vpop.permute.xlu0 %3260
        %v3264 = vadd.f32 %v3224, %v3259
        %v3265 = vadd.f32 %v3225, %v3261
        %s3266 = sld [smem:[#allocation11 + $0x9d]]
        %v3267 = vstv %s3266
        %v3268 = vmul.f32 %v3267, %v3212
        %v3269 = vmul.f32 %v3267, %v3213
        %3272 = vrot.lane.b32.xlu0 %v3268, 127
        %v3273 = vpop.permute.xlu0 %3272
        %3274 = vrot.lane.b32.xlu0 %v3269, 127
        %v3275 = vpop.permute.xlu0 %3274
        %v3278 = vadd.f32 %v3230, %v3273
        %v3279 = vadd.f32 %v3231, %v3275
        %s3280 = sld [smem:[#allocation11 + $0xe5]]
        %v3281 = vstv %s3280
        %v3282 = vmul.f32 %v3281, %v3212
        %v3283 = vmul.f32 %v3281, %v3213
        %3286 = vrot.lane.b32.xlu0 %v3282, 127
        %v3287 = vpop.permute.xlu0 %3286
        %3288 = vrot.lane.b32.xlu0 %v3283, 127
        %v3289 = vpop.permute.xlu0 %3288
        %v3292 = vadd.f32 %v3236, %v3287
        %v3293 = vadd.f32 %v3237, %v3289
        %s3294 = sld [smem:[#allocation11 + $0xe]]
        %v3295 = vstv %s3294
        %v3296 = vmul.f32 %v3295, %v3212
        %v3297 = vmul.f32 %v3295, %v3213
        %3300 = vrot.lane.b32.xlu0 %v3296, 126
        %v3301 = vpop.permute.xlu0 %3300
        %3302 = vrot.lane.b32.xlu0 %v3297, 126
        %v3303 = vpop.permute.xlu0 %3302
        %v3306 = vadd.f32 %v3250, %v3301
        %v3307 = vadd.f32 %v3251, %v3303
        %s3308 = sld [smem:[#allocation11 + $0x56]]
        %v3309 = vstv %s3308
        %v3310 = vmul.f32 %v3309, %v3212
        %v3311 = vmul.f32 %v3309, %v3213
        %3314 = vrot.lane.b32.xlu0 %v3310, 126
        %v3315 = vpop.permute.xlu0 %3314
        %3316 = vrot.lane.b32.xlu0 %v3311, 126
        %v3317 = vpop.permute.xlu0 %3316
        %v3320 = vadd.f32 %v3264, %v3315
        %v3321 = vadd.f32 %v3265, %v3317
        %s3322 = sld [smem:[#allocation11 + $0x9e]]
        %v3323 = vstv %s3322
        %v3324 = vmul.f32 %v3323, %v3212
        %v3325 = vmul.f32 %v3323, %v3213
        %3328 = vrot.lane.b32.xlu0 %v3324, 126
        %v3329 = vpop.permute.xlu0 %3328
        %3330 = vrot.lane.b32.xlu0 %v3325, 126
        %v3331 = vpop.permute.xlu0 %3330
        %v3334 = vadd.f32 %v3278, %v3329
        %v3335 = vadd.f32 %v3279, %v3331
        %s3336 = sld [smem:[#allocation11 + $0xe6]]
        %v3337 = vstv %s3336
        %v3338 = vmul.f32 %v3337, %v3212
        %v3339 = vmul.f32 %v3337, %v3213
        %3342 = vrot.lane.b32.xlu0 %v3338, 126
        %v3343 = vpop.permute.xlu0 %3342
        %3344 = vrot.lane.b32.xlu0 %v3339, 126
        %v3345 = vpop.permute.xlu0 %3344
        %v3348 = vadd.f32 %v3292, %v3343
        %v3349 = vadd.f32 %v3293, %v3345
        %v3350 = vld [vmem:[%s683 + $0x2] sm:$0xff]
        %v3351 = vld [vmem:[%s683 + $0xa] sm:$0xff]
        %s3352 = sld [smem:[#allocation11 + $0xf]]
        %v3353 = vstv %s3352
        %v3354 = vmul.f32 %v3353, %v3350
        %v3355 = vmul.f32 %v3353, %v3351
        %v3356 = vadd.f32 %v3306, %v3354
        %v3357 = vadd.f32 %v3307, %v3355
        %s3358 = sld [smem:[#allocation11 + $0x57]]
        %v3359 = vstv %s3358
        %v3360 = vmul.f32 %v3359, %v3350
        %v3361 = vmul.f32 %v3359, %v3351
        %v3362 = vadd.f32 %v3320, %v3360
        %v3363 = vadd.f32 %v3321, %v3361
        %s3364 = sld [smem:[#allocation11 + $0x9f]]
        %v3365 = vstv %s3364
        %v3366 = vmul.f32 %v3365, %v3350
        %v3367 = vmul.f32 %v3365, %v3351
        %v3368 = vadd.f32 %v3334, %v3366
        %v3369 = vadd.f32 %v3335, %v3367
        %s3370 = sld [smem:[#allocation11 + $0xe7]]
        %v3371 = vstv %s3370
        %v3372 = vmul.f32 %v3371, %v3350
        %v3373 = vmul.f32 %v3371, %v3351
        %v3374 = vadd.f32 %v3348, %v3372
        %v3375 = vadd.f32 %v3349, %v3373
        %s3376 = sld [smem:[#allocation11 + $0x10]]
        %v3377 = vstv %s3376
        %v3378 = vmul.f32 %v3377, %v3350
        %v3379 = vmul.f32 %v3377, %v3351
        %3382 = vrot.lane.b32.xlu0 %v3378, 127
        %v3383 = vpop.permute.xlu0 %3382
        %3384 = vrot.lane.b32.xlu0 %v3379, 127
        %v3385 = vpop.permute.xlu0 %3384
        %v3388 = vadd.f32 %v3356, %v3383
        %v3389 = vadd.f32 %v3357, %v3385
        %s3390 = sld [smem:[#allocation11 + $0x58]]
        %v3391 = vstv %s3390
        %v3392 = vmul.f32 %v3391, %v3350
        %v3393 = vmul.f32 %v3391, %v3351
        %3396 = vrot.lane.b32.xlu0 %v3392, 127
        %v3397 = vpop.permute.xlu0 %3396
        %3398 = vrot.lane.b32.xlu0 %v3393, 127
        %v3399 = vpop.permute.xlu0 %3398
        %v3402 = vadd.f32 %v3362, %v3397
        %v3403 = vadd.f32 %v3363, %v3399
        %s3404 = sld [smem:[#allocation11 + $0xa0]]
        %v3405 = vstv %s3404
        %v3406 = vmul.f32 %v3405, %v3350
        %v3407 = vmul.f32 %v3405, %v3351
        %3410 = vrot.lane.b32.xlu0 %v3406, 127
        %v3411 = vpop.permute.xlu0 %3410
        %3412 = vrot.lane.b32.xlu0 %v3407, 127
        %v3413 = vpop.permute.xlu0 %3412
        %v3416 = vadd.f32 %v3368, %v3411
        %v3417 = vadd.f32 %v3369, %v3413
        %s3418 = sld [smem:[#allocation11 + $0xe8]]
        %v3419 = vstv %s3418
        %v3420 = vmul.f32 %v3419, %v3350
        %v3421 = vmul.f32 %v3419, %v3351
        %3424 = vrot.lane.b32.xlu0 %v3420, 127
        %v3425 = vpop.permute.xlu0 %3424
        %3426 = vrot.lane.b32.xlu0 %v3421, 127
        %v3427 = vpop.permute.xlu0 %3426
        %v3430 = vadd.f32 %v3374, %v3425
        %v3431 = vadd.f32 %v3375, %v3427
        %s3432 = sld [smem:[#allocation11 + $0x11]]
        %v3433 = vstv %s3432
        %v3434 = vmul.f32 %v3433, %v3350
        %v3435 = vmul.f32 %v3433, %v3351
        %3438 = vrot.lane.b32.xlu0 %v3434, 126
        %v3439 = vpop.permute.xlu0 %3438
        %3440 = vrot.lane.b32.xlu0 %v3435, 126
        %v3441 = vpop.permute.xlu0 %3440
        %v3444 = vadd.f32 %v3388, %v3439
        %v3445 = vadd.f32 %v3389, %v3441
        %s3446 = sld [smem:[#allocation11 + $0x59]]
        %v3447 = vstv %s3446
        %v3448 = vmul.f32 %v3447, %v3350
        %v3449 = vmul.f32 %v3447, %v3351
        %3452 = vrot.lane.b32.xlu0 %v3448, 126
        %v3453 = vpop.permute.xlu0 %3452
        %3454 = vrot.lane.b32.xlu0 %v3449, 126
        %v3455 = vpop.permute.xlu0 %3454
        %v3458 = vadd.f32 %v3402, %v3453
        %v3459 = vadd.f32 %v3403, %v3455
        %s3460 = sld [smem:[#allocation11 + $0xa1]]
        %v3461 = vstv %s3460
        %v3462 = vmul.f32 %v3461, %v3350
        %v3463 = vmul.f32 %v3461, %v3351
        %3466 = vrot.lane.b32.xlu0 %v3462, 126
        %v3467 = vpop.permute.xlu0 %3466
        %3468 = vrot.lane.b32.xlu0 %v3463, 126
        %v3469 = vpop.permute.xlu0 %3468
        %v3472 = vadd.f32 %v3416, %v3467
        %v3473 = vadd.f32 %v3417, %v3469
        %s3474 = sld [smem:[#allocation11 + $0xe9]]
        %v3475 = vstv %s3474
        %v3476 = vmul.f32 %v3475, %v3350
        %v3477 = vmul.f32 %v3475, %v3351
        %3480 = vrot.lane.b32.xlu0 %v3476, 126
        %v3481 = vpop.permute.xlu0 %3480
        %3482 = vrot.lane.b32.xlu0 %v3477, 126
        %v3483 = vpop.permute.xlu0 %3482
        %v3486 = vadd.f32 %v3430, %v3481
        %v3487 = vadd.f32 %v3431, %v3483
        %v3488 = vld [vmem:[%s894] sm:$0xff]
        %v3489 = vld [vmem:[%s894 + $0x8] sm:$0xff]
        %s3490 = sld [smem:[#allocation11 + $0x12]]
        %v3491 = vstv %s3490
        %v3492 = vmul.f32 %v3491, %v3488
        %v3493 = vmul.f32 %v3491, %v3489
        %v3494 = vadd.f32 %v3444, %v3492
        %v3495 = vadd.f32 %v3445, %v3493
        %s3496 = sld [smem:[#allocation11 + $0x5a]]
        %v3497 = vstv %s3496
        %v3498 = vmul.f32 %v3497, %v3488
        %v3499 = vmul.f32 %v3497, %v3489
        %v3500 = vadd.f32 %v3458, %v3498
        %v3501 = vadd.f32 %v3459, %v3499
        %s3502 = sld [smem:[#allocation11 + $0xa2]]
        %v3503 = vstv %s3502
        %v3504 = vmul.f32 %v3503, %v3488
        %v3505 = vmul.f32 %v3503, %v3489
        %v3506 = vadd.f32 %v3472, %v3504
        %v3507 = vadd.f32 %v3473, %v3505
        %s3508 = sld [smem:[#allocation11 + $0xea]]
        %v3509 = vstv %s3508
        %v3510 = vmul.f32 %v3509, %v3488
        %v3511 = vmul.f32 %v3509, %v3489
        %v3512 = vadd.f32 %v3486, %v3510
        %v3513 = vadd.f32 %v3487, %v3511
        %s3514 = sld [smem:[#allocation11 + $0x13]]
        %v3515 = vstv %s3514
        %v3516 = vmul.f32 %v3515, %v3488
        %v3517 = vmul.f32 %v3515, %v3489
        %3520 = vrot.lane.b32.xlu0 %v3516, 127
        %v3521 = vpop.permute.xlu0 %3520
        %3522 = vrot.lane.b32.xlu0 %v3517, 127
        %v3523 = vpop.permute.xlu0 %3522
        %v3526 = vadd.f32 %v3494, %v3521
        %v3527 = vadd.f32 %v3495, %v3523
        %s3528 = sld [smem:[#allocation11 + $0x5b]]
        %v3529 = vstv %s3528
        %v3530 = vmul.f32 %v3529, %v3488
        %v3531 = vmul.f32 %v3529, %v3489
        %3534 = vrot.lane.b32.xlu0 %v3530, 127
        %v3535 = vpop.permute.xlu0 %3534
        %3536 = vrot.lane.b32.xlu0 %v3531, 127
        %v3537 = vpop.permute.xlu0 %3536
        %v3540 = vadd.f32 %v3500, %v3535
        %v3541 = vadd.f32 %v3501, %v3537
        %s3542 = sld [smem:[#allocation11 + $0xa3]]
        %v3543 = vstv %s3542
        %v3544 = vmul.f32 %v3543, %v3488
        %v3545 = vmul.f32 %v3543, %v3489
        %3548 = vrot.lane.b32.xlu0 %v3544, 127
        %v3549 = vpop.permute.xlu0 %3548
        %3550 = vrot.lane.b32.xlu0 %v3545, 127
        %v3551 = vpop.permute.xlu0 %3550
        %v3554 = vadd.f32 %v3506, %v3549
        %v3555 = vadd.f32 %v3507, %v3551
        %s3556 = sld [smem:[#allocation11 + $0xeb]]
        %v3557 = vstv %s3556
        %v3558 = vmul.f32 %v3557, %v3488
        %v3559 = vmul.f32 %v3557, %v3489
        %3562 = vrot.lane.b32.xlu0 %v3558, 127
        %v3563 = vpop.permute.xlu0 %3562
        %3564 = vrot.lane.b32.xlu0 %v3559, 127
        %v3565 = vpop.permute.xlu0 %3564
        %v3568 = vadd.f32 %v3512, %v3563
        %v3569 = vadd.f32 %v3513, %v3565
        %s3570 = sld [smem:[#allocation11 + $0x14]]
        %v3571 = vstv %s3570
        %v3572 = vmul.f32 %v3571, %v3488
        %v3573 = vmul.f32 %v3571, %v3489
        %3576 = vrot.lane.b32.xlu0 %v3572, 126
        %v3577 = vpop.permute.xlu0 %3576
        %3578 = vrot.lane.b32.xlu0 %v3573, 126
        %v3579 = vpop.permute.xlu0 %3578
        %v3582 = vadd.f32 %v3526, %v3577
        %v3583 = vadd.f32 %v3527, %v3579
        %s3584 = sld [smem:[#allocation11 + $0x5c]]
        %v3585 = vstv %s3584
        %v3586 = vmul.f32 %v3585, %v3488
        %v3587 = vmul.f32 %v3585, %v3489
        %3590 = vrot.lane.b32.xlu0 %v3586, 126
        %v3591 = vpop.permute.xlu0 %3590
        %3592 = vrot.lane.b32.xlu0 %v3587, 126
        %v3593 = vpop.permute.xlu0 %3592
        %v3596 = vadd.f32 %v3540, %v3591
        %v3597 = vadd.f32 %v3541, %v3593
        %s3598 = sld [smem:[#allocation11 + $0xa4]]
        %v3599 = vstv %s3598
        %v3600 = vmul.f32 %v3599, %v3488
        %v3601 = vmul.f32 %v3599, %v3489
        %3604 = vrot.lane.b32.xlu0 %v3600, 126
        %v3605 = vpop.permute.xlu0 %3604
        %3606 = vrot.lane.b32.xlu0 %v3601, 126
        %v3607 = vpop.permute.xlu0 %3606
        %v3610 = vadd.f32 %v3554, %v3605
        %v3611 = vadd.f32 %v3555, %v3607
        %s3612 = sld [smem:[#allocation11 + $0xec]]
        %v3613 = vstv %s3612
        %v3614 = vmul.f32 %v3613, %v3488
        %v3615 = vmul.f32 %v3613, %v3489
        %3618 = vrot.lane.b32.xlu0 %v3614, 126
        %v3619 = vpop.permute.xlu0 %3618
        %3620 = vrot.lane.b32.xlu0 %v3615, 126
        %v3621 = vpop.permute.xlu0 %3620
        %v3624 = vadd.f32 %v3568, %v3619
        %v3625 = vadd.f32 %v3569, %v3621
        %v3626 = vld [vmem:[%s894 + $0x1] sm:$0xff]
        %v3627 = vld [vmem:[%s894 + $0x9] sm:$0xff]
        %s3628 = sld [smem:[#allocation11 + $0x15]]
        %v3629 = vstv %s3628
        %v3630 = vmul.f32 %v3629, %v3626
        %v3631 = vmul.f32 %v3629, %v3627
        %v3632 = vadd.f32 %v3582, %v3630
        %v3633 = vadd.f32 %v3583, %v3631
        %s3634 = sld [smem:[#allocation11 + $0x5d]]
        %v3635 = vstv %s3634
        %v3636 = vmul.f32 %v3635, %v3626
        %v3637 = vmul.f32 %v3635, %v3627
        %v3638 = vadd.f32 %v3596, %v3636
        %v3639 = vadd.f32 %v3597, %v3637
        %s3640 = sld [smem:[#allocation11 + $0xa5]]
        %v3641 = vstv %s3640
        %v3642 = vmul.f32 %v3641, %v3626
        %v3643 = vmul.f32 %v3641, %v3627
        %v3644 = vadd.f32 %v3610, %v3642
        %v3645 = vadd.f32 %v3611, %v3643
        %s3646 = sld [smem:[#allocation11 + $0xed]]
        %v3647 = vstv %s3646
        %v3648 = vmul.f32 %v3647, %v3626
        %v3649 = vmul.f32 %v3647, %v3627
        %v3650 = vadd.f32 %v3624, %v3648
        %v3651 = vadd.f32 %v3625, %v3649
        %s3652 = sld [smem:[#allocation11 + $0x16]]
        %v3653 = vstv %s3652
        %v3654 = vmul.f32 %v3653, %v3626
        %v3655 = vmul.f32 %v3653, %v3627
        %3658 = vrot.lane.b32.xlu0 %v3654, 127
        %v3659 = vpop.permute.xlu0 %3658
        %3660 = vrot.lane.b32.xlu0 %v3655, 127
        %v3661 = vpop.permute.xlu0 %3660
        %v3664 = vadd.f32 %v3632, %v3659
        %v3665 = vadd.f32 %v3633, %v3661
        %s3666 = sld [smem:[#allocation11 + $0x5e]]
        %v3667 = vstv %s3666
        %v3668 = vmul.f32 %v3667, %v3626
        %v3669 = vmul.f32 %v3667, %v3627
        %3672 = vrot.lane.b32.xlu0 %v3668, 127
        %v3673 = vpop.permute.xlu0 %3672
        %3674 = vrot.lane.b32.xlu0 %v3669, 127
        %v3675 = vpop.permute.xlu0 %3674
        %v3678 = vadd.f32 %v3638, %v3673
        %v3679 = vadd.f32 %v3639, %v3675
        %s3680 = sld [smem:[#allocation11 + $0xa6]]
        %v3681 = vstv %s3680
        %v3682 = vmul.f32 %v3681, %v3626
        %v3683 = vmul.f32 %v3681, %v3627
        %3686 = vrot.lane.b32.xlu0 %v3682, 127
        %v3687 = vpop.permute.xlu0 %3686
        %3688 = vrot.lane.b32.xlu0 %v3683, 127
        %v3689 = vpop.permute.xlu0 %3688
        %v3692 = vadd.f32 %v3644, %v3687
        %v3693 = vadd.f32 %v3645, %v3689
        %s3694 = sld [smem:[#allocation11 + $0xee]]
        %v3695 = vstv %s3694
        %v3696 = vmul.f32 %v3695, %v3626
        %v3697 = vmul.f32 %v3695, %v3627
        %3700 = vrot.lane.b32.xlu0 %v3696, 127
        %v3701 = vpop.permute.xlu0 %3700
        %3702 = vrot.lane.b32.xlu0 %v3697, 127
        %v3703 = vpop.permute.xlu0 %3702
        %v3706 = vadd.f32 %v3650, %v3701
        %v3707 = vadd.f32 %v3651, %v3703
        %s3708 = sld [smem:[#allocation11 + $0x17]]
        %v3709 = vstv %s3708
        %v3710 = vmul.f32 %v3709, %v3626
        %v3711 = vmul.f32 %v3709, %v3627
        %3714 = vrot.lane.b32.xlu0 %v3710, 126
        %v3715 = vpop.permute.xlu0 %3714
        %3716 = vrot.lane.b32.xlu0 %v3711, 126
        %v3717 = vpop.permute.xlu0 %3716
        %v3720 = vadd.f32 %v3664, %v3715
        %v3721 = vadd.f32 %v3665, %v3717
        %s3722 = sld [smem:[#allocation11 + $0x5f]]
        %v3723 = vstv %s3722
        %v3724 = vmul.f32 %v3723, %v3626
        %v3725 = vmul.f32 %v3723, %v3627
        %3728 = vrot.lane.b32.xlu0 %v3724, 126
        %v3729 = vpop.permute.xlu0 %3728
        %3730 = vrot.lane.b32.xlu0 %v3725, 126
        %v3731 = vpop.permute.xlu0 %3730
        %v3734 = vadd.f32 %v3678, %v3729
        %v3735 = vadd.f32 %v3679, %v3731
        %s3736 = sld [smem:[#allocation11 + $0xa7]]
        %v3737 = vstv %s3736
        %v3738 = vmul.f32 %v3737, %v3626
        %v3739 = vmul.f32 %v3737, %v3627
        %3742 = vrot.lane.b32.xlu0 %v3738, 126
        %v3743 = vpop.permute.xlu0 %3742
        %3744 = vrot.lane.b32.xlu0 %v3739, 126
        %v3745 = vpop.permute.xlu0 %3744
        %v3748 = vadd.f32 %v3692, %v3743
        %v3749 = vadd.f32 %v3693, %v3745
        %s3750 = sld [smem:[#allocation11 + $0xef]]
        %v3751 = vstv %s3750
        %v3752 = vmul.f32 %v3751, %v3626
        %v3753 = vmul.f32 %v3751, %v3627
        %3756 = vrot.lane.b32.xlu0 %v3752, 126
        %v3757 = vpop.permute.xlu0 %3756
        %3758 = vrot.lane.b32.xlu0 %v3753, 126
        %v3759 = vpop.permute.xlu0 %3758
        %v3762 = vadd.f32 %v3706, %v3757
        %v3763 = vadd.f32 %v3707, %v3759
        %v3764 = vld [vmem:[%s894 + $0x2] sm:$0xff]
        %v3765 = vld [vmem:[%s894 + $0xa] sm:$0xff]
        %s3766 = sld [smem:[#allocation11 + $0x18]]
        %v3767 = vstv %s3766
        %v3768 = vmul.f32 %v3767, %v3764
        %v3769 = vmul.f32 %v3767, %v3765
        %v3770 = vadd.f32 %v3720, %v3768
        %v3771 = vadd.f32 %v3721, %v3769
        %s3772 = sld [smem:[#allocation11 + $0x60]]
        %v3773 = vstv %s3772
        %v3774 = vmul.f32 %v3773, %v3764
        %v3775 = vmul.f32 %v3773, %v3765
        %v3776 = vadd.f32 %v3734, %v3774
        %v3777 = vadd.f32 %v3735, %v3775
        %s3778 = sld [smem:[#allocation11 + $0xa8]]
        %v3779 = vstv %s3778
        %v3780 = vmul.f32 %v3779, %v3764
        %v3781 = vmul.f32 %v3779, %v3765
        %v3782 = vadd.f32 %v3748, %v3780
        %v3783 = vadd.f32 %v3749, %v3781
        %s3784 = sld [smem:[#allocation11 + $0xf0]]
        %v3785 = vstv %s3784
        %v3786 = vmul.f32 %v3785, %v3764
        %v3787 = vmul.f32 %v3785, %v3765
        %v3788 = vadd.f32 %v3762, %v3786
        %v3789 = vadd.f32 %v3763, %v3787
        %s3790 = sld [smem:[#allocation11 + $0x19]]
        %v3791 = vstv %s3790
        %v3792 = vmul.f32 %v3791, %v3764
        %v3793 = vmul.f32 %v3791, %v3765
        %3796 = vrot.lane.b32.xlu0 %v3792, 127
        %v3797 = vpop.permute.xlu0 %3796
        %3798 = vrot.lane.b32.xlu0 %v3793, 127
        %v3799 = vpop.permute.xlu0 %3798
        %v3802 = vadd.f32 %v3770, %v3797
        %v3803 = vadd.f32 %v3771, %v3799
        %s3804 = sld [smem:[#allocation11 + $0x61]]
        %v3805 = vstv %s3804
        %v3806 = vmul.f32 %v3805, %v3764
        %v3807 = vmul.f32 %v3805, %v3765
        %3810 = vrot.lane.b32.xlu0 %v3806, 127
        %v3811 = vpop.permute.xlu0 %3810
        %3812 = vrot.lane.b32.xlu0 %v3807, 127
        %v3813 = vpop.permute.xlu0 %3812
        %v3816 = vadd.f32 %v3776, %v3811
        %v3817 = vadd.f32 %v3777, %v3813
        %s3818 = sld [smem:[#allocation11 + $0xa9]]
        %v3819 = vstv %s3818
        %v3820 = vmul.f32 %v3819, %v3764
        %v3821 = vmul.f32 %v3819, %v3765
        %3824 = vrot.lane.b32.xlu0 %v3820, 127
        %v3825 = vpop.permute.xlu0 %3824
        %3826 = vrot.lane.b32.xlu0 %v3821, 127
        %v3827 = vpop.permute.xlu0 %3826
        %v3830 = vadd.f32 %v3782, %v3825
        %v3831 = vadd.f32 %v3783, %v3827
        %s3832 = sld [smem:[#allocation11 + $0xf1]]
        %v3833 = vstv %s3832
        %v3834 = vmul.f32 %v3833, %v3764
        %v3835 = vmul.f32 %v3833, %v3765
        %3838 = vrot.lane.b32.xlu0 %v3834, 127
        %v3839 = vpop.permute.xlu0 %3838
        %3840 = vrot.lane.b32.xlu0 %v3835, 127
        %v3841 = vpop.permute.xlu0 %3840
        %v3844 = vadd.f32 %v3788, %v3839
        %v3845 = vadd.f32 %v3789, %v3841
        %s3846 = sld [smem:[#allocation11 + $0x1a]]
        %v3847 = vstv %s3846
        %v3848 = vmul.f32 %v3847, %v3764
        %v3849 = vmul.f32 %v3847, %v3765
        %3852 = vrot.lane.b32.xlu0 %v3848, 126
        %v3853 = vpop.permute.xlu0 %3852
        %3854 = vrot.lane.b32.xlu0 %v3849, 126
        %v3855 = vpop.permute.xlu0 %3854
        %v3858 = vadd.f32 %v3802, %v3853
        %v3859 = vadd.f32 %v3803, %v3855
        %s3860 = sld [smem:[#allocation11 + $0x62]]
        %v3861 = vstv %s3860
        %v3862 = vmul.f32 %v3861, %v3764
        %v3863 = vmul.f32 %v3861, %v3765
        %3866 = vrot.lane.b32.xlu0 %v3862, 126
        %v3867 = vpop.permute.xlu0 %3866
        %3868 = vrot.lane.b32.xlu0 %v3863, 126
        %v3869 = vpop.permute.xlu0 %3868
        %v3872 = vadd.f32 %v3816, %v3867
        %v3873 = vadd.f32 %v3817, %v3869
        %s3874 = sld [smem:[#allocation11 + $0xaa]]
        %v3875 = vstv %s3874
        %v3876 = vmul.f32 %v3875, %v3764
        %v3877 = vmul.f32 %v3875, %v3765
        %3880 = vrot.lane.b32.xlu0 %v3876, 126
        %v3881 = vpop.permute.xlu0 %3880
        %3882 = vrot.lane.b32.xlu0 %v3877, 126
        %v3883 = vpop.permute.xlu0 %3882
        %v3886 = vadd.f32 %v3830, %v3881
        %v3887 = vadd.f32 %v3831, %v3883
        %s3888 = sld [smem:[#allocation11 + $0xf2]]
        %v3889 = vstv %s3888
        %v3890 = vmul.f32 %v3889, %v3764
        %v3891 = vmul.f32 %v3889, %v3765
        %3894 = vrot.lane.b32.xlu0 %v3890, 126
        %v3895 = vpop.permute.xlu0 %3894
        %3896 = vrot.lane.b32.xlu0 %v3891, 126
        %v3897 = vpop.permute.xlu0 %3896
        %v3900 = vadd.f32 %v3844, %v3895
        %v3901 = vadd.f32 %v3845, %v3897
        %v3902 = vld [vmem:[%s1105] sm:$0xff]
        %v3903 = vld [vmem:[%s1105 + $0x8] sm:$0xff]
        %s3904 = sld [smem:[#allocation11 + $0x1b]]
        %v3905 = vstv %s3904
        %v3906 = vmul.f32 %v3905, %v3902
        %v3907 = vmul.f32 %v3905, %v3903
        %v3908 = vadd.f32 %v3858, %v3906
        %v3909 = vadd.f32 %v3859, %v3907
        %s3910 = sld [smem:[#allocation11 + $0x63]]
        %v3911 = vstv %s3910
        %v3912 = vmul.f32 %v3911, %v3902
        %v3913 = vmul.f32 %v3911, %v3903
        %v3914 = vadd.f32 %v3872, %v3912
        %v3915 = vadd.f32 %v3873, %v3913
        %s3916 = sld [smem:[#allocation11 + $0xab]]
        %v3917 = vstv %s3916
        %v3918 = vmul.f32 %v3917, %v3902
        %v3919 = vmul.f32 %v3917, %v3903
        %v3920 = vadd.f32 %v3886, %v3918
        %v3921 = vadd.f32 %v3887, %v3919
        %s3922 = sld [smem:[#allocation11 + $0xf3]]
        %v3923 = vstv %s3922
        %v3924 = vmul.f32 %v3923, %v3902
        %v3925 = vmul.f32 %v3923, %v3903
        %v3926 = vadd.f32 %v3900, %v3924
        %v3927 = vadd.f32 %v3901, %v3925
        %s3928 = sld [smem:[#allocation11 + $0x1c]]
        %v3929 = vstv %s3928
        %v3930 = vmul.f32 %v3929, %v3902
        %v3931 = vmul.f32 %v3929, %v3903
        %3934 = vrot.lane.b32.xlu0 %v3930, 127
        %v3935 = vpop.permute.xlu0 %3934
        %3936 = vrot.lane.b32.xlu0 %v3931, 127
        %v3937 = vpop.permute.xlu0 %3936
        %v3940 = vadd.f32 %v3908, %v3935
        %v3941 = vadd.f32 %v3909, %v3937
        %s3942 = sld [smem:[#allocation11 + $0x64]]
        %v3943 = vstv %s3942
        %v3944 = vmul.f32 %v3943, %v3902
        %v3945 = vmul.f32 %v3943, %v3903
        %3948 = vrot.lane.b32.xlu0 %v3944, 127
        %v3949 = vpop.permute.xlu0 %3948
        %3950 = vrot.lane.b32.xlu0 %v3945, 127
        %v3951 = vpop.permute.xlu0 %3950
        %v3954 = vadd.f32 %v3914, %v3949
        %v3955 = vadd.f32 %v3915, %v3951
        %s3956 = sld [smem:[#allocation11 + $0xac]]
        %v3957 = vstv %s3956
        %v3958 = vmul.f32 %v3957, %v3902
        %v3959 = vmul.f32 %v3957, %v3903
        %3962 = vrot.lane.b32.xlu0 %v3958, 127
        %v3963 = vpop.permute.xlu0 %3962
        %3964 = vrot.lane.b32.xlu0 %v3959, 127
        %v3965 = vpop.permute.xlu0 %3964
        %v3968 = vadd.f32 %v3920, %v3963
        %v3969 = vadd.f32 %v3921, %v3965
        %s3970 = sld [smem:[#allocation11 + $0xf4]]
        %v3971 = vstv %s3970
        %v3972 = vmul.f32 %v3971, %v3902
        %v3973 = vmul.f32 %v3971, %v3903
        %3976 = vrot.lane.b32.xlu0 %v3972, 127
        %v3977 = vpop.permute.xlu0 %3976
        %3978 = vrot.lane.b32.xlu0 %v3973, 127
        %v3979 = vpop.permute.xlu0 %3978
        %v3982 = vadd.f32 %v3926, %v3977
        %v3983 = vadd.f32 %v3927, %v3979
        %s3984 = sld [smem:[#allocation11 + $0x1d]]
        %v3985 = vstv %s3984
        %v3986 = vmul.f32 %v3985, %v3902
        %v3987 = vmul.f32 %v3985, %v3903
        %3990 = vrot.lane.b32.xlu0 %v3986, 126
        %v3991 = vpop.permute.xlu0 %3990
        %3992 = vrot.lane.b32.xlu0 %v3987, 126
        %v3993 = vpop.permute.xlu0 %3992
        %v3996 = vadd.f32 %v3940, %v3991
        %v3997 = vadd.f32 %v3941, %v3993
        %s3998 = sld [smem:[#allocation11 + $0x65]]
        %v3999 = vstv %s3998
        %v4000 = vmul.f32 %v3999, %v3902
        %v4001 = vmul.f32 %v3999, %v3903
        %4004 = vrot.lane.b32.xlu0 %v4000, 126
        %v4005 = vpop.permute.xlu0 %4004
        %4006 = vrot.lane.b32.xlu0 %v4001, 126
        %v4007 = vpop.permute.xlu0 %4006
        %v4010 = vadd.f32 %v3954, %v4005
        %v4011 = vadd.f32 %v3955, %v4007
        %s4012 = sld [smem:[#allocation11 + $0xad]]
        %v4013 = vstv %s4012
        %v4014 = vmul.f32 %v4013, %v3902
        %v4015 = vmul.f32 %v4013, %v3903
        %4018 = vrot.lane.b32.xlu0 %v4014, 126
        %v4019 = vpop.permute.xlu0 %4018
        %4020 = vrot.lane.b32.xlu0 %v4015, 126
        %v4021 = vpop.permute.xlu0 %4020
        %v4024 = vadd.f32 %v3968, %v4019
        %v4025 = vadd.f32 %v3969, %v4021
        %s4026 = sld [smem:[#allocation11 + $0xf5]]
        %v4027 = vstv %s4026
        %v4028 = vmul.f32 %v4027, %v3902
        %v4029 = vmul.f32 %v4027, %v3903
        %4032 = vrot.lane.b32.xlu0 %v4028, 126
        %v4033 = vpop.permute.xlu0 %4032
        %4034 = vrot.lane.b32.xlu0 %v4029, 126
        %v4035 = vpop.permute.xlu0 %4034
        %v4038 = vadd.f32 %v3982, %v4033
        %v4039 = vadd.f32 %v3983, %v4035
        %v4040 = vld [vmem:[%s1105 + $0x1] sm:$0xff]
        %v4041 = vld [vmem:[%s1105 + $0x9] sm:$0xff]
        %s4042 = sld [smem:[#allocation11 + $0x1e]]
        %v4043 = vstv %s4042
        %v4044 = vmul.f32 %v4043, %v4040
        %v4045 = vmul.f32 %v4043, %v4041
        %v4046 = vadd.f32 %v3996, %v4044
        %v4047 = vadd.f32 %v3997, %v4045
        %s4048 = sld [smem:[#allocation11 + $0x66]]
        %v4049 = vstv %s4048
        %v4050 = vmul.f32 %v4049, %v4040
        %v4051 = vmul.f32 %v4049, %v4041
        %v4052 = vadd.f32 %v4010, %v4050
        %v4053 = vadd.f32 %v4011, %v4051
        %s4054 = sld [smem:[#allocation11 + $0xae]]
        %v4055 = vstv %s4054
        %v4056 = vmul.f32 %v4055, %v4040
        %v4057 = vmul.f32 %v4055, %v4041
        %v4058 = vadd.f32 %v4024, %v4056
        %v4059 = vadd.f32 %v4025, %v4057
        %s4060 = sld [smem:[#allocation11 + $0xf6]]
        %v4061 = vstv %s4060
        %v4062 = vmul.f32 %v4061, %v4040
        %v4063 = vmul.f32 %v4061, %v4041
        %v4064 = vadd.f32 %v4038, %v4062
        %v4065 = vadd.f32 %v4039, %v4063
        %s4066 = sld [smem:[#allocation11 + $0x1f]]
        %v4067 = vstv %s4066
        %v4068 = vmul.f32 %v4067, %v4040
        %v4069 = vmul.f32 %v4067, %v4041
        %4072 = vrot.lane.b32.xlu0 %v4068, 127
        %v4073 = vpop.permute.xlu0 %4072
        %4074 = vrot.lane.b32.xlu0 %v4069, 127
        %v4075 = vpop.permute.xlu0 %4074
        %v4078 = vadd.f32 %v4046, %v4073
        %v4079 = vadd.f32 %v4047, %v4075
        %s4080 = sld [smem:[#allocation11 + $0x67]]
        %v4081 = vstv %s4080
        %v4082 = vmul.f32 %v4081, %v4040
        %v4083 = vmul.f32 %v4081, %v4041
        %4086 = vrot.lane.b32.xlu0 %v4082, 127
        %v4087 = vpop.permute.xlu0 %4086
        %4088 = vrot.lane.b32.xlu0 %v4083, 127
        %v4089 = vpop.permute.xlu0 %4088
        %v4092 = vadd.f32 %v4052, %v4087
        %v4093 = vadd.f32 %v4053, %v4089
        %s4094 = sld [smem:[#allocation11 + $0xaf]]
        %v4095 = vstv %s4094
        %v4096 = vmul.f32 %v4095, %v4040
        %v4097 = vmul.f32 %v4095, %v4041
        %4100 = vrot.lane.b32.xlu0 %v4096, 127
        %v4101 = vpop.permute.xlu0 %4100
        %4102 = vrot.lane.b32.xlu0 %v4097, 127
        %v4103 = vpop.permute.xlu0 %4102
        %v4106 = vadd.f32 %v4058, %v4101
        %v4107 = vadd.f32 %v4059, %v4103
        %s4108 = sld [smem:[#allocation11 + $0xf7]]
        %v4109 = vstv %s4108
        %v4110 = vmul.f32 %v4109, %v4040
        %v4111 = vmul.f32 %v4109, %v4041
        %4114 = vrot.lane.b32.xlu0 %v4110, 127
        %v4115 = vpop.permute.xlu0 %4114
        %4116 = vrot.lane.b32.xlu0 %v4111, 127
        %v4117 = vpop.permute.xlu0 %4116
        %v4120 = vadd.f32 %v4064, %v4115
        %v4121 = vadd.f32 %v4065, %v4117
        %s4122 = sld [smem:[#allocation11 + $0x20]]
        %v4123 = vstv %s4122
        %v4124 = vmul.f32 %v4123, %v4040
        %v4125 = vmul.f32 %v4123, %v4041
        %4128 = vrot.lane.b32.xlu0 %v4124, 126
        %v4129 = vpop.permute.xlu0 %4128
        %4130 = vrot.lane.b32.xlu0 %v4125, 126
        %v4131 = vpop.permute.xlu0 %4130
        %v4134 = vadd.f32 %v4078, %v4129
        %v4135 = vadd.f32 %v4079, %v4131
        %s4136 = sld [smem:[#allocation11 + $0x68]]
        %v4137 = vstv %s4136
        %v4138 = vmul.f32 %v4137, %v4040
        %v4139 = vmul.f32 %v4137, %v4041
        %4142 = vrot.lane.b32.xlu0 %v4138, 126
        %v4143 = vpop.permute.xlu0 %4142
        %4144 = vrot.lane.b32.xlu0 %v4139, 126
        %v4145 = vpop.permute.xlu0 %4144
        %v4148 = vadd.f32 %v4092, %v4143
        %v4149 = vadd.f32 %v4093, %v4145
        %s4150 = sld [smem:[#allocation11 + $0xb0]]
        %v4151 = vstv %s4150
        %v4152 = vmul.f32 %v4151, %v4040
        %v4153 = vmul.f32 %v4151, %v4041
        %4156 = vrot.lane.b32.xlu0 %v4152, 126
        %v4157 = vpop.permute.xlu0 %4156
        %4158 = vrot.lane.b32.xlu0 %v4153, 126
        %v4159 = vpop.permute.xlu0 %4158
        %v4162 = vadd.f32 %v4106, %v4157
        %v4163 = vadd.f32 %v4107, %v4159
        %s4164 = sld [smem:[#allocation11 + $0xf8]]
        %v4165 = vstv %s4164
        %v4166 = vmul.f32 %v4165, %v4040
        %v4167 = vmul.f32 %v4165, %v4041
        %4170 = vrot.lane.b32.xlu0 %v4166, 126
        %v4171 = vpop.permute.xlu0 %4170
        %4172 = vrot.lane.b32.xlu0 %v4167, 126
        %v4173 = vpop.permute.xlu0 %4172
        %v4176 = vadd.f32 %v4120, %v4171
        %v4177 = vadd.f32 %v4121, %v4173
        %v4178 = vld [vmem:[%s1105 + $0x2] sm:$0xff]
        %v4179 = vld [vmem:[%s1105 + $0xa] sm:$0xff]
        %s4180 = sld [smem:[#allocation11 + $0x21]]
        %v4181 = vstv %s4180
        %v4182 = vmul.f32 %v4181, %v4178
        %v4183 = vmul.f32 %v4181, %v4179
        %v4184 = vadd.f32 %v4134, %v4182
        %v4185 = vadd.f32 %v4135, %v4183
        %s4186 = sld [smem:[#allocation11 + $0x69]]
        %v4187 = vstv %s4186
        %v4188 = vmul.f32 %v4187, %v4178
        %v4189 = vmul.f32 %v4187, %v4179
        %v4190 = vadd.f32 %v4148, %v4188
        %v4191 = vadd.f32 %v4149, %v4189
        %s4192 = sld [smem:[#allocation11 + $0xb1]]
        %v4193 = vstv %s4192
        %v4194 = vmul.f32 %v4193, %v4178
        %v4195 = vmul.f32 %v4193, %v4179
        %v4196 = vadd.f32 %v4162, %v4194
        %v4197 = vadd.f32 %v4163, %v4195
        %s4198 = sld [smem:[#allocation11 + $0xf9]]
        %v4199 = vstv %s4198
        %v4200 = vmul.f32 %v4199, %v4178
        %v4201 = vmul.f32 %v4199, %v4179
        %v4202 = vadd.f32 %v4176, %v4200
        %v4203 = vadd.f32 %v4177, %v4201
        %s4204 = sld [smem:[#allocation11 + $0x22]]
        %v4205 = vstv %s4204
        %v4206 = vmul.f32 %v4205, %v4178
        %v4207 = vmul.f32 %v4205, %v4179
        %4210 = vrot.lane.b32.xlu0 %v4206, 127
        %v4211 = vpop.permute.xlu0 %4210
        %4212 = vrot.lane.b32.xlu0 %v4207, 127
        %v4213 = vpop.permute.xlu0 %4212
        %v4216 = vadd.f32 %v4184, %v4211
        %v4217 = vadd.f32 %v4185, %v4213
        %s4218 = sld [smem:[#allocation11 + $0x6a]]
        %v4219 = vstv %s4218
        %v4220 = vmul.f32 %v4219, %v4178
        %v4221 = vmul.f32 %v4219, %v4179
        %4224 = vrot.lane.b32.xlu0 %v4220, 127
        %v4225 = vpop.permute.xlu0 %4224
        %4226 = vrot.lane.b32.xlu0 %v4221, 127
        %v4227 = vpop.permute.xlu0 %4226
        %v4230 = vadd.f32 %v4190, %v4225
        %v4231 = vadd.f32 %v4191, %v4227
        %s4232 = sld [smem:[#allocation11 + $0xb2]]
        %v4233 = vstv %s4232
        %v4234 = vmul.f32 %v4233, %v4178
        %v4235 = vmul.f32 %v4233, %v4179
        %4238 = vrot.lane.b32.xlu0 %v4234, 127
        %v4239 = vpop.permute.xlu0 %4238
        %4240 = vrot.lane.b32.xlu0 %v4235, 127
        %v4241 = vpop.permute.xlu0 %4240
        %v4244 = vadd.f32 %v4196, %v4239
        %v4245 = vadd.f32 %v4197, %v4241
        %s4246 = sld [smem:[#allocation11 + $0xfa]]
        %v4247 = vstv %s4246
        %v4248 = vmul.f32 %v4247, %v4178
        %v4249 = vmul.f32 %v4247, %v4179
        %4252 = vrot.lane.b32.xlu0 %v4248, 127
        %v4253 = vpop.permute.xlu0 %4252
        %4254 = vrot.lane.b32.xlu0 %v4249, 127
        %v4255 = vpop.permute.xlu0 %4254
        %v4258 = vadd.f32 %v4202, %v4253
        %v4259 = vadd.f32 %v4203, %v4255
        %s4260 = sld [smem:[#allocation11 + $0x23]]
        %v4261 = vstv %s4260
        %v4262 = vmul.f32 %v4261, %v4178
        %v4263 = vmul.f32 %v4261, %v4179
        %4266 = vrot.lane.b32.xlu0 %v4262, 126
        %v4267 = vpop.permute.xlu0 %4266
        %4268 = vrot.lane.b32.xlu0 %v4263, 126
        %v4269 = vpop.permute.xlu0 %4268
        %v4272 = vadd.f32 %v4216, %v4267
        %v4273 = vadd.f32 %v4217, %v4269
        %s4274 = sld [smem:[#allocation11 + $0x6b]]
        %v4275 = vstv %s4274
        %v4276 = vmul.f32 %v4275, %v4178
        %v4277 = vmul.f32 %v4275, %v4179
        %4280 = vrot.lane.b32.xlu0 %v4276, 126
        %v4281 = vpop.permute.xlu0 %4280
        %4282 = vrot.lane.b32.xlu0 %v4277, 126
        %v4283 = vpop.permute.xlu0 %4282
        %v4286 = vadd.f32 %v4230, %v4281
        %v4287 = vadd.f32 %v4231, %v4283
        %s4288 = sld [smem:[#allocation11 + $0xb3]]
        %v4289 = vstv %s4288
        %v4290 = vmul.f32 %v4289, %v4178
        %v4291 = vmul.f32 %v4289, %v4179
        %4294 = vrot.lane.b32.xlu0 %v4290, 126
        %v4295 = vpop.permute.xlu0 %4294
        %4296 = vrot.lane.b32.xlu0 %v4291, 126
        %v4297 = vpop.permute.xlu0 %4296
        %v4300 = vadd.f32 %v4244, %v4295
        %v4301 = vadd.f32 %v4245, %v4297
        %s4302 = sld [smem:[#allocation11 + $0xfb]]
        %v4303 = vstv %s4302
        %v4304 = vmul.f32 %v4303, %v4178
        %v4305 = vmul.f32 %v4303, %v4179
        %4308 = vrot.lane.b32.xlu0 %v4304, 126
        %v4309 = vpop.permute.xlu0 %4308
        %4310 = vrot.lane.b32.xlu0 %v4305, 126
        %v4311 = vpop.permute.xlu0 %4310
        %v4314 = vadd.f32 %v4258, %v4309
        %v4315 = vadd.f32 %v4259, %v4311
        %v4316 = vld [vmem:[%s1337] sm:$0xff]
        %v4317 = vld [vmem:[%s1337 + $0x8] sm:$0xff]
        %s4318 = sld [smem:[#allocation11 + $0x24]]
        %v4319 = vstv %s4318
        %v4320 = vmul.f32 %v4319, %v4316
        %v4321 = vmul.f32 %v4319, %v4317
        %v4322 = vadd.f32 %v4272, %v4320
        %v4323 = vadd.f32 %v4273, %v4321
        %s4324 = sld [smem:[#allocation11 + $0x6c]]
        %v4325 = vstv %s4324
        %v4326 = vmul.f32 %v4325, %v4316
        %v4327 = vmul.f32 %v4325, %v4317
        %v4328 = vadd.f32 %v4286, %v4326
        %v4329 = vadd.f32 %v4287, %v4327
        %s4330 = sld [smem:[#allocation11 + $0xb4]]
        %v4331 = vstv %s4330
        %v4332 = vmul.f32 %v4331, %v4316
        %v4333 = vmul.f32 %v4331, %v4317
        %v4334 = vadd.f32 %v4300, %v4332
        %v4335 = vadd.f32 %v4301, %v4333
        %s4336 = sld [smem:[#allocation11 + $0xfc]]
        %v4337 = vstv %s4336
        %v4338 = vmul.f32 %v4337, %v4316
        %v4339 = vmul.f32 %v4337, %v4317
        %v4340 = vadd.f32 %v4314, %v4338
        %v4341 = vadd.f32 %v4315, %v4339
        %s4342 = sld [smem:[#allocation11 + $0x25]]
        %v4343 = vstv %s4342
        %v4344 = vmul.f32 %v4343, %v4316
        %v4345 = vmul.f32 %v4343, %v4317
        %4348 = vrot.lane.b32.xlu0 %v4344, 127
        %v4349 = vpop.permute.xlu0 %4348
        %4350 = vrot.lane.b32.xlu0 %v4345, 127
        %v4351 = vpop.permute.xlu0 %4350
        %v4354 = vadd.f32 %v4322, %v4349
        %v4355 = vadd.f32 %v4323, %v4351
        %s4356 = sld [smem:[#allocation11 + $0x6d]]
        %v4357 = vstv %s4356
        %v4358 = vmul.f32 %v4357, %v4316
        %v4359 = vmul.f32 %v4357, %v4317
        %4362 = vrot.lane.b32.xlu0 %v4358, 127
        %v4363 = vpop.permute.xlu0 %4362
        %4364 = vrot.lane.b32.xlu0 %v4359, 127
        %v4365 = vpop.permute.xlu0 %4364
        %v4368 = vadd.f32 %v4328, %v4363
        %v4369 = vadd.f32 %v4329, %v4365
        %s4370 = sld [smem:[#allocation11 + $0xb5]]
        %v4371 = vstv %s4370
        %v4372 = vmul.f32 %v4371, %v4316
        %v4373 = vmul.f32 %v4371, %v4317
        %4376 = vrot.lane.b32.xlu0 %v4372, 127
        %v4377 = vpop.permute.xlu0 %4376
        %4378 = vrot.lane.b32.xlu0 %v4373, 127
        %v4379 = vpop.permute.xlu0 %4378
        %v4382 = vadd.f32 %v4334, %v4377
        %v4383 = vadd.f32 %v4335, %v4379
        %s4384 = sld [smem:[#allocation11 + $0xfd]]
        %v4385 = vstv %s4384
        %v4386 = vmul.f32 %v4385, %v4316
        %v4387 = vmul.f32 %v4385, %v4317
        %4390 = vrot.lane.b32.xlu0 %v4386, 127
        %v4391 = vpop.permute.xlu0 %4390
        %4392 = vrot.lane.b32.xlu0 %v4387, 127
        %v4393 = vpop.permute.xlu0 %4392
        %v4396 = vadd.f32 %v4340, %v4391
        %v4397 = vadd.f32 %v4341, %v4393
        %s4398 = sld [smem:[#allocation11 + $0x26]]
        %v4399 = vstv %s4398
        %v4400 = vmul.f32 %v4399, %v4316
        %v4401 = vmul.f32 %v4399, %v4317
        %4404 = vrot.lane.b32.xlu0 %v4400, 126
        %v4405 = vpop.permute.xlu0 %4404
        %4406 = vrot.lane.b32.xlu0 %v4401, 126
        %v4407 = vpop.permute.xlu0 %4406
        %v4410 = vadd.f32 %v4354, %v4405
        %v4411 = vadd.f32 %v4355, %v4407
        %s4412 = sld [smem:[#allocation11 + $0x6e]]
        %v4413 = vstv %s4412
        %v4414 = vmul.f32 %v4413, %v4316
        %v4415 = vmul.f32 %v4413, %v4317
        %4418 = vrot.lane.b32.xlu0 %v4414, 126
        %v4419 = vpop.permute.xlu0 %4418
        %4420 = vrot.lane.b32.xlu0 %v4415, 126
        %v4421 = vpop.permute.xlu0 %4420
        %v4424 = vadd.f32 %v4368, %v4419
        %v4425 = vadd.f32 %v4369, %v4421
        %s4426 = sld [smem:[#allocation11 + $0xb6]]
        %v4427 = vstv %s4426
        %v4428 = vmul.f32 %v4427, %v4316
        %v4429 = vmul.f32 %v4427, %v4317
        %4432 = vrot.lane.b32.xlu0 %v4428, 126
        %v4433 = vpop.permute.xlu0 %4432
        %4434 = vrot.lane.b32.xlu0 %v4429, 126
        %v4435 = vpop.permute.xlu0 %4434
        %v4438 = vadd.f32 %v4382, %v4433
        %v4439 = vadd.f32 %v4383, %v4435
        %s4440 = sld [smem:[#allocation11 + $0xfe]]
        %v4441 = vstv %s4440
        %v4442 = vmul.f32 %v4441, %v4316
        %v4443 = vmul.f32 %v4441, %v4317
        %4446 = vrot.lane.b32.xlu0 %v4442, 126
        %v4447 = vpop.permute.xlu0 %4446
        %4448 = vrot.lane.b32.xlu0 %v4443, 126
        %v4449 = vpop.permute.xlu0 %4448
        %v4452 = vadd.f32 %v4396, %v4447
        %v4453 = vadd.f32 %v4397, %v4449
        %v4454 = vld [vmem:[%s1337 + $0x1] sm:$0xff]
        %v4455 = vld [vmem:[%s1337 + $0x9] sm:$0xff]
        %s4456 = sld [smem:[#allocation11 + $0x27]]
        %v4457 = vstv %s4456
        %v4458 = vmul.f32 %v4457, %v4454
        %v4459 = vmul.f32 %v4457, %v4455
        %v4460 = vadd.f32 %v4410, %v4458
        %v4461 = vadd.f32 %v4411, %v4459
        %s4462 = sld [smem:[#allocation11 + $0x6f]]
        %v4463 = vstv %s4462
        %v4464 = vmul.f32 %v4463, %v4454
        %v4465 = vmul.f32 %v4463, %v4455
        %v4466 = vadd.f32 %v4424, %v4464
        %v4467 = vadd.f32 %v4425, %v4465
        %s4468 = sld [smem:[#allocation11 + $0xb7]]
        %v4469 = vstv %s4468
        %v4470 = vmul.f32 %v4469, %v4454
        %v4471 = vmul.f32 %v4469, %v4455
        %v4472 = vadd.f32 %v4438, %v4470
        %v4473 = vadd.f32 %v4439, %v4471
        %s4474 = sld [smem:[#allocation11 + $0xff]]
        %v4475 = vstv %s4474
        %v4476 = vmul.f32 %v4475, %v4454
        %v4477 = vmul.f32 %v4475, %v4455
        %v4478 = vadd.f32 %v4452, %v4476
        %v4479 = vadd.f32 %v4453, %v4477
        %s4480 = sld [smem:[#allocation11 + $0x28]]
        %v4481 = vstv %s4480
        %v4482 = vmul.f32 %v4481, %v4454
        %v4483 = vmul.f32 %v4481, %v4455
        %4486 = vrot.lane.b32.xlu0 %v4482, 127
        %v4487 = vpop.permute.xlu0 %4486
        %4488 = vrot.lane.b32.xlu0 %v4483, 127
        %v4489 = vpop.permute.xlu0 %4488
        %v4492 = vadd.f32 %v4460, %v4487
        %v4493 = vadd.f32 %v4461, %v4489
        %s4494 = sld [smem:[#allocation11 + $0x70]]
        %v4495 = vstv %s4494
        %v4496 = vmul.f32 %v4495, %v4454
        %v4497 = vmul.f32 %v4495, %v4455
        %4500 = vrot.lane.b32.xlu0 %v4496, 127
        %v4501 = vpop.permute.xlu0 %4500
        %4502 = vrot.lane.b32.xlu0 %v4497, 127
        %v4503 = vpop.permute.xlu0 %4502
        %v4506 = vadd.f32 %v4466, %v4501
        %v4507 = vadd.f32 %v4467, %v4503
        %s4508 = sld [smem:[#allocation11 + $0xb8]]
        %v4509 = vstv %s4508
        %v4510 = vmul.f32 %v4509, %v4454
        %v4511 = vmul.f32 %v4509, %v4455
        %4514 = vrot.lane.b32.xlu0 %v4510, 127
        %v4515 = vpop.permute.xlu0 %4514
        %4516 = vrot.lane.b32.xlu0 %v4511, 127
        %v4517 = vpop.permute.xlu0 %4516
        %v4520 = vadd.f32 %v4472, %v4515
        %v4521 = vadd.f32 %v4473, %v4517
        %s4522 = sld [smem:[#allocation11 + $0x100]]
        %v4523 = vstv %s4522
        %v4524 = vmul.f32 %v4523, %v4454
        %v4525 = vmul.f32 %v4523, %v4455
        %4528 = vrot.lane.b32.xlu0 %v4524, 127
        %v4529 = vpop.permute.xlu0 %4528
        %4530 = vrot.lane.b32.xlu0 %v4525, 127
        %v4531 = vpop.permute.xlu0 %4530
        %v4534 = vadd.f32 %v4478, %v4529
        %v4535 = vadd.f32 %v4479, %v4531
        %s4536 = sld [smem:[#allocation11 + $0x29]]
        %v4537 = vstv %s4536
        %v4538 = vmul.f32 %v4537, %v4454
        %v4539 = vmul.f32 %v4537, %v4455
        %4542 = vrot.lane.b32.xlu0 %v4538, 126
        %v4543 = vpop.permute.xlu0 %4542
        %4544 = vrot.lane.b32.xlu0 %v4539, 126
        %v4545 = vpop.permute.xlu0 %4544
        %v4548 = vadd.f32 %v4492, %v4543
        %v4549 = vadd.f32 %v4493, %v4545
        %s4550 = sld [smem:[#allocation11 + $0x71]]
        %v4551 = vstv %s4550
        %v4552 = vmul.f32 %v4551, %v4454
        %v4553 = vmul.f32 %v4551, %v4455
        %4556 = vrot.lane.b32.xlu0 %v4552, 126
        %v4557 = vpop.permute.xlu0 %4556
        %4558 = vrot.lane.b32.xlu0 %v4553, 126
        %v4559 = vpop.permute.xlu0 %4558
        %v4562 = vadd.f32 %v4506, %v4557
        %v4563 = vadd.f32 %v4507, %v4559
        %s4564 = sld [smem:[#allocation11 + $0xb9]]
        %v4565 = vstv %s4564
        %v4566 = vmul.f32 %v4565, %v4454
        %v4567 = vmul.f32 %v4565, %v4455
        %4570 = vrot.lane.b32.xlu0 %v4566, 126
        %v4571 = vpop.permute.xlu0 %4570
        %4572 = vrot.lane.b32.xlu0 %v4567, 126
        %v4573 = vpop.permute.xlu0 %4572
        %v4576 = vadd.f32 %v4520, %v4571
        %v4577 = vadd.f32 %v4521, %v4573
        %s4578 = sld [smem:[#allocation11 + $0x101]]
        %v4579 = vstv %s4578
        %v4580 = vmul.f32 %v4579, %v4454
        %v4581 = vmul.f32 %v4579, %v4455
        %4584 = vrot.lane.b32.xlu0 %v4580, 126
        %v4585 = vpop.permute.xlu0 %4584
        %4586 = vrot.lane.b32.xlu0 %v4581, 126
        %v4587 = vpop.permute.xlu0 %4586
        %v4590 = vadd.f32 %v4534, %v4585
        %v4591 = vadd.f32 %v4535, %v4587
        %v4592 = vld [vmem:[%s1337 + $0x2] sm:$0xff]
        %v4593 = vld [vmem:[%s1337 + $0xa] sm:$0xff]
        %s4594 = sld [smem:[#allocation11 + $0x2a]]
        %v4595 = vstv %s4594
        %v4596 = vmul.f32 %v4595, %v4592
        %v4597 = vmul.f32 %v4595, %v4593
        %v4598 = vadd.f32 %v4548, %v4596
        %v4599 = vadd.f32 %v4549, %v4597
        %s4600 = sld [smem:[#allocation11 + $0x72]]
        %v4601 = vstv %s4600
        %v4602 = vmul.f32 %v4601, %v4592
        %v4603 = vmul.f32 %v4601, %v4593
        %v4604 = vadd.f32 %v4562, %v4602
        %v4605 = vadd.f32 %v4563, %v4603
        %s4606 = sld [smem:[#allocation11 + $0xba]]
        %v4607 = vstv %s4606
        %v4608 = vmul.f32 %v4607, %v4592
        %v4609 = vmul.f32 %v4607, %v4593
        %v4610 = vadd.f32 %v4576, %v4608
        %v4611 = vadd.f32 %v4577, %v4609
        %s4612 = sld [smem:[#allocation11 + $0x102]]
        %v4613 = vstv %s4612
        %v4614 = vmul.f32 %v4613, %v4592
        %v4615 = vmul.f32 %v4613, %v4593
        %v4616 = vadd.f32 %v4590, %v4614
        %v4617 = vadd.f32 %v4591, %v4615
        %s4618 = sld [smem:[#allocation11 + $0x2b]]
        %v4619 = vstv %s4618
        %v4620 = vmul.f32 %v4619, %v4592
        %v4621 = vmul.f32 %v4619, %v4593
        %4624 = vrot.lane.b32.xlu0 %v4620, 127
        %v4625 = vpop.permute.xlu0 %4624
        %4626 = vrot.lane.b32.xlu0 %v4621, 127
        %v4627 = vpop.permute.xlu0 %4626
        %v4630 = vadd.f32 %v4598, %v4625
        %v4631 = vadd.f32 %v4599, %v4627
        %s4632 = sld [smem:[#allocation11 + $0x73]]
        %v4633 = vstv %s4632
        %v4634 = vmul.f32 %v4633, %v4592
        %v4635 = vmul.f32 %v4633, %v4593
        %4638 = vrot.lane.b32.xlu0 %v4634, 127
        %v4639 = vpop.permute.xlu0 %4638
        %4640 = vrot.lane.b32.xlu0 %v4635, 127
        %v4641 = vpop.permute.xlu0 %4640
        %v4644 = vadd.f32 %v4604, %v4639
        %v4645 = vadd.f32 %v4605, %v4641
        %s4646 = sld [smem:[#allocation11 + $0xbb]]
        %v4647 = vstv %s4646
        %v4648 = vmul.f32 %v4647, %v4592
        %v4649 = vmul.f32 %v4647, %v4593
        %4652 = vrot.lane.b32.xlu0 %v4648, 127
        %v4653 = vpop.permute.xlu0 %4652
        %4654 = vrot.lane.b32.xlu0 %v4649, 127
        %v4655 = vpop.permute.xlu0 %4654
        %v4658 = vadd.f32 %v4610, %v4653
        %v4659 = vadd.f32 %v4611, %v4655
        %s4660 = sld [smem:[#allocation11 + $0x103]]
        %v4661 = vstv %s4660
        %v4662 = vmul.f32 %v4661, %v4592
        %v4663 = vmul.f32 %v4661, %v4593
        %4666 = vrot.lane.b32.xlu0 %v4662, 127
        %v4667 = vpop.permute.xlu0 %4666
        %4668 = vrot.lane.b32.xlu0 %v4663, 127
        %v4669 = vpop.permute.xlu0 %4668
        %v4672 = vadd.f32 %v4616, %v4667
        %v4673 = vadd.f32 %v4617, %v4669
        %s4674 = sld [smem:[#allocation11 + $0x2c]]
        %v4675 = vstv %s4674
        %v4676 = vmul.f32 %v4675, %v4592
        %v4677 = vmul.f32 %v4675, %v4593
        %4680 = vrot.lane.b32.xlu0 %v4676, 126
        %v4681 = vpop.permute.xlu0 %4680
        %4682 = vrot.lane.b32.xlu0 %v4677, 126
        %v4683 = vpop.permute.xlu0 %4682
        %v4686 = vadd.f32 %v4630, %v4681
        %v4687 = vadd.f32 %v4631, %v4683
        %s4688 = sld [smem:[#allocation11 + $0x74]]
        %v4689 = vstv %s4688
        %v4690 = vmul.f32 %v4689, %v4592
        %v4691 = vmul.f32 %v4689, %v4593
        %4694 = vrot.lane.b32.xlu0 %v4690, 126
        %v4695 = vpop.permute.xlu0 %4694
        %4696 = vrot.lane.b32.xlu0 %v4691, 126
        %v4697 = vpop.permute.xlu0 %4696
        %v4700 = vadd.f32 %v4644, %v4695
        %v4701 = vadd.f32 %v4645, %v4697
        %s4702 = sld [smem:[#allocation11 + $0xbc]]
        %v4703 = vstv %s4702
        %v4704 = vmul.f32 %v4703, %v4592
        %v4705 = vmul.f32 %v4703, %v4593
        %4708 = vrot.lane.b32.xlu0 %v4704, 126
        %v4709 = vpop.permute.xlu0 %4708
        %4710 = vrot.lane.b32.xlu0 %v4705, 126
        %v4711 = vpop.permute.xlu0 %4710
        %v4714 = vadd.f32 %v4658, %v4709
        %v4715 = vadd.f32 %v4659, %v4711
        %s4716 = sld [smem:[#allocation11 + $0x104]]
        %v4717 = vstv %s4716
        %v4718 = vmul.f32 %v4717, %v4592
        %v4719 = vmul.f32 %v4717, %v4593
        %4722 = vrot.lane.b32.xlu0 %v4718, 126
        %v4723 = vpop.permute.xlu0 %4722
        %4724 = vrot.lane.b32.xlu0 %v4719, 126
        %v4725 = vpop.permute.xlu0 %4724
        %v4728 = vadd.f32 %v4672, %v4723
        %v4729 = vadd.f32 %v4673, %v4725
        %v4730 = vld [vmem:[%s1348] sm:$0xff]
        %v4731 = vld [vmem:[%s1348 + $0x8] sm:$0xff]
        %s4732 = sld [smem:[#allocation11 + $0x2d]]
        %v4733 = vstv %s4732
        %v4734 = vmul.f32 %v4733, %v4730
        %v4735 = vmul.f32 %v4733, %v4731
        %v4736 = vadd.f32 %v4686, %v4734
        %v4737 = vadd.f32 %v4687, %v4735
        %s4738 = sld [smem:[#allocation11 + $0x75]]
        %v4739 = vstv %s4738
        %v4740 = vmul.f32 %v4739, %v4730
        %v4741 = vmul.f32 %v4739, %v4731
        %v4742 = vadd.f32 %v4700, %v4740
        %v4743 = vadd.f32 %v4701, %v4741
        %s4744 = sld [smem:[#allocation11 + $0xbd]]
        %v4745 = vstv %s4744
        %v4746 = vmul.f32 %v4745, %v4730
        %v4747 = vmul.f32 %v4745, %v4731
        %v4748 = vadd.f32 %v4714, %v4746
        %v4749 = vadd.f32 %v4715, %v4747
        %s4750 = sld [smem:[#allocation11 + $0x105]]
        %v4751 = vstv %s4750
        %v4752 = vmul.f32 %v4751, %v4730
        %v4753 = vmul.f32 %v4751, %v4731
        %v4754 = vadd.f32 %v4728, %v4752
        %v4755 = vadd.f32 %v4729, %v4753
        %s4756 = sld [smem:[#allocation11 + $0x2e]]
        %v4757 = vstv %s4756
        %v4758 = vmul.f32 %v4757, %v4730
        %v4759 = vmul.f32 %v4757, %v4731
        %4762 = vrot.lane.b32.xlu0 %v4758, 127
        %v4763 = vpop.permute.xlu0 %4762
        %4764 = vrot.lane.b32.xlu0 %v4759, 127
        %v4765 = vpop.permute.xlu0 %4764
        %v4768 = vadd.f32 %v4736, %v4763
        %v4769 = vadd.f32 %v4737, %v4765
        %s4770 = sld [smem:[#allocation11 + $0x76]]
        %v4771 = vstv %s4770
        %v4772 = vmul.f32 %v4771, %v4730
        %v4773 = vmul.f32 %v4771, %v4731
        %4776 = vrot.lane.b32.xlu0 %v4772, 127
        %v4777 = vpop.permute.xlu0 %4776
        %4778 = vrot.lane.b32.xlu0 %v4773, 127
        %v4779 = vpop.permute.xlu0 %4778
        %v4782 = vadd.f32 %v4742, %v4777
        %v4783 = vadd.f32 %v4743, %v4779
        %s4784 = sld [smem:[#allocation11 + $0xbe]]
        %v4785 = vstv %s4784
        %v4786 = vmul.f32 %v4785, %v4730
        %v4787 = vmul.f32 %v4785, %v4731
        %4790 = vrot.lane.b32.xlu0 %v4786, 127
        %v4791 = vpop.permute.xlu0 %4790
        %4792 = vrot.lane.b32.xlu0 %v4787, 127
        %v4793 = vpop.permute.xlu0 %4792
        %v4796 = vadd.f32 %v4748, %v4791
        %v4797 = vadd.f32 %v4749, %v4793
        %s4798 = sld [smem:[#allocation11 + $0x106]]
        %v4799 = vstv %s4798
        %v4800 = vmul.f32 %v4799, %v4730
        %v4801 = vmul.f32 %v4799, %v4731
        %4804 = vrot.lane.b32.xlu0 %v4800, 127
        %v4805 = vpop.permute.xlu0 %4804
        %4806 = vrot.lane.b32.xlu0 %v4801, 127
        %v4807 = vpop.permute.xlu0 %4806
        %v4810 = vadd.f32 %v4754, %v4805
        %v4811 = vadd.f32 %v4755, %v4807
        %s4812 = sld [smem:[#allocation11 + $0x2f]]
        %v4813 = vstv %s4812
        %v4814 = vmul.f32 %v4813, %v4730
        %v4815 = vmul.f32 %v4813, %v4731
        %4818 = vrot.lane.b32.xlu0 %v4814, 126
        %v4819 = vpop.permute.xlu0 %4818
        %4820 = vrot.lane.b32.xlu0 %v4815, 126
        %v4821 = vpop.permute.xlu0 %4820
        %v4824 = vadd.f32 %v4768, %v4819
        %v4825 = vadd.f32 %v4769, %v4821
        %s4826 = sld [smem:[#allocation11 + $0x77]]
        %v4827 = vstv %s4826
        %v4828 = vmul.f32 %v4827, %v4730
        %v4829 = vmul.f32 %v4827, %v4731
        %4832 = vrot.lane.b32.xlu0 %v4828, 126
        %v4833 = vpop.permute.xlu0 %4832
        %4834 = vrot.lane.b32.xlu0 %v4829, 126
        %v4835 = vpop.permute.xlu0 %4834
        %v4838 = vadd.f32 %v4782, %v4833
        %v4839 = vadd.f32 %v4783, %v4835
        %s4840 = sld [smem:[#allocation11 + $0xbf]]
        %v4841 = vstv %s4840
        %v4842 = vmul.f32 %v4841, %v4730
        %v4843 = vmul.f32 %v4841, %v4731
        %4846 = vrot.lane.b32.xlu0 %v4842, 126
        %v4847 = vpop.permute.xlu0 %4846
        %4848 = vrot.lane.b32.xlu0 %v4843, 126
        %v4849 = vpop.permute.xlu0 %4848
        %v4852 = vadd.f32 %v4796, %v4847
        %v4853 = vadd.f32 %v4797, %v4849
        %s4854 = sld [smem:[#allocation11 + $0x107]]
        %v4855 = vstv %s4854
        %v4856 = vmul.f32 %v4855, %v4730
        %v4857 = vmul.f32 %v4855, %v4731
        %4860 = vrot.lane.b32.xlu0 %v4856, 126
        %v4861 = vpop.permute.xlu0 %4860
        %4862 = vrot.lane.b32.xlu0 %v4857, 126
        %v4863 = vpop.permute.xlu0 %4862
        %v4866 = vadd.f32 %v4810, %v4861
        %v4867 = vadd.f32 %v4811, %v4863
        %v4868 = vld [vmem:[%s1348 + $0x1] sm:$0xff]
        %v4869 = vld [vmem:[%s1348 + $0x9] sm:$0xff]
        %s4870 = sld [smem:[#allocation11 + $0x30]]
        %v4871 = vstv %s4870
        %v4872 = vmul.f32 %v4871, %v4868
        %v4873 = vmul.f32 %v4871, %v4869
        %v4874 = vadd.f32 %v4824, %v4872
        %v4875 = vadd.f32 %v4825, %v4873
        %s4876 = sld [smem:[#allocation11 + $0x78]]
        %v4877 = vstv %s4876
        %v4878 = vmul.f32 %v4877, %v4868
        %v4879 = vmul.f32 %v4877, %v4869
        %v4880 = vadd.f32 %v4838, %v4878
        %v4881 = vadd.f32 %v4839, %v4879
        %s4882 = sld [smem:[#allocation11 + $0xc0]]
        %v4883 = vstv %s4882
        %v4884 = vmul.f32 %v4883, %v4868
        %v4885 = vmul.f32 %v4883, %v4869
        %v4886 = vadd.f32 %v4852, %v4884
        %v4887 = vadd.f32 %v4853, %v4885
        %s4888 = sld [smem:[#allocation11 + $0x108]]
        %v4889 = vstv %s4888
        %v4890 = vmul.f32 %v4889, %v4868
        %v4891 = vmul.f32 %v4889, %v4869
        %v4892 = vadd.f32 %v4866, %v4890
        %v4893 = vadd.f32 %v4867, %v4891
        %s4894 = sld [smem:[#allocation11 + $0x31]]
        %v4895 = vstv %s4894
        %v4896 = vmul.f32 %v4895, %v4868
        %v4897 = vmul.f32 %v4895, %v4869
        %4900 = vrot.lane.b32.xlu0 %v4896, 127
        %v4901 = vpop.permute.xlu0 %4900
        %4902 = vrot.lane.b32.xlu0 %v4897, 127
        %v4903 = vpop.permute.xlu0 %4902
        %v4906 = vadd.f32 %v4874, %v4901
        %v4907 = vadd.f32 %v4875, %v4903
        %s4908 = sld [smem:[#allocation11 + $0x79]]
        %v4909 = vstv %s4908
        %v4910 = vmul.f32 %v4909, %v4868
        %v4911 = vmul.f32 %v4909, %v4869
        %4914 = vrot.lane.b32.xlu0 %v4910, 127
        %v4915 = vpop.permute.xlu0 %4914
        %4916 = vrot.lane.b32.xlu0 %v4911, 127
        %v4917 = vpop.permute.xlu0 %4916
        %v4920 = vadd.f32 %v4880, %v4915
        %v4921 = vadd.f32 %v4881, %v4917
        %s4922 = sld [smem:[#allocation11 + $0xc1]]
        %v4923 = vstv %s4922
        %v4924 = vmul.f32 %v4923, %v4868
        %v4925 = vmul.f32 %v4923, %v4869
        %4928 = vrot.lane.b32.xlu0 %v4924, 127
        %v4929 = vpop.permute.xlu0 %4928
        %4930 = vrot.lane.b32.xlu0 %v4925, 127
        %v4931 = vpop.permute.xlu0 %4930
        %v4934 = vadd.f32 %v4886, %v4929
        %v4935 = vadd.f32 %v4887, %v4931
        %s4936 = sld [smem:[#allocation11 + $0x109]]
        %v4937 = vstv %s4936
        %v4938 = vmul.f32 %v4937, %v4868
        %v4939 = vmul.f32 %v4937, %v4869
        %4942 = vrot.lane.b32.xlu0 %v4938, 127
        %v4943 = vpop.permute.xlu0 %4942
        %4944 = vrot.lane.b32.xlu0 %v4939, 127
        %v4945 = vpop.permute.xlu0 %4944
        %v4948 = vadd.f32 %v4892, %v4943
        %v4949 = vadd.f32 %v4893, %v4945
        %s4950 = sld [smem:[#allocation11 + $0x32]]
        %v4951 = vstv %s4950
        %v4952 = vmul.f32 %v4951, %v4868
        %v4953 = vmul.f32 %v4951, %v4869
        %4956 = vrot.lane.b32.xlu0 %v4952, 126
        %v4957 = vpop.permute.xlu0 %4956
        %4958 = vrot.lane.b32.xlu0 %v4953, 126
        %v4959 = vpop.permute.xlu0 %4958
        %v4962 = vadd.f32 %v4906, %v4957
        %v4963 = vadd.f32 %v4907, %v4959
        %s4964 = sld [smem:[#allocation11 + $0x7a]]
        %v4965 = vstv %s4964
        %v4966 = vmul.f32 %v4965, %v4868
        %v4967 = vmul.f32 %v4965, %v4869
        %4970 = vrot.lane.b32.xlu0 %v4966, 126
        %v4971 = vpop.permute.xlu0 %4970
        %4972 = vrot.lane.b32.xlu0 %v4967, 126
        %v4973 = vpop.permute.xlu0 %4972
        %v4976 = vadd.f32 %v4920, %v4971
        %v4977 = vadd.f32 %v4921, %v4973
        %s4978 = sld [smem:[#allocation11 + $0xc2]]
        %v4979 = vstv %s4978
        %v4980 = vmul.f32 %v4979, %v4868
        %v4981 = vmul.f32 %v4979, %v4869
        %4984 = vrot.lane.b32.xlu0 %v4980, 126
        %v4985 = vpop.permute.xlu0 %4984
        %4986 = vrot.lane.b32.xlu0 %v4981, 126
        %v4987 = vpop.permute.xlu0 %4986
        %v4990 = vadd.f32 %v4934, %v4985
        %v4991 = vadd.f32 %v4935, %v4987
        %s4992 = sld [smem:[#allocation11 + $0x10a]]
        %v4993 = vstv %s4992
        %v4994 = vmul.f32 %v4993, %v4868
        %v4995 = vmul.f32 %v4993, %v4869
        %4998 = vrot.lane.b32.xlu0 %v4994, 126
        %v4999 = vpop.permute.xlu0 %4998
        %5000 = vrot.lane.b32.xlu0 %v4995, 126
        %v5001 = vpop.permute.xlu0 %5000
        %v5004 = vadd.f32 %v4948, %v4999
        %v5005 = vadd.f32 %v4949, %v5001
        %v5006 = vld [vmem:[%s1348 + $0x2] sm:$0xff]
        %v5007 = vld [vmem:[%s1348 + $0xa] sm:$0xff]
        %s5008 = sld [smem:[#allocation11 + $0x33]]
        %v5009 = vstv %s5008
        %v5010 = vmul.f32 %v5009, %v5006
        %v5011 = vmul.f32 %v5009, %v5007
        %v5012 = vadd.f32 %v4962, %v5010
        %v5013 = vadd.f32 %v4963, %v5011
        %s5014 = sld [smem:[#allocation11 + $0x7b]]
        %v5015 = vstv %s5014
        %v5016 = vmul.f32 %v5015, %v5006
        %v5017 = vmul.f32 %v5015, %v5007
        %v5018 = vadd.f32 %v4976, %v5016
        %v5019 = vadd.f32 %v4977, %v5017
        %s5020 = sld [smem:[#allocation11 + $0xc3]]
        %v5021 = vstv %s5020
        %v5022 = vmul.f32 %v5021, %v5006
        %v5023 = vmul.f32 %v5021, %v5007
        %v5024 = vadd.f32 %v4990, %v5022
        %v5025 = vadd.f32 %v4991, %v5023
        %s5026 = sld [smem:[#allocation11 + $0x10b]]
        %v5027 = vstv %s5026
        %v5028 = vmul.f32 %v5027, %v5006
        %v5029 = vmul.f32 %v5027, %v5007
        %v5030 = vadd.f32 %v5004, %v5028
        %v5031 = vadd.f32 %v5005, %v5029
        %s5032 = sld [smem:[#allocation11 + $0x34]]
        %v5033 = vstv %s5032
        %v5034 = vmul.f32 %v5033, %v5006
        %v5035 = vmul.f32 %v5033, %v5007
        %5038 = vrot.lane.b32.xlu0 %v5034, 127
        %v5039 = vpop.permute.xlu0 %5038
        %5040 = vrot.lane.b32.xlu0 %v5035, 127
        %v5041 = vpop.permute.xlu0 %5040
        %v5044 = vadd.f32 %v5012, %v5039
        %v5045 = vadd.f32 %v5013, %v5041
        %s5046 = sld [smem:[#allocation11 + $0x7c]]
        %v5047 = vstv %s5046
        %v5048 = vmul.f32 %v5047, %v5006
        %v5049 = vmul.f32 %v5047, %v5007
        %5052 = vrot.lane.b32.xlu0 %v5048, 127
        %v5053 = vpop.permute.xlu0 %5052
        %5054 = vrot.lane.b32.xlu0 %v5049, 127
        %v5055 = vpop.permute.xlu0 %5054
        %v5058 = vadd.f32 %v5018, %v5053
        %v5059 = vadd.f32 %v5019, %v5055
        %s5060 = sld [smem:[#allocation11 + $0xc4]]
        %v5061 = vstv %s5060
        %v5062 = vmul.f32 %v5061, %v5006
        %v5063 = vmul.f32 %v5061, %v5007
        %5066 = vrot.lane.b32.xlu0 %v5062, 127
        %v5067 = vpop.permute.xlu0 %5066
        %5068 = vrot.lane.b32.xlu0 %v5063, 127
        %v5069 = vpop.permute.xlu0 %5068
        %v5072 = vadd.f32 %v5024, %v5067
        %v5073 = vadd.f32 %v5025, %v5069
        %s5074 = sld [smem:[#allocation11 + $0x10c]]
        %v5075 = vstv %s5074
        %v5076 = vmul.f32 %v5075, %v5006
        %v5077 = vmul.f32 %v5075, %v5007
        %5080 = vrot.lane.b32.xlu0 %v5076, 127
        %v5081 = vpop.permute.xlu0 %5080
        %5082 = vrot.lane.b32.xlu0 %v5077, 127
        %v5083 = vpop.permute.xlu0 %5082
        %v5086 = vadd.f32 %v5030, %v5081
        %v5087 = vadd.f32 %v5031, %v5083
        %s5088 = sld [smem:[#allocation11 + $0x35]]
        %v5089 = vstv %s5088
        %v5090 = vmul.f32 %v5089, %v5006
        %v5091 = vmul.f32 %v5089, %v5007
        %5094 = vrot.lane.b32.xlu0 %v5090, 126
        %v5095 = vpop.permute.xlu0 %5094
        %5096 = vrot.lane.b32.xlu0 %v5091, 126
        %v5097 = vpop.permute.xlu0 %5096
        %v5100 = vadd.f32 %v5044, %v5095
        %v5101 = vadd.f32 %v5045, %v5097
        %s5102 = sld [smem:[#allocation11 + $0x7d]]
        %v5103 = vstv %s5102
        %v5104 = vmul.f32 %v5103, %v5006
        %v5105 = vmul.f32 %v5103, %v5007
        %5108 = vrot.lane.b32.xlu0 %v5104, 126
        %v5109 = vpop.permute.xlu0 %5108
        %5110 = vrot.lane.b32.xlu0 %v5105, 126
        %v5111 = vpop.permute.xlu0 %5110
        %v5114 = vadd.f32 %v5058, %v5109
        %v5115 = vadd.f32 %v5059, %v5111
        %s5116 = sld [smem:[#allocation11 + $0xc5]]
        %v5117 = vstv %s5116
        %v5118 = vmul.f32 %v5117, %v5006
        %v5119 = vmul.f32 %v5117, %v5007
        %5122 = vrot.lane.b32.xlu0 %v5118, 126
        %v5123 = vpop.permute.xlu0 %5122
        %5124 = vrot.lane.b32.xlu0 %v5119, 126
        %v5125 = vpop.permute.xlu0 %5124
        %v5128 = vadd.f32 %v5072, %v5123
        %v5129 = vadd.f32 %v5073, %v5125
        %s5130 = sld [smem:[#allocation11 + $0x10d]]
        %v5131 = vstv %s5130
        %v5132 = vmul.f32 %v5131, %v5006
        %v5133 = vmul.f32 %v5131, %v5007
        %5136 = vrot.lane.b32.xlu0 %v5132, 126
        %v5137 = vpop.permute.xlu0 %5136
        %5138 = vrot.lane.b32.xlu0 %v5133, 126
        %v5139 = vpop.permute.xlu0 %5138
        %v5142 = vadd.f32 %v5086, %v5137
        %v5143 = vadd.f32 %v5087, %v5139
        %v5144 = vld [vmem:[%s2637] sm:$0xff]
        %v5145 = vld [vmem:[%s2637 + $0x8] sm:$0xff]
        %s5146 = sld [smem:[#allocation11 + $0x36]]
        %v5147 = vstv %s5146
        %v5148 = vmul.f32 %v5147, %v5144
        %v5149 = vmul.f32 %v5147, %v5145
        %v5150 = vadd.f32 %v5100, %v5148
        %v5151 = vadd.f32 %v5101, %v5149
        %s5152 = sld [smem:[#allocation11 + $0x7e]]
        %v5153 = vstv %s5152
        %v5154 = vmul.f32 %v5153, %v5144
        %v5155 = vmul.f32 %v5153, %v5145
        %v5156 = vadd.f32 %v5114, %v5154
        %v5157 = vadd.f32 %v5115, %v5155
        %s5158 = sld [smem:[#allocation11 + $0xc6]]
        %v5159 = vstv %s5158
        %v5160 = vmul.f32 %v5159, %v5144
        %v5161 = vmul.f32 %v5159, %v5145
        %v5162 = vadd.f32 %v5128, %v5160
        %v5163 = vadd.f32 %v5129, %v5161
        %s5164 = sld [smem:[#allocation11 + $0x10e]]
        %v5165 = vstv %s5164
        %v5166 = vmul.f32 %v5165, %v5144
        %v5167 = vmul.f32 %v5165, %v5145
        %v5168 = vadd.f32 %v5142, %v5166
        %v5169 = vadd.f32 %v5143, %v5167
        %s5170 = sld [smem:[#allocation11 + $0x37]]
        %v5171 = vstv %s5170
        %v5172 = vmul.f32 %v5171, %v5144
        %v5173 = vmul.f32 %v5171, %v5145
        %5176 = vrot.lane.b32.xlu0 %v5172, 127
        %v5177 = vpop.permute.xlu0 %5176
        %5178 = vrot.lane.b32.xlu0 %v5173, 127
        %v5179 = vpop.permute.xlu0 %5178
        %v5182 = vadd.f32 %v5150, %v5177
        %v5183 = vadd.f32 %v5151, %v5179
        %s5184 = sld [smem:[#allocation11 + $0x7f]]
        %v5185 = vstv %s5184
        %v5186 = vmul.f32 %v5185, %v5144
        %v5187 = vmul.f32 %v5185, %v5145
        %5190 = vrot.lane.b32.xlu0 %v5186, 127
        %v5191 = vpop.permute.xlu0 %5190
        %5192 = vrot.lane.b32.xlu0 %v5187, 127
        %v5193 = vpop.permute.xlu0 %5192
        %v5196 = vadd.f32 %v5156, %v5191
        %v5197 = vadd.f32 %v5157, %v5193
        %s5198 = sld [smem:[#allocation11 + $0xc7]]
        %v5199 = vstv %s5198
        %v5200 = vmul.f32 %v5199, %v5144
        %v5201 = vmul.f32 %v5199, %v5145
        %5204 = vrot.lane.b32.xlu0 %v5200, 127
        %v5205 = vpop.permute.xlu0 %5204
        %5206 = vrot.lane.b32.xlu0 %v5201, 127
        %v5207 = vpop.permute.xlu0 %5206
        %v5210 = vadd.f32 %v5162, %v5205
        %v5211 = vadd.f32 %v5163, %v5207
        %s5212 = sld [smem:[#allocation11 + $0x10f]]
        %v5213 = vstv %s5212
        %v5214 = vmul.f32 %v5213, %v5144
        %v5215 = vmul.f32 %v5213, %v5145
        %5218 = vrot.lane.b32.xlu0 %v5214, 127
        %v5219 = vpop.permute.xlu0 %5218
        %5220 = vrot.lane.b32.xlu0 %v5215, 127
        %v5221 = vpop.permute.xlu0 %5220
        %v5224 = vadd.f32 %v5168, %v5219
        %v5225 = vadd.f32 %v5169, %v5221
        %s5226 = sld [smem:[#allocation11 + $0x38]]
        %v5227 = vstv %s5226
        %v5228 = vmul.f32 %v5227, %v5144
        %v5229 = vmul.f32 %v5227, %v5145
        %5232 = vrot.lane.b32.xlu0 %v5228, 126
        %v5233 = vpop.permute.xlu0 %5232
        %5234 = vrot.lane.b32.xlu0 %v5229, 126
        %v5235 = vpop.permute.xlu0 %5234
        %v5238 = vadd.f32 %v5182, %v5233
        %v5239 = vadd.f32 %v5183, %v5235
        %s5240 = sld [smem:[#allocation11 + $0x80]]
        %v5241 = vstv %s5240
        %v5242 = vmul.f32 %v5241, %v5144
        %v5243 = vmul.f32 %v5241, %v5145
        %5246 = vrot.lane.b32.xlu0 %v5242, 126
        %v5247 = vpop.permute.xlu0 %5246
        %5248 = vrot.lane.b32.xlu0 %v5243, 126
        %v5249 = vpop.permute.xlu0 %5248
        %v5252 = vadd.f32 %v5196, %v5247
        %v5253 = vadd.f32 %v5197, %v5249
        %s5254 = sld [smem:[#allocation11 + $0xc8]]
        %v5255 = vstv %s5254
        %v5256 = vmul.f32 %v5255, %v5144
        %v5257 = vmul.f32 %v5255, %v5145
        %5260 = vrot.lane.b32.xlu0 %v5256, 126
        %v5261 = vpop.permute.xlu0 %5260
        %5262 = vrot.lane.b32.xlu0 %v5257, 126
        %v5263 = vpop.permute.xlu0 %5262
        %v5266 = vadd.f32 %v5210, %v5261
        %v5267 = vadd.f32 %v5211, %v5263
        %s5268 = sld [smem:[#allocation11 + $0x110]]
        %v5269 = vstv %s5268
        %v5270 = vmul.f32 %v5269, %v5144
        %v5271 = vmul.f32 %v5269, %v5145
        %5274 = vrot.lane.b32.xlu0 %v5270, 126
        %v5275 = vpop.permute.xlu0 %5274
        %5276 = vrot.lane.b32.xlu0 %v5271, 126
        %v5277 = vpop.permute.xlu0 %5276
        %v5280 = vadd.f32 %v5224, %v5275
        %v5281 = vadd.f32 %v5225, %v5277
        %v5282 = vld [vmem:[%s2637 + $0x1] sm:$0xff]
        %v5283 = vld [vmem:[%s2637 + $0x9] sm:$0xff]
        %s5284 = sld [smem:[#allocation11 + $0x39]]
        %v5285 = vstv %s5284
        %v5286 = vmul.f32 %v5285, %v5282
        %v5287 = vmul.f32 %v5285, %v5283
        %v5288 = vadd.f32 %v5238, %v5286
        %v5289 = vadd.f32 %v5239, %v5287
        %s5290 = sld [smem:[#allocation11 + $0x81]]
        %v5291 = vstv %s5290
        %v5292 = vmul.f32 %v5291, %v5282
        %v5293 = vmul.f32 %v5291, %v5283
        %v5294 = vadd.f32 %v5252, %v5292
        %v5295 = vadd.f32 %v5253, %v5293
        %s5296 = sld [smem:[#allocation11 + $0xc9]]
        %v5297 = vstv %s5296
        %v5298 = vmul.f32 %v5297, %v5282
        %v5299 = vmul.f32 %v5297, %v5283
        %v5300 = vadd.f32 %v5266, %v5298
        %v5301 = vadd.f32 %v5267, %v5299
        %s5302 = sld [smem:[#allocation11 + $0x111]]
        %v5303 = vstv %s5302
        %v5304 = vmul.f32 %v5303, %v5282
        %v5305 = vmul.f32 %v5303, %v5283
        %v5306 = vadd.f32 %v5280, %v5304
        %v5307 = vadd.f32 %v5281, %v5305
        %s5308 = sld [smem:[#allocation11 + $0x3a]]
        %v5309 = vstv %s5308
        %v5310 = vmul.f32 %v5309, %v5282
        %v5311 = vmul.f32 %v5309, %v5283
        %5314 = vrot.lane.b32.xlu0 %v5310, 127
        %v5315 = vpop.permute.xlu0 %5314
        %5316 = vrot.lane.b32.xlu0 %v5311, 127
        %v5317 = vpop.permute.xlu0 %5316
        %v5320 = vadd.f32 %v5288, %v5315
        %v5321 = vadd.f32 %v5289, %v5317
        %s5322 = sld [smem:[#allocation11 + $0x82]]
        %v5323 = vstv %s5322
        %v5324 = vmul.f32 %v5323, %v5282
        %v5325 = vmul.f32 %v5323, %v5283
        %5328 = vrot.lane.b32.xlu0 %v5324, 127
        %v5329 = vpop.permute.xlu0 %5328
        %5330 = vrot.lane.b32.xlu0 %v5325, 127
        %v5331 = vpop.permute.xlu0 %5330
        %v5334 = vadd.f32 %v5294, %v5329
        %v5335 = vadd.f32 %v5295, %v5331
        %s5336 = sld [smem:[#allocation11 + $0xca]]
        %v5337 = vstv %s5336
        %v5338 = vmul.f32 %v5337, %v5282
        %v5339 = vmul.f32 %v5337, %v5283
        %5342 = vrot.lane.b32.xlu0 %v5338, 127
        %v5343 = vpop.permute.xlu0 %5342
        %5344 = vrot.lane.b32.xlu0 %v5339, 127
        %v5345 = vpop.permute.xlu0 %5344
        %v5348 = vadd.f32 %v5300, %v5343
        %v5349 = vadd.f32 %v5301, %v5345
        %s5350 = sld [smem:[#allocation11 + $0x112]]
        %v5351 = vstv %s5350
        %v5352 = vmul.f32 %v5351, %v5282
        %v5353 = vmul.f32 %v5351, %v5283
        %5356 = vrot.lane.b32.xlu0 %v5352, 127
        %v5357 = vpop.permute.xlu0 %5356
        %5358 = vrot.lane.b32.xlu0 %v5353, 127
        %v5359 = vpop.permute.xlu0 %5358
        %v5362 = vadd.f32 %v5306, %v5357
        %v5363 = vadd.f32 %v5307, %v5359
        %s5364 = sld [smem:[#allocation11 + $0x3b]]
        %v5365 = vstv %s5364
        %v5366 = vmul.f32 %v5365, %v5282
        %v5367 = vmul.f32 %v5365, %v5283
        %5370 = vrot.lane.b32.xlu0 %v5366, 126
        %v5371 = vpop.permute.xlu0 %5370
        %5372 = vrot.lane.b32.xlu0 %v5367, 126
        %v5373 = vpop.permute.xlu0 %5372
        %v5376 = vadd.f32 %v5320, %v5371
        %v5377 = vadd.f32 %v5321, %v5373
        %s5378 = sld [smem:[#allocation11 + $0x83]]
        %v5379 = vstv %s5378
        %v5380 = vmul.f32 %v5379, %v5282
        %v5381 = vmul.f32 %v5379, %v5283
        %5384 = vrot.lane.b32.xlu0 %v5380, 126
        %v5385 = vpop.permute.xlu0 %5384
        %5386 = vrot.lane.b32.xlu0 %v5381, 126
        %v5387 = vpop.permute.xlu0 %5386
        %v5390 = vadd.f32 %v5334, %v5385
        %v5391 = vadd.f32 %v5335, %v5387
        %s5392 = sld [smem:[#allocation11 + $0xcb]]
        %v5393 = vstv %s5392
        %v5394 = vmul.f32 %v5393, %v5282
        %v5395 = vmul.f32 %v5393, %v5283
        %5398 = vrot.lane.b32.xlu0 %v5394, 126
        %v5399 = vpop.permute.xlu0 %5398
        %5400 = vrot.lane.b32.xlu0 %v5395, 126
        %v5401 = vpop.permute.xlu0 %5400
        %v5404 = vadd.f32 %v5348, %v5399
        %v5405 = vadd.f32 %v5349, %v5401
        %s5406 = sld [smem:[#allocation11 + $0x113]]
        %v5407 = vstv %s5406
        %v5408 = vmul.f32 %v5407, %v5282
        %v5409 = vmul.f32 %v5407, %v5283
        %5412 = vrot.lane.b32.xlu0 %v5408, 126
        %v5413 = vpop.permute.xlu0 %5412
        %5414 = vrot.lane.b32.xlu0 %v5409, 126
        %v5415 = vpop.permute.xlu0 %5414
        %v5418 = vadd.f32 %v5362, %v5413
        %v5419 = vadd.f32 %v5363, %v5415
        %v5420 = vld [vmem:[%s2637 + $0x2] sm:$0xff]
        %v5421 = vld [vmem:[%s2637 + $0xa] sm:$0xff]
        %s5422 = sld [smem:[#allocation11 + $0x3c]]
        %v5423 = vstv %s5422
        %v5424 = vmul.f32 %v5423, %v5420
        %v5425 = vmul.f32 %v5423, %v5421
        %v5426 = vadd.f32 %v5376, %v5424
        %v5427 = vadd.f32 %v5377, %v5425
        %s5428 = sld [smem:[#allocation11 + $0x84]]
        %v5429 = vstv %s5428
        %v5430 = vmul.f32 %v5429, %v5420
        %v5431 = vmul.f32 %v5429, %v5421
        %v5432 = vadd.f32 %v5390, %v5430
        %v5433 = vadd.f32 %v5391, %v5431
        %s5434 = sld [smem:[#allocation11 + $0xcc]]
        %v5435 = vstv %s5434
        %v5436 = vmul.f32 %v5435, %v5420
        %v5437 = vmul.f32 %v5435, %v5421
        %v5438 = vadd.f32 %v5404, %v5436
        %v5439 = vadd.f32 %v5405, %v5437
        %s5440 = sld [smem:[#allocation11 + $0x114]]
        %v5441 = vstv %s5440
        %v5442 = vmul.f32 %v5441, %v5420
        %v5443 = vmul.f32 %v5441, %v5421
        %v5444 = vadd.f32 %v5418, %v5442
        %v5445 = vadd.f32 %v5419, %v5443
        %s5446 = sld [smem:[#allocation11 + $0x3d]]
        %v5447 = vstv %s5446
        %v5448 = vmul.f32 %v5447, %v5420
        %v5449 = vmul.f32 %v5447, %v5421
        %5452 = vrot.lane.b32.xlu0 %v5448, 127
        %v5453 = vpop.permute.xlu0 %5452
        %5454 = vrot.lane.b32.xlu0 %v5449, 127
        %v5455 = vpop.permute.xlu0 %5454
        %v5458 = vadd.f32 %v5426, %v5453
        %v5459 = vadd.f32 %v5427, %v5455
        %s5460 = sld [smem:[#allocation11 + $0x85]]
        %v5461 = vstv %s5460
        %v5462 = vmul.f32 %v5461, %v5420
        %v5463 = vmul.f32 %v5461, %v5421
        %5466 = vrot.lane.b32.xlu0 %v5462, 127
        %v5467 = vpop.permute.xlu0 %5466
        %5468 = vrot.lane.b32.xlu0 %v5463, 127
        %v5469 = vpop.permute.xlu0 %5468
        %v5472 = vadd.f32 %v5432, %v5467
        %v5473 = vadd.f32 %v5433, %v5469
        %s5474 = sld [smem:[#allocation11 + $0xcd]]
        %v5475 = vstv %s5474
        %v5476 = vmul.f32 %v5475, %v5420
        %v5477 = vmul.f32 %v5475, %v5421
        %5480 = vrot.lane.b32.xlu0 %v5476, 127
        %v5481 = vpop.permute.xlu0 %5480
        %5482 = vrot.lane.b32.xlu0 %v5477, 127
        %v5483 = vpop.permute.xlu0 %5482
        %v5486 = vadd.f32 %v5438, %v5481
        %v5487 = vadd.f32 %v5439, %v5483
        %s5488 = sld [smem:[#allocation11 + $0x115]]
        %v5489 = vstv %s5488
        %v5490 = vmul.f32 %v5489, %v5420
        %v5491 = vmul.f32 %v5489, %v5421
        %5494 = vrot.lane.b32.xlu0 %v5490, 127
        %v5495 = vpop.permute.xlu0 %5494
        %5496 = vrot.lane.b32.xlu0 %v5491, 127
        %v5497 = vpop.permute.xlu0 %5496
        %v5500 = vadd.f32 %v5444, %v5495
        %v5501 = vadd.f32 %v5445, %v5497
        %s5502 = sld [smem:[#allocation11 + $0x3e]]
        %v5503 = vstv %s5502
        %v5504 = vmul.f32 %v5503, %v5420
        %v5505 = vmul.f32 %v5503, %v5421
        %5508 = vrot.lane.b32.xlu0 %v5504, 126
        %v5509 = vpop.permute.xlu0 %5508
        %5510 = vrot.lane.b32.xlu0 %v5505, 126
        %v5511 = vpop.permute.xlu0 %5510
        %v5514 = vadd.f32 %v5458, %v5509
        %v5515 = vadd.f32 %v5459, %v5511
        %s5516 = sld [smem:[#allocation11 + $0x86]]
        %v5517 = vstv %s5516
        %v5518 = vmul.f32 %v5517, %v5420
        %v5519 = vmul.f32 %v5517, %v5421
        %5522 = vrot.lane.b32.xlu0 %v5518, 126
        %v5523 = vpop.permute.xlu0 %5522
        %5524 = vrot.lane.b32.xlu0 %v5519, 126
        %v5525 = vpop.permute.xlu0 %5524
        %v5528 = vadd.f32 %v5472, %v5523
        %v5529 = vadd.f32 %v5473, %v5525
        %s5530 = sld [smem:[#allocation11 + $0xce]]
        %v5531 = vstv %s5530
        %v5532 = vmul.f32 %v5531, %v5420
        %v5533 = vmul.f32 %v5531, %v5421
        %5536 = vrot.lane.b32.xlu0 %v5532, 126
        %v5537 = vpop.permute.xlu0 %5536
        %5538 = vrot.lane.b32.xlu0 %v5533, 126
        %v5539 = vpop.permute.xlu0 %5538
        %v5542 = vadd.f32 %v5486, %v5537
        %v5543 = vadd.f32 %v5487, %v5539
        %s5544 = sld [smem:[#allocation11 + $0x116]]
        %v5545 = vstv %s5544
        %v5546 = vmul.f32 %v5545, %v5420
        %v5547 = vmul.f32 %v5545, %v5421
        %5550 = vrot.lane.b32.xlu0 %v5546, 126
        %v5551 = vpop.permute.xlu0 %5550
        %5552 = vrot.lane.b32.xlu0 %v5547, 126
        %v5553 = vpop.permute.xlu0 %5552
        %v5556 = vadd.f32 %v5500, %v5551
        %v5557 = vadd.f32 %v5501, %v5553
        %v5558 = vld [vmem:[%s2648] sm:$0xff]
        %v5559 = vld [vmem:[%s2648 + $0x8] sm:$0xff]
        %s5560 = sld [smem:[#allocation11 + $0x3f]]
        %v5561 = vstv %s5560
        %v5562 = vmul.f32 %v5561, %v5558
        %v5563 = vmul.f32 %v5561, %v5559
        %v5564 = vadd.f32 %v5514, %v5562
        %v5565 = vadd.f32 %v5515, %v5563
        %s5566 = sld [smem:[#allocation11 + $0x87]]
        %v5567 = vstv %s5566
        %v5568 = vmul.f32 %v5567, %v5558
        %v5569 = vmul.f32 %v5567, %v5559
        %v5570 = vadd.f32 %v5528, %v5568
        %v5571 = vadd.f32 %v5529, %v5569
        %s5572 = sld [smem:[#allocation11 + $0xcf]]
        %v5573 = vstv %s5572
        %v5574 = vmul.f32 %v5573, %v5558
        %v5575 = vmul.f32 %v5573, %v5559
        %v5576 = vadd.f32 %v5542, %v5574
        %v5577 = vadd.f32 %v5543, %v5575
        %s5578 = sld [smem:[#allocation11 + $0x117]]
        %v5579 = vstv %s5578
        %v5580 = vmul.f32 %v5579, %v5558
        %v5581 = vmul.f32 %v5579, %v5559
        %v5582 = vadd.f32 %v5556, %v5580
        %v5583 = vadd.f32 %v5557, %v5581
        %s5584 = sld [smem:[#allocation11 + $0x40]]
        %v5585 = vstv %s5584
        %v5586 = vmul.f32 %v5585, %v5558
        %v5587 = vmul.f32 %v5585, %v5559
        %5590 = vrot.lane.b32.xlu0 %v5586, 127
        %v5591 = vpop.permute.xlu0 %5590
        %5592 = vrot.lane.b32.xlu0 %v5587, 127
        %v5593 = vpop.permute.xlu0 %5592
        %v5596 = vadd.f32 %v5564, %v5591
        %v5597 = vadd.f32 %v5565, %v5593
        %s5598 = sld [smem:[#allocation11 + $0x88]]
        %v5599 = vstv %s5598
        %v5600 = vmul.f32 %v5599, %v5558
        %v5601 = vmul.f32 %v5599, %v5559
        %5604 = vrot.lane.b32.xlu0 %v5600, 127
        %v5605 = vpop.permute.xlu0 %5604
        %5606 = vrot.lane.b32.xlu0 %v5601, 127
        %v5607 = vpop.permute.xlu0 %5606
        %v5610 = vadd.f32 %v5570, %v5605
        %v5611 = vadd.f32 %v5571, %v5607
        %s5612 = sld [smem:[#allocation11 + $0xd0]]
        %v5613 = vstv %s5612
        %v5614 = vmul.f32 %v5613, %v5558
        %v5615 = vmul.f32 %v5613, %v5559
        %5618 = vrot.lane.b32.xlu0 %v5614, 127
        %v5619 = vpop.permute.xlu0 %5618
        %5620 = vrot.lane.b32.xlu0 %v5615, 127
        %v5621 = vpop.permute.xlu0 %5620
        %v5624 = vadd.f32 %v5576, %v5619
        %v5625 = vadd.f32 %v5577, %v5621
        %s5626 = sld [smem:[#allocation11 + $0x118]]
        %v5627 = vstv %s5626
        %v5628 = vmul.f32 %v5627, %v5558
        %v5629 = vmul.f32 %v5627, %v5559
        %5632 = vrot.lane.b32.xlu0 %v5628, 127
        %v5633 = vpop.permute.xlu0 %5632
        %5634 = vrot.lane.b32.xlu0 %v5629, 127
        %v5635 = vpop.permute.xlu0 %5634
        %v5638 = vadd.f32 %v5582, %v5633
        %v5639 = vadd.f32 %v5583, %v5635
        %s5640 = sld [smem:[#allocation11 + $0x41]]
        %v5641 = vstv %s5640
        %v5642 = vmul.f32 %v5641, %v5558
        %v5643 = vmul.f32 %v5641, %v5559
        %5646 = vrot.lane.b32.xlu0 %v5642, 126
        %v5647 = vpop.permute.xlu0 %5646
        %5648 = vrot.lane.b32.xlu0 %v5643, 126
        %v5649 = vpop.permute.xlu0 %5648
        %v5652 = vadd.f32 %v5596, %v5647
        %v5653 = vadd.f32 %v5597, %v5649
        %s5654 = sld [smem:[#allocation11 + $0x89]]
        %v5655 = vstv %s5654
        %v5656 = vmul.f32 %v5655, %v5558
        %v5657 = vmul.f32 %v5655, %v5559
        %5660 = vrot.lane.b32.xlu0 %v5656, 126
        %v5661 = vpop.permute.xlu0 %5660
        %5662 = vrot.lane.b32.xlu0 %v5657, 126
        %v5663 = vpop.permute.xlu0 %5662
        %v5666 = vadd.f32 %v5610, %v5661
        %v5667 = vadd.f32 %v5611, %v5663
        %s5668 = sld [smem:[#allocation11 + $0xd1]]
        %v5669 = vstv %s5668
        %v5670 = vmul.f32 %v5669, %v5558
        %v5671 = vmul.f32 %v5669, %v5559
        %5674 = vrot.lane.b32.xlu0 %v5670, 126
        %v5675 = vpop.permute.xlu0 %5674
        %5676 = vrot.lane.b32.xlu0 %v5671, 126
        %v5677 = vpop.permute.xlu0 %5676
        %v5680 = vadd.f32 %v5624, %v5675
        %v5681 = vadd.f32 %v5625, %v5677
        %s5682 = sld [smem:[#allocation11 + $0x119]]
        %v5683 = vstv %s5682
        %v5684 = vmul.f32 %v5683, %v5558
        %v5685 = vmul.f32 %v5683, %v5559
        %5688 = vrot.lane.b32.xlu0 %v5684, 126
        %v5689 = vpop.permute.xlu0 %5688
        %5690 = vrot.lane.b32.xlu0 %v5685, 126
        %v5691 = vpop.permute.xlu0 %5690
        %v5694 = vadd.f32 %v5638, %v5689
        %v5695 = vadd.f32 %v5639, %v5691
        %v5696 = vld [vmem:[%s2648 + $0x1] sm:$0xff]
        %v5697 = vld [vmem:[%s2648 + $0x9] sm:$0xff]
        %s5698 = sld [smem:[#allocation11 + $0x42]]
        %v5699 = vstv %s5698
        %v5700 = vmul.f32 %v5699, %v5696
        %v5701 = vmul.f32 %v5699, %v5697
        %v5702 = vadd.f32 %v5652, %v5700
        %v5703 = vadd.f32 %v5653, %v5701
        %s5704 = sld [smem:[#allocation11 + $0x8a]]
        %v5705 = vstv %s5704
        %v5706 = vmul.f32 %v5705, %v5696
        %v5707 = vmul.f32 %v5705, %v5697
        %v5708 = vadd.f32 %v5666, %v5706
        %v5709 = vadd.f32 %v5667, %v5707
        %s5710 = sld [smem:[#allocation11 + $0xd2]]
        %v5711 = vstv %s5710
        %v5712 = vmul.f32 %v5711, %v5696
        %v5713 = vmul.f32 %v5711, %v5697
        %v5714 = vadd.f32 %v5680, %v5712
        %v5715 = vadd.f32 %v5681, %v5713
        %s5716 = sld [smem:[#allocation11 + $0x11a]]
        %v5717 = vstv %s5716
        %v5718 = vmul.f32 %v5717, %v5696
        %v5719 = vmul.f32 %v5717, %v5697
        %v5720 = vadd.f32 %v5694, %v5718
        %v5721 = vadd.f32 %v5695, %v5719
        %s5722 = sld [smem:[#allocation11 + $0x43]]
        %v5723 = vstv %s5722
        %v5724 = vmul.f32 %v5723, %v5696
        %v5725 = vmul.f32 %v5723, %v5697
        %5728 = vrot.lane.b32.xlu0 %v5724, 127
        %v5729 = vpop.permute.xlu0 %5728
        %5730 = vrot.lane.b32.xlu0 %v5725, 127
        %v5731 = vpop.permute.xlu0 %5730
        %v5734 = vadd.f32 %v5702, %v5729
        %v5735 = vadd.f32 %v5703, %v5731
        %s5736 = sld [smem:[#allocation11 + $0x8b]]
        %v5737 = vstv %s5736
        %v5738 = vmul.f32 %v5737, %v5696
        %v5739 = vmul.f32 %v5737, %v5697
        %5742 = vrot.lane.b32.xlu0 %v5738, 127
        %v5743 = vpop.permute.xlu0 %5742
        %5744 = vrot.lane.b32.xlu0 %v5739, 127
        %v5745 = vpop.permute.xlu0 %5744
        %v5748 = vadd.f32 %v5708, %v5743
        %v5749 = vadd.f32 %v5709, %v5745
        %s5750 = sld [smem:[#allocation11 + $0xd3]]
        %v5751 = vstv %s5750
        %v5752 = vmul.f32 %v5751, %v5696
        %v5753 = vmul.f32 %v5751, %v5697
        %5756 = vrot.lane.b32.xlu0 %v5752, 127
        %v5757 = vpop.permute.xlu0 %5756
        %5758 = vrot.lane.b32.xlu0 %v5753, 127
        %v5759 = vpop.permute.xlu0 %5758
        %v5762 = vadd.f32 %v5714, %v5757
        %v5763 = vadd.f32 %v5715, %v5759
        %s5764 = sld [smem:[#allocation11 + $0x11b]]
        %v5765 = vstv %s5764
        %v5766 = vmul.f32 %v5765, %v5696
        %v5767 = vmul.f32 %v5765, %v5697
        %5770 = vrot.lane.b32.xlu0 %v5766, 127
        %v5771 = vpop.permute.xlu0 %5770
        %5772 = vrot.lane.b32.xlu0 %v5767, 127
        %v5773 = vpop.permute.xlu0 %5772
        %v5776 = vadd.f32 %v5720, %v5771
        %v5777 = vadd.f32 %v5721, %v5773
        %s5778 = sld [smem:[#allocation11 + $0x44]]
        %v5779 = vstv %s5778
        %v5780 = vmul.f32 %v5779, %v5696
        %v5781 = vmul.f32 %v5779, %v5697
        %5784 = vrot.lane.b32.xlu0 %v5780, 126
        %v5785 = vpop.permute.xlu0 %5784
        %5786 = vrot.lane.b32.xlu0 %v5781, 126
        %v5787 = vpop.permute.xlu0 %5786
        %v5790 = vadd.f32 %v5734, %v5785
        %v5791 = vadd.f32 %v5735, %v5787
        %s5792 = sld [smem:[#allocation11 + $0x8c]]
        %v5793 = vstv %s5792
        %v5794 = vmul.f32 %v5793, %v5696
        %v5795 = vmul.f32 %v5793, %v5697
        %5798 = vrot.lane.b32.xlu0 %v5794, 126
        %v5799 = vpop.permute.xlu0 %5798
        %5800 = vrot.lane.b32.xlu0 %v5795, 126
        %v5801 = vpop.permute.xlu0 %5800
        %v5804 = vadd.f32 %v5748, %v5799
        %v5805 = vadd.f32 %v5749, %v5801
        %s5806 = sld [smem:[#allocation11 + $0xd4]]
        %v5807 = vstv %s5806
        %v5808 = vmul.f32 %v5807, %v5696
        %v5809 = vmul.f32 %v5807, %v5697
        %5812 = vrot.lane.b32.xlu0 %v5808, 126
        %v5813 = vpop.permute.xlu0 %5812
        %5814 = vrot.lane.b32.xlu0 %v5809, 126
        %v5815 = vpop.permute.xlu0 %5814
        %v5818 = vadd.f32 %v5762, %v5813
        %v5819 = vadd.f32 %v5763, %v5815
        %s5820 = sld [smem:[#allocation11 + $0x11c]]
        %v5821 = vstv %s5820
        %v5822 = vmul.f32 %v5821, %v5696
        %v5823 = vmul.f32 %v5821, %v5697
        %5826 = vrot.lane.b32.xlu0 %v5822, 126
        %v5827 = vpop.permute.xlu0 %5826
        %5828 = vrot.lane.b32.xlu0 %v5823, 126
        %v5829 = vpop.permute.xlu0 %5828
        %v5832 = vadd.f32 %v5776, %v5827
        %v5833 = vadd.f32 %v5777, %v5829
        %v5834 = vld [vmem:[%s2648 + $0x2] sm:$0xff]
        %v5835 = vld [vmem:[%s2648 + $0xa] sm:$0xff]
        %s5836 = sld [smem:[#allocation11 + $0x45]]
        %v5837 = vstv %s5836
        %v5838 = vmul.f32 %v5837, %v5834
        %v5839 = vmul.f32 %v5837, %v5835
        %v5840 = vadd.f32 %v5790, %v5838
        %v5841 = vadd.f32 %v5791, %v5839
        %s5842 = sld [smem:[#allocation11 + $0x8d]]
        %v5843 = vstv %s5842
        %v5844 = vmul.f32 %v5843, %v5834
        %v5845 = vmul.f32 %v5843, %v5835
        %v5846 = vadd.f32 %v5804, %v5844
        %v5847 = vadd.f32 %v5805, %v5845
        %s5848 = sld [smem:[#allocation11 + $0xd5]]
        %v5849 = vstv %s5848
        %v5850 = vmul.f32 %v5849, %v5834
        %v5851 = vmul.f32 %v5849, %v5835
        %v5852 = vadd.f32 %v5818, %v5850
        %v5853 = vadd.f32 %v5819, %v5851
        %s5854 = sld [smem:[#allocation11 + $0x11d]]
        %v5855 = vstv %s5854
        %v5856 = vmul.f32 %v5855, %v5834
        %v5857 = vmul.f32 %v5855, %v5835
        %v5858 = vadd.f32 %v5832, %v5856
        %v5859 = vadd.f32 %v5833, %v5857
        %s5860 = sld [smem:[#allocation11 + $0x46]]
        %v5861 = vstv %s5860
        %v5862 = vmul.f32 %v5861, %v5834
        %v5863 = vmul.f32 %v5861, %v5835
        %5866 = vrot.lane.b32.xlu0 %v5862, 127
        %v5867 = vpop.permute.xlu0 %5866
        %5868 = vrot.lane.b32.xlu0 %v5863, 127
        %v5869 = vpop.permute.xlu0 %5868
        %v5872 = vadd.f32 %v5840, %v5867
        %v5873 = vadd.f32 %v5841, %v5869
        %s5874 = sld [smem:[#allocation11 + $0x8e]]
        %v5875 = vstv %s5874
        %v5876 = vmul.f32 %v5875, %v5834
        %v5877 = vmul.f32 %v5875, %v5835
        %5880 = vrot.lane.b32.xlu0 %v5876, 127
        %v5881 = vpop.permute.xlu0 %5880
        %5882 = vrot.lane.b32.xlu0 %v5877, 127
        %v5883 = vpop.permute.xlu0 %5882
        %v5886 = vadd.f32 %v5846, %v5881
        %v5887 = vadd.f32 %v5847, %v5883
        %s5888 = sld [smem:[#allocation11 + $0xd6]]
        %v5889 = vstv %s5888
        %v5890 = vmul.f32 %v5889, %v5834
        %v5891 = vmul.f32 %v5889, %v5835
        %5894 = vrot.lane.b32.xlu0 %v5890, 127
        %v5895 = vpop.permute.xlu0 %5894
        %5896 = vrot.lane.b32.xlu0 %v5891, 127
        %v5897 = vpop.permute.xlu0 %5896
        %v5900 = vadd.f32 %v5852, %v5895
        %v5901 = vadd.f32 %v5853, %v5897
        %s5902 = sld [smem:[#allocation11 + $0x11e]]
        %v5903 = vstv %s5902
        %v5904 = vmul.f32 %v5903, %v5834
        %v5905 = vmul.f32 %v5903, %v5835
        %5908 = vrot.lane.b32.xlu0 %v5904, 127
        %v5909 = vpop.permute.xlu0 %5908
        %5910 = vrot.lane.b32.xlu0 %v5905, 127
        %v5911 = vpop.permute.xlu0 %5910
        %v5914 = vadd.f32 %v5858, %v5909
        %v5915 = vadd.f32 %v5859, %v5911
        %s5916 = sld [smem:[#allocation11 + $0x47]]
        %v5917 = vstv %s5916
        %v5918 = vmul.f32 %v5917, %v5834
        %v5919 = vmul.f32 %v5917, %v5835
        %5922 = vrot.lane.b32.xlu0 %v5918, 126
        %v5923 = vpop.permute.xlu0 %5922
        %5924 = vrot.lane.b32.xlu0 %v5919, 126
        %v5925 = vpop.permute.xlu0 %5924
        %v5928 = vadd.f32 %v5872, %v5923
        %v5929 = vadd.f32 %v5873, %v5925
        %s5930 = sld [smem:[#allocation11 + $0x8f]]
        %v5931 = vstv %s5930
        %v5932 = vmul.f32 %v5931, %v5834
        %v5933 = vmul.f32 %v5931, %v5835
        %5936 = vrot.lane.b32.xlu0 %v5932, 126
        %v5937 = vpop.permute.xlu0 %5936
        %5938 = vrot.lane.b32.xlu0 %v5933, 126
        %v5939 = vpop.permute.xlu0 %5938
        %v5942 = vadd.f32 %v5886, %v5937
        %v5943 = vadd.f32 %v5887, %v5939
        %s5944 = sld [smem:[#allocation11 + $0xd7]]
        %v5945 = vstv %s5944
        %v5946 = vmul.f32 %v5945, %v5834
        %v5947 = vmul.f32 %v5945, %v5835
        %5950 = vrot.lane.b32.xlu0 %v5946, 126
        %v5951 = vpop.permute.xlu0 %5950
        %5952 = vrot.lane.b32.xlu0 %v5947, 126
        %v5953 = vpop.permute.xlu0 %5952
        %v5956 = vadd.f32 %v5900, %v5951
        %v5957 = vadd.f32 %v5901, %v5953
        %s5958 = sld [smem:[#allocation11 + $0x11f]]
        %v5959 = vstv %s5958
        %v5960 = vmul.f32 %v5959, %v5834
        %v5961 = vmul.f32 %v5959, %v5835
        %5964 = vrot.lane.b32.xlu0 %v5960, 126
        %v5965 = vpop.permute.xlu0 %5964
        %5966 = vrot.lane.b32.xlu0 %v5961, 126
        %v5967 = vpop.permute.xlu0 %5966
        %v5970 = vadd.f32 %v5914, %v5965
        %v5971 = vadd.f32 %v5915, %v5967
        %vm5972 = vcmp.gt.f32.partialorder %v5928, 0.0
        %vm5973 = vcmp.gt.f32.partialorder %v5929, 0.0
        %v5974 = vstv %s2651
        %v5975 = vmul.f32 %v5974, %v5928
        %v5976 = vmul.f32 %v5974, %v5929
        %v5977 = vsel %vm5972, %v5928, %v5975
        %v5978 = vsel %vm5973, %v5929, %v5976
        %vm5979 = vcmp.gt.f32.partialorder %v5942, 0.0
        %vm5980 = vcmp.gt.f32.partialorder %v5943, 0.0
        %v5981 = vmul.f32 %v5974, %v5942
        %v5982 = vmul.f32 %v5974, %v5943
        %v5983 = vsel %vm5979, %v5942, %v5981
        %v5984 = vsel %vm5980, %v5943, %v5982
        %vm5985 = vcmp.gt.f32.partialorder %v5956, 0.0
        %vm5986 = vcmp.gt.f32.partialorder %v5957, 0.0
        %v5987 = vmul.f32 %v5974, %v5956
        %v5988 = vmul.f32 %v5974, %v5957
        %v5989 = vsel %vm5985, %v5956, %v5987
        %v5990 = vsel %vm5986, %v5957, %v5988
        %vm5991 = vcmp.gt.f32.partialorder %v5970, 0.0
        %vm5992 = vcmp.gt.f32.partialorder %v5971, 0.0
        %v5993 = vmul.f32 %v5974, %v5970
        %v5994 = vmul.f32 %v5974, %v5971
        %v5995 = vsel %vm5991, %v5970, %v5993
        %v5996 = vsel %vm5992, %v5971, %v5994
        %v5997 = vld [vmem:[%s392] sm:$0xff]
        %v5998 = vld [vmem:[%s392 + $0x8] sm:$0xff]
        %v5999 = vadd.f32 %v5977, %v5997
        %v6000 = vadd.f32 %v5978, %v5998
        %vm6001 = vcmask 130048
        %6002 = vst.msk [vmem:[%s387] sm:$0xff] %vm6001, %v5999
        %6003 = vst.msk [vmem:[%s387 + $0x8] sm:$0xff] %vm6001, %v6000
        %s6004 = scalar_lea.vmem %s392, 16
        %v6005 = vld [vmem:[%s6004] sm:$0xff]
        %v6006 = vld [vmem:[%s6004 + $0x8] sm:$0xff]
        %v6007 = vadd.f32 %v5983, %v6005
        %v6008 = vadd.f32 %v5984, %v6006
        %s6009 = scalar_lea.vmem %s387, 16 [#allocation15]
        %6010 = vst.msk [vmem:[%s6009] sm:$0xff] %vm6001, %v6007
        %6011 = vst.msk [vmem:[%s6009 + $0x8] sm:$0xff] %vm6001, %v6008
        %s6012 = scalar_lea.vmem %s392, 32
        %v6013 = vld [vmem:[%s6012] sm:$0xff]
        %v6014 = vld [vmem:[%s6012 + $0x8] sm:$0xff]
        %v6015 = vadd.f32 %v5989, %v6013
        %v6016 = vadd.f32 %v5990, %v6014
        %s6017 = scalar_lea.vmem %s387, 32 [#allocation15]
        %6018 = vst.msk [vmem:[%s6017] sm:$0xff] %vm6001, %v6015
        %6019 = vst.msk [vmem:[%s6017 + $0x8] sm:$0xff] %vm6001, %v6016
        %s6020 = scalar_lea.vmem %s392, 48
        %v6021 = vld [vmem:[%s6020] sm:$0xff]
        %v6022 = vld [vmem:[%s6020 + $0x8] sm:$0xff]
        %v6023 = vadd.f32 %v5995, %v6021
        %v6024 = vadd.f32 %v5996, %v6022
        %s6025 = scalar_lea.vmem %s387, 48 [#allocation15]
        %6026 = vst.msk [vmem:[%s6025] sm:$0xff] %vm6001, %v6023
        %6027 = vst.msk [vmem:[%s6025 + $0x8] sm:$0xff] %vm6001, %v6024
        %s6028 = sand.u32 %s207, 1
        %s6029 = scalar_lea.sflag [#allocation4], %s6028
        %s6030 = sand.u32 %s207, 1
        %s6031 = smul.addr %s6030, 64
        %s6032 = scalar_lea.vmem [#allocation15], %s6031
        // Predicated region
        $region81: #{dc_block_forward.1} parent=51 // pred_check
          %p6033 = pneg %p217
        $region82: #{dc_block_forward.1} parent=51 // pred_check_branch
          %6035 = sbr.rel (%p6033) target = $region84
        $region83: #{dc_block_forward.1} parent=51 // pred_region
          %s6037 = ssub.s32 1024, 1024
          %6038 = vsyncadd %s6029, %s6037
          %s6039 = smul.addr %s26, 8
          %s6040 = smul.addr %s6039, 128
          %s6041 = scalar_lea.hbm %s8, %s6040
          %s6042 = sshll.u32 %s6032, 4
          %s6043 = int_to_ptr.vmem [resolvable:$true] %s6042
          %6048 = dma.vmem_to_hbm [thread:$0]  %s6043, 1024, %s6041, %s6029, 128, 128, 8
        $region84: #{dc_block_forward.1} parent=51 // pred_fallthru
          _
      $region52: #{dc_block_forward.1} parent=5 // pred_fallthru
        _
      %p6049 = scmp.le.s32.totalorder 2, %s21
      // Predicated region
      $region85: #{dc_block_forward.1} parent=5 // pred_check
        %p6050 = pneg %p6049
      $region86: #{dc_block_forward.1} parent=5 // pred_check_branch
        %6052 = sbr.rel (%p6050) target = $region88
      $region87: #{dc_block_forward.1} parent=5 // pred_region
        %s6053 = ssub.s32 %s21, 2
        // Predicated region
        $region89: #{dc_block_forward.1} parent=87 // pred_check
          %p6054 = pneg %p223
        $region90: #{dc_block_forward.1} parent=87 // pred_check_branch
          %6056 = sbr.rel (%p6054) target = $region92
        $region91: #{dc_block_forward.1} parent=87 // pred_region
          %s6057 = sand.u32 %s208, 1
          %s6058 = scalar_lea.sflag [#allocation4], %s6057
          %s6059 = sand.u32 %s208, 1
          %s6060 = smul.addr %s6059, 64
          %s6061 = scalar_lea.vmem [#allocation15], %s6060
          %6062 = dma.done %s6058, 1024
        $region92: #{dc_block_forward.1} parent=87 // pred_fallthru
          _
      $region88: #{dc_block_forward.1} parent=5 // pred_fallthru
        _
    $region6: #{dc_block_forward.1} parent=1 // loop_footer
      %s25 = sadd.s32 1, %s21
    $region7: #{dc_block_forward.1} parent=1 // loop_footer_branch
      %20 = sbr.rel target = $region3
    $region8: #{dc_block_forward.1} parent=1 // loop_exit
      _
    %6063 = vsyncpa [#allocation4], 1
    %s6064 = scalar_lea.sflag [#allocation4], 1
    %6065 = vsyncpa %s6064, 1
    %6066 = vsyncpa [#allocation5], 1
    %s6067 = scalar_lea.sflag [#allocation5], 1
    %6068 = vsyncpa %s6067, 1
    %6069 = vsyncpa [#allocation7], 1
    %6070 = vsyncpa [#allocation10], 1
    %6071 = vsyncpa [#allocation13], 1

</llo_original>
